<compile_context>
chip_gen: v7x
topology: tpu7x:2x2x1
jax: 0.10.0
libtpu: 0.0.40
codegen_flags: <defaults>
</compile_context>

<pallas_src>
import functools

import numpy as np

import jax
import jax.numpy as jnp
from jax.experimental import pallas as pl
from jax.experimental.pallas import tpu as pltpu


# ----------------------------------------------------------------------------
# Architecture constants (input must be 3x32x32 for the 16*5*5 flatten).
# ----------------------------------------------------------------------------
_IN_C, _IN_H, _IN_W = 3, 32, 32
_K = 5                       # conv kernel size
_C1, _H1, _W1 = 6, 28, 28    # conv1 output
_P1H, _P1W = 14, 14          # pool1 output
_C2, _H2, _W2 = 16, 10, 10   # conv2 output
_P2H, _P2W = 5, 5            # pool2 output
_FC_IN = _C2 * _P2H * _P2W   # 400
_FC1, _FC2, _FC3 = 120, 84, 10


# ----------------------------------------------------------------------------
# The single fused forward kernel
# ----------------------------------------------------------------------------
def _lenet_forward_kernel(x_ref, w1s_ref, b1_ref, w2s_ref, b2_ref,
                          fw1_ref, fb1_ref, fw2_ref, fb2_ref, fw3_ref, fb3_ref,
                          out_ref, fcin_ref, *, n_batch):
    """Whole MyNetwork forward for a small batch, fully VMEM-resident.

    x_ref   : (n_batch*3*32, 32) f32  -- NCHW input, rows = (n, c, h), lanes = w
    w1s_ref : (5*3*32, 168) f32       -- conv1 block-Toeplitz weights
    w2s_ref : (5*6*14, 160) f32       -- conv2 block-Toeplitz weights
    b1/b2   : (1, 168)/(1, 160)       -- conv biases repeated along the W axis
    fw*/fb* : fc weights (fc1 rows pre-permuted to our flatten order)
    out_ref : (n_batch, 10)
    fcin_ref: (n_batch, 400) VMEM scratch (flattened fc input)
    """
    f32 = jnp.float32

    def _dot(a, b):
        return jnp.dot(a, b, preferred_element_type=f32)

    def _row_sel(n_out, offset):
        # (n_out, 2*n_out) 0/1 matrix: (S @ Y)[r, :] == Y[2*r + offset, :]
        r = jax.lax.broadcasted_iota(jnp.int32, (n_out, 2 * n_out), 0)
        c = jax.lax.broadcasted_iota(jnp.int32, (n_out, 2 * n_out), 1)
        return (c == 2 * r + offset).astype(f32)

    def _col_sel(n_out, offset):
        # (2*n_out, n_out) 0/1 matrix: (Y @ S)[:, c] == Y[:, 2*c + offset]
        r = jax.lax.broadcasted_iota(jnp.int32, (2 * n_out, n_out), 0)
        c = jax.lax.broadcasted_iota(jnp.int32, (2 * n_out, n_out), 1)
        return (r == 2 * c + offset).astype(f32)

    def _pool2x2(y, r_e, r_o, c_e, c_o):
        # Exact 2x2/stride-2 max pool: pairwise row max via selection matmuls,
        # then pairwise column max.  Selection matrices copy exactly (0/1).
        z = jnp.maximum(_dot(r_e, y), _dot(r_o, y))
        return jnp.maximum(_dot(z, c_e), _dot(z, c_o))

    # Pooling selectors (built once per invocation; a few KB of VPU work).
    r1e, r1o = _row_sel(_P1H, 0), _row_sel(_P1H, 1)          # (14, 28)
    c1e, c1o = _col_sel(_C1 * _P1W, 0), _col_sel(_C1 * _P1W, 1)  # (168, 84)
    r2e, r2o = _row_sel(_P2H, 0), _row_sel(_P2H, 1)          # (5, 10)
    c2e, c2o = _col_sel(_C2 * _P2W, 0), _col_sel(_C2 * _P2W, 1)  # (160, 80)

    b1 = b1_ref[...]   # (1, C1*W1)  = (1, 168)
    b2 = b2_ref[...]   # (1, C2*W2)  = (1, 160)

    for n in range(n_batch):
        # ---- conv1 (5x5, 3->6) + bias + ReLU --------------------------------
        # y1[oh, co*28 + ow] = sum_{i,ci,j} x[n,ci,oh+i,ow+j] * w1[i,j,ci,co]
        # computed as 5*3 row-shifted (28,32) x (32,168) matmuls.
        y1 = jnp.zeros((_H1, _C1 * _W1), f32)
        for i in range(_K):
            for ci in range(_IN_C):
                rows = x_ref[pl.ds(n * _IN_C * _IN_H + ci * _IN_H + i, _H1), :]
                wblk = w1s_ref[pl.ds((i * _IN_C + ci) * _IN_W, _IN_W), :]
                y1 = y1 + _dot(rows, wblk)
        y1 = jnp.maximum(y1 + b1, 0.0)                    # (28, 168)

        # ---- 2x2 max pool -> (14, 6*14), lane layout co*14 + ow -------------
        p1 = _pool2x2(y1, r1e, r1o, c1e, c1o)             # (14, 84)

        # ---- conv2 (5x5, 6->16) + bias + ReLU -------------------------------
        # 5 row-shifted (10,84) x (84,160) matmuls (lanes of p1 are (ci, w)).
        y2 = jnp.zeros((_H2, _C2 * _W2), f32)
        for i in range(_K):
            rows = p1[i:i + _H2, :]                       # (10, 84)
            wblk = w2s_ref[pl.ds(i * _C1 * _P1W, _C1 * _P1W), :]   # (84, 160)
            y2 = y2 + _dot(rows, wblk)
        y2 = jnp.maximum(y2 + b2, 0.0)                    # (10, 160)

        # ---- 2x2 max pool -> (5, 16*5), lane layout co*5 + ow ---------------
        p2 = _pool2x2(y2, r2e, r2o, c2e, c2o)             # (5, 80)

        # ---- flatten into the (n_batch, 400) fc input scratch ---------------
        # fcin[n, h*80 + co*5 + w] = pool2[n, co, h, w]; fc1_w rows were
        # permuted at prep time to match this order (torch NCHW flatten).
        blk = _C2 * _P2W
        for h in range(_P2H):
            fcin_ref[n:n + 1, h * blk:(h + 1) * blk] = p2[h:h + 1, :]

    # ---- fully-connected head on the whole batch ----------------------------
    a = fcin_ref[...]                                                  # (N, 400)
    h1 = jnp.maximum(_dot(a, fw1_ref[...]) + fb1_ref[...], 0.0)        # (N, 120)
    h2 = jnp.maximum(_dot(h1, fw2_ref[...]) + fb2_ref[...], 0.0)       # (N, 84)
    out_ref[...] = (_dot(h2, fw3_ref[...]) + fb3_ref[...]).astype(out_ref.dtype)


# ----------------------------------------------------------------------------
# One-time (host-side) weight preprocessing
# ----------------------------------------------------------------------------
def _make_structured_conv(w, in_w, out_w):
    """Block-Toeplitz expansion of a conv weight (KH, KW, Cin, Cout).

    Returns ws of shape (KH*Cin*in_w, out_w*Cout) with
        ws[(i*Cin + ci)*in_w + x, co*out_w + ow] = w[i, x-ow, ci, co]   (0<=x-ow<KW)
    so that a valid stride-1 conv is  y = sum_i  x_rows_i @ ws_block_i, with
    output lane layout co*out_w + ow (channel-major, lane-dense).
    """
    w = np.asarray(w, np.float32)
    kh, kw, cin, cout = w.shape
    ws = np.zeros((kh, cin, in_w, out_w * cout), np.float32)
    for i in range(kh):
        for j in range(kw):
            for ow in range(out_w):
                ws[i, :, ow + j, ow::out_w] = w[i, j]      # (cin, cout) block
    return jnp.asarray(ws.reshape(kh * cin * in_w, out_w * cout))


def _fc1_row_permutation():
    # our flatten index: h*80 + co*5 + w   ->   torch flatten index: co*25 + h*5 + w
    idx = np.empty(_FC_IN, np.int32)
    for h in range(_P2H):
        for co in range(_C2):
            for w in range(_P2W):
                idx[h * (_C2 * _P2W) + co * _P2W + w] = co * (_P2H * _P2W) + h * _P2W + w
    return idx


def prepare_weights(params):
    """Fold all layout transforms into the weights once (zero runtime cost)."""
    w1s = _make_structured_conv(params["conv1_w"], _IN_W, _W1)   # (480, 168)
    w2s = _make_structured_conv(params["conv2_w"], _P1W, _W2)    # (420, 160)
    b1 = jnp.asarray(np.repeat(np.asarray(params["conv1_b"], np.float32), _W1)[None, :])
    b2 = jnp.asarray(np.repeat(np.asarray(params["conv2_b"], np.float32), _W2)[None, :])
    fw1 = jnp.asarray(np.asarray(params["fc1_w"], np.float32)[_fc1_row_permutation(), :])
    return {
        "w1s": w1s, "b1": b1, "w2s": w2s, "b2": b2,
        "fw1": fw1, "fb1": jnp.asarray(params["fc1_b"], jnp.float32)[None, :],
        "fw2": jnp.asarray(params["fc2_w"], jnp.float32),
        "fb2": jnp.asarray(params["fc2_b"], jnp.float32)[None, :],
        "fw3": jnp.asarray(params["fc3_w"], jnp.float32),
        "fb3": jnp.asarray(params["fc3_b"], jnp.float32)[None, :],
    }


# ----------------------------------------------------------------------------
# Parameters (PyTorch-equivalent float path) and forward wrapper
# ----------------------------------------------------------------------------
def init_params(key):
    ks = jax.random.split(key, 10)
    s = 0.05
    return {
        # BinaryConvLayer(3, 6, 5, 1): conv weight stored as (KH, KW, Cin, Cout)
        "conv1_w": s * jax.random.normal(ks[0], (_K, _K, _IN_C, _C1), jnp.float32),
        "conv1_b": s * jax.random.normal(ks[1], (_C1,), jnp.float32),
        # BinaryConvLayer(6, 16, 5, 1)
        "conv2_w": s * jax.random.normal(ks[2], (_K, _K, _C1, _C2), jnp.float32),
        "conv2_b": s * jax.random.normal(ks[3], (_C2,), jnp.float32),
        # BinaryLayer(400, 120) stored as (in, out)
        "fc1_w": s * jax.random.normal(ks[4], (_FC_IN, _FC1), jnp.float32),
        "fc1_b": s * jax.random.normal(ks[5], (_FC1,), jnp.float32),
        # BinaryLayer(120, 84)
        "fc2_w": s * jax.random.normal(ks[6], (_FC1, _FC2), jnp.float32),
        "fc2_b": s * jax.random.normal(ks[7], (_FC2,), jnp.float32),
        # BinaryLayer(84, 10)
        "fc3_w": s * jax.random.normal(ks[8], (_FC2, _FC3), jnp.float32),
        "fc3_b": s * jax.random.normal(ks[9], (_FC3,), jnp.float32),
    }


def my_network_forward(prepped, x_nchw):
    """x_nchw: (N, 3, 32, 32) f32 (PyTorch NCHW input). Returns (N, 10) logits."""
    n = x_nchw.shape[0]
    # Free row-major reshape (no transpose, no copy): rows = (n, c, h), lanes = w.
    x2d = x_nchw.astype(jnp.float32).reshape(n * _IN_C * _IN_H, _IN_W)

    vmem = pl.BlockSpec(memory_space=pltpu.MemorySpace.VMEM)
    kern = functools.partial(_lenet_forward_kernel, n_batch=n)
    return pl.pallas_call(
        kern,
        out_shape=jax.ShapeDtypeStruct((n, _FC3), jnp.float32),
        in_specs=[vmem] * 11,
        out_specs=vmem,
        scratch_shapes=[pltpu.VMEM((n, _FC_IN), jnp.float32)],
    )(x2d,
      prepped["w1s"], prepped["b1"], prepped["w2s"], prepped["b2"],
      prepped["fw1"], prepped["fb1"], prepped["fw2"], prepped["fb2"],
      prepped["fw3"], prepped["fb3"])


if __name__ == "__main__":
    key = jax.random.PRNGKey(0)
    pkey, xkey = jax.random.split(key)

    params = init_params(pkey)
    prepped = prepare_weights(params)          # one-time host-side prep

    # Batch=2, NCHW 3x32x32 (32x32 spatial is required by the 16*5*5 flatten).
    x = jax.random.normal(xkey, (2, _IN_C, _IN_H, _IN_W), jnp.float32)

    fwd = jax.jit(my_network_forward)
    logits = fwd(prepped, x)
    jax.block_until_ready(logits)

    assert logits.shape == (2, _FC3), logits.shape
    assert logits.dtype == jnp.float32
    assert bool(jnp.all(jnp.isfinite(logits)))
    print("KERNEL_OK")
</pallas_src>

<mosaic_0001>
module attributes {stable_mosaic.version = 11 : i64} {
  func.func @_lenet_forward_kernel(%arg0: memref<192x32xf32, #tpu.memory_space<vmem>>, %arg1: memref<480x168xf32, #tpu.memory_space<vmem>>, %arg2: memref<1x168xf32, #tpu.memory_space<vmem>>, %arg3: memref<420x160xf32, #tpu.memory_space<vmem>>, %arg4: memref<1x160xf32, #tpu.memory_space<vmem>>, %arg5: memref<400x120xf32, #tpu.memory_space<vmem>>, %arg6: memref<1x120xf32, #tpu.memory_space<vmem>>, %arg7: memref<120x84xf32, #tpu.memory_space<vmem>>, %arg8: memref<1x84xf32, #tpu.memory_space<vmem>>, %arg9: memref<84x10xf32, #tpu.memory_space<vmem>>, %arg10: memref<1x10xf32, #tpu.memory_space<vmem>>, %arg11: memref<2x10xf32, #tpu.memory_space<vmem>>, %arg12: memref<2x400xf32, #tpu.memory_space<vmem>>) attributes {dimension_semantics = [], scalar_prefetch = 0 : i64, scratch_operands = 1 : i64, tpu.core_type = #tpu.core_type<tc>} {
    %0 = tpu.iota {dimensions = array<i32: 0>} : vector<14x28xi32>
    %1 = tpu.iota {dimensions = array<i32: 1>} : vector<14x28xi32>
    %c2_i32 = arith.constant 2 : i32
    %2 = vector.broadcast %c2_i32 : i32 to vector<14x28xi32>
    %3 = arith.muli %2, %0 : vector<14x28xi32>
    %c0_i32 = arith.constant 0 : i32
    %4 = vector.broadcast %c0_i32 : i32 to vector<14x28xi32>
    %5 = arith.addi %3, %4 : vector<14x28xi32>
    %6 = arith.cmpi eq, %1, %5 : vector<14x28xi32>
    %7 = arith.extui %6 : vector<14x28xi1> to vector<14x28xi32>
    %8 = arith.sitofp %7 : vector<14x28xi32> to vector<14x28xf32>
    %9 = tpu.iota {dimensions = array<i32: 0>} : vector<14x28xi32>
    %10 = tpu.iota {dimensions = array<i32: 1>} : vector<14x28xi32>
    %c2_i32_0 = arith.constant 2 : i32
    %11 = vector.broadcast %c2_i32_0 : i32 to vector<14x28xi32>
    %12 = arith.muli %11, %9 : vector<14x28xi32>
    %c1_i32 = arith.constant 1 : i32
    %13 = vector.broadcast %c1_i32 : i32 to vector<14x28xi32>
    %14 = arith.addi %12, %13 : vector<14x28xi32>
    %15 = arith.cmpi eq, %10, %14 : vector<14x28xi32>
    %16 = arith.extui %15 : vector<14x28xi1> to vector<14x28xi32>
    %17 = arith.sitofp %16 : vector<14x28xi32> to vector<14x28xf32>
    %18 = tpu.iota {dimensions = array<i32: 0>} : vector<168x84xi32>
    %19 = tpu.iota {dimensions = array<i32: 1>} : vector<168x84xi32>
    %c2_i32_1 = arith.constant 2 : i32
    %20 = vector.broadcast %c2_i32_1 : i32 to vector<168x84xi32>
    %21 = arith.muli %20, %19 : vector<168x84xi32>
    %c0_i32_2 = arith.constant 0 : i32
    %22 = vector.broadcast %c0_i32_2 : i32 to vector<168x84xi32>
    %23 = arith.addi %21, %22 : vector<168x84xi32>
    %24 = arith.cmpi eq, %18, %23 : vector<168x84xi32>
    %25 = arith.extui %24 : vector<168x84xi1> to vector<168x84xi32>
    %26 = arith.sitofp %25 : vector<168x84xi32> to vector<168x84xf32>
    %27 = tpu.iota {dimensions = array<i32: 0>} : vector<168x84xi32>
    %28 = tpu.iota {dimensions = array<i32: 1>} : vector<168x84xi32>
    %c2_i32_3 = arith.constant 2 : i32
    %29 = vector.broadcast %c2_i32_3 : i32 to vector<168x84xi32>
    %30 = arith.muli %29, %28 : vector<168x84xi32>
    %c1_i32_4 = arith.constant 1 : i32
    %31 = vector.broadcast %c1_i32_4 : i32 to vector<168x84xi32>
    %32 = arith.addi %30, %31 : vector<168x84xi32>
    %33 = arith.cmpi eq, %27, %32 : vector<168x84xi32>
    %34 = arith.extui %33 : vector<168x84xi1> to vector<168x84xi32>
    %35 = arith.sitofp %34 : vector<168x84xi32> to vector<168x84xf32>
    %36 = tpu.iota {dimensions = array<i32: 0>} : vector<5x10xi32>
    %37 = tpu.iota {dimensions = array<i32: 1>} : vector<5x10xi32>
    %c2_i32_5 = arith.constant 2 : i32
    %38 = vector.broadcast %c2_i32_5 : i32 to vector<5x10xi32>
    %39 = arith.muli %38, %36 : vector<5x10xi32>
    %c0_i32_6 = arith.constant 0 : i32
    %40 = vector.broadcast %c0_i32_6 : i32 to vector<5x10xi32>
    %41 = arith.addi %39, %40 : vector<5x10xi32>
    %42 = arith.cmpi eq, %37, %41 : vector<5x10xi32>
    %43 = arith.extui %42 : vector<5x10xi1> to vector<5x10xi32>
    %44 = arith.sitofp %43 : vector<5x10xi32> to vector<5x10xf32>
    %45 = tpu.iota {dimensions = array<i32: 0>} : vector<5x10xi32>
    %46 = tpu.iota {dimensions = array<i32: 1>} : vector<5x10xi32>
    %c2_i32_7 = arith.constant 2 : i32
    %47 = vector.broadcast %c2_i32_7 : i32 to vector<5x10xi32>
    %48 = arith.muli %47, %45 : vector<5x10xi32>
    %c1_i32_8 = arith.constant 1 : i32
    %49 = vector.broadcast %c1_i32_8 : i32 to vector<5x10xi32>
    %50 = arith.addi %48, %49 : vector<5x10xi32>
    %51 = arith.cmpi eq, %46, %50 : vector<5x10xi32>
    %52 = arith.extui %51 : vector<5x10xi1> to vector<5x10xi32>
    %53 = arith.sitofp %52 : vector<5x10xi32> to vector<5x10xf32>
    %54 = tpu.iota {dimensions = array<i32: 0>} : vector<160x80xi32>
    %55 = tpu.iota {dimensions = array<i32: 1>} : vector<160x80xi32>
    %c2_i32_9 = arith.constant 2 : i32
    %56 = vector.broadcast %c2_i32_9 : i32 to vector<160x80xi32>
    %57 = arith.muli %56, %55 : vector<160x80xi32>
    %c0_i32_10 = arith.constant 0 : i32
    %58 = vector.broadcast %c0_i32_10 : i32 to vector<160x80xi32>
    %59 = arith.addi %57, %58 : vector<160x80xi32>
    %60 = arith.cmpi eq, %54, %59 : vector<160x80xi32>
    %61 = arith.extui %60 : vector<160x80xi1> to vector<160x80xi32>
    %62 = arith.sitofp %61 : vector<160x80xi32> to vector<160x80xf32>
    %63 = tpu.iota {dimensions = array<i32: 0>} : vector<160x80xi32>
    %64 = tpu.iota {dimensions = array<i32: 1>} : vector<160x80xi32>
    %c2_i32_11 = arith.constant 2 : i32
    %65 = vector.broadcast %c2_i32_11 : i32 to vector<160x80xi32>
    %66 = arith.muli %65, %64 : vector<160x80xi32>
    %c1_i32_12 = arith.constant 1 : i32
    %67 = vector.broadcast %c1_i32_12 : i32 to vector<160x80xi32>
    %68 = arith.addi %66, %67 : vector<160x80xi32>
    %69 = arith.cmpi eq, %63, %68 : vector<160x80xi32>
    %70 = arith.extui %69 : vector<160x80xi1> to vector<160x80xi32>
    %71 = arith.sitofp %70 : vector<160x80xi32> to vector<160x80xf32>
    %c0 = arith.constant 0 : index
    %c0_13 = arith.constant 0 : index
    %72 = vector.load %arg2[%c0, %c0_13] : memref<1x168xf32, #tpu.memory_space<vmem>>, vector<1x168xf32>
    %c0_14 = arith.constant 0 : index
    %c0_15 = arith.constant 0 : index
    %73 = vector.load %arg4[%c0_14, %c0_15] : memref<1x160xf32, #tpu.memory_space<vmem>>, vector<1x160xf32>
    %cst = arith.constant 0.000000e+00 : f32
    %74 = vector.broadcast %cst : f32 to vector<28x168xf32>
    %c0_16 = arith.constant 0 : index
    %c0_17 = arith.constant 0 : index
    %75 = vector.load %arg0[%c0_16, %c0_17] : memref<192x32xf32, #tpu.memory_space<vmem>>, vector<28x32xf32>
    %c0_18 = arith.constant 0 : index
    %c0_19 = arith.constant 0 : index
    %76 = vector.load %arg1[%c0_18, %c0_19] : memref<480x168xf32, #tpu.memory_space<vmem>>, vector<32x168xf32>
    %cst_20 = arith.constant dense<0.000000e+00> : vector<28x168xf32>
    %77 = tpu.matmul %75, %76, %cst_20 {dimension_numbers = #tpu.dot_dimension_numbers<[1], [0], [0], [1], [0, 0, 1, 1], [], []>} : vector<28x32xf32>, vector<32x168xf32>, vector<28x168xf32> -> vector<28x168xf32>
    %78 = arith.addf %74, %77 : vector<28x168xf32>
    %c32 = arith.constant 32 : index
    %c0_21 = arith.constant 0 : index
    %79 = vector.load %arg0[%c32, %c0_21] : memref<192x32xf32, #tpu.memory_space<vmem>>, vector<28x32xf32>
    %c32_22 = arith.constant 32 : index
    %c0_23 = arith.constant 0 : index
    %80 = vector.load %arg1[%c32_22, %c0_23] : memref<480x168xf32, #tpu.memory_space<vmem>>, vector<32x168xf32>
    %cst_24 = arith.constant dense<0.000000e+00> : vector<28x168xf32>
    %81 = tpu.matmul %79, %80, %cst_24 {dimension_numbers = #tpu.dot_dimension_numbers<[1], [0], [0], [1], [0, 0, 1, 1], [], []>} : vector<28x32xf32>, vector<32x168xf32>, vector<28x168xf32> -> vector<28x168xf32>
    %82 = arith.addf %78, %81 : vector<28x168xf32>
    %c64 = arith.constant 64 : index
    %c0_25 = arith.constant 0 : index
    %83 = vector.load %arg0[%c64, %c0_25] : memref<192x32xf32, #tpu.memory_space<vmem>>, vector<28x32xf32>
    %c64_26 = arith.constant 64 : index
    %c0_27 = arith.constant 0 : index
    %84 = vector.load %arg1[%c64_26, %c0_27] : memref<480x168xf32, #tpu.memory_space<vmem>>, vector<32x168xf32>
    %cst_28 = arith.constant dense<0.000000e+00> : vector<28x168xf32>
    %85 = tpu.matmul %83, %84, %cst_28 {dimension_numbers = #tpu.dot_dimension_numbers<[1], [0], [0], [1], [0, 0, 1, 1], [], []>} : vector<28x32xf32>, vector<32x168xf32>, vector<28x168xf32> -> vector<28x168xf32>
    %86 = arith.addf %82, %85 : vector<28x168xf32>
    %c1 = arith.constant 1 : index
    %c0_29 = arith.constant 0 : index
    %87 = vector.load %arg0[%c1, %c0_29] : memref<192x32xf32, #tpu.memory_space<vmem>>, vector<28x32xf32>
    %c96 = arith.constant 96 : index
    %c0_30 = arith.constant 0 : index
    %88 = vector.load %arg1[%c96, %c0_30] : memref<480x168xf32, #tpu.memory_space<vmem>>, vector<32x168xf32>
    %cst_31 = arith.constant dense<0.000000e+00> : vector<28x168xf32>
    %89 = tpu.matmul %87, %88, %cst_31 {dimension_numbers = #tpu.dot_dimension_numbers<[1], [0], [0], [1], [0, 0, 1, 1], [], []>} : vector<28x32xf32>, vector<32x168xf32>, vector<28x168xf32> -> vector<28x168xf32>
    %90 = arith.addf %86, %89 : vector<28x168xf32>
    %c33 = arith.constant 33 : index
    %c0_32 = arith.constant 0 : index
    %91 = vector.load %arg0[%c33, %c0_32] : memref<192x32xf32, #tpu.memory_space<vmem>>, vector<28x32xf32>
    %c128 = arith.constant 128 : index
    %c0_33 = arith.constant 0 : index
    %92 = vector.load %arg1[%c128, %c0_33] : memref<480x168xf32, #tpu.memory_space<vmem>>, vector<32x168xf32>
    %cst_34 = arith.constant dense<0.000000e+00> : vector<28x168xf32>
    %93 = tpu.matmul %91, %92, %cst_34 {dimension_numbers = #tpu.dot_dimension_numbers<[1], [0], [0], [1], [0, 0, 1, 1], [], []>} : vector<28x32xf32>, vector<32x168xf32>, vector<28x168xf32> -> vector<28x168xf32>
    %94 = arith.addf %90, %93 : vector<28x168xf32>
    %c65 = arith.constant 65 : index
    %c0_35 = arith.constant 0 : index
    %95 = vector.load %arg0[%c65, %c0_35] : memref<192x32xf32, #tpu.memory_space<vmem>>, vector<28x32xf32>
    %c160 = arith.constant 160 : index
    %c0_36 = arith.constant 0 : index
    %96 = vector.load %arg1[%c160, %c0_36] : memref<480x168xf32, #tpu.memory_space<vmem>>, vector<32x168xf32>
    %cst_37 = arith.constant dense<0.000000e+00> : vector<28x168xf32>
    %97 = tpu.matmul %95, %96, %cst_37 {dimension_numbers = #tpu.dot_dimension_numbers<[1], [0], [0], [1], [0, 0, 1, 1], [], []>} : vector<28x32xf32>, vector<32x168xf32>, vector<28x168xf32> -> vector<28x168xf32>
    %98 = arith.addf %94, %97 : vector<28x168xf32>
    %c2 = arith.constant 2 : index
    %c0_38 = arith.constant 0 : index
    %99 = vector.load %arg0[%c2, %c0_38] : memref<192x32xf32, #tpu.memory_space<vmem>>, vector<28x32xf32>
    %c192 = arith.constant 192 : index
    %c0_39 = arith.constant 0 : index
    %100 = vector.load %arg1[%c192, %c0_39] : memref<480x168xf32, #tpu.memory_space<vmem>>, vector<32x168xf32>
    %cst_40 = arith.constant dense<0.000000e+00> : vector<28x168xf32>
    %101 = tpu.matmul %99, %100, %cst_40 {dimension_numbers = #tpu.dot_dimension_numbers<[1], [0], [0], [1], [0, 0, 1, 1], [], []>} : vector<28x32xf32>, vector<32x168xf32>, vector<28x168xf32> -> vector<28x168xf32>
    %102 = arith.addf %98, %101 : vector<28x168xf32>
    %c34 = arith.constant 34 : index
    %c0_41 = arith.constant 0 : index
    %103 = vector.load %arg0[%c34, %c0_41] : memref<192x32xf32, #tpu.memory_space<vmem>>, vector<28x32xf32>
    %c224 = arith.constant 224 : index
    %c0_42 = arith.constant 0 : index
    %104 = vector.load %arg1[%c224, %c0_42] : memref<480x168xf32, #tpu.memory_space<vmem>>, vector<32x168xf32>
    %cst_43 = arith.constant dense<0.000000e+00> : vector<28x168xf32>
    %105 = tpu.matmul %103, %104, %cst_43 {dimension_numbers = #tpu.dot_dimension_numbers<[1], [0], [0], [1], [0, 0, 1, 1], [], []>} : vector<28x32xf32>, vector<32x168xf32>, vector<28x168xf32> -> vector<28x168xf32>
    %106 = arith.addf %102, %105 : vector<28x168xf32>
    %c66 = arith.constant 66 : index
    %c0_44 = arith.constant 0 : index
    %107 = vector.load %arg0[%c66, %c0_44] : memref<192x32xf32, #tpu.memory_space<vmem>>, vector<28x32xf32>
    %c256 = arith.constant 256 : index
    %c0_45 = arith.constant 0 : index
    %108 = vector.load %arg1[%c256, %c0_45] : memref<480x168xf32, #tpu.memory_space<vmem>>, vector<32x168xf32>
    %cst_46 = arith.constant dense<0.000000e+00> : vector<28x168xf32>
    %109 = tpu.matmul %107, %108, %cst_46 {dimension_numbers = #tpu.dot_dimension_numbers<[1], [0], [0], [1], [0, 0, 1, 1], [], []>} : vector<28x32xf32>, vector<32x168xf32>, vector<28x168xf32> -> vector<28x168xf32>
    %110 = arith.addf %106, %109 : vector<28x168xf32>
    %c3 = arith.constant 3 : index
    %c0_47 = arith.constant 0 : index
    %111 = vector.load %arg0[%c3, %c0_47] : memref<192x32xf32, #tpu.memory_space<vmem>>, vector<28x32xf32>
    %c288 = arith.constant 288 : index
    %c0_48 = arith.constant 0 : index
    %112 = vector.load %arg1[%c288, %c0_48] : memref<480x168xf32, #tpu.memory_space<vmem>>, vector<32x168xf32>
    %cst_49 = arith.constant dense<0.000000e+00> : vector<28x168xf32>
    %113 = tpu.matmul %111, %112, %cst_49 {dimension_numbers = #tpu.dot_dimension_numbers<[1], [0], [0], [1], [0, 0, 1, 1], [], []>} : vector<28x32xf32>, vector<32x168xf32>, vector<28x168xf32> -> vector<28x168xf32>
    %114 = arith.addf %110, %113 : vector<28x168xf32>
    %c35 = arith.constant 35 : index
    %c0_50 = arith.constant 0 : index
    %115 = vector.load %arg0[%c35, %c0_50] : memref<192x32xf32, #tpu.memory_space<vmem>>, vector<28x32xf32>
    %c320 = arith.constant 320 : index
    %c0_51 = arith.constant 0 : index
    %116 = vector.load %arg1[%c320, %c0_51] : memref<480x168xf32, #tpu.memory_space<vmem>>, vector<32x168xf32>
    %cst_52 = arith.constant dense<0.000000e+00> : vector<28x168xf32>
    %117 = tpu.matmul %115, %116, %cst_52 {dimension_numbers = #tpu.dot_dimension_numbers<[1], [0], [0], [1], [0, 0, 1, 1], [], []>} : vector<28x32xf32>, vector<32x168xf32>, vector<28x168xf32> -> vector<28x168xf32>
    %118 = arith.addf %114, %117 : vector<28x168xf32>
    %c67 = arith.constant 67 : index
    %c0_53 = arith.constant 0 : index
    %119 = vector.load %arg0[%c67, %c0_53] : memref<192x32xf32, #tpu.memory_space<vmem>>, vector<28x32xf32>
    %c352 = arith.constant 352 : index
    %c0_54 = arith.constant 0 : index
    %120 = vector.load %arg1[%c352, %c0_54] : memref<480x168xf32, #tpu.memory_space<vmem>>, vector<32x168xf32>
    %cst_55 = arith.constant dense<0.000000e+00> : vector<28x168xf32>
    %121 = tpu.matmul %119, %120, %cst_55 {dimension_numbers = #tpu.dot_dimension_numbers<[1], [0], [0], [1], [0, 0, 1, 1], [], []>} : vector<28x32xf32>, vector<32x168xf32>, vector<28x168xf32> -> vector<28x168xf32>
    %122 = arith.addf %118, %121 : vector<28x168xf32>
    %c4 = arith.constant 4 : index
    %c0_56 = arith.constant 0 : index
    %123 = vector.load %arg0[%c4, %c0_56] : memref<192x32xf32, #tpu.memory_space<vmem>>, vector<28x32xf32>
    %c384 = arith.constant 384 : index
    %c0_57 = arith.constant 0 : index
    %124 = vector.load %arg1[%c384, %c0_57] : memref<480x168xf32, #tpu.memory_space<vmem>>, vector<32x168xf32>
    %cst_58 = arith.constant dense<0.000000e+00> : vector<28x168xf32>
    %125 = tpu.matmul %123, %124, %cst_58 {dimension_numbers = #tpu.dot_dimension_numbers<[1], [0], [0], [1], [0, 0, 1, 1], [], []>} : vector<28x32xf32>, vector<32x168xf32>, vector<28x168xf32> -> vector<28x168xf32>
    %126 = arith.addf %122, %125 : vector<28x168xf32>
    %c36 = arith.constant 36 : index
    %c0_59 = arith.constant 0 : index
    %127 = vector.load %arg0[%c36, %c0_59] : memref<192x32xf32, #tpu.memory_space<vmem>>, vector<28x32xf32>
    %c416 = arith.constant 416 : index
    %c0_60 = arith.constant 0 : index
    %128 = vector.load %arg1[%c416, %c0_60] : memref<480x168xf32, #tpu.memory_space<vmem>>, vector<32x168xf32>
    %cst_61 = arith.constant dense<0.000000e+00> : vector<28x168xf32>
    %129 = tpu.matmul %127, %128, %cst_61 {dimension_numbers = #tpu.dot_dimension_numbers<[1], [0], [0], [1], [0, 0, 1, 1], [], []>} : vector<28x32xf32>, vector<32x168xf32>, vector<28x168xf32> -> vector<28x168xf32>
    %130 = arith.addf %126, %129 : vector<28x168xf32>
    %c68 = arith.constant 68 : index
    %c0_62 = arith.constant 0 : index
    %131 = vector.load %arg0[%c68, %c0_62] : memref<192x32xf32, #tpu.memory_space<vmem>>, vector<28x32xf32>
    %c448 = arith.constant 448 : index
    %c0_63 = arith.constant 0 : index
    %132 = vector.load %arg1[%c448, %c0_63] : memref<480x168xf32, #tpu.memory_space<vmem>>, vector<32x168xf32>
    %cst_64 = arith.constant dense<0.000000e+00> : vector<28x168xf32>
    %133 = tpu.matmul %131, %132, %cst_64 {dimension_numbers = #tpu.dot_dimension_numbers<[1], [0], [0], [1], [0, 0, 1, 1], [], []>} : vector<28x32xf32>, vector<32x168xf32>, vector<28x168xf32> -> vector<28x168xf32>
    %134 = arith.addf %130, %133 : vector<28x168xf32>
    %135 = vector.broadcast %72 : vector<1x168xf32> to vector<28x168xf32>
    %136 = arith.addf %134, %135 : vector<28x168xf32>
    %cst_65 = arith.constant 0.000000e+00 : f32
    %137 = vector.broadcast %cst_65 : f32 to vector<28x168xf32>
    %138 = arith.maximumf %136, %137 : vector<28x168xf32>
    %cst_66 = arith.constant dense<0.000000e+00> : vector<14x168xf32>
    %139 = tpu.matmul %8, %138, %cst_66 {dimension_numbers = #tpu.dot_dimension_numbers<[1], [0], [0], [1], [0, 0, 1, 1], [], []>} : vector<14x28xf32>, vector<28x168xf32>, vector<14x168xf32> -> vector<14x168xf32>
    %cst_67 = arith.constant dense<0.000000e+00> : vector<14x168xf32>
    %140 = tpu.matmul %17, %138, %cst_67 {dimension_numbers = #tpu.dot_dimension_numbers<[1], [0], [0], [1], [0, 0, 1, 1], [], []>} : vector<14x28xf32>, vector<28x168xf32>, vector<14x168xf32> -> vector<14x168xf32>
    %141 = arith.maximumf %139, %140 : vector<14x168xf32>
    %cst_68 = arith.constant dense<0.000000e+00> : vector<14x84xf32>
    %142 = tpu.matmul %141, %26, %cst_68 {dimension_numbers = #tpu.dot_dimension_numbers<[1], [0], [0], [1], [0, 0, 1, 1], [], []>} : vector<14x168xf32>, vector<168x84xf32>, vector<14x84xf32> -> vector<14x84xf32>
    %cst_69 = arith.constant dense<0.000000e+00> : vector<14x84xf32>
    %143 = tpu.matmul %141, %35, %cst_69 {dimension_numbers = #tpu.dot_dimension_numbers<[1], [0], [0], [1], [0, 0, 1, 1], [], []>} : vector<14x168xf32>, vector<168x84xf32>, vector<14x84xf32> -> vector<14x84xf32>
    %144 = arith.maximumf %142, %143 : vector<14x84xf32>
    %cst_70 = arith.constant 0.000000e+00 : f32
    %145 = vector.broadcast %cst_70 : f32 to vector<10x160xf32>
    %146 = vector.extract_strided_slice %144 {offsets = [0, 0], sizes = [10, 84], strides = [1, 1]} : vector<14x84xf32> to vector<10x84xf32>
    %c0_71 = arith.constant 0 : index
    %c0_72 = arith.constant 0 : index
    %147 = vector.load %arg3[%c0_71, %c0_72] : memref<420x160xf32, #tpu.memory_space<vmem>>, vector<84x160xf32>
    %cst_73 = arith.constant dense<0.000000e+00> : vector<10x160xf32>
    %148 = tpu.matmul %146, %147, %cst_73 {dimension_numbers = #tpu.dot_dimension_numbers<[1], [0], [0], [1], [0, 0, 1, 1], [], []>} : vector<10x84xf32>, vector<84x160xf32>, vector<10x160xf32> -> vector<10x160xf32>
    %149 = arith.addf %145, %148 : vector<10x160xf32>
    %150 = vector.extract_strided_slice %144 {offsets = [1, 0], sizes = [10, 84], strides = [1, 1]} : vector<14x84xf32> to vector<10x84xf32>
    %c84 = arith.constant 84 : index
    %c0_74 = arith.constant 0 : index
    %151 = vector.load %arg3[%c84, %c0_74] : memref<420x160xf32, #tpu.memory_space<vmem>>, vector<84x160xf32>
    %cst_75 = arith.constant dense<0.000000e+00> : vector<10x160xf32>
    %152 = tpu.matmul %150, %151, %cst_75 {dimension_numbers = #tpu.dot_dimension_numbers<[1], [0], [0], [1], [0, 0, 1, 1], [], []>} : vector<10x84xf32>, vector<84x160xf32>, vector<10x160xf32> -> vector<10x160xf32>
    %153 = arith.addf %149, %152 : vector<10x160xf32>
    %154 = vector.extract_strided_slice %144 {offsets = [2, 0], sizes = [10, 84], strides = [1, 1]} : vector<14x84xf32> to vector<10x84xf32>
    %c168 = arith.constant 168 : index
    %c0_76 = arith.constant 0 : index
    %155 = vector.load %arg3[%c168, %c0_76] : memref<420x160xf32, #tpu.memory_space<vmem>>, vector<84x160xf32>
    %cst_77 = arith.constant dense<0.000000e+00> : vector<10x160xf32>
    %156 = tpu.matmul %154, %155, %cst_77 {dimension_numbers = #tpu.dot_dimension_numbers<[1], [0], [0], [1], [0, 0, 1, 1], [], []>} : vector<10x84xf32>, vector<84x160xf32>, vector<10x160xf32> -> vector<10x160xf32>
    %157 = arith.addf %153, %156 : vector<10x160xf32>
    %158 = vector.extract_strided_slice %144 {offsets = [3, 0], sizes = [10, 84], strides = [1, 1]} : vector<14x84xf32> to vector<10x84xf32>
    %c252 = arith.constant 252 : index
    %c0_78 = arith.constant 0 : index
    %159 = vector.load %arg3[%c252, %c0_78] : memref<420x160xf32, #tpu.memory_space<vmem>>, vector<84x160xf32>
    %cst_79 = arith.constant dense<0.000000e+00> : vector<10x160xf32>
    %160 = tpu.matmul %158, %159, %cst_79 {dimension_numbers = #tpu.dot_dimension_numbers<[1], [0], [0], [1], [0, 0, 1, 1], [], []>} : vector<10x84xf32>, vector<84x160xf32>, vector<10x160xf32> -> vector<10x160xf32>
    %161 = arith.addf %157, %160 : vector<10x160xf32>
    %162 = vector.extract_strided_slice %144 {offsets = [4, 0], sizes = [10, 84], strides = [1, 1]} : vector<14x84xf32> to vector<10x84xf32>
    %c336 = arith.constant 336 : index
    %c0_80 = arith.constant 0 : index
    %163 = vector.load %arg3[%c336, %c0_80] : memref<420x160xf32, #tpu.memory_space<vmem>>, vector<84x160xf32>
    %cst_81 = arith.constant dense<0.000000e+00> : vector<10x160xf32>
    %164 = tpu.matmul %162, %163, %cst_81 {dimension_numbers = #tpu.dot_dimension_numbers<[1], [0], [0], [1], [0, 0, 1, 1], [], []>} : vector<10x84xf32>, vector<84x160xf32>, vector<10x160xf32> -> vector<10x160xf32>
    %165 = arith.addf %161, %164 : vector<10x160xf32>
    %166 = vector.broadcast %73 : vector<1x160xf32> to vector<10x160xf32>
    %167 = arith.addf %165, %166 : vector<10x160xf32>
    %cst_82 = arith.constant 0.000000e+00 : f32
    %168 = vector.broadcast %cst_82 : f32 to vector<10x160xf32>
    %169 = arith.maximumf %167, %168 : vector<10x160xf32>
    %cst_83 = arith.constant dense<0.000000e+00> : vector<5x160xf32>
    %170 = tpu.matmul %44, %169, %cst_83 {dimension_numbers = #tpu.dot_dimension_numbers<[1], [0], [0], [1], [0, 0, 1, 1], [], []>} : vector<5x10xf32>, vector<10x160xf32>, vector<5x160xf32> -> vector<5x160xf32>
    %cst_84 = arith.constant dense<0.000000e+00> : vector<5x160xf32>
    %171 = tpu.matmul %53, %169, %cst_84 {dimension_numbers = #tpu.dot_dimension_numbers<[1], [0], [0], [1], [0, 0, 1, 1], [], []>} : vector<5x10xf32>, vector<10x160xf32>, vector<5x160xf32> -> vector<5x160xf32>
    %172 = arith.maximumf %170, %171 : vector<5x160xf32>
    %cst_85 = arith.constant dense<0.000000e+00> : vector<5x80xf32>
    %173 = tpu.matmul %172, %62, %cst_85 {dimension_numbers = #tpu.dot_dimension_numbers<[1], [0], [0], [1], [0, 0, 1, 1], [], []>} : vector<5x160xf32>, vector<160x80xf32>, vector<5x80xf32> -> vector<5x80xf32>
    %cst_86 = arith.constant dense<0.000000e+00> : vector<5x80xf32>
    %174 = tpu.matmul %172, %71, %cst_86 {dimension_numbers = #tpu.dot_dimension_numbers<[1], [0], [0], [1], [0, 0, 1, 1], [], []>} : vector<5x160xf32>, vector<160x80xf32>, vector<5x80xf32> -> vector<5x80xf32>
    %175 = arith.maximumf %173, %174 : vector<5x80xf32>
    %176 = vector.extract_strided_slice %175 {offsets = [0, 0], sizes = [1, 80], strides = [1, 1]} : vector<5x80xf32> to vector<1x80xf32>
    %c0_87 = arith.constant 0 : index
    %c0_88 = arith.constant 0 : index
    %177 = vector.load %arg12[%c0_87, %c0_88] : memref<2x400xf32, #tpu.memory_space<vmem>>, vector<1x80xf32>
    tpu.vector_store %arg12[%c0_87, %c0_88], %176 {strides = array<i32>} : memref<2x400xf32, #tpu.memory_space<vmem>>, vector<1x80xf32>,
    %178 = vector.extract_strided_slice %175 {offsets = [1, 0], sizes = [1, 80], strides = [1, 1]} : vector<5x80xf32> to vector<1x80xf32>
    %c0_89 = arith.constant 0 : index
    %c80 = arith.constant 80 : index
    %179 = vector.load %arg12[%c0_89, %c80] : memref<2x400xf32, #tpu.memory_space<vmem>>, vector<1x80xf32>
    tpu.vector_store %arg12[%c0_89, %c80], %178 {strides = array<i32>} : memref<2x400xf32, #tpu.memory_space<vmem>>, vector<1x80xf32>,
    %180 = vector.extract_strided_slice %175 {offsets = [2, 0], sizes = [1, 80], strides = [1, 1]} : vector<5x80xf32> to vector<1x80xf32>
    %c0_90 = arith.constant 0 : index
    %c160_91 = arith.constant 160 : index
    %181 = vector.load %arg12[%c0_90, %c160_91] : memref<2x400xf32, #tpu.memory_space<vmem>>, vector<1x80xf32>
    tpu.vector_store %arg12[%c0_90, %c160_91], %180 {strides = array<i32>} : memref<2x400xf32, #tpu.memory_space<vmem>>, vector<1x80xf32>,
    %182 = vector.extract_strided_slice %175 {offsets = [3, 0], sizes = [1, 80], strides = [1, 1]} : vector<5x80xf32> to vector<1x80xf32>
    %c0_92 = arith.constant 0 : index
    %c240 = arith.constant 240 : index
    %183 = vector.load %arg12[%c0_92, %c240] : memref<2x400xf32, #tpu.memory_space<vmem>>, vector<1x80xf32>
    tpu.vector_store %arg12[%c0_92, %c240], %182 {strides = array<i32>} : memref<2x400xf32, #tpu.memory_space<vmem>>, vector<1x80xf32>,
    %184 = vector.extract_strided_slice %175 {offsets = [4, 0], sizes = [1, 80], strides = [1, 1]} : vector<5x80xf32> to vector<1x80xf32>
    %c0_93 = arith.constant 0 : index
    %c320_94 = arith.constant 320 : index
    %185 = vector.load %arg12[%c0_93, %c320_94] : memref<2x400xf32, #tpu.memory_space<vmem>>, vector<1x80xf32>
    tpu.vector_store %arg12[%c0_93, %c320_94], %184 {strides = array<i32>} : memref<2x400xf32, #tpu.memory_space<vmem>>, vector<1x80xf32>,
    %cst_95 = arith.constant 0.000000e+00 : f32
    %186 = vector.broadcast %cst_95 : f32 to vector<28x168xf32>
    %c96_96 = arith.constant 96 : index
    %c0_97 = arith.constant 0 : index
    %187 = vector.load %arg0[%c96_96, %c0_97] : memref<192x32xf32, #tpu.memory_space<vmem>>, vector<28x32xf32>
    %c0_98 = arith.constant 0 : index
    %c0_99 = arith.constant 0 : index
    %188 = vector.load %arg1[%c0_98, %c0_99] : memref<480x168xf32, #tpu.memory_space<vmem>>, vector<32x168xf32>
    %cst_100 = arith.constant dense<0.000000e+00> : vector<28x168xf32>
    %189 = tpu.matmul %187, %188, %cst_100 {dimension_numbers = #tpu.dot_dimension_numbers<[1], [0], [0], [1], [0, 0, 1, 1], [], []>} : vector<28x32xf32>, vector<32x168xf32>, vector<28x168xf32> -> vector<28x168xf32>
    %190 = arith.addf %186, %189 : vector<28x168xf32>
    %c128_101 = arith.constant 128 : index
    %c0_102 = arith.constant 0 : index
    %191 = vector.load %arg0[%c128_101, %c0_102] : memref<192x32xf32, #tpu.memory_space<vmem>>, vector<28x32xf32>
    %c32_103 = arith.constant 32 : index
    %c0_104 = arith.constant 0 : index
    %192 = vector.load %arg1[%c32_103, %c0_104] : memref<480x168xf32, #tpu.memory_space<vmem>>, vector<32x168xf32>
    %cst_105 = arith.constant dense<0.000000e+00> : vector<28x168xf32>
    %193 = tpu.matmul %191, %192, %cst_105 {dimension_numbers = #tpu.dot_dimension_numbers<[1], [0], [0], [1], [0, 0, 1, 1], [], []>} : vector<28x32xf32>, vector<32x168xf32>, vector<28x168xf32> -> vector<28x168xf32>
    %194 = arith.addf %190, %193 : vector<28x168xf32>
    %c160_106 = arith.constant 160 : index
    %c0_107 = arith.constant 0 : index
    %195 = vector.load %arg0[%c160_106, %c0_107] : memref<192x32xf32, #tpu.memory_space<vmem>>, vector<28x32xf32>
    %c64_108 = arith.constant 64 : index
    %c0_109 = arith.constant 0 : index
    %196 = vector.load %arg1[%c64_108, %c0_109] : memref<480x168xf32, #tpu.memory_space<vmem>>, vector<32x168xf32>
    %cst_110 = arith.constant dense<0.000000e+00> : vector<28x168xf32>
    %197 = tpu.matmul %195, %196, %cst_110 {dimension_numbers = #tpu.dot_dimension_numbers<[1], [0], [0], [1], [0, 0, 1, 1], [], []>} : vector<28x32xf32>, vector<32x168xf32>, vector<28x168xf32> -> vector<28x168xf32>
    %198 = arith.addf %194, %197 : vector<28x168xf32>
    %c97 = arith.constant 97 : index
    %c0_111 = arith.constant 0 : index
    %199 = vector.load %arg0[%c97, %c0_111] : memref<192x32xf32, #tpu.memory_space<vmem>>, vector<28x32xf32>
    %c96_112 = arith.constant 96 : index
    %c0_113 = arith.constant 0 : index
    %200 = vector.load %arg1[%c96_112, %c0_113] : memref<480x168xf32, #tpu.memory_space<vmem>>, vector<32x168xf32>
    %cst_114 = arith.constant dense<0.000000e+00> : vector<28x168xf32>
    %201 = tpu.matmul %199, %200, %cst_114 {dimension_numbers = #tpu.dot_dimension_numbers<[1], [0], [0], [1], [0, 0, 1, 1], [], []>} : vector<28x32xf32>, vector<32x168xf32>, vector<28x168xf32> -> vector<28x168xf32>
    %202 = arith.addf %198, %201 : vector<28x168xf32>
    %c129 = arith.constant 129 : index
    %c0_115 = arith.constant 0 : index
    %203 = vector.load %arg0[%c129, %c0_115] : memref<192x32xf32, #tpu.memory_space<vmem>>, vector<28x32xf32>
    %c128_116 = arith.constant 128 : index
    %c0_117 = arith.constant 0 : index
    %204 = vector.load %arg1[%c128_116, %c0_117] : memref<480x168xf32, #tpu.memory_space<vmem>>, vector<32x168xf32>
    %cst_118 = arith.constant dense<0.000000e+00> : vector<28x168xf32>
    %205 = tpu.matmul %203, %204, %cst_118 {dimension_numbers = #tpu.dot_dimension_numbers<[1], [0], [0], [1], [0, 0, 1, 1], [], []>} : vector<28x32xf32>, vector<32x168xf32>, vector<28x168xf32> -> vector<28x168xf32>
    %206 = arith.addf %202, %205 : vector<28x168xf32>
    %c161 = arith.constant 161 : index
    %c0_119 = arith.constant 0 : index
    %207 = vector.load %arg0[%c161, %c0_119] : memref<192x32xf32, #tpu.memory_space<vmem>>, vector<28x32xf32>
    %c160_120 = arith.constant 160 : index
    %c0_121 = arith.constant 0 : index
    %208 = vector.load %arg1[%c160_120, %c0_121] : memref<480x168xf32, #tpu.memory_space<vmem>>, vector<32x168xf32>
    %cst_122 = arith.constant dense<0.000000e+00> : vector<28x168xf32>
    %209 = tpu.matmul %207, %208, %cst_122 {dimension_numbers = #tpu.dot_dimension_numbers<[1], [0], [0], [1], [0, 0, 1, 1], [], []>} : vector<28x32xf32>, vector<32x168xf32>, vector<28x168xf32> -> vector<28x168xf32>
    %210 = arith.addf %206, %209 : vector<28x168xf32>
    %c98 = arith.constant 98 : index
    %c0_123 = arith.constant 0 : index
    %211 = vector.load %arg0[%c98, %c0_123] : memref<192x32xf32, #tpu.memory_space<vmem>>, vector<28x32xf32>
    %c192_124 = arith.constant 192 : index
    %c0_125 = arith.constant 0 : index
    %212 = vector.load %arg1[%c192_124, %c0_125] : memref<480x168xf32, #tpu.memory_space<vmem>>, vector<32x168xf32>
    %cst_126 = arith.constant dense<0.000000e+00> : vector<28x168xf32>
    %213 = tpu.matmul %211, %212, %cst_126 {dimension_numbers = #tpu.dot_dimension_numbers<[1], [0], [0], [1], [0, 0, 1, 1], [], []>} : vector<28x32xf32>, vector<32x168xf32>, vector<28x168xf32> -> vector<28x168xf32>
    %214 = arith.addf %210, %213 : vector<28x168xf32>
    %c130 = arith.constant 130 : index
    %c0_127 = arith.constant 0 : index
    %215 = vector.load %arg0[%c130, %c0_127] : memref<192x32xf32, #tpu.memory_space<vmem>>, vector<28x32xf32>
    %c224_128 = arith.constant 224 : index
    %c0_129 = arith.constant 0 : index
    %216 = vector.load %arg1[%c224_128, %c0_129] : memref<480x168xf32, #tpu.memory_space<vmem>>, vector<32x168xf32>
    %cst_130 = arith.constant dense<0.000000e+00> : vector<28x168xf32>
    %217 = tpu.matmul %215, %216, %cst_130 {dimension_numbers = #tpu.dot_dimension_numbers<[1], [0], [0], [1], [0, 0, 1, 1], [], []>} : vector<28x32xf32>, vector<32x168xf32>, vector<28x168xf32> -> vector<28x168xf32>
    %218 = arith.addf %214, %217 : vector<28x168xf32>
    %c162 = arith.constant 162 : index
    %c0_131 = arith.constant 0 : index
    %219 = vector.load %arg0[%c162, %c0_131] : memref<192x32xf32, #tpu.memory_space<vmem>>, vector<28x32xf32>
    %c256_132 = arith.constant 256 : index
    %c0_133 = arith.constant 0 : index
    %220 = vector.load %arg1[%c256_132, %c0_133] : memref<480x168xf32, #tpu.memory_space<vmem>>, vector<32x168xf32>
    %cst_134 = arith.constant dense<0.000000e+00> : vector<28x168xf32>
    %221 = tpu.matmul %219, %220, %cst_134 {dimension_numbers = #tpu.dot_dimension_numbers<[1], [0], [0], [1], [0, 0, 1, 1], [], []>} : vector<28x32xf32>, vector<32x168xf32>, vector<28x168xf32> -> vector<28x168xf32>
    %222 = arith.addf %218, %221 : vector<28x168xf32>
    %c99 = arith.constant 99 : index
    %c0_135 = arith.constant 0 : index
    %223 = vector.load %arg0[%c99, %c0_135] : memref<192x32xf32, #tpu.memory_space<vmem>>, vector<28x32xf32>
    %c288_136 = arith.constant 288 : index
    %c0_137 = arith.constant 0 : index
    %224 = vector.load %arg1[%c288_136, %c0_137] : memref<480x168xf32, #tpu.memory_space<vmem>>, vector<32x168xf32>
    %cst_138 = arith.constant dense<0.000000e+00> : vector<28x168xf32>
    %225 = tpu.matmul %223, %224, %cst_138 {dimension_numbers = #tpu.dot_dimension_numbers<[1], [0], [0], [1], [0, 0, 1, 1], [], []>} : vector<28x32xf32>, vector<32x168xf32>, vector<28x168xf32> -> vector<28x168xf32>
    %226 = arith.addf %222, %225 : vector<28x168xf32>
    %c131 = arith.constant 131 : index
    %c0_139 = arith.constant 0 : index
    %227 = vector.load %arg0[%c131, %c0_139] : memref<192x32xf32, #tpu.memory_space<vmem>>, vector<28x32xf32>
    %c320_140 = arith.constant 320 : index
    %c0_141 = arith.constant 0 : index
    %228 = vector.load %arg1[%c320_140, %c0_141] : memref<480x168xf32, #tpu.memory_space<vmem>>, vector<32x168xf32>
    %cst_142 = arith.constant dense<0.000000e+00> : vector<28x168xf32>
    %229 = tpu.matmul %227, %228, %cst_142 {dimension_numbers = #tpu.dot_dimension_numbers<[1], [0], [0], [1], [0, 0, 1, 1], [], []>} : vector<28x32xf32>, vector<32x168xf32>, vector<28x168xf32> -> vector<28x168xf32>
    %230 = arith.addf %226, %229 : vector<28x168xf32>
    %c163 = arith.constant 163 : index
    %c0_143 = arith.constant 0 : index
    %231 = vector.load %arg0[%c163, %c0_143] : memref<192x32xf32, #tpu.memory_space<vmem>>, vector<28x32xf32>
    %c352_144 = arith.constant 352 : index
    %c0_145 = arith.constant 0 : index
    %232 = vector.load %arg1[%c352_144, %c0_145] : memref<480x168xf32, #tpu.memory_space<vmem>>, vector<32x168xf32>
    %cst_146 = arith.constant dense<0.000000e+00> : vector<28x168xf32>
    %233 = tpu.matmul %231, %232, %cst_146 {dimension_numbers = #tpu.dot_dimension_numbers<[1], [0], [0], [1], [0, 0, 1, 1], [], []>} : vector<28x32xf32>, vector<32x168xf32>, vector<28x168xf32> -> vector<28x168xf32>
    %234 = arith.addf %230, %233 : vector<28x168xf32>
    %c100 = arith.constant 100 : index
    %c0_147 = arith.constant 0 : index
    %235 = vector.load %arg0[%c100, %c0_147] : memref<192x32xf32, #tpu.memory_space<vmem>>, vector<28x32xf32>
    %c384_148 = arith.constant 384 : index
    %c0_149 = arith.constant 0 : index
    %236 = vector.load %arg1[%c384_148, %c0_149] : memref<480x168xf32, #tpu.memory_space<vmem>>, vector<32x168xf32>
    %cst_150 = arith.constant dense<0.000000e+00> : vector<28x168xf32>
    %237 = tpu.matmul %235, %236, %cst_150 {dimension_numbers = #tpu.dot_dimension_numbers<[1], [0], [0], [1], [0, 0, 1, 1], [], []>} : vector<28x32xf32>, vector<32x168xf32>, vector<28x168xf32> -> vector<28x168xf32>
    %238 = arith.addf %234, %237 : vector<28x168xf32>
    %c132 = arith.constant 132 : index
    %c0_151 = arith.constant 0 : index
    %239 = vector.load %arg0[%c132, %c0_151] : memref<192x32xf32, #tpu.memory_space<vmem>>, vector<28x32xf32>
    %c416_152 = arith.constant 416 : index
    %c0_153 = arith.constant 0 : index
    %240 = vector.load %arg1[%c416_152, %c0_153] : memref<480x168xf32, #tpu.memory_space<vmem>>, vector<32x168xf32>
    %cst_154 = arith.constant dense<0.000000e+00> : vector<28x168xf32>
    %241 = tpu.matmul %239, %240, %cst_154 {dimension_numbers = #tpu.dot_dimension_numbers<[1], [0], [0], [1], [0, 0, 1, 1], [], []>} : vector<28x32xf32>, vector<32x168xf32>, vector<28x168xf32> -> vector<28x168xf32>
    %242 = arith.addf %238, %241 : vector<28x168xf32>
    %c164 = arith.constant 164 : index
    %c0_155 = arith.constant 0 : index
    %243 = vector.load %arg0[%c164, %c0_155] : memref<192x32xf32, #tpu.memory_space<vmem>>, vector<28x32xf32>
    %c448_156 = arith.constant 448 : index
    %c0_157 = arith.constant 0 : index
    %244 = vector.load %arg1[%c448_156, %c0_157] : memref<480x168xf32, #tpu.memory_space<vmem>>, vector<32x168xf32>
    %cst_158 = arith.constant dense<0.000000e+00> : vector<28x168xf32>
    %245 = tpu.matmul %243, %244, %cst_158 {dimension_numbers = #tpu.dot_dimension_numbers<[1], [0], [0], [1], [0, 0, 1, 1], [], []>} : vector<28x32xf32>, vector<32x168xf32>, vector<28x168xf32> -> vector<28x168xf32>
    %246 = arith.addf %242, %245 : vector<28x168xf32>
    %247 = vector.broadcast %72 : vector<1x168xf32> to vector<28x168xf32>
    %248 = arith.addf %246, %247 : vector<28x168xf32>
    %cst_159 = arith.constant 0.000000e+00 : f32
    %249 = vector.broadcast %cst_159 : f32 to vector<28x168xf32>
    %250 = arith.maximumf %248, %249 : vector<28x168xf32>
    %cst_160 = arith.constant dense<0.000000e+00> : vector<14x168xf32>
    %251 = tpu.matmul %8, %250, %cst_160 {dimension_numbers = #tpu.dot_dimension_numbers<[1], [0], [0], [1], [0, 0, 1, 1], [], []>} : vector<14x28xf32>, vector<28x168xf32>, vector<14x168xf32> -> vector<14x168xf32>
    %cst_161 = arith.constant dense<0.000000e+00> : vector<14x168xf32>
    %252 = tpu.matmul %17, %250, %cst_161 {dimension_numbers = #tpu.dot_dimension_numbers<[1], [0], [0], [1], [0, 0, 1, 1], [], []>} : vector<14x28xf32>, vector<28x168xf32>, vector<14x168xf32> -> vector<14x168xf32>
    %253 = arith.maximumf %251, %252 : vector<14x168xf32>
    %cst_162 = arith.constant dense<0.000000e+00> : vector<14x84xf32>
    %254 = tpu.matmul %253, %26, %cst_162 {dimension_numbers = #tpu.dot_dimension_numbers<[1], [0], [0], [1], [0, 0, 1, 1], [], []>} : vector<14x168xf32>, vector<168x84xf32>, vector<14x84xf32> -> vector<14x84xf32>
    %cst_163 = arith.constant dense<0.000000e+00> : vector<14x84xf32>
    %255 = tpu.matmul %253, %35, %cst_163 {dimension_numbers = #tpu.dot_dimension_numbers<[1], [0], [0], [1], [0, 0, 1, 1], [], []>} : vector<14x168xf32>, vector<168x84xf32>, vector<14x84xf32> -> vector<14x84xf32>
    %256 = arith.maximumf %254, %255 : vector<14x84xf32>
    %cst_164 = arith.constant 0.000000e+00 : f32
    %257 = vector.broadcast %cst_164 : f32 to vector<10x160xf32>
    %258 = vector.extract_strided_slice %256 {offsets = [0, 0], sizes = [10, 84], strides = [1, 1]} : vector<14x84xf32> to vector<10x84xf32>
    %c0_165 = arith.constant 0 : index
    %c0_166 = arith.constant 0 : index
    %259 = vector.load %arg3[%c0_165, %c0_166] : memref<420x160xf32, #tpu.memory_space<vmem>>, vector<84x160xf32>
    %cst_167 = arith.constant dense<0.000000e+00> : vector<10x160xf32>
    %260 = tpu.matmul %258, %259, %cst_167 {dimension_numbers = #tpu.dot_dimension_numbers<[1], [0], [0], [1], [0, 0, 1, 1], [], []>} : vector<10x84xf32>, vector<84x160xf32>, vector<10x160xf32> -> vector<10x160xf32>
    %261 = arith.addf %257, %260 : vector<10x160xf32>
    %262 = vector.extract_strided_slice %256 {offsets = [1, 0], sizes = [10, 84], strides = [1, 1]} : vector<14x84xf32> to vector<10x84xf32>
    %c84_168 = arith.constant 84 : index
    %c0_169 = arith.constant 0 : index
    %263 = vector.load %arg3[%c84_168, %c0_169] : memref<420x160xf32, #tpu.memory_space<vmem>>, vector<84x160xf32>
    %cst_170 = arith.constant dense<0.000000e+00> : vector<10x160xf32>
    %264 = tpu.matmul %262, %263, %cst_170 {dimension_numbers = #tpu.dot_dimension_numbers<[1], [0], [0], [1], [0, 0, 1, 1], [], []>} : vector<10x84xf32>, vector<84x160xf32>, vector<10x160xf32> -> vector<10x160xf32>
    %265 = arith.addf %261, %264 : vector<10x160xf32>
    %266 = vector.extract_strided_slice %256 {offsets = [2, 0], sizes = [10, 84], strides = [1, 1]} : vector<14x84xf32> to vector<10x84xf32>
    %c168_171 = arith.constant 168 : index
    %c0_172 = arith.constant 0 : index
    %267 = vector.load %arg3[%c168_171, %c0_172] : memref<420x160xf32, #tpu.memory_space<vmem>>, vector<84x160xf32>
    %cst_173 = arith.constant dense<0.000000e+00> : vector<10x160xf32>
    %268 = tpu.matmul %266, %267, %cst_173 {dimension_numbers = #tpu.dot_dimension_numbers<[1], [0], [0], [1], [0, 0, 1, 1], [], []>} : vector<10x84xf32>, vector<84x160xf32>, vector<10x160xf32> -> vector<10x160xf32>
    %269 = arith.addf %265, %268 : vector<10x160xf32>
    %270 = vector.extract_strided_slice %256 {offsets = [3, 0], sizes = [10, 84], strides = [1, 1]} : vector<14x84xf32> to vector<10x84xf32>
    %c252_174 = arith.constant 252 : index
    %c0_175 = arith.constant 0 : index
    %271 = vector.load %arg3[%c252_174, %c0_175] : memref<420x160xf32, #tpu.memory_space<vmem>>, vector<84x160xf32>
    %cst_176 = arith.constant dense<0.000000e+00> : vector<10x160xf32>
    %272 = tpu.matmul %270, %271, %cst_176 {dimension_numbers = #tpu.dot_dimension_numbers<[1], [0], [0], [1], [0, 0, 1, 1], [], []>} : vector<10x84xf32>, vector<84x160xf32>, vector<10x160xf32> -> vector<10x160xf32>
    %273 = arith.addf %269, %272 : vector<10x160xf32>
    %274 = vector.extract_strided_slice %256 {offsets = [4, 0], sizes = [10, 84], strides = [1, 1]} : vector<14x84xf32> to vector<10x84xf32>
    %c336_177 = arith.constant 336 : index
    %c0_178 = arith.constant 0 : index
    %275 = vector.load %arg3[%c336_177, %c0_178] : memref<420x160xf32, #tpu.memory_space<vmem>>, vector<84x160xf32>
    %cst_179 = arith.constant dense<0.000000e+00> : vector<10x160xf32>
    %276 = tpu.matmul %274, %275, %cst_179 {dimension_numbers = #tpu.dot_dimension_numbers<[1], [0], [0], [1], [0, 0, 1, 1], [], []>} : vector<10x84xf32>, vector<84x160xf32>, vector<10x160xf32> -> vector<10x160xf32>
    %277 = arith.addf %273, %276 : vector<10x160xf32>
    %278 = vector.broadcast %73 : vector<1x160xf32> to vector<10x160xf32>
    %279 = arith.addf %277, %278 : vector<10x160xf32>
    %cst_180 = arith.constant 0.000000e+00 : f32
    %280 = vector.broadcast %cst_180 : f32 to vector<10x160xf32>
    %281 = arith.maximumf %279, %280 : vector<10x160xf32>
    %cst_181 = arith.constant dense<0.000000e+00> : vector<5x160xf32>
    %282 = tpu.matmul %44, %281, %cst_181 {dimension_numbers = #tpu.dot_dimension_numbers<[1], [0], [0], [1], [0, 0, 1, 1], [], []>} : vector<5x10xf32>, vector<10x160xf32>, vector<5x160xf32> -> vector<5x160xf32>
    %cst_182 = arith.constant dense<0.000000e+00> : vector<5x160xf32>
    %283 = tpu.matmul %53, %281, %cst_182 {dimension_numbers = #tpu.dot_dimension_numbers<[1], [0], [0], [1], [0, 0, 1, 1], [], []>} : vector<5x10xf32>, vector<10x160xf32>, vector<5x160xf32> -> vector<5x160xf32>
    %284 = arith.maximumf %282, %283 : vector<5x160xf32>
    %cst_183 = arith.constant dense<0.000000e+00> : vector<5x80xf32>
    %285 = tpu.matmul %284, %62, %cst_183 {dimension_numbers = #tpu.dot_dimension_numbers<[1], [0], [0], [1], [0, 0, 1, 1], [], []>} : vector<5x160xf32>, vector<160x80xf32>, vector<5x80xf32> -> vector<5x80xf32>
    %cst_184 = arith.constant dense<0.000000e+00> : vector<5x80xf32>
    %286 = tpu.matmul %284, %71, %cst_184 {dimension_numbers = #tpu.dot_dimension_numbers<[1], [0], [0], [1], [0, 0, 1, 1], [], []>} : vector<5x160xf32>, vector<160x80xf32>, vector<5x80xf32> -> vector<5x80xf32>
    %287 = arith.maximumf %285, %286 : vector<5x80xf32>
    %288 = vector.extract_strided_slice %287 {offsets = [0, 0], sizes = [1, 80], strides = [1, 1]} : vector<5x80xf32> to vector<1x80xf32>
    %c1_185 = arith.constant 1 : index
    %c0_186 = arith.constant 0 : index
    %289 = vector.load %arg12[%c1_185, %c0_186] : memref<2x400xf32, #tpu.memory_space<vmem>>, vector<1x80xf32>
    tpu.vector_store %arg12[%c1_185, %c0_186], %288 {strides = array<i32>} : memref<2x400xf32, #tpu.memory_space<vmem>>, vector<1x80xf32>,
    %290 = vector.extract_strided_slice %287 {offsets = [1, 0], sizes = [1, 80], strides = [1, 1]} : vector<5x80xf32> to vector<1x80xf32>
    %c1_187 = arith.constant 1 : index
    %c80_188 = arith.constant 80 : index
    %291 = vector.load %arg12[%c1_187, %c80_188] : memref<2x400xf32, #tpu.memory_space<vmem>>, vector<1x80xf32>
    tpu.vector_store %arg12[%c1_187, %c80_188], %290 {strides = array<i32>} : memref<2x400xf32, #tpu.memory_space<vmem>>, vector<1x80xf32>,
    %292 = vector.extract_strided_slice %287 {offsets = [2, 0], sizes = [1, 80], strides = [1, 1]} : vector<5x80xf32> to vector<1x80xf32>
    %c1_189 = arith.constant 1 : index
    %c160_190 = arith.constant 160 : index
    %293 = vector.load %arg12[%c1_189, %c160_190] : memref<2x400xf32, #tpu.memory_space<vmem>>, vector<1x80xf32>
    tpu.vector_store %arg12[%c1_189, %c160_190], %292 {strides = array<i32>} : memref<2x400xf32, #tpu.memory_space<vmem>>, vector<1x80xf32>,
    %294 = vector.extract_strided_slice %287 {offsets = [3, 0], sizes = [1, 80], strides = [1, 1]} : vector<5x80xf32> to vector<1x80xf32>
    %c1_191 = arith.constant 1 : index
    %c240_192 = arith.constant 240 : index
    %295 = vector.load %arg12[%c1_191, %c240_192] : memref<2x400xf32, #tpu.memory_space<vmem>>, vector<1x80xf32>
    tpu.vector_store %arg12[%c1_191, %c240_192], %294 {strides = array<i32>} : memref<2x400xf32, #tpu.memory_space<vmem>>, vector<1x80xf32>,
    %296 = vector.extract_strided_slice %287 {offsets = [4, 0], sizes = [1, 80], strides = [1, 1]} : vector<5x80xf32> to vector<1x80xf32>
    %c1_193 = arith.constant 1 : index
    %c320_194 = arith.constant 320 : index
    %297 = vector.load %arg12[%c1_193, %c320_194] : memref<2x400xf32, #tpu.memory_space<vmem>>, vector<1x80xf32>
    tpu.vector_store %arg12[%c1_193, %c320_194], %296 {strides = array<i32>} : memref<2x400xf32, #tpu.memory_space<vmem>>, vector<1x80xf32>,
    %c0_195 = arith.constant 0 : index
    %c0_196 = arith.constant 0 : index
    %298 = vector.load %arg12[%c0_195, %c0_196] : memref<2x400xf32, #tpu.memory_space<vmem>>, vector<2x400xf32>
    %c0_197 = arith.constant 0 : index
    %c0_198 = arith.constant 0 : index
    %299 = vector.load %arg5[%c0_197, %c0_198] : memref<400x120xf32, #tpu.memory_space<vmem>>, vector<400x120xf32>
    %cst_199 = arith.constant dense<0.000000e+00> : vector<2x120xf32>
    %300 = tpu.matmul %298, %299, %cst_199 {dimension_numbers = #tpu.dot_dimension_numbers<[1], [0], [0], [1], [0, 0, 1, 1], [], []>} : vector<2x400xf32>, vector<400x120xf32>, vector<2x120xf32> -> vector<2x120xf32>
    %c0_200 = arith.constant 0 : index
    %c0_201 = arith.constant 0 : index
    %301 = vector.load %arg6[%c0_200, %c0_201] : memref<1x120xf32, #tpu.memory_space<vmem>>, vector<1x120xf32>
    %302 = vector.broadcast %301 : vector<1x120xf32> to vector<2x120xf32>
    %303 = arith.addf %300, %302 : vector<2x120xf32>
    %cst_202 = arith.constant 0.000000e+00 : f32
    %304 = vector.broadcast %cst_202 : f32 to vector<2x120xf32>
    %305 = arith.maximumf %303, %304 : vector<2x120xf32>
    %c0_203 = arith.constant 0 : index
    %c0_204 = arith.constant 0 : index
    %306 = vector.load %arg7[%c0_203, %c0_204] : memref<120x84xf32, #tpu.memory_space<vmem>>, vector<120x84xf32>
    %cst_205 = arith.constant dense<0.000000e+00> : vector<2x84xf32>
    %307 = tpu.matmul %305, %306, %cst_205 {dimension_numbers = #tpu.dot_dimension_numbers<[1], [0], [0], [1], [0, 0, 1, 1], [], []>} : vector<2x120xf32>, vector<120x84xf32>, vector<2x84xf32> -> vector<2x84xf32>
    %c0_206 = arith.constant 0 : index
    %c0_207 = arith.constant 0 : index
    %308 = vector.load %arg8[%c0_206, %c0_207] : memref<1x84xf32, #tpu.memory_space<vmem>>, vector<1x84xf32>
    %309 = vector.broadcast %308 : vector<1x84xf32> to vector<2x84xf32>
    %310 = arith.addf %307, %309 : vector<2x84xf32>
    %cst_208 = arith.constant 0.000000e+00 : f32
    %311 = vector.broadcast %cst_208 : f32 to vector<2x84xf32>
    %312 = arith.maximumf %310, %311 : vector<2x84xf32>
    %c0_209 = arith.constant 0 : index
    %c0_210 = arith.constant 0 : index
    %313 = vector.load %arg9[%c0_209, %c0_210] : memref<84x10xf32, #tpu.memory_space<vmem>>, vector<84x10xf32>
    %cst_211 = arith.constant dense<0.000000e+00> : vector<2x10xf32>
    %314 = tpu.matmul %312, %313, %cst_211 {dimension_numbers = #tpu.dot_dimension_numbers<[1], [0], [0], [1], [0, 0, 1, 1], [], []>} : vector<2x84xf32>, vector<84x10xf32>, vector<2x10xf32> -> vector<2x10xf32>
    %c0_212 = arith.constant 0 : index
    %c0_213 = arith.constant 0 : index
    %315 = vector.load %arg10[%c0_212, %c0_213] : memref<1x10xf32, #tpu.memory_space<vmem>>, vector<1x10xf32>
    %316 = vector.broadcast %315 : vector<1x10xf32> to vector<2x10xf32>
    %317 = arith.addf %314, %316 : vector<2x10xf32>
    %c0_214 = arith.constant 0 : index
    %c0_215 = arith.constant 0 : index
    %318 = vector.load %arg11[%c0_214, %c0_215] : memref<2x10xf32, #tpu.memory_space<vmem>>, vector<2x10xf32>
    tpu.vector_store %arg11[%c0_214, %c0_215], %317 {strides = array<i32>} : memref<2x10xf32, #tpu.memory_space<vmem>>, vector<2x10xf32>,
    return
  }
}

</mosaic_0001>

<llo_original>
// kernel: my_network_forward.1
$region0: #{my_network_forward.1}
  #allocation0 [shape = 'u32[]', space=smem, size = 0x4, offset = 0x4, fixed_abs, tag = 'smem constant byte address 0x4 - core index']
  #allocation1 [shape = 'u32[144,128]{1,0:T(1,128)}', space=vmem, size = 0x12000, scoped, tag = 'internal scratch']
  #allocation2 [shape = 'f32[2,400]{1,0:T(2,128)}', space=vmem, size = 0x1000, scoped, tag = 'scratch operand']
  %s0 = inlined_call_operand.vmem [shape: f32[192,32], index: 0, kind: input, shape index: {}]
  %s1 = inlined_call_operand.vmem [shape: f32[480,168], index: 1, kind: input, shape index: {}]
  %s2 = inlined_call_operand.vmem [shape: f32[1,168], index: 2, kind: input, shape index: {}]
  %s3 = inlined_call_operand.vmem [shape: f32[420,160], index: 3, kind: input, shape index: {}]
  %s4 = inlined_call_operand.vmem [shape: f32[1,160], index: 4, kind: input, shape index: {}]
  %s5 = inlined_call_operand.vmem [shape: f32[400,120], index: 5, kind: input, shape index: {}]
  %s6 = inlined_call_operand.vmem [shape: f32[1,120], index: 6, kind: input, shape index: {}]
  %s7 = inlined_call_operand.vmem [shape: f32[120,84], index: 7, kind: input, shape index: {}]
  %s8 = inlined_call_operand.vmem [shape: f32[1,84], index: 8, kind: input, shape index: {}]
  %s9 = inlined_call_operand.vmem [shape: f32[84,10], index: 9, kind: input, shape index: {}]
  %s10 = inlined_call_operand.vmem [shape: f32[1,10], index: 10, kind: input, shape index: {}]
  %s11 = inlined_call_operand.hbm [shape: f32[2,10], index: 11, kind: output, shape index: {}]
  %s12 = sld [smem:[#allocation0]]
  $region54: #{my_network_forward.1} parent=0
    _
  %s14 = ssub.s32 1, %s12
  %s15 = scalar_select 0, %s14, %s12
  $region1: #{my_network_forward.1} parent=0
    #allocation3 [shape = 'u8[1024]{0}', space=vmem, size = 0x400, scoped, tag = 'output window, operand 0, single buffered']
    #allocation4 [shape = 's32[1]{0}', space=sflag, size = 0x4, scoped, tag = 'scoped memory for my_network_forward.1']
    %16 = vsyncpa [#allocation4], 0
    // Predicated region
    $region2: #{my_network_forward.1} parent=1 // pred_check
      _
    $region3: #{my_network_forward.1} parent=1 // pred_check_branch
      %18 = sbr.rel (0) target = $region5
    $region4: #{my_network_forward.1} parent=1 // pred_region
      _
    $region5: #{my_network_forward.1} parent=1 // pred_fallthru
      _
    // Predicated region
    $region6: #{my_network_forward.1} parent=1 // pred_check
      _
    $region7: #{my_network_forward.1} parent=1 // pred_check_branch
      %20 = sbr.rel (0) target = $region9
    $region8: #{my_network_forward.1} parent=1 // pred_region
      _
    $region9: #{my_network_forward.1} parent=1 // pred_fallthru
      _
    // Predicated region
    $region10: #{my_network_forward.1} parent=1 // pred_check
      _
    $region11: #{my_network_forward.1} parent=1 // pred_check_branch
      %22 = sbr.rel (0) target = $region13
    $region12: #{my_network_forward.1} parent=1 // pred_region
      _
    $region13: #{my_network_forward.1} parent=1 // pred_fallthru
      _
    // Predicated region
    $region14: #{my_network_forward.1} parent=1 // pred_check
      _
    $region15: #{my_network_forward.1} parent=1 // pred_check_branch
      %24 = sbr.rel (0) target = $region17
    $region16: #{my_network_forward.1} parent=1 // pred_region
      _
    $region17: #{my_network_forward.1} parent=1 // pred_fallthru
      _
    // Predicated region
    $region18: #{my_network_forward.1} parent=1 // pred_check
      _
    $region19: #{my_network_forward.1} parent=1 // pred_check_branch
      %26 = sbr.rel (0) target = $region21
    $region20: #{my_network_forward.1} parent=1 // pred_region
      _
    $region21: #{my_network_forward.1} parent=1 // pred_fallthru
      _
    // Predicated region
    $region22: #{my_network_forward.1} parent=1 // pred_check
      _
    $region23: #{my_network_forward.1} parent=1 // pred_check_branch
      %28 = sbr.rel (0) target = $region25
    $region24: #{my_network_forward.1} parent=1 // pred_region
      _
    $region25: #{my_network_forward.1} parent=1 // pred_fallthru
      _
    // Predicated region
    $region26: #{my_network_forward.1} parent=1 // pred_check
      _
    $region27: #{my_network_forward.1} parent=1 // pred_check_branch
      %30 = sbr.rel (0) target = $region29
    $region28: #{my_network_forward.1} parent=1 // pred_region
      _
    $region29: #{my_network_forward.1} parent=1 // pred_fallthru
      _
    // Predicated region
    $region30: #{my_network_forward.1} parent=1 // pred_check
      _
    $region31: #{my_network_forward.1} parent=1 // pred_check_branch
      %32 = sbr.rel (0) target = $region33
    $region32: #{my_network_forward.1} parent=1 // pred_region
      _
    $region33: #{my_network_forward.1} parent=1 // pred_fallthru
      _
    // Predicated region
    $region34: #{my_network_forward.1} parent=1 // pred_check
      _
    $region35: #{my_network_forward.1} parent=1 // pred_check_branch
      %34 = sbr.rel (0) target = $region37
    $region36: #{my_network_forward.1} parent=1 // pred_region
      _
    $region37: #{my_network_forward.1} parent=1 // pred_fallthru
      _
    // Predicated region
    $region38: #{my_network_forward.1} parent=1 // pred_check
      _
    $region39: #{my_network_forward.1} parent=1 // pred_check_branch
      %36 = sbr.rel (0) target = $region41
    $region40: #{my_network_forward.1} parent=1 // pred_region
      _
    $region41: #{my_network_forward.1} parent=1 // pred_fallthru
      _
    // Predicated region
    $region42: #{my_network_forward.1} parent=1 // pred_check
      _
    $region43: #{my_network_forward.1} parent=1 // pred_check_branch
      %38 = sbr.rel (0) target = $region45
    $region44: #{my_network_forward.1} parent=1 // pred_region
      _
    $region45: #{my_network_forward.1} parent=1 // pred_fallthru
      _
    %v39 = vlaneseq
    %v40 = vshrl.u32 %v39, 7
    %v41 = vadd.s32 %v40, 8
    %v42 = vlaneseq
    %v43 = vand.u32 %v42, 127
    %v44 = vmul.u32 %v40, 2
    %v45 = vmul.u32 %v41, 2
    %vm46 = vcmp.eq.s32.totalorder %v43, %v44
    %vm47 = vcmp.eq.s32.totalorder %v43, %v45
    %v48 = vsel %vm46, 1, 0
    %v49 = vsel %vm47, 1, 0
    %v50 = vcvt.s32.f32 %v48
    %v51 = vcvt.s32.f32 %v49
    %v52 = vadd.s32 %v44, 1
    %v53 = vadd.s32 %v45, 1
    %vm54 = vcmp.eq.s32.totalorder %v43, %v52
    %vm55 = vcmp.eq.s32.totalorder %v43, %v53
    %v56 = vsel %vm54, 1, 0
    %v57 = vsel %vm55, 1, 0
    %v58 = vcvt.s32.f32 %v56
    %v59 = vcvt.s32.f32 %v57
    %v60 = vadd.s32 %v40, 16
    %v61 = vadd.s32 %v40, 24
    %v62 = vadd.s32 %v40, 32
    %v63 = vadd.s32 %v40, 40
    %v64 = vadd.s32 %v40, 48
    %v65 = vadd.s32 %v40, 56
    %v66 = vadd.s32 %v40, 64
    %v67 = vadd.s32 %v40, 72
    %v68 = vadd.s32 %v40, 80
    %v69 = vadd.s32 %v40, 88
    %v70 = vadd.s32 %v40, 96
    %v71 = vadd.s32 %v40, 104
    %v72 = vadd.s32 %v40, 112
    %v73 = vadd.s32 %v40, 120
    %v74 = vadd.s32 %v40, 128
    %v75 = vadd.s32 %v40, 136
    %v76 = vadd.s32 %v40, 144
    %v77 = vadd.s32 %v40, 152
    %v78 = vadd.s32 %v40, 160
    %v79 = vmul.u32 %v43, 2
    %vm80 = vcmp.eq.s32.totalorder %v40, %v79
    %vm81 = vcmp.eq.s32.totalorder %v41, %v79
    %vm82 = vcmp.eq.s32.totalorder %v60, %v79
    %vm83 = vcmp.eq.s32.totalorder %v61, %v79
    %vm84 = vcmp.eq.s32.totalorder %v62, %v79
    %vm85 = vcmp.eq.s32.totalorder %v63, %v79
    %vm86 = vcmp.eq.s32.totalorder %v64, %v79
    %vm87 = vcmp.eq.s32.totalorder %v65, %v79
    %vm88 = vcmp.eq.s32.totalorder %v66, %v79
    %vm89 = vcmp.eq.s32.totalorder %v67, %v79
    %vm90 = vcmp.eq.s32.totalorder %v68, %v79
    %vm91 = vcmp.eq.s32.totalorder %v69, %v79
    %vm92 = vcmp.eq.s32.totalorder %v70, %v79
    %vm93 = vcmp.eq.s32.totalorder %v71, %v79
    %vm94 = vcmp.eq.s32.totalorder %v72, %v79
    %vm95 = vcmp.eq.s32.totalorder %v73, %v79
    %vm96 = vcmp.eq.s32.totalorder %v74, %v79
    %vm97 = vcmp.eq.s32.totalorder %v75, %v79
    %vm98 = vcmp.eq.s32.totalorder %v76, %v79
    %vm99 = vcmp.eq.s32.totalorder %v77, %v79
    %vm100 = vcmp.eq.s32.totalorder %v78, %v79
    %v101 = vsel %vm80, 1, 0
    %v102 = vsel %vm81, 1, 0
    %v103 = vsel %vm82, 1, 0
    %v104 = vsel %vm83, 1, 0
    %v105 = vsel %vm84, 1, 0
    %v106 = vsel %vm85, 1, 0
    %v107 = vsel %vm86, 1, 0
    %v108 = vsel %vm87, 1, 0
    %v109 = vsel %vm88, 1, 0
    %v110 = vsel %vm89, 1, 0
    %v111 = vsel %vm90, 1, 0
    %v112 = vsel %vm91, 1, 0
    %v113 = vsel %vm92, 1, 0
    %v114 = vsel %vm93, 1, 0
    %v115 = vsel %vm94, 1, 0
    %v116 = vsel %vm95, 1, 0
    %v117 = vsel %vm96, 1, 0
    %v118 = vsel %vm97, 1, 0
    %v119 = vsel %vm98, 1, 0
    %v120 = vsel %vm99, 1, 0
    %v121 = vsel %vm100, 1, 0
    %v122 = vcvt.s32.f32 %v101
    %v123 = vcvt.s32.f32 %v102
    %v124 = vcvt.s32.f32 %v103
    %v125 = vcvt.s32.f32 %v104
    %v126 = vcvt.s32.f32 %v105
    %v127 = vcvt.s32.f32 %v106
    %v128 = vcvt.s32.f32 %v107
    %v129 = vcvt.s32.f32 %v108
    %v130 = vcvt.s32.f32 %v109
    %v131 = vcvt.s32.f32 %v110
    %v132 = vcvt.s32.f32 %v111
    %v133 = vcvt.s32.f32 %v112
    %v134 = vcvt.s32.f32 %v113
    %v135 = vcvt.s32.f32 %v114
    %v136 = vcvt.s32.f32 %v115
    %v137 = vcvt.s32.f32 %v116
    %v138 = vcvt.s32.f32 %v117
    %v139 = vcvt.s32.f32 %v118
    %v140 = vcvt.s32.f32 %v119
    %v141 = vcvt.s32.f32 %v120
    %v142 = vcvt.s32.f32 %v121
    %v143 = vadd.s32 %v79, 1
    %vm144 = vcmp.eq.s32.totalorder %v40, %v143
    %vm145 = vcmp.eq.s32.totalorder %v41, %v143
    %vm146 = vcmp.eq.s32.totalorder %v60, %v143
    %vm147 = vcmp.eq.s32.totalorder %v61, %v143
    %vm148 = vcmp.eq.s32.totalorder %v62, %v143
    %vm149 = vcmp.eq.s32.totalorder %v63, %v143
    %vm150 = vcmp.eq.s32.totalorder %v64, %v143
    %vm151 = vcmp.eq.s32.totalorder %v65, %v143
    %vm152 = vcmp.eq.s32.totalorder %v66, %v143
    %vm153 = vcmp.eq.s32.totalorder %v67, %v143
    %vm154 = vcmp.eq.s32.totalorder %v68, %v143
    %vm155 = vcmp.eq.s32.totalorder %v69, %v143
    %vm156 = vcmp.eq.s32.totalorder %v70, %v143
    %vm157 = vcmp.eq.s32.totalorder %v71, %v143
    %vm158 = vcmp.eq.s32.totalorder %v72, %v143
    %vm159 = vcmp.eq.s32.totalorder %v73, %v143
    %vm160 = vcmp.eq.s32.totalorder %v74, %v143
    %vm161 = vcmp.eq.s32.totalorder %v75, %v143
    %vm162 = vcmp.eq.s32.totalorder %v76, %v143
    %vm163 = vcmp.eq.s32.totalorder %v77, %v143
    %vm164 = vcmp.eq.s32.totalorder %v78, %v143
    %v165 = vsel %vm144, 1, 0
    %v166 = vsel %vm145, 1, 0
    %v167 = vsel %vm146, 1, 0
    %v168 = vsel %vm147, 1, 0
    %v169 = vsel %vm148, 1, 0
    %v170 = vsel %vm149, 1, 0
    %v171 = vsel %vm150, 1, 0
    %v172 = vsel %vm151, 1, 0
    %v173 = vsel %vm152, 1, 0
    %v174 = vsel %vm153, 1, 0
    %v175 = vsel %vm154, 1, 0
    %v176 = vsel %vm155, 1, 0
    %v177 = vsel %vm156, 1, 0
    %v178 = vsel %vm157, 1, 0
    %v179 = vsel %vm158, 1, 0
    %v180 = vsel %vm159, 1, 0
    %v181 = vsel %vm160, 1, 0
    %v182 = vsel %vm161, 1, 0
    %v183 = vsel %vm162, 1, 0
    %v184 = vsel %vm163, 1, 0
    %v185 = vsel %vm164, 1, 0
    %v186 = vcvt.s32.f32 %v165
    %v187 = vcvt.s32.f32 %v166
    %v188 = vcvt.s32.f32 %v167
    %v189 = vcvt.s32.f32 %v168
    %v190 = vcvt.s32.f32 %v169
    %v191 = vcvt.s32.f32 %v170
    %v192 = vcvt.s32.f32 %v171
    %v193 = vcvt.s32.f32 %v172
    %v194 = vcvt.s32.f32 %v173
    %v195 = vcvt.s32.f32 %v174
    %v196 = vcvt.s32.f32 %v175
    %v197 = vcvt.s32.f32 %v176
    %v198 = vcvt.s32.f32 %v177
    %v199 = vcvt.s32.f32 %v178
    %v200 = vcvt.s32.f32 %v179
    %v201 = vcvt.s32.f32 %v180
    %v202 = vcvt.s32.f32 %v181
    %v203 = vcvt.s32.f32 %v182
    %v204 = vcvt.s32.f32 %v183
    %v205 = vcvt.s32.f32 %v184
    %v206 = vcvt.s32.f32 %v185
    %v207 = vld [vmem:[%s2] sm:$0x3]
    %v208 = vld [vmem:[%s4] sm:$0x3]
    %v209 = vld [vmem:[%s0] sm:$0xff]
    %v210 = vld [vmem:[%s0 + $0x8] sm:$0xff]
    %v211 = vld [vmem:[%s0 + $0x10] sm:$0xff]
    %v212 = vld [vmem:[%s0 + $0x18] sm:$0xf]
    %v213 = vld [vmem:[%s1] sm:$0xff]
    %v214 = vld [vmem:[%s1 + $0x8] sm:$0xff]
    %v215 = vld [vmem:[%s1 + $0x10] sm:$0xff]
    %v216 = vld [vmem:[%s1 + $0x18] sm:$0xff]
    %v217 = vld [vmem:[%s1 + $0x20] sm:$0xff]
    %v218 = vld [vmem:[%s1 + $0x28] sm:$0xff]
    %v219 = vld [vmem:[%s1 + $0x30] sm:$0xff]
    %v220 = vld [vmem:[%s1 + $0x38] sm:$0xff]
    %v221 = vld [vmem:[%s0 + $0x20] sm:$0xff]
    %v222 = vld [vmem:[%s0 + $0x28] sm:$0xff]
    %v223 = vld [vmem:[%s0 + $0x30] sm:$0xff]
    %v224 = vld [vmem:[%s0 + $0x38] sm:$0xf]
    %v225 = vld [vmem:[%s1 + $0x40] sm:$0xff]
    %v226 = vld [vmem:[%s1 + $0x48] sm:$0xff]
    %v227 = vld [vmem:[%s1 + $0x50] sm:$0xff]
    %v228 = vld [vmem:[%s1 + $0x58] sm:$0xff]
    %v229 = vld [vmem:[%s1 + $0x60] sm:$0xff]
    %v230 = vld [vmem:[%s1 + $0x68] sm:$0xff]
    %v231 = vld [vmem:[%s1 + $0x70] sm:$0xff]
    %v232 = vld [vmem:[%s1 + $0x78] sm:$0xff]
    %vm233 = vcmask 261120
    %v235 = vsel %vm233, %v221, 0
    %v238 = vsel %vm233, %v222, 0
    %v241 = vsel %vm233, %v223, 0
    %v244 = vsel %vm233, %v224, 0
    %246 = vmatprep.subr.mxu0 %v226
    %247 = vmatpush1.msra.mxu0 %v225
    %248 = vmatprep.subr.mxu0 %v228
    %249 = vmatpush1.msra.mxu0 %v227
    %250 = vmatprep.subr.mxu0 %v230
    %251 = vmatpush1.msra.mxu0 %v229
    %252 = vmatprep.subr.mxu0 %v232
    %253 = vmatpush1.msra.mxu0 %v231
    %254 = vmatprep.subr.mxu0 0.0
    %255 = vmatpush1.msra.mxu0 0.0
    %256 = vmatprep.subr.mxu0 0.0
    %257 = vmatpush1.msra.mxu0 0.0
    %258 = vmatprep.subr.mxu0 0.0
    %259 = vmatpush1.msra.mxu0 0.0
    %260 = vmatprep.subr.mxu0 0.0
    %261 = vmatpush1.msra.mxu0 0.0
    %262 = vmatprep.subr.mxu0 0.0
    %263 = vmatpush1.msra.mxu0 0.0
    %264 = vmatprep.subr.mxu0 0.0
    %265 = vmatpush1.msra.mxu0 0.0
    %266 = vmatprep.subr.mxu0 0.0
    %267 = vmatpush1.msra.mxu0 0.0
    %268 = vmatprep.subr.mxu0 0.0
    %269 = vmatpush1.msra.mxu0 0.0
    %270 = vmatprep.subr.mxu0 0.0
    %271 = vmatpush1.msra.mxu0 0.0
    %272 = vmatprep.subr.mxu0 0.0
    %273 = vmatpush1.msra.mxu0 0.0
    %274 = vmatprep.subr.mxu0 0.0
    %275 = vmatpush1.msra.mxu0 0.0
    %276 = vmatprep.subr.mxu0 0.0
    %277 = vmatpush1.msra.mxu0 0.0
    %278 = vmatprep.subr.mxu0 0.0
    %279 = vmatpush1.msra.mxu0 0.0
    %280 = vmatprep.subr.mxu0 0.0
    %281 = vmatpush1.msra.mxu0 0.0
    %282 = vmatprep.subr.mxu0 0.0
    %283 = vmatpush1.msra.mxu0 0.0
    %284 = vmatprep.subr.mxu0 0.0
    %285 = vmatpush1.msra.mxu0 0.0
    %286 = vmatprep.subr.mxu0 0.0
    %287 = vmatpush1.msra.mxu0 0.0
    %288 = vmatprep.subr.mxu0 0.0
    %289 = vmatpush1.msra.mxu0 0.0
    %290 = vmatprep.subr.mxu0 0.0
    %291 = vmatpush1.msra.mxu0 0.0
    %292 = vmatprep.subr.mxu0 0.0
    %293 = vmatpush1.msra.mxu0 0.0
    %294 = vmatprep.subr.mxu0 0.0
    %295 = vmatpush1.msra.mxu0 0.0
    %296 = vmatprep.subr.mxu0 0.0
    %297 = vmatpush1.msra.mxu0 0.0
    %298 = vmatprep.subr.mxu0 0.0
    %299 = vmatpush1.msra.mxu0 0.0
    %300 = vmatprep.subr.mxu0 0.0
    %301 = vmatpush1.msra.mxu0 0.0
    %302 = vmatprep.subr.mxu0 0.0
    %303 = vmatpush1.msra.mxu0 0.0
    %304 = vmatprep.subr.mxu0 0.0
    %305 = vmatpush1.msra.mxu0 0.0
    %306 = vmatprep.subr.mxu0 0.0
    %307 = vmatpush1.msra.mxu0 0.0
    %308 = vmatprep.subr.mxu0 0.0
    %309 = vmatpush1.msra.mxu0 0.0
    %310 = vmatprep.mubr.f32.mxu0 0.0
    %311 = vmatmul.mubr.f32.gmra.mrb[0].mxu0 %v235
    %v312 = vpop.f32.mrb[0].mxu0
    %v313 = vadd.f32 0.0, %v312
    %v314 = vpop.f32.mrb[0].mxu0
    %v315 = vadd.f32 0.0, %v314
    %316 = vmatprep.mubr.f32.mxu0 0.0
    %317 = vmatmul.mubr.f32.gmra.mrb[0].mxu0 %v238
    %v318 = vpop.f32.mrb[0].mxu0
    %v319 = vadd.f32 0.0, %v318
    %v320 = vpop.f32.mrb[0].mxu0
    %v321 = vadd.f32 0.0, %v320
    %322 = vmatprep.mubr.f32.mxu0 0.0
    %323 = vmatmul.mubr.f32.gmra.mrb[0].mxu0 %v241
    %v324 = vpop.f32.mrb[0].mxu0
    %v325 = vadd.f32 0.0, %v324
    %v326 = vpop.f32.mrb[0].mxu0
    %v327 = vadd.f32 0.0, %v326
    %328 = vmatprep.mubr.f32.mxu0 0.0
    %329 = vmatmul.mubr.f32.gmra.mrb[0].mxu0 %v244
    %v330 = vpop.f32.mrb[0].mxu0
    %v331 = vadd.f32 0.0, %v330
    %v332 = vpop.f32.mrb[0].mxu0
    %v333 = vadd.f32 0.0, %v332
    %334 = vdwg.mxu0
    %v336 = vsel %vm233, %v209, 0
    %v339 = vsel %vm233, %v210, 0
    %v342 = vsel %vm233, %v211, 0
    %v345 = vsel %vm233, %v212, 0
    %347 = vmatprep.subr.mxu0 %v214
    %348 = vmatpush1.msra.mxu0 %v213
    %349 = vmatprep.subr.mxu0 %v216
    %350 = vmatpush1.msra.mxu0 %v215
    %351 = vmatprep.subr.mxu0 %v218
    %352 = vmatpush1.msra.mxu0 %v217
    %353 = vmatprep.subr.mxu0 %v220
    %354 = vmatpush1.msra.mxu0 %v219
    %355 = vmatprep.subr.mxu0 0.0
    %356 = vmatpush1.msra.mxu0 0.0
    %357 = vmatprep.subr.mxu0 0.0
    %358 = vmatpush1.msra.mxu0 0.0
    %359 = vmatprep.subr.mxu0 0.0
    %360 = vmatpush1.msra.mxu0 0.0
    %361 = vmatprep.subr.mxu0 0.0
    %362 = vmatpush1.msra.mxu0 0.0
    %363 = vmatprep.subr.mxu0 0.0
    %364 = vmatpush1.msra.mxu0 0.0
    %365 = vmatprep.subr.mxu0 0.0
    %366 = vmatpush1.msra.mxu0 0.0
    %367 = vmatprep.subr.mxu0 0.0
    %368 = vmatpush1.msra.mxu0 0.0
    %369 = vmatprep.subr.mxu0 0.0
    %370 = vmatpush1.msra.mxu0 0.0
    %371 = vmatprep.subr.mxu0 0.0
    %372 = vmatpush1.msra.mxu0 0.0
    %373 = vmatprep.subr.mxu0 0.0
    %374 = vmatpush1.msra.mxu0 0.0
    %375 = vmatprep.subr.mxu0 0.0
    %376 = vmatpush1.msra.mxu0 0.0
    %377 = vmatprep.subr.mxu0 0.0
    %378 = vmatpush1.msra.mxu0 0.0
    %379 = vmatprep.subr.mxu0 0.0
    %380 = vmatpush1.msra.mxu0 0.0
    %381 = vmatprep.subr.mxu0 0.0
    %382 = vmatpush1.msra.mxu0 0.0
    %383 = vmatprep.subr.mxu0 0.0
    %384 = vmatpush1.msra.mxu0 0.0
    %385 = vmatprep.subr.mxu0 0.0
    %386 = vmatpush1.msra.mxu0 0.0
    %387 = vmatprep.subr.mxu0 0.0
    %388 = vmatpush1.msra.mxu0 0.0
    %389 = vmatprep.subr.mxu0 0.0
    %390 = vmatpush1.msra.mxu0 0.0
    %391 = vmatprep.subr.mxu0 0.0
    %392 = vmatpush1.msra.mxu0 0.0
    %393 = vmatprep.subr.mxu0 0.0
    %394 = vmatpush1.msra.mxu0 0.0
    %395 = vmatprep.subr.mxu0 0.0
    %396 = vmatpush1.msra.mxu0 0.0
    %397 = vmatprep.subr.mxu0 0.0
    %398 = vmatpush1.msra.mxu0 0.0
    %399 = vmatprep.subr.mxu0 0.0
    %400 = vmatpush1.msra.mxu0 0.0
    %401 = vmatprep.subr.mxu0 0.0
    %402 = vmatpush1.msra.mxu0 0.0
    %403 = vmatprep.subr.mxu0 0.0
    %404 = vmatpush1.msra.mxu0 0.0
    %405 = vmatprep.subr.mxu0 0.0
    %406 = vmatpush1.msra.mxu0 0.0
    %407 = vmatprep.subr.mxu0 0.0
    %408 = vmatpush1.msra.mxu0 0.0
    %409 = vmatprep.subr.mxu0 0.0
    %410 = vmatpush1.msra.mxu0 0.0
    %411 = vmatprep.mubr.f32.mxu0 0.0
    %412 = vmatmul.mubr.f32.gmra.mrb[0].mxu0 %v336
    %v413 = vpop.f32.mrb[0].mxu0
    %v414 = vadd.f32 %v313, %v413
    %v415 = vpop.f32.mrb[0].mxu0
    %v416 = vadd.f32 %v315, %v415
    %417 = vmatprep.mubr.f32.mxu0 0.0
    %418 = vmatmul.mubr.f32.gmra.mrb[0].mxu0 %v339
    %v419 = vpop.f32.mrb[0].mxu0
    %v420 = vadd.f32 %v319, %v419
    %v421 = vpop.f32.mrb[0].mxu0
    %v422 = vadd.f32 %v321, %v421
    %423 = vmatprep.mubr.f32.mxu0 0.0
    %424 = vmatmul.mubr.f32.gmra.mrb[0].mxu0 %v342
    %v425 = vpop.f32.mrb[0].mxu0
    %v426 = vadd.f32 %v325, %v425
    %v427 = vpop.f32.mrb[0].mxu0
    %v428 = vadd.f32 %v327, %v427
    %429 = vmatprep.mubr.f32.mxu0 0.0
    %430 = vmatmul.mubr.f32.gmra.mrb[0].mxu0 %v345
    %v431 = vpop.f32.mrb[0].mxu0
    %v432 = vadd.f32 %v331, %v431
    %v433 = vpop.f32.mrb[0].mxu0
    %v434 = vadd.f32 %v333, %v433
    %435 = vdwg.mxu0
    %v436 = vld [vmem:[%s0 + $0x40] sm:$0xff]
    %v437 = vld [vmem:[%s0 + $0x48] sm:$0xff]
    %v438 = vld [vmem:[%s0 + $0x50] sm:$0xff]
    %v439 = vld [vmem:[%s0 + $0x58] sm:$0xf]
    %v440 = vld [vmem:[%s1 + $0x80] sm:$0xff]
    %v441 = vld [vmem:[%s1 + $0x88] sm:$0xff]
    %v442 = vld [vmem:[%s1 + $0x90] sm:$0xff]
    %v443 = vld [vmem:[%s1 + $0x98] sm:$0xff]
    %v444 = vld [vmem:[%s1 + $0xa0] sm:$0xff]
    %v445 = vld [vmem:[%s1 + $0xa8] sm:$0xff]
    %v446 = vld [vmem:[%s1 + $0xb0] sm:$0xff]
    %v447 = vld [vmem:[%s1 + $0xb8] sm:$0xff]
    %v449 = vsel %vm233, %v436, 0
    %v452 = vsel %vm233, %v437, 0
    %v455 = vsel %vm233, %v438, 0
    %v458 = vsel %vm233, %v439, 0
    %460 = vmatprep.subr.mxu0 %v441
    %461 = vmatpush1.msra.mxu0 %v440
    %462 = vmatprep.subr.mxu0 %v443
    %463 = vmatpush1.msra.mxu0 %v442
    %464 = vmatprep.subr.mxu0 %v445
    %465 = vmatpush1.msra.mxu0 %v444
    %466 = vmatprep.subr.mxu0 %v447
    %467 = vmatpush1.msra.mxu0 %v446
    %468 = vmatprep.subr.mxu0 0.0
    %469 = vmatpush1.msra.mxu0 0.0
    %470 = vmatprep.subr.mxu0 0.0
    %471 = vmatpush1.msra.mxu0 0.0
    %472 = vmatprep.subr.mxu0 0.0
    %473 = vmatpush1.msra.mxu0 0.0
    %474 = vmatprep.subr.mxu0 0.0
    %475 = vmatpush1.msra.mxu0 0.0
    %476 = vmatprep.subr.mxu0 0.0
    %477 = vmatpush1.msra.mxu0 0.0
    %478 = vmatprep.subr.mxu0 0.0
    %479 = vmatpush1.msra.mxu0 0.0
    %480 = vmatprep.subr.mxu0 0.0
    %481 = vmatpush1.msra.mxu0 0.0
    %482 = vmatprep.subr.mxu0 0.0
    %483 = vmatpush1.msra.mxu0 0.0
    %484 = vmatprep.subr.mxu0 0.0
    %485 = vmatpush1.msra.mxu0 0.0
    %486 = vmatprep.subr.mxu0 0.0
    %487 = vmatpush1.msra.mxu0 0.0
    %488 = vmatprep.subr.mxu0 0.0
    %489 = vmatpush1.msra.mxu0 0.0
    %490 = vmatprep.subr.mxu0 0.0
    %491 = vmatpush1.msra.mxu0 0.0
    %492 = vmatprep.subr.mxu0 0.0
    %493 = vmatpush1.msra.mxu0 0.0
    %494 = vmatprep.subr.mxu0 0.0
    %495 = vmatpush1.msra.mxu0 0.0
    %496 = vmatprep.subr.mxu0 0.0
    %497 = vmatpush1.msra.mxu0 0.0
    %498 = vmatprep.subr.mxu0 0.0
    %499 = vmatpush1.msra.mxu0 0.0
    %500 = vmatprep.subr.mxu0 0.0
    %501 = vmatpush1.msra.mxu0 0.0
    %502 = vmatprep.subr.mxu0 0.0
    %503 = vmatpush1.msra.mxu0 0.0
    %504 = vmatprep.subr.mxu0 0.0
    %505 = vmatpush1.msra.mxu0 0.0
    %506 = vmatprep.subr.mxu0 0.0
    %507 = vmatpush1.msra.mxu0 0.0
    %508 = vmatprep.subr.mxu0 0.0
    %509 = vmatpush1.msra.mxu0 0.0
    %510 = vmatprep.subr.mxu0 0.0
    %511 = vmatpush1.msra.mxu0 0.0
    %512 = vmatprep.subr.mxu0 0.0
    %513 = vmatpush1.msra.mxu0 0.0
    %514 = vmatprep.subr.mxu0 0.0
    %515 = vmatpush1.msra.mxu0 0.0
    %516 = vmatprep.subr.mxu0 0.0
    %517 = vmatpush1.msra.mxu0 0.0
    %518 = vmatprep.subr.mxu0 0.0
    %519 = vmatpush1.msra.mxu0 0.0
    %520 = vmatprep.subr.mxu0 0.0
    %521 = vmatpush1.msra.mxu0 0.0
    %522 = vmatprep.subr.mxu0 0.0
    %523 = vmatpush1.msra.mxu0 0.0
    %524 = vmatprep.mubr.f32.mxu0 0.0
    %525 = vmatmul.mubr.f32.gmra.mrb[0].mxu0 %v449
    %v526 = vpop.f32.mrb[0].mxu0
    %v527 = vadd.f32 0.0, %v526
    %v528 = vpop.f32.mrb[0].mxu0
    %v529 = vadd.f32 0.0, %v528
    %530 = vmatprep.mubr.f32.mxu0 0.0
    %531 = vmatmul.mubr.f32.gmra.mrb[0].mxu0 %v452
    %v532 = vpop.f32.mrb[0].mxu0
    %v533 = vadd.f32 0.0, %v532
    %v534 = vpop.f32.mrb[0].mxu0
    %v535 = vadd.f32 0.0, %v534
    %536 = vmatprep.mubr.f32.mxu0 0.0
    %537 = vmatmul.mubr.f32.gmra.mrb[0].mxu0 %v455
    %v538 = vpop.f32.mrb[0].mxu0
    %v539 = vadd.f32 0.0, %v538
    %v540 = vpop.f32.mrb[0].mxu0
    %v541 = vadd.f32 0.0, %v540
    %542 = vmatprep.mubr.f32.mxu0 0.0
    %543 = vmatmul.mubr.f32.gmra.mrb[0].mxu0 %v458
    %v544 = vpop.f32.mrb[0].mxu0
    %v545 = vadd.f32 0.0, %v544
    %v546 = vpop.f32.mrb[0].mxu0
    %v547 = vadd.f32 0.0, %v546
    %548 = vdwg.mxu0
    %v549 = vadd.f32 %v414, %v527
    %v550 = vadd.f32 %v416, %v529
    %v551 = vadd.f32 %v420, %v533
    %v552 = vadd.f32 %v422, %v535
    %v553 = vadd.f32 %v426, %v539
    %v554 = vadd.f32 %v428, %v541
    %v555 = vadd.f32 %v432, %v545
    %v556 = vadd.f32 %v434, %v547
    %v557 = vld [vmem:[%s0 + $0x1] sm:$0xff]
    %v558 = vld [vmem:[%s0 + $0x9] sm:$0xff]
    %v559 = vld [vmem:[%s0 + $0x11] sm:$0xff]
    %v560 = vld [vmem:[%s0 + $0x19] sm:$0xf]
    %v561 = vld [vmem:[%s1 + $0xc0] sm:$0xff]
    %v562 = vld [vmem:[%s1 + $0xc8] sm:$0xff]
    %v563 = vld [vmem:[%s1 + $0xd0] sm:$0xff]
    %v564 = vld [vmem:[%s1 + $0xd8] sm:$0xff]
    %v565 = vld [vmem:[%s1 + $0xe0] sm:$0xff]
    %v566 = vld [vmem:[%s1 + $0xe8] sm:$0xff]
    %v567 = vld [vmem:[%s1 + $0xf0] sm:$0xff]
    %v568 = vld [vmem:[%s1 + $0xf8] sm:$0xff]
    %v570 = vsel %vm233, %v557, 0
    %v573 = vsel %vm233, %v558, 0
    %v576 = vsel %vm233, %v559, 0
    %v579 = vsel %vm233, %v560, 0
    %581 = vmatprep.subr.mxu0 %v562
    %582 = vmatpush1.msra.mxu0 %v561
    %583 = vmatprep.subr.mxu0 %v564
    %584 = vmatpush1.msra.mxu0 %v563
    %585 = vmatprep.subr.mxu0 %v566
    %586 = vmatpush1.msra.mxu0 %v565
    %587 = vmatprep.subr.mxu0 %v568
    %588 = vmatpush1.msra.mxu0 %v567
    %589 = vmatprep.subr.mxu0 0.0
    %590 = vmatpush1.msra.mxu0 0.0
    %591 = vmatprep.subr.mxu0 0.0
    %592 = vmatpush1.msra.mxu0 0.0
    %593 = vmatprep.subr.mxu0 0.0
    %594 = vmatpush1.msra.mxu0 0.0
    %595 = vmatprep.subr.mxu0 0.0
    %596 = vmatpush1.msra.mxu0 0.0
    %597 = vmatprep.subr.mxu0 0.0
    %598 = vmatpush1.msra.mxu0 0.0
    %599 = vmatprep.subr.mxu0 0.0
    %600 = vmatpush1.msra.mxu0 0.0
    %601 = vmatprep.subr.mxu0 0.0
    %602 = vmatpush1.msra.mxu0 0.0
    %603 = vmatprep.subr.mxu0 0.0
    %604 = vmatpush1.msra.mxu0 0.0
    %605 = vmatprep.subr.mxu0 0.0
    %606 = vmatpush1.msra.mxu0 0.0
    %607 = vmatprep.subr.mxu0 0.0
    %608 = vmatpush1.msra.mxu0 0.0
    %609 = vmatprep.subr.mxu0 0.0
    %610 = vmatpush1.msra.mxu0 0.0
    %611 = vmatprep.subr.mxu0 0.0
    %612 = vmatpush1.msra.mxu0 0.0
    %613 = vmatprep.subr.mxu0 0.0
    %614 = vmatpush1.msra.mxu0 0.0
    %615 = vmatprep.subr.mxu0 0.0
    %616 = vmatpush1.msra.mxu0 0.0
    %617 = vmatprep.subr.mxu0 0.0
    %618 = vmatpush1.msra.mxu0 0.0
    %619 = vmatprep.subr.mxu0 0.0
    %620 = vmatpush1.msra.mxu0 0.0
    %621 = vmatprep.subr.mxu0 0.0
    %622 = vmatpush1.msra.mxu0 0.0
    %623 = vmatprep.subr.mxu0 0.0
    %624 = vmatpush1.msra.mxu0 0.0
    %625 = vmatprep.subr.mxu0 0.0
    %626 = vmatpush1.msra.mxu0 0.0
    %627 = vmatprep.subr.mxu0 0.0
    %628 = vmatpush1.msra.mxu0 0.0
    %629 = vmatprep.subr.mxu0 0.0
    %630 = vmatpush1.msra.mxu0 0.0
    %631 = vmatprep.subr.mxu0 0.0
    %632 = vmatpush1.msra.mxu0 0.0
    %633 = vmatprep.subr.mxu0 0.0
    %634 = vmatpush1.msra.mxu0 0.0
    %635 = vmatprep.subr.mxu0 0.0
    %636 = vmatpush1.msra.mxu0 0.0
    %637 = vmatprep.subr.mxu0 0.0
    %638 = vmatpush1.msra.mxu0 0.0
    %639 = vmatprep.subr.mxu0 0.0
    %640 = vmatpush1.msra.mxu0 0.0
    %641 = vmatprep.subr.mxu0 0.0
    %642 = vmatpush1.msra.mxu0 0.0
    %643 = vmatprep.subr.mxu0 0.0
    %644 = vmatpush1.msra.mxu0 0.0
    %645 = vmatprep.mubr.f32.mxu0 0.0
    %646 = vmatmul.mubr.f32.gmra.mrb[0].mxu0 %v570
    %v647 = vpop.f32.mrb[0].mxu0
    %v648 = vadd.f32 0.0, %v647
    %v649 = vpop.f32.mrb[0].mxu0
    %v650 = vadd.f32 0.0, %v649
    %651 = vmatprep.mubr.f32.mxu0 0.0
    %652 = vmatmul.mubr.f32.gmra.mrb[0].mxu0 %v573
    %v653 = vpop.f32.mrb[0].mxu0
    %v654 = vadd.f32 0.0, %v653
    %v655 = vpop.f32.mrb[0].mxu0
    %v656 = vadd.f32 0.0, %v655
    %657 = vmatprep.mubr.f32.mxu0 0.0
    %658 = vmatmul.mubr.f32.gmra.mrb[0].mxu0 %v576
    %v659 = vpop.f32.mrb[0].mxu0
    %v660 = vadd.f32 0.0, %v659
    %v661 = vpop.f32.mrb[0].mxu0
    %v662 = vadd.f32 0.0, %v661
    %663 = vmatprep.mubr.f32.mxu0 0.0
    %664 = vmatmul.mubr.f32.gmra.mrb[0].mxu0 %v579
    %v665 = vpop.f32.mrb[0].mxu0
    %v666 = vadd.f32 0.0, %v665
    %v667 = vpop.f32.mrb[0].mxu0
    %v668 = vadd.f32 0.0, %v667
    %669 = vdwg.mxu0
    %v670 = vadd.f32 %v549, %v648
    %v671 = vadd.f32 %v550, %v650
    %v672 = vadd.f32 %v551, %v654
    %v673 = vadd.f32 %v552, %v656
    %v674 = vadd.f32 %v553, %v660
    %v675 = vadd.f32 %v554, %v662
    %v676 = vadd.f32 %v555, %v666
    %v677 = vadd.f32 %v556, %v668
    %v678 = vld [vmem:[%s0 + $0x21] sm:$0xff]
    %v679 = vld [vmem:[%s0 + $0x29] sm:$0xff]
    %v680 = vld [vmem:[%s0 + $0x31] sm:$0xff]
    %v681 = vld [vmem:[%s0 + $0x39] sm:$0xf]
    %v682 = vld [vmem:[%s1 + $0x100] sm:$0xff]
    %v683 = vld [vmem:[%s1 + $0x108] sm:$0xff]
    %v684 = vld [vmem:[%s1 + $0x110] sm:$0xff]
    %v685 = vld [vmem:[%s1 + $0x118] sm:$0xff]
    %v686 = vld [vmem:[%s1 + $0x120] sm:$0xff]
    %v687 = vld [vmem:[%s1 + $0x128] sm:$0xff]
    %v688 = vld [vmem:[%s1 + $0x130] sm:$0xff]
    %v689 = vld [vmem:[%s1 + $0x138] sm:$0xff]
    %v691 = vsel %vm233, %v678, 0
    %v694 = vsel %vm233, %v679, 0
    %v697 = vsel %vm233, %v680, 0
    %v700 = vsel %vm233, %v681, 0
    %702 = vmatprep.subr.mxu0 %v683
    %703 = vmatpush1.msra.mxu0 %v682
    %704 = vmatprep.subr.mxu0 %v685
    %705 = vmatpush1.msra.mxu0 %v684
    %706 = vmatprep.subr.mxu0 %v687
    %707 = vmatpush1.msra.mxu0 %v686
    %708 = vmatprep.subr.mxu0 %v689
    %709 = vmatpush1.msra.mxu0 %v688
    %710 = vmatprep.subr.mxu0 0.0
    %711 = vmatpush1.msra.mxu0 0.0
    %712 = vmatprep.subr.mxu0 0.0
    %713 = vmatpush1.msra.mxu0 0.0
    %714 = vmatprep.subr.mxu0 0.0
    %715 = vmatpush1.msra.mxu0 0.0
    %716 = vmatprep.subr.mxu0 0.0
    %717 = vmatpush1.msra.mxu0 0.0
    %718 = vmatprep.subr.mxu0 0.0
    %719 = vmatpush1.msra.mxu0 0.0
    %720 = vmatprep.subr.mxu0 0.0
    %721 = vmatpush1.msra.mxu0 0.0
    %722 = vmatprep.subr.mxu0 0.0
    %723 = vmatpush1.msra.mxu0 0.0
    %724 = vmatprep.subr.mxu0 0.0
    %725 = vmatpush1.msra.mxu0 0.0
    %726 = vmatprep.subr.mxu0 0.0
    %727 = vmatpush1.msra.mxu0 0.0
    %728 = vmatprep.subr.mxu0 0.0
    %729 = vmatpush1.msra.mxu0 0.0
    %730 = vmatprep.subr.mxu0 0.0
    %731 = vmatpush1.msra.mxu0 0.0
    %732 = vmatprep.subr.mxu0 0.0
    %733 = vmatpush1.msra.mxu0 0.0
    %734 = vmatprep.subr.mxu0 0.0
    %735 = vmatpush1.msra.mxu0 0.0
    %736 = vmatprep.subr.mxu0 0.0
    %737 = vmatpush1.msra.mxu0 0.0
    %738 = vmatprep.subr.mxu0 0.0
    %739 = vmatpush1.msra.mxu0 0.0
    %740 = vmatprep.subr.mxu0 0.0
    %741 = vmatpush1.msra.mxu0 0.0
    %742 = vmatprep.subr.mxu0 0.0
    %743 = vmatpush1.msra.mxu0 0.0
    %744 = vmatprep.subr.mxu0 0.0
    %745 = vmatpush1.msra.mxu0 0.0
    %746 = vmatprep.subr.mxu0 0.0
    %747 = vmatpush1.msra.mxu0 0.0
    %748 = vmatprep.subr.mxu0 0.0
    %749 = vmatpush1.msra.mxu0 0.0
    %750 = vmatprep.subr.mxu0 0.0
    %751 = vmatpush1.msra.mxu0 0.0
    %752 = vmatprep.subr.mxu0 0.0
    %753 = vmatpush1.msra.mxu0 0.0
    %754 = vmatprep.subr.mxu0 0.0
    %755 = vmatpush1.msra.mxu0 0.0
    %756 = vmatprep.subr.mxu0 0.0
    %757 = vmatpush1.msra.mxu0 0.0
    %758 = vmatprep.subr.mxu0 0.0
    %759 = vmatpush1.msra.mxu0 0.0
    %760 = vmatprep.subr.mxu0 0.0
    %761 = vmatpush1.msra.mxu0 0.0
    %762 = vmatprep.subr.mxu0 0.0
    %763 = vmatpush1.msra.mxu0 0.0
    %764 = vmatprep.subr.mxu0 0.0
    %765 = vmatpush1.msra.mxu0 0.0
    %766 = vmatprep.mubr.f32.mxu0 0.0
    %767 = vmatmul.mubr.f32.gmra.mrb[0].mxu0 %v691
    %v768 = vpop.f32.mrb[0].mxu0
    %v769 = vadd.f32 0.0, %v768
    %v770 = vpop.f32.mrb[0].mxu0
    %v771 = vadd.f32 0.0, %v770
    %772 = vmatprep.mubr.f32.mxu0 0.0
    %773 = vmatmul.mubr.f32.gmra.mrb[0].mxu0 %v694
    %v774 = vpop.f32.mrb[0].mxu0
    %v775 = vadd.f32 0.0, %v774
    %v776 = vpop.f32.mrb[0].mxu0
    %v777 = vadd.f32 0.0, %v776
    %778 = vmatprep.mubr.f32.mxu0 0.0
    %779 = vmatmul.mubr.f32.gmra.mrb[0].mxu0 %v697
    %v780 = vpop.f32.mrb[0].mxu0
    %v781 = vadd.f32 0.0, %v780
    %v782 = vpop.f32.mrb[0].mxu0
    %v783 = vadd.f32 0.0, %v782
    %784 = vmatprep.mubr.f32.mxu0 0.0
    %785 = vmatmul.mubr.f32.gmra.mrb[0].mxu0 %v700
    %v786 = vpop.f32.mrb[0].mxu0
    %v787 = vadd.f32 0.0, %v786
    %v788 = vpop.f32.mrb[0].mxu0
    %v789 = vadd.f32 0.0, %v788
    %790 = vdwg.mxu0
    %v791 = vadd.f32 %v670, %v769
    %v792 = vadd.f32 %v671, %v771
    %v793 = vadd.f32 %v672, %v775
    %v794 = vadd.f32 %v673, %v777
    %v795 = vadd.f32 %v674, %v781
    %v796 = vadd.f32 %v675, %v783
    %v797 = vadd.f32 %v676, %v787
    %v798 = vadd.f32 %v677, %v789
    %v799 = vld [vmem:[%s0 + $0x41] sm:$0xff]
    %v800 = vld [vmem:[%s0 + $0x49] sm:$0xff]
    %v801 = vld [vmem:[%s0 + $0x51] sm:$0xff]
    %v802 = vld [vmem:[%s0 + $0x59] sm:$0xf]
    %v803 = vld [vmem:[%s1 + $0x140] sm:$0xff]
    %v804 = vld [vmem:[%s1 + $0x148] sm:$0xff]
    %v805 = vld [vmem:[%s1 + $0x150] sm:$0xff]
    %v806 = vld [vmem:[%s1 + $0x158] sm:$0xff]
    %v807 = vld [vmem:[%s1 + $0x160] sm:$0xff]
    %v808 = vld [vmem:[%s1 + $0x168] sm:$0xff]
    %v809 = vld [vmem:[%s1 + $0x170] sm:$0xff]
    %v810 = vld [vmem:[%s1 + $0x178] sm:$0xff]
    %v812 = vsel %vm233, %v799, 0
    %v815 = vsel %vm233, %v800, 0
    %v818 = vsel %vm233, %v801, 0
    %v821 = vsel %vm233, %v802, 0
    %823 = vmatprep.subr.mxu0 %v804
    %824 = vmatpush1.msra.mxu0 %v803
    %825 = vmatprep.subr.mxu0 %v806
    %826 = vmatpush1.msra.mxu0 %v805
    %827 = vmatprep.subr.mxu0 %v808
    %828 = vmatpush1.msra.mxu0 %v807
    %829 = vmatprep.subr.mxu0 %v810
    %830 = vmatpush1.msra.mxu0 %v809
    %831 = vmatprep.subr.mxu0 0.0
    %832 = vmatpush1.msra.mxu0 0.0
    %833 = vmatprep.subr.mxu0 0.0
    %834 = vmatpush1.msra.mxu0 0.0
    %835 = vmatprep.subr.mxu0 0.0
    %836 = vmatpush1.msra.mxu0 0.0
    %837 = vmatprep.subr.mxu0 0.0
    %838 = vmatpush1.msra.mxu0 0.0
    %839 = vmatprep.subr.mxu0 0.0
    %840 = vmatpush1.msra.mxu0 0.0
    %841 = vmatprep.subr.mxu0 0.0
    %842 = vmatpush1.msra.mxu0 0.0
    %843 = vmatprep.subr.mxu0 0.0
    %844 = vmatpush1.msra.mxu0 0.0
    %845 = vmatprep.subr.mxu0 0.0
    %846 = vmatpush1.msra.mxu0 0.0
    %847 = vmatprep.subr.mxu0 0.0
    %848 = vmatpush1.msra.mxu0 0.0
    %849 = vmatprep.subr.mxu0 0.0
    %850 = vmatpush1.msra.mxu0 0.0
    %851 = vmatprep.subr.mxu0 0.0
    %852 = vmatpush1.msra.mxu0 0.0
    %853 = vmatprep.subr.mxu0 0.0
    %854 = vmatpush1.msra.mxu0 0.0
    %855 = vmatprep.subr.mxu0 0.0
    %856 = vmatpush1.msra.mxu0 0.0
    %857 = vmatprep.subr.mxu0 0.0
    %858 = vmatpush1.msra.mxu0 0.0
    %859 = vmatprep.subr.mxu0 0.0
    %860 = vmatpush1.msra.mxu0 0.0
    %861 = vmatprep.subr.mxu0 0.0
    %862 = vmatpush1.msra.mxu0 0.0
    %863 = vmatprep.subr.mxu0 0.0
    %864 = vmatpush1.msra.mxu0 0.0
    %865 = vmatprep.subr.mxu0 0.0
    %866 = vmatpush1.msra.mxu0 0.0
    %867 = vmatprep.subr.mxu0 0.0
    %868 = vmatpush1.msra.mxu0 0.0
    %869 = vmatprep.subr.mxu0 0.0
    %870 = vmatpush1.msra.mxu0 0.0
    %871 = vmatprep.subr.mxu0 0.0
    %872 = vmatpush1.msra.mxu0 0.0
    %873 = vmatprep.subr.mxu0 0.0
    %874 = vmatpush1.msra.mxu0 0.0
    %875 = vmatprep.subr.mxu0 0.0
    %876 = vmatpush1.msra.mxu0 0.0
    %877 = vmatprep.subr.mxu0 0.0
    %878 = vmatpush1.msra.mxu0 0.0
    %879 = vmatprep.subr.mxu0 0.0
    %880 = vmatpush1.msra.mxu0 0.0
    %881 = vmatprep.subr.mxu0 0.0
    %882 = vmatpush1.msra.mxu0 0.0
    %883 = vmatprep.subr.mxu0 0.0
    %884 = vmatpush1.msra.mxu0 0.0
    %885 = vmatprep.subr.mxu0 0.0
    %886 = vmatpush1.msra.mxu0 0.0
    %887 = vmatprep.mubr.f32.mxu0 0.0
    %888 = vmatmul.mubr.f32.gmra.mrb[0].mxu0 %v812
    %v889 = vpop.f32.mrb[0].mxu0
    %v890 = vadd.f32 0.0, %v889
    %v891 = vpop.f32.mrb[0].mxu0
    %v892 = vadd.f32 0.0, %v891
    %893 = vmatprep.mubr.f32.mxu0 0.0
    %894 = vmatmul.mubr.f32.gmra.mrb[0].mxu0 %v815
    %v895 = vpop.f32.mrb[0].mxu0
    %v896 = vadd.f32 0.0, %v895
    %v897 = vpop.f32.mrb[0].mxu0
    %v898 = vadd.f32 0.0, %v897
    %899 = vmatprep.mubr.f32.mxu0 0.0
    %900 = vmatmul.mubr.f32.gmra.mrb[0].mxu0 %v818
    %v901 = vpop.f32.mrb[0].mxu0
    %v902 = vadd.f32 0.0, %v901
    %v903 = vpop.f32.mrb[0].mxu0
    %v904 = vadd.f32 0.0, %v903
    %905 = vmatprep.mubr.f32.mxu0 0.0
    %906 = vmatmul.mubr.f32.gmra.mrb[0].mxu0 %v821
    %v907 = vpop.f32.mrb[0].mxu0
    %v908 = vadd.f32 0.0, %v907
    %v909 = vpop.f32.mrb[0].mxu0
    %v910 = vadd.f32 0.0, %v909
    %911 = vdwg.mxu0
    %v912 = vadd.f32 %v791, %v890
    %v913 = vadd.f32 %v792, %v892
    %v914 = vadd.f32 %v793, %v896
    %v915 = vadd.f32 %v794, %v898
    %v916 = vadd.f32 %v795, %v902
    %v917 = vadd.f32 %v796, %v904
    %v918 = vadd.f32 %v797, %v908
    %v919 = vadd.f32 %v798, %v910
    %v920 = vld [vmem:[%s0 + $0x2] sm:$0xff]
    %v921 = vld [vmem:[%s0 + $0xa] sm:$0xff]
    %v922 = vld [vmem:[%s0 + $0x12] sm:$0xff]
    %v923 = vld [vmem:[%s0 + $0x1a] sm:$0xf]
    %v924 = vld [vmem:[%s1 + $0x180] sm:$0xff]
    %v925 = vld [vmem:[%s1 + $0x188] sm:$0xff]
    %v926 = vld [vmem:[%s1 + $0x190] sm:$0xff]
    %v927 = vld [vmem:[%s1 + $0x198] sm:$0xff]
    %v928 = vld [vmem:[%s1 + $0x1a0] sm:$0xff]
    %v929 = vld [vmem:[%s1 + $0x1a8] sm:$0xff]
    %v930 = vld [vmem:[%s1 + $0x1b0] sm:$0xff]
    %v931 = vld [vmem:[%s1 + $0x1b8] sm:$0xff]
    %v933 = vsel %vm233, %v920, 0
    %v936 = vsel %vm233, %v921, 0
    %v939 = vsel %vm233, %v922, 0
    %v942 = vsel %vm233, %v923, 0
    %944 = vmatprep.subr.mxu0 %v925
    %945 = vmatpush1.msra.mxu0 %v924
    %946 = vmatprep.subr.mxu0 %v927
    %947 = vmatpush1.msra.mxu0 %v926
    %948 = vmatprep.subr.mxu0 %v929
    %949 = vmatpush1.msra.mxu0 %v928
    %950 = vmatprep.subr.mxu0 %v931
    %951 = vmatpush1.msra.mxu0 %v930
    %952 = vmatprep.subr.mxu0 0.0
    %953 = vmatpush1.msra.mxu0 0.0
    %954 = vmatprep.subr.mxu0 0.0
    %955 = vmatpush1.msra.mxu0 0.0
    %956 = vmatprep.subr.mxu0 0.0
    %957 = vmatpush1.msra.mxu0 0.0
    %958 = vmatprep.subr.mxu0 0.0
    %959 = vmatpush1.msra.mxu0 0.0
    %960 = vmatprep.subr.mxu0 0.0
    %961 = vmatpush1.msra.mxu0 0.0
    %962 = vmatprep.subr.mxu0 0.0
    %963 = vmatpush1.msra.mxu0 0.0
    %964 = vmatprep.subr.mxu0 0.0
    %965 = vmatpush1.msra.mxu0 0.0
    %966 = vmatprep.subr.mxu0 0.0
    %967 = vmatpush1.msra.mxu0 0.0
    %968 = vmatprep.subr.mxu0 0.0
    %969 = vmatpush1.msra.mxu0 0.0
    %970 = vmatprep.subr.mxu0 0.0
    %971 = vmatpush1.msra.mxu0 0.0
    %972 = vmatprep.subr.mxu0 0.0
    %973 = vmatpush1.msra.mxu0 0.0
    %974 = vmatprep.subr.mxu0 0.0
    %975 = vmatpush1.msra.mxu0 0.0
    %976 = vmatprep.subr.mxu0 0.0
    %977 = vmatpush1.msra.mxu0 0.0
    %978 = vmatprep.subr.mxu0 0.0
    %979 = vmatpush1.msra.mxu0 0.0
    %980 = vmatprep.subr.mxu0 0.0
    %981 = vmatpush1.msra.mxu0 0.0
    %982 = vmatprep.subr.mxu0 0.0
    %983 = vmatpush1.msra.mxu0 0.0
    %984 = vmatprep.subr.mxu0 0.0
    %985 = vmatpush1.msra.mxu0 0.0
    %986 = vmatprep.subr.mxu0 0.0
    %987 = vmatpush1.msra.mxu0 0.0
    %988 = vmatprep.subr.mxu0 0.0
    %989 = vmatpush1.msra.mxu0 0.0
    %990 = vmatprep.subr.mxu0 0.0
    %991 = vmatpush1.msra.mxu0 0.0
    %992 = vmatprep.subr.mxu0 0.0
    %993 = vmatpush1.msra.mxu0 0.0
    %994 = vmatprep.subr.mxu0 0.0
    %995 = vmatpush1.msra.mxu0 0.0
    %996 = vmatprep.subr.mxu0 0.0
    %997 = vmatpush1.msra.mxu0 0.0
    %998 = vmatprep.subr.mxu0 0.0
    %999 = vmatpush1.msra.mxu0 0.0
    %1000 = vmatprep.subr.mxu0 0.0
    %1001 = vmatpush1.msra.mxu0 0.0
    %1002 = vmatprep.subr.mxu0 0.0
    %1003 = vmatpush1.msra.mxu0 0.0
    %1004 = vmatprep.subr.mxu0 0.0
    %1005 = vmatpush1.msra.mxu0 0.0
    %1006 = vmatprep.subr.mxu0 0.0
    %1007 = vmatpush1.msra.mxu0 0.0
    %1008 = vmatprep.mubr.f32.mxu0 0.0
    %1009 = vmatmul.mubr.f32.gmra.mrb[0].mxu0 %v933
    %v1010 = vpop.f32.mrb[0].mxu0
    %v1011 = vadd.f32 0.0, %v1010
    %v1012 = vpop.f32.mrb[0].mxu0
    %v1013 = vadd.f32 0.0, %v1012
    %1014 = vmatprep.mubr.f32.mxu0 0.0
    %1015 = vmatmul.mubr.f32.gmra.mrb[0].mxu0 %v936
    %v1016 = vpop.f32.mrb[0].mxu0
    %v1017 = vadd.f32 0.0, %v1016
    %v1018 = vpop.f32.mrb[0].mxu0
    %v1019 = vadd.f32 0.0, %v1018
    %1020 = vmatprep.mubr.f32.mxu0 0.0
    %1021 = vmatmul.mubr.f32.gmra.mrb[0].mxu0 %v939
    %v1022 = vpop.f32.mrb[0].mxu0
    %v1023 = vadd.f32 0.0, %v1022
    %v1024 = vpop.f32.mrb[0].mxu0
    %v1025 = vadd.f32 0.0, %v1024
    %1026 = vmatprep.mubr.f32.mxu0 0.0
    %1027 = vmatmul.mubr.f32.gmra.mrb[0].mxu0 %v942
    %v1028 = vpop.f32.mrb[0].mxu0
    %v1029 = vadd.f32 0.0, %v1028
    %v1030 = vpop.f32.mrb[0].mxu0
    %v1031 = vadd.f32 0.0, %v1030
    %1032 = vdwg.mxu0
    %v1033 = vadd.f32 %v912, %v1011
    %v1034 = vadd.f32 %v913, %v1013
    %v1035 = vadd.f32 %v914, %v1017
    %v1036 = vadd.f32 %v915, %v1019
    %v1037 = vadd.f32 %v916, %v1023
    %v1038 = vadd.f32 %v917, %v1025
    %v1039 = vadd.f32 %v918, %v1029
    %v1040 = vadd.f32 %v919, %v1031
    %v1041 = vld [vmem:[%s0 + $0x22] sm:$0xff]
    %v1042 = vld [vmem:[%s0 + $0x2a] sm:$0xff]
    %v1043 = vld [vmem:[%s0 + $0x32] sm:$0xff]
    %v1044 = vld [vmem:[%s0 + $0x3a] sm:$0xf]
    %v1045 = vld [vmem:[%s1 + $0x1c0] sm:$0xff]
    %v1046 = vld [vmem:[%s1 + $0x1c8] sm:$0xff]
    %v1047 = vld [vmem:[%s1 + $0x1d0] sm:$0xff]
    %v1048 = vld [vmem:[%s1 + $0x1d8] sm:$0xff]
    %v1049 = vld [vmem:[%s1 + $0x1e0] sm:$0xff]
    %v1050 = vld [vmem:[%s1 + $0x1e8] sm:$0xff]
    %v1051 = vld [vmem:[%s1 + $0x1f0] sm:$0xff]
    %v1052 = vld [vmem:[%s1 + $0x1f8] sm:$0xff]
    %v1054 = vsel %vm233, %v1041, 0
    %v1057 = vsel %vm233, %v1042, 0
    %v1060 = vsel %vm233, %v1043, 0
    %v1063 = vsel %vm233, %v1044, 0
    %1065 = vmatprep.subr.mxu0 %v1046
    %1066 = vmatpush1.msra.mxu0 %v1045
    %1067 = vmatprep.subr.mxu0 %v1048
    %1068 = vmatpush1.msra.mxu0 %v1047
    %1069 = vmatprep.subr.mxu0 %v1050
    %1070 = vmatpush1.msra.mxu0 %v1049
    %1071 = vmatprep.subr.mxu0 %v1052
    %1072 = vmatpush1.msra.mxu0 %v1051
    %1073 = vmatprep.subr.mxu0 0.0
    %1074 = vmatpush1.msra.mxu0 0.0
    %1075 = vmatprep.subr.mxu0 0.0
    %1076 = vmatpush1.msra.mxu0 0.0
    %1077 = vmatprep.subr.mxu0 0.0
    %1078 = vmatpush1.msra.mxu0 0.0
    %1079 = vmatprep.subr.mxu0 0.0
    %1080 = vmatpush1.msra.mxu0 0.0
    %1081 = vmatprep.subr.mxu0 0.0
    %1082 = vmatpush1.msra.mxu0 0.0
    %1083 = vmatprep.subr.mxu0 0.0
    %1084 = vmatpush1.msra.mxu0 0.0
    %1085 = vmatprep.subr.mxu0 0.0
    %1086 = vmatpush1.msra.mxu0 0.0
    %1087 = vmatprep.subr.mxu0 0.0
    %1088 = vmatpush1.msra.mxu0 0.0
    %1089 = vmatprep.subr.mxu0 0.0
    %1090 = vmatpush1.msra.mxu0 0.0
    %1091 = vmatprep.subr.mxu0 0.0
    %1092 = vmatpush1.msra.mxu0 0.0
    %1093 = vmatprep.subr.mxu0 0.0
    %1094 = vmatpush1.msra.mxu0 0.0
    %1095 = vmatprep.subr.mxu0 0.0
    %1096 = vmatpush1.msra.mxu0 0.0
    %1097 = vmatprep.subr.mxu0 0.0
    %1098 = vmatpush1.msra.mxu0 0.0
    %1099 = vmatprep.subr.mxu0 0.0
    %1100 = vmatpush1.msra.mxu0 0.0
    %1101 = vmatprep.subr.mxu0 0.0
    %1102 = vmatpush1.msra.mxu0 0.0
    %1103 = vmatprep.subr.mxu0 0.0
    %1104 = vmatpush1.msra.mxu0 0.0
    %1105 = vmatprep.subr.mxu0 0.0
    %1106 = vmatpush1.msra.mxu0 0.0
    %1107 = vmatprep.subr.mxu0 0.0
    %1108 = vmatpush1.msra.mxu0 0.0
    %1109 = vmatprep.subr.mxu0 0.0
    %1110 = vmatpush1.msra.mxu0 0.0
    %1111 = vmatprep.subr.mxu0 0.0
    %1112 = vmatpush1.msra.mxu0 0.0
    %1113 = vmatprep.subr.mxu0 0.0
    %1114 = vmatpush1.msra.mxu0 0.0
    %1115 = vmatprep.subr.mxu0 0.0
    %1116 = vmatpush1.msra.mxu0 0.0
    %1117 = vmatprep.subr.mxu0 0.0
    %1118 = vmatpush1.msra.mxu0 0.0
    %1119 = vmatprep.subr.mxu0 0.0
    %1120 = vmatpush1.msra.mxu0 0.0
    %1121 = vmatprep.subr.mxu0 0.0
    %1122 = vmatpush1.msra.mxu0 0.0
    %1123 = vmatprep.subr.mxu0 0.0
    %1124 = vmatpush1.msra.mxu0 0.0
    %1125 = vmatprep.subr.mxu0 0.0
    %1126 = vmatpush1.msra.mxu0 0.0
    %1127 = vmatprep.subr.mxu0 0.0
    %1128 = vmatpush1.msra.mxu0 0.0
    %1129 = vmatprep.mubr.f32.mxu0 0.0
    %1130 = vmatmul.mubr.f32.gmra.mrb[0].mxu0 %v1054
    %v1131 = vpop.f32.mrb[0].mxu0
    %v1132 = vadd.f32 0.0, %v1131
    %v1133 = vpop.f32.mrb[0].mxu0
    %v1134 = vadd.f32 0.0, %v1133
    %1135 = vmatprep.mubr.f32.mxu0 0.0
    %1136 = vmatmul.mubr.f32.gmra.mrb[0].mxu0 %v1057
    %v1137 = vpop.f32.mrb[0].mxu0
    %v1138 = vadd.f32 0.0, %v1137
    %v1139 = vpop.f32.mrb[0].mxu0
    %v1140 = vadd.f32 0.0, %v1139
    %1141 = vmatprep.mubr.f32.mxu0 0.0
    %1142 = vmatmul.mubr.f32.gmra.mrb[0].mxu0 %v1060
    %v1143 = vpop.f32.mrb[0].mxu0
    %v1144 = vadd.f32 0.0, %v1143
    %v1145 = vpop.f32.mrb[0].mxu0
    %v1146 = vadd.f32 0.0, %v1145
    %1147 = vmatprep.mubr.f32.mxu0 0.0
    %1148 = vmatmul.mubr.f32.gmra.mrb[0].mxu0 %v1063
    %v1149 = vpop.f32.mrb[0].mxu0
    %v1150 = vadd.f32 0.0, %v1149
    %v1151 = vpop.f32.mrb[0].mxu0
    %v1152 = vadd.f32 0.0, %v1151
    %1153 = vdwg.mxu0
    %v1154 = vadd.f32 %v1033, %v1132
    %v1155 = vadd.f32 %v1034, %v1134
    %v1156 = vadd.f32 %v1035, %v1138
    %v1157 = vadd.f32 %v1036, %v1140
    %v1158 = vadd.f32 %v1037, %v1144
    %v1159 = vadd.f32 %v1038, %v1146
    %v1160 = vadd.f32 %v1039, %v1150
    %v1161 = vadd.f32 %v1040, %v1152
    %v1162 = vld [vmem:[%s0 + $0x42] sm:$0xff]
    %v1163 = vld [vmem:[%s0 + $0x4a] sm:$0xff]
    %v1164 = vld [vmem:[%s0 + $0x52] sm:$0xff]
    %v1165 = vld [vmem:[%s0 + $0x5a] sm:$0xf]
    %v1166 = vld [vmem:[%s1 + $0x200] sm:$0xff]
    %v1167 = vld [vmem:[%s1 + $0x208] sm:$0xff]
    %v1168 = vld [vmem:[%s1 + $0x210] sm:$0xff]
    %v1169 = vld [vmem:[%s1 + $0x218] sm:$0xff]
    %v1170 = vld [vmem:[%s1 + $0x220] sm:$0xff]
    %v1171 = vld [vmem:[%s1 + $0x228] sm:$0xff]
    %v1172 = vld [vmem:[%s1 + $0x230] sm:$0xff]
    %v1173 = vld [vmem:[%s1 + $0x238] sm:$0xff]
    %v1175 = vsel %vm233, %v1162, 0
    %v1178 = vsel %vm233, %v1163, 0
    %v1181 = vsel %vm233, %v1164, 0
    %v1184 = vsel %vm233, %v1165, 0
    %1186 = vmatprep.subr.mxu0 %v1167
    %1187 = vmatpush1.msra.mxu0 %v1166
    %1188 = vmatprep.subr.mxu0 %v1169
    %1189 = vmatpush1.msra.mxu0 %v1168
    %1190 = vmatprep.subr.mxu0 %v1171
    %1191 = vmatpush1.msra.mxu0 %v1170
    %1192 = vmatprep.subr.mxu0 %v1173
    %1193 = vmatpush1.msra.mxu0 %v1172
    %1194 = vmatprep.subr.mxu0 0.0
    %1195 = vmatpush1.msra.mxu0 0.0
    %1196 = vmatprep.subr.mxu0 0.0
    %1197 = vmatpush1.msra.mxu0 0.0
    %1198 = vmatprep.subr.mxu0 0.0
    %1199 = vmatpush1.msra.mxu0 0.0
    %1200 = vmatprep.subr.mxu0 0.0
    %1201 = vmatpush1.msra.mxu0 0.0
    %1202 = vmatprep.subr.mxu0 0.0
    %1203 = vmatpush1.msra.mxu0 0.0
    %1204 = vmatprep.subr.mxu0 0.0
    %1205 = vmatpush1.msra.mxu0 0.0
    %1206 = vmatprep.subr.mxu0 0.0
    %1207 = vmatpush1.msra.mxu0 0.0
    %1208 = vmatprep.subr.mxu0 0.0
    %1209 = vmatpush1.msra.mxu0 0.0
    %1210 = vmatprep.subr.mxu0 0.0
    %1211 = vmatpush1.msra.mxu0 0.0
    %1212 = vmatprep.subr.mxu0 0.0
    %1213 = vmatpush1.msra.mxu0 0.0
    %1214 = vmatprep.subr.mxu0 0.0
    %1215 = vmatpush1.msra.mxu0 0.0
    %1216 = vmatprep.subr.mxu0 0.0
    %1217 = vmatpush1.msra.mxu0 0.0
    %1218 = vmatprep.subr.mxu0 0.0
    %1219 = vmatpush1.msra.mxu0 0.0
    %1220 = vmatprep.subr.mxu0 0.0
    %1221 = vmatpush1.msra.mxu0 0.0
    %1222 = vmatprep.subr.mxu0 0.0
    %1223 = vmatpush1.msra.mxu0 0.0
    %1224 = vmatprep.subr.mxu0 0.0
    %1225 = vmatpush1.msra.mxu0 0.0
    %1226 = vmatprep.subr.mxu0 0.0
    %1227 = vmatpush1.msra.mxu0 0.0
    %1228 = vmatprep.subr.mxu0 0.0
    %1229 = vmatpush1.msra.mxu0 0.0
    %1230 = vmatprep.subr.mxu0 0.0
    %1231 = vmatpush1.msra.mxu0 0.0
    %1232 = vmatprep.subr.mxu0 0.0
    %1233 = vmatpush1.msra.mxu0 0.0
    %1234 = vmatprep.subr.mxu0 0.0
    %1235 = vmatpush1.msra.mxu0 0.0
    %1236 = vmatprep.subr.mxu0 0.0
    %1237 = vmatpush1.msra.mxu0 0.0
    %1238 = vmatprep.subr.mxu0 0.0
    %1239 = vmatpush1.msra.mxu0 0.0
    %1240 = vmatprep.subr.mxu0 0.0
    %1241 = vmatpush1.msra.mxu0 0.0
    %1242 = vmatprep.subr.mxu0 0.0
    %1243 = vmatpush1.msra.mxu0 0.0
    %1244 = vmatprep.subr.mxu0 0.0
    %1245 = vmatpush1.msra.mxu0 0.0
    %1246 = vmatprep.subr.mxu0 0.0
    %1247 = vmatpush1.msra.mxu0 0.0
    %1248 = vmatprep.subr.mxu0 0.0
    %1249 = vmatpush1.msra.mxu0 0.0
    %1250 = vmatprep.mubr.f32.mxu0 0.0
    %1251 = vmatmul.mubr.f32.gmra.mrb[0].mxu0 %v1175
    %v1252 = vpop.f32.mrb[0].mxu0
    %v1253 = vadd.f32 0.0, %v1252
    %v1254 = vpop.f32.mrb[0].mxu0
    %v1255 = vadd.f32 0.0, %v1254
    %1256 = vmatprep.mubr.f32.mxu0 0.0
    %1257 = vmatmul.mubr.f32.gmra.mrb[0].mxu0 %v1178
    %v1258 = vpop.f32.mrb[0].mxu0
    %v1259 = vadd.f32 0.0, %v1258
    %v1260 = vpop.f32.mrb[0].mxu0
    %v1261 = vadd.f32 0.0, %v1260
    %1262 = vmatprep.mubr.f32.mxu0 0.0
    %1263 = vmatmul.mubr.f32.gmra.mrb[0].mxu0 %v1181
    %v1264 = vpop.f32.mrb[0].mxu0
    %v1265 = vadd.f32 0.0, %v1264
    %v1266 = vpop.f32.mrb[0].mxu0
    %v1267 = vadd.f32 0.0, %v1266
    %1268 = vmatprep.mubr.f32.mxu0 0.0
    %1269 = vmatmul.mubr.f32.gmra.mrb[0].mxu0 %v1184
    %v1270 = vpop.f32.mrb[0].mxu0
    %v1271 = vadd.f32 0.0, %v1270
    %v1272 = vpop.f32.mrb[0].mxu0
    %v1273 = vadd.f32 0.0, %v1272
    %1274 = vdwg.mxu0
    %v1275 = vadd.f32 %v1154, %v1253
    %v1276 = vadd.f32 %v1155, %v1255
    %v1277 = vadd.f32 %v1156, %v1259
    %v1278 = vadd.f32 %v1157, %v1261
    %v1279 = vadd.f32 %v1158, %v1265
    %v1280 = vadd.f32 %v1159, %v1267
    %v1281 = vadd.f32 %v1160, %v1271
    %v1282 = vadd.f32 %v1161, %v1273
    %v1283 = vld [vmem:[%s0 + $0x3] sm:$0xff]
    %v1284 = vld [vmem:[%s0 + $0xb] sm:$0xff]
    %v1285 = vld [vmem:[%s0 + $0x13] sm:$0xff]
    %v1286 = vld [vmem:[%s0 + $0x1b] sm:$0xf]
    %v1287 = vld [vmem:[%s1 + $0x240] sm:$0xff]
    %v1288 = vld [vmem:[%s1 + $0x248] sm:$0xff]
    %v1289 = vld [vmem:[%s1 + $0x250] sm:$0xff]
    %v1290 = vld [vmem:[%s1 + $0x258] sm:$0xff]
    %v1291 = vld [vmem:[%s1 + $0x260] sm:$0xff]
    %v1292 = vld [vmem:[%s1 + $0x268] sm:$0xff]
    %v1293 = vld [vmem:[%s1 + $0x270] sm:$0xff]
    %v1294 = vld [vmem:[%s1 + $0x278] sm:$0xff]
    %v1296 = vsel %vm233, %v1283, 0
    %v1299 = vsel %vm233, %v1284, 0
    %v1302 = vsel %vm233, %v1285, 0
    %v1305 = vsel %vm233, %v1286, 0
    %1307 = vmatprep.subr.mxu0 %v1288
    %1308 = vmatpush1.msra.mxu0 %v1287
    %1309 = vmatprep.subr.mxu0 %v1290
    %1310 = vmatpush1.msra.mxu0 %v1289
    %1311 = vmatprep.subr.mxu0 %v1292
    %1312 = vmatpush1.msra.mxu0 %v1291
    %1313 = vmatprep.subr.mxu0 %v1294
    %1314 = vmatpush1.msra.mxu0 %v1293
    %1315 = vmatprep.subr.mxu0 0.0
    %1316 = vmatpush1.msra.mxu0 0.0
    %1317 = vmatprep.subr.mxu0 0.0
    %1318 = vmatpush1.msra.mxu0 0.0
    %1319 = vmatprep.subr.mxu0 0.0
    %1320 = vmatpush1.msra.mxu0 0.0
    %1321 = vmatprep.subr.mxu0 0.0
    %1322 = vmatpush1.msra.mxu0 0.0
    %1323 = vmatprep.subr.mxu0 0.0
    %1324 = vmatpush1.msra.mxu0 0.0
    %1325 = vmatprep.subr.mxu0 0.0
    %1326 = vmatpush1.msra.mxu0 0.0
    %1327 = vmatprep.subr.mxu0 0.0
    %1328 = vmatpush1.msra.mxu0 0.0
    %1329 = vmatprep.subr.mxu0 0.0
    %1330 = vmatpush1.msra.mxu0 0.0
    %1331 = vmatprep.subr.mxu0 0.0
    %1332 = vmatpush1.msra.mxu0 0.0
    %1333 = vmatprep.subr.mxu0 0.0
    %1334 = vmatpush1.msra.mxu0 0.0
    %1335 = vmatprep.subr.mxu0 0.0
    %1336 = vmatpush1.msra.mxu0 0.0
    %1337 = vmatprep.subr.mxu0 0.0
    %1338 = vmatpush1.msra.mxu0 0.0
    %1339 = vmatprep.subr.mxu0 0.0
    %1340 = vmatpush1.msra.mxu0 0.0
    %1341 = vmatprep.subr.mxu0 0.0
    %1342 = vmatpush1.msra.mxu0 0.0
    %1343 = vmatprep.subr.mxu0 0.0
    %1344 = vmatpush1.msra.mxu0 0.0
    %1345 = vmatprep.subr.mxu0 0.0
    %1346 = vmatpush1.msra.mxu0 0.0
    %1347 = vmatprep.subr.mxu0 0.0
    %1348 = vmatpush1.msra.mxu0 0.0
    %1349 = vmatprep.subr.mxu0 0.0
    %1350 = vmatpush1.msra.mxu0 0.0
    %1351 = vmatprep.subr.mxu0 0.0
    %1352 = vmatpush1.msra.mxu0 0.0
    %1353 = vmatprep.subr.mxu0 0.0
    %1354 = vmatpush1.msra.mxu0 0.0
    %1355 = vmatprep.subr.mxu0 0.0
    %1356 = vmatpush1.msra.mxu0 0.0
    %1357 = vmatprep.subr.mxu0 0.0
    %1358 = vmatpush1.msra.mxu0 0.0
    %1359 = vmatprep.subr.mxu0 0.0
    %1360 = vmatpush1.msra.mxu0 0.0
    %1361 = vmatprep.subr.mxu0 0.0
    %1362 = vmatpush1.msra.mxu0 0.0
    %1363 = vmatprep.subr.mxu0 0.0
    %1364 = vmatpush1.msra.mxu0 0.0
    %1365 = vmatprep.subr.mxu0 0.0
    %1366 = vmatpush1.msra.mxu0 0.0
    %1367 = vmatprep.subr.mxu0 0.0
    %1368 = vmatpush1.msra.mxu0 0.0
    %1369 = vmatprep.subr.mxu0 0.0
    %1370 = vmatpush1.msra.mxu0 0.0
    %1371 = vmatprep.mubr.f32.mxu0 0.0
    %1372 = vmatmul.mubr.f32.gmra.mrb[0].mxu0 %v1296
    %v1373 = vpop.f32.mrb[0].mxu0
    %v1374 = vadd.f32 0.0, %v1373
    %v1375 = vpop.f32.mrb[0].mxu0
    %v1376 = vadd.f32 0.0, %v1375
    %1377 = vmatprep.mubr.f32.mxu0 0.0
    %1378 = vmatmul.mubr.f32.gmra.mrb[0].mxu0 %v1299
    %v1379 = vpop.f32.mrb[0].mxu0
    %v1380 = vadd.f32 0.0, %v1379
    %v1381 = vpop.f32.mrb[0].mxu0
    %v1382 = vadd.f32 0.0, %v1381
    %1383 = vmatprep.mubr.f32.mxu0 0.0
    %1384 = vmatmul.mubr.f32.gmra.mrb[0].mxu0 %v1302
    %v1385 = vpop.f32.mrb[0].mxu0
    %v1386 = vadd.f32 0.0, %v1385
    %v1387 = vpop.f32.mrb[0].mxu0
    %v1388 = vadd.f32 0.0, %v1387
    %1389 = vmatprep.mubr.f32.mxu0 0.0
    %1390 = vmatmul.mubr.f32.gmra.mrb[0].mxu0 %v1305
    %v1391 = vpop.f32.mrb[0].mxu0
    %v1392 = vadd.f32 0.0, %v1391
    %v1393 = vpop.f32.mrb[0].mxu0
    %v1394 = vadd.f32 0.0, %v1393
    %1395 = vdwg.mxu0
    %v1396 = vadd.f32 %v1275, %v1374
    %v1397 = vadd.f32 %v1276, %v1376
    %v1398 = vadd.f32 %v1277, %v1380
    %v1399 = vadd.f32 %v1278, %v1382
    %v1400 = vadd.f32 %v1279, %v1386
    %v1401 = vadd.f32 %v1280, %v1388
    %v1402 = vadd.f32 %v1281, %v1392
    %v1403 = vadd.f32 %v1282, %v1394
    %v1404 = vld [vmem:[%s0 + $0x23] sm:$0xff]
    %v1405 = vld [vmem:[%s0 + $0x2b] sm:$0xff]
    %v1406 = vld [vmem:[%s0 + $0x33] sm:$0xff]
    %v1407 = vld [vmem:[%s0 + $0x3b] sm:$0xf]
    %v1408 = vld [vmem:[%s1 + $0x280] sm:$0xff]
    %v1409 = vld [vmem:[%s1 + $0x288] sm:$0xff]
    %v1410 = vld [vmem:[%s1 + $0x290] sm:$0xff]
    %v1411 = vld [vmem:[%s1 + $0x298] sm:$0xff]
    %v1412 = vld [vmem:[%s1 + $0x2a0] sm:$0xff]
    %v1413 = vld [vmem:[%s1 + $0x2a8] sm:$0xff]
    %v1414 = vld [vmem:[%s1 + $0x2b0] sm:$0xff]
    %v1415 = vld [vmem:[%s1 + $0x2b8] sm:$0xff]
    %v1417 = vsel %vm233, %v1404, 0
    %v1420 = vsel %vm233, %v1405, 0
    %v1423 = vsel %vm233, %v1406, 0
    %v1426 = vsel %vm233, %v1407, 0
    %1428 = vmatprep.subr.mxu0 %v1409
    %1429 = vmatpush1.msra.mxu0 %v1408
    %1430 = vmatprep.subr.mxu0 %v1411
    %1431 = vmatpush1.msra.mxu0 %v1410
    %1432 = vmatprep.subr.mxu0 %v1413
    %1433 = vmatpush1.msra.mxu0 %v1412
    %1434 = vmatprep.subr.mxu0 %v1415
    %1435 = vmatpush1.msra.mxu0 %v1414
    %1436 = vmatprep.subr.mxu0 0.0
    %1437 = vmatpush1.msra.mxu0 0.0
    %1438 = vmatprep.subr.mxu0 0.0
    %1439 = vmatpush1.msra.mxu0 0.0
    %1440 = vmatprep.subr.mxu0 0.0
    %1441 = vmatpush1.msra.mxu0 0.0
    %1442 = vmatprep.subr.mxu0 0.0
    %1443 = vmatpush1.msra.mxu0 0.0
    %1444 = vmatprep.subr.mxu0 0.0
    %1445 = vmatpush1.msra.mxu0 0.0
    %1446 = vmatprep.subr.mxu0 0.0
    %1447 = vmatpush1.msra.mxu0 0.0
    %1448 = vmatprep.subr.mxu0 0.0
    %1449 = vmatpush1.msra.mxu0 0.0
    %1450 = vmatprep.subr.mxu0 0.0
    %1451 = vmatpush1.msra.mxu0 0.0
    %1452 = vmatprep.subr.mxu0 0.0
    %1453 = vmatpush1.msra.mxu0 0.0
    %1454 = vmatprep.subr.mxu0 0.0
    %1455 = vmatpush1.msra.mxu0 0.0
    %1456 = vmatprep.subr.mxu0 0.0
    %1457 = vmatpush1.msra.mxu0 0.0
    %1458 = vmatprep.subr.mxu0 0.0
    %1459 = vmatpush1.msra.mxu0 0.0
    %1460 = vmatprep.subr.mxu0 0.0
    %1461 = vmatpush1.msra.mxu0 0.0
    %1462 = vmatprep.subr.mxu0 0.0
    %1463 = vmatpush1.msra.mxu0 0.0
    %1464 = vmatprep.subr.mxu0 0.0
    %1465 = vmatpush1.msra.mxu0 0.0
    %1466 = vmatprep.subr.mxu0 0.0
    %1467 = vmatpush1.msra.mxu0 0.0
    %1468 = vmatprep.subr.mxu0 0.0
    %1469 = vmatpush1.msra.mxu0 0.0
    %1470 = vmatprep.subr.mxu0 0.0
    %1471 = vmatpush1.msra.mxu0 0.0
    %1472 = vmatprep.subr.mxu0 0.0
    %1473 = vmatpush1.msra.mxu0 0.0
    %1474 = vmatprep.subr.mxu0 0.0
    %1475 = vmatpush1.msra.mxu0 0.0
    %1476 = vmatprep.subr.mxu0 0.0
    %1477 = vmatpush1.msra.mxu0 0.0
    %1478 = vmatprep.subr.mxu0 0.0
    %1479 = vmatpush1.msra.mxu0 0.0
    %1480 = vmatprep.subr.mxu0 0.0
    %1481 = vmatpush1.msra.mxu0 0.0
    %1482 = vmatprep.subr.mxu0 0.0
    %1483 = vmatpush1.msra.mxu0 0.0
    %1484 = vmatprep.subr.mxu0 0.0
    %1485 = vmatpush1.msra.mxu0 0.0
    %1486 = vmatprep.subr.mxu0 0.0
    %1487 = vmatpush1.msra.mxu0 0.0
    %1488 = vmatprep.subr.mxu0 0.0
    %1489 = vmatpush1.msra.mxu0 0.0
    %1490 = vmatprep.subr.mxu0 0.0
    %1491 = vmatpush1.msra.mxu0 0.0
    %1492 = vmatprep.mubr.f32.mxu0 0.0
    %1493 = vmatmul.mubr.f32.gmra.mrb[0].mxu0 %v1417
    %v1494 = vpop.f32.mrb[0].mxu0
    %v1495 = vadd.f32 0.0, %v1494
    %v1496 = vpop.f32.mrb[0].mxu0
    %v1497 = vadd.f32 0.0, %v1496
    %1498 = vmatprep.mubr.f32.mxu0 0.0
    %1499 = vmatmul.mubr.f32.gmra.mrb[0].mxu0 %v1420
    %v1500 = vpop.f32.mrb[0].mxu0
    %v1501 = vadd.f32 0.0, %v1500
    %v1502 = vpop.f32.mrb[0].mxu0
    %v1503 = vadd.f32 0.0, %v1502
    %1504 = vmatprep.mubr.f32.mxu0 0.0
    %1505 = vmatmul.mubr.f32.gmra.mrb[0].mxu0 %v1423
    %v1506 = vpop.f32.mrb[0].mxu0
    %v1507 = vadd.f32 0.0, %v1506
    %v1508 = vpop.f32.mrb[0].mxu0
    %v1509 = vadd.f32 0.0, %v1508
    %1510 = vmatprep.mubr.f32.mxu0 0.0
    %1511 = vmatmul.mubr.f32.gmra.mrb[0].mxu0 %v1426
    %v1512 = vpop.f32.mrb[0].mxu0
    %v1513 = vadd.f32 0.0, %v1512
    %v1514 = vpop.f32.mrb[0].mxu0
    %v1515 = vadd.f32 0.0, %v1514
    %1516 = vdwg.mxu0
    %v1517 = vadd.f32 %v1396, %v1495
    %v1518 = vadd.f32 %v1397, %v1497
    %v1519 = vadd.f32 %v1398, %v1501
    %v1520 = vadd.f32 %v1399, %v1503
    %v1521 = vadd.f32 %v1400, %v1507
    %v1522 = vadd.f32 %v1401, %v1509
    %v1523 = vadd.f32 %v1402, %v1513
    %v1524 = vadd.f32 %v1403, %v1515
    %v1525 = vld [vmem:[%s0 + $0x43] sm:$0xff]
    %v1526 = vld [vmem:[%s0 + $0x4b] sm:$0xff]
    %v1527 = vld [vmem:[%s0 + $0x53] sm:$0xff]
    %v1528 = vld [vmem:[%s0 + $0x5b] sm:$0xf]
    %v1529 = vld [vmem:[%s1 + $0x2c0] sm:$0xff]
    %v1530 = vld [vmem:[%s1 + $0x2c8] sm:$0xff]
    %v1531 = vld [vmem:[%s1 + $0x2d0] sm:$0xff]
    %v1532 = vld [vmem:[%s1 + $0x2d8] sm:$0xff]
    %v1533 = vld [vmem:[%s1 + $0x2e0] sm:$0xff]
    %v1534 = vld [vmem:[%s1 + $0x2e8] sm:$0xff]
    %v1535 = vld [vmem:[%s1 + $0x2f0] sm:$0xff]
    %v1536 = vld [vmem:[%s1 + $0x2f8] sm:$0xff]
    %v1538 = vsel %vm233, %v1525, 0
    %v1541 = vsel %vm233, %v1526, 0
    %v1544 = vsel %vm233, %v1527, 0
    %v1547 = vsel %vm233, %v1528, 0
    %1549 = vmatprep.subr.mxu0 %v1530
    %1550 = vmatpush1.msra.mxu0 %v1529
    %1551 = vmatprep.subr.mxu0 %v1532
    %1552 = vmatpush1.msra.mxu0 %v1531
    %1553 = vmatprep.subr.mxu0 %v1534
    %1554 = vmatpush1.msra.mxu0 %v1533
    %1555 = vmatprep.subr.mxu0 %v1536
    %1556 = vmatpush1.msra.mxu0 %v1535
    %1557 = vmatprep.subr.mxu0 0.0
    %1558 = vmatpush1.msra.mxu0 0.0
    %1559 = vmatprep.subr.mxu0 0.0
    %1560 = vmatpush1.msra.mxu0 0.0
    %1561 = vmatprep.subr.mxu0 0.0
    %1562 = vmatpush1.msra.mxu0 0.0
    %1563 = vmatprep.subr.mxu0 0.0
    %1564 = vmatpush1.msra.mxu0 0.0
    %1565 = vmatprep.subr.mxu0 0.0
    %1566 = vmatpush1.msra.mxu0 0.0
    %1567 = vmatprep.subr.mxu0 0.0
    %1568 = vmatpush1.msra.mxu0 0.0
    %1569 = vmatprep.subr.mxu0 0.0
    %1570 = vmatpush1.msra.mxu0 0.0
    %1571 = vmatprep.subr.mxu0 0.0
    %1572 = vmatpush1.msra.mxu0 0.0
    %1573 = vmatprep.subr.mxu0 0.0
    %1574 = vmatpush1.msra.mxu0 0.0
    %1575 = vmatprep.subr.mxu0 0.0
    %1576 = vmatpush1.msra.mxu0 0.0
    %1577 = vmatprep.subr.mxu0 0.0
    %1578 = vmatpush1.msra.mxu0 0.0
    %1579 = vmatprep.subr.mxu0 0.0
    %1580 = vmatpush1.msra.mxu0 0.0
    %1581 = vmatprep.subr.mxu0 0.0
    %1582 = vmatpush1.msra.mxu0 0.0
    %1583 = vmatprep.subr.mxu0 0.0
    %1584 = vmatpush1.msra.mxu0 0.0
    %1585 = vmatprep.subr.mxu0 0.0
    %1586 = vmatpush1.msra.mxu0 0.0
    %1587 = vmatprep.subr.mxu0 0.0
    %1588 = vmatpush1.msra.mxu0 0.0
    %1589 = vmatprep.subr.mxu0 0.0
    %1590 = vmatpush1.msra.mxu0 0.0
    %1591 = vmatprep.subr.mxu0 0.0
    %1592 = vmatpush1.msra.mxu0 0.0
    %1593 = vmatprep.subr.mxu0 0.0
    %1594 = vmatpush1.msra.mxu0 0.0
    %1595 = vmatprep.subr.mxu0 0.0
    %1596 = vmatpush1.msra.mxu0 0.0
    %1597 = vmatprep.subr.mxu0 0.0
    %1598 = vmatpush1.msra.mxu0 0.0
    %1599 = vmatprep.subr.mxu0 0.0
    %1600 = vmatpush1.msra.mxu0 0.0
    %1601 = vmatprep.subr.mxu0 0.0
    %1602 = vmatpush1.msra.mxu0 0.0
    %1603 = vmatprep.subr.mxu0 0.0
    %1604 = vmatpush1.msra.mxu0 0.0
    %1605 = vmatprep.subr.mxu0 0.0
    %1606 = vmatpush1.msra.mxu0 0.0
    %1607 = vmatprep.subr.mxu0 0.0
    %1608 = vmatpush1.msra.mxu0 0.0
    %1609 = vmatprep.subr.mxu0 0.0
    %1610 = vmatpush1.msra.mxu0 0.0
    %1611 = vmatprep.subr.mxu0 0.0
    %1612 = vmatpush1.msra.mxu0 0.0
    %1613 = vmatprep.mubr.f32.mxu0 0.0
    %1614 = vmatmul.mubr.f32.gmra.mrb[0].mxu0 %v1538
    %v1615 = vpop.f32.mrb[0].mxu0
    %v1616 = vadd.f32 0.0, %v1615
    %v1617 = vpop.f32.mrb[0].mxu0
    %v1618 = vadd.f32 0.0, %v1617
    %1619 = vmatprep.mubr.f32.mxu0 0.0
    %1620 = vmatmul.mubr.f32.gmra.mrb[0].mxu0 %v1541
    %v1621 = vpop.f32.mrb[0].mxu0
    %v1622 = vadd.f32 0.0, %v1621
    %v1623 = vpop.f32.mrb[0].mxu0
    %v1624 = vadd.f32 0.0, %v1623
    %1625 = vmatprep.mubr.f32.mxu0 0.0
    %1626 = vmatmul.mubr.f32.gmra.mrb[0].mxu0 %v1544
    %v1627 = vpop.f32.mrb[0].mxu0
    %v1628 = vadd.f32 0.0, %v1627
    %v1629 = vpop.f32.mrb[0].mxu0
    %v1630 = vadd.f32 0.0, %v1629
    %1631 = vmatprep.mubr.f32.mxu0 0.0
    %1632 = vmatmul.mubr.f32.gmra.mrb[0].mxu0 %v1547
    %v1633 = vpop.f32.mrb[0].mxu0
    %v1634 = vadd.f32 0.0, %v1633
    %v1635 = vpop.f32.mrb[0].mxu0
    %v1636 = vadd.f32 0.0, %v1635
    %1637 = vdwg.mxu0
    %v1638 = vadd.f32 %v1517, %v1616
    %v1639 = vadd.f32 %v1518, %v1618
    %v1640 = vadd.f32 %v1519, %v1622
    %v1641 = vadd.f32 %v1520, %v1624
    %v1642 = vadd.f32 %v1521, %v1628
    %v1643 = vadd.f32 %v1522, %v1630
    %v1644 = vadd.f32 %v1523, %v1634
    %v1645 = vadd.f32 %v1524, %v1636
    %v1646 = vld [vmem:[%s0 + $0x4] sm:$0xff]
    %v1647 = vld [vmem:[%s0 + $0xc] sm:$0xff]
    %v1648 = vld [vmem:[%s0 + $0x14] sm:$0xff]
    %v1649 = vld [vmem:[%s0 + $0x1c] sm:$0xf]
    %v1650 = vld [vmem:[%s1 + $0x300] sm:$0xff]
    %v1651 = vld [vmem:[%s1 + $0x308] sm:$0xff]
    %v1652 = vld [vmem:[%s1 + $0x310] sm:$0xff]
    %v1653 = vld [vmem:[%s1 + $0x318] sm:$0xff]
    %v1654 = vld [vmem:[%s1 + $0x320] sm:$0xff]
    %v1655 = vld [vmem:[%s1 + $0x328] sm:$0xff]
    %v1656 = vld [vmem:[%s1 + $0x330] sm:$0xff]
    %v1657 = vld [vmem:[%s1 + $0x338] sm:$0xff]
    %v1659 = vsel %vm233, %v1646, 0
    %v1662 = vsel %vm233, %v1647, 0
    %v1665 = vsel %vm233, %v1648, 0
    %v1668 = vsel %vm233, %v1649, 0
    %1670 = vmatprep.subr.mxu0 %v1651
    %1671 = vmatpush1.msra.mxu0 %v1650
    %1672 = vmatprep.subr.mxu0 %v1653
    %1673 = vmatpush1.msra.mxu0 %v1652
    %1674 = vmatprep.subr.mxu0 %v1655
    %1675 = vmatpush1.msra.mxu0 %v1654
    %1676 = vmatprep.subr.mxu0 %v1657
    %1677 = vmatpush1.msra.mxu0 %v1656
    %1678 = vmatprep.subr.mxu0 0.0
    %1679 = vmatpush1.msra.mxu0 0.0
    %1680 = vmatprep.subr.mxu0 0.0
    %1681 = vmatpush1.msra.mxu0 0.0
    %1682 = vmatprep.subr.mxu0 0.0
    %1683 = vmatpush1.msra.mxu0 0.0
    %1684 = vmatprep.subr.mxu0 0.0
    %1685 = vmatpush1.msra.mxu0 0.0
    %1686 = vmatprep.subr.mxu0 0.0
    %1687 = vmatpush1.msra.mxu0 0.0
    %1688 = vmatprep.subr.mxu0 0.0
    %1689 = vmatpush1.msra.mxu0 0.0
    %1690 = vmatprep.subr.mxu0 0.0
    %1691 = vmatpush1.msra.mxu0 0.0
    %1692 = vmatprep.subr.mxu0 0.0
    %1693 = vmatpush1.msra.mxu0 0.0
    %1694 = vmatprep.subr.mxu0 0.0
    %1695 = vmatpush1.msra.mxu0 0.0
    %1696 = vmatprep.subr.mxu0 0.0
    %1697 = vmatpush1.msra.mxu0 0.0
    %1698 = vmatprep.subr.mxu0 0.0
    %1699 = vmatpush1.msra.mxu0 0.0
    %1700 = vmatprep.subr.mxu0 0.0
    %1701 = vmatpush1.msra.mxu0 0.0
    %1702 = vmatprep.subr.mxu0 0.0
    %1703 = vmatpush1.msra.mxu0 0.0
    %1704 = vmatprep.subr.mxu0 0.0
    %1705 = vmatpush1.msra.mxu0 0.0
    %1706 = vmatprep.subr.mxu0 0.0
    %1707 = vmatpush1.msra.mxu0 0.0
    %1708 = vmatprep.subr.mxu0 0.0
    %1709 = vmatpush1.msra.mxu0 0.0
    %1710 = vmatprep.subr.mxu0 0.0
    %1711 = vmatpush1.msra.mxu0 0.0
    %1712 = vmatprep.subr.mxu0 0.0
    %1713 = vmatpush1.msra.mxu0 0.0
    %1714 = vmatprep.subr.mxu0 0.0
    %1715 = vmatpush1.msra.mxu0 0.0
    %1716 = vmatprep.subr.mxu0 0.0
    %1717 = vmatpush1.msra.mxu0 0.0
    %1718 = vmatprep.subr.mxu0 0.0
    %1719 = vmatpush1.msra.mxu0 0.0
    %1720 = vmatprep.subr.mxu0 0.0
    %1721 = vmatpush1.msra.mxu0 0.0
    %1722 = vmatprep.subr.mxu0 0.0
    %1723 = vmatpush1.msra.mxu0 0.0
    %1724 = vmatprep.subr.mxu0 0.0
    %1725 = vmatpush1.msra.mxu0 0.0
    %1726 = vmatprep.subr.mxu0 0.0
    %1727 = vmatpush1.msra.mxu0 0.0
    %1728 = vmatprep.subr.mxu0 0.0
    %1729 = vmatpush1.msra.mxu0 0.0
    %1730 = vmatprep.subr.mxu0 0.0
    %1731 = vmatpush1.msra.mxu0 0.0
    %1732 = vmatprep.subr.mxu0 0.0
    %1733 = vmatpush1.msra.mxu0 0.0
    %1734 = vmatprep.mubr.f32.mxu0 0.0
    %1735 = vmatmul.mubr.f32.gmra.mrb[0].mxu0 %v1659
    %v1736 = vpop.f32.mrb[0].mxu0
    %v1737 = vadd.f32 0.0, %v1736
    %v1738 = vpop.f32.mrb[0].mxu0
    %v1739 = vadd.f32 0.0, %v1738
    %1740 = vmatprep.mubr.f32.mxu0 0.0
    %1741 = vmatmul.mubr.f32.gmra.mrb[0].mxu0 %v1662
    %v1742 = vpop.f32.mrb[0].mxu0
    %v1743 = vadd.f32 0.0, %v1742
    %v1744 = vpop.f32.mrb[0].mxu0
    %v1745 = vadd.f32 0.0, %v1744
    %1746 = vmatprep.mubr.f32.mxu0 0.0
    %1747 = vmatmul.mubr.f32.gmra.mrb[0].mxu0 %v1665
    %v1748 = vpop.f32.mrb[0].mxu0
    %v1749 = vadd.f32 0.0, %v1748
    %v1750 = vpop.f32.mrb[0].mxu0
    %v1751 = vadd.f32 0.0, %v1750
    %1752 = vmatprep.mubr.f32.mxu0 0.0
    %1753 = vmatmul.mubr.f32.gmra.mrb[0].mxu0 %v1668
    %v1754 = vpop.f32.mrb[0].mxu0
    %v1755 = vadd.f32 0.0, %v1754
    %v1756 = vpop.f32.mrb[0].mxu0
    %v1757 = vadd.f32 0.0, %v1756
    %1758 = vdwg.mxu0
    %v1759 = vadd.f32 %v1638, %v1737
    %v1760 = vadd.f32 %v1639, %v1739
    %v1761 = vadd.f32 %v1640, %v1743
    %v1762 = vadd.f32 %v1641, %v1745
    %v1763 = vadd.f32 %v1642, %v1749
    %v1764 = vadd.f32 %v1643, %v1751
    %v1765 = vadd.f32 %v1644, %v1755
    %v1766 = vadd.f32 %v1645, %v1757
    %v1767 = vld [vmem:[%s0 + $0x24] sm:$0xff]
    %v1768 = vld [vmem:[%s0 + $0x2c] sm:$0xff]
    %v1769 = vld [vmem:[%s0 + $0x34] sm:$0xff]
    %v1770 = vld [vmem:[%s0 + $0x3c] sm:$0xf]
    %v1771 = vld [vmem:[%s1 + $0x340] sm:$0xff]
    %v1772 = vld [vmem:[%s1 + $0x348] sm:$0xff]
    %v1773 = vld [vmem:[%s1 + $0x350] sm:$0xff]
    %v1774 = vld [vmem:[%s1 + $0x358] sm:$0xff]
    %v1775 = vld [vmem:[%s1 + $0x360] sm:$0xff]
    %v1776 = vld [vmem:[%s1 + $0x368] sm:$0xff]
    %v1777 = vld [vmem:[%s1 + $0x370] sm:$0xff]
    %v1778 = vld [vmem:[%s1 + $0x378] sm:$0xff]
    %v1780 = vsel %vm233, %v1767, 0
    %v1783 = vsel %vm233, %v1768, 0
    %v1786 = vsel %vm233, %v1769, 0
    %v1789 = vsel %vm233, %v1770, 0
    %1791 = vmatprep.subr.mxu0 %v1772
    %1792 = vmatpush1.msra.mxu0 %v1771
    %1793 = vmatprep.subr.mxu0 %v1774
    %1794 = vmatpush1.msra.mxu0 %v1773
    %1795 = vmatprep.subr.mxu0 %v1776
    %1796 = vmatpush1.msra.mxu0 %v1775
    %1797 = vmatprep.subr.mxu0 %v1778
    %1798 = vmatpush1.msra.mxu0 %v1777
    %1799 = vmatprep.subr.mxu0 0.0
    %1800 = vmatpush1.msra.mxu0 0.0
    %1801 = vmatprep.subr.mxu0 0.0
    %1802 = vmatpush1.msra.mxu0 0.0
    %1803 = vmatprep.subr.mxu0 0.0
    %1804 = vmatpush1.msra.mxu0 0.0
    %1805 = vmatprep.subr.mxu0 0.0
    %1806 = vmatpush1.msra.mxu0 0.0
    %1807 = vmatprep.subr.mxu0 0.0
    %1808 = vmatpush1.msra.mxu0 0.0
    %1809 = vmatprep.subr.mxu0 0.0
    %1810 = vmatpush1.msra.mxu0 0.0
    %1811 = vmatprep.subr.mxu0 0.0
    %1812 = vmatpush1.msra.mxu0 0.0
    %1813 = vmatprep.subr.mxu0 0.0
    %1814 = vmatpush1.msra.mxu0 0.0
    %1815 = vmatprep.subr.mxu0 0.0
    %1816 = vmatpush1.msra.mxu0 0.0
    %1817 = vmatprep.subr.mxu0 0.0
    %1818 = vmatpush1.msra.mxu0 0.0
    %1819 = vmatprep.subr.mxu0 0.0
    %1820 = vmatpush1.msra.mxu0 0.0
    %1821 = vmatprep.subr.mxu0 0.0
    %1822 = vmatpush1.msra.mxu0 0.0
    %1823 = vmatprep.subr.mxu0 0.0
    %1824 = vmatpush1.msra.mxu0 0.0
    %1825 = vmatprep.subr.mxu0 0.0
    %1826 = vmatpush1.msra.mxu0 0.0
    %1827 = vmatprep.subr.mxu0 0.0
    %1828 = vmatpush1.msra.mxu0 0.0
    %1829 = vmatprep.subr.mxu0 0.0
    %1830 = vmatpush1.msra.mxu0 0.0
    %1831 = vmatprep.subr.mxu0 0.0
    %1832 = vmatpush1.msra.mxu0 0.0
    %1833 = vmatprep.subr.mxu0 0.0
    %1834 = vmatpush1.msra.mxu0 0.0
    %1835 = vmatprep.subr.mxu0 0.0
    %1836 = vmatpush1.msra.mxu0 0.0
    %1837 = vmatprep.subr.mxu0 0.0
    %1838 = vmatpush1.msra.mxu0 0.0
    %1839 = vmatprep.subr.mxu0 0.0
    %1840 = vmatpush1.msra.mxu0 0.0
    %1841 = vmatprep.subr.mxu0 0.0
    %1842 = vmatpush1.msra.mxu0 0.0
    %1843 = vmatprep.subr.mxu0 0.0
    %1844 = vmatpush1.msra.mxu0 0.0
    %1845 = vmatprep.subr.mxu0 0.0
    %1846 = vmatpush1.msra.mxu0 0.0
    %1847 = vmatprep.subr.mxu0 0.0
    %1848 = vmatpush1.msra.mxu0 0.0
    %1849 = vmatprep.subr.mxu0 0.0
    %1850 = vmatpush1.msra.mxu0 0.0
    %1851 = vmatprep.subr.mxu0 0.0
    %1852 = vmatpush1.msra.mxu0 0.0
    %1853 = vmatprep.subr.mxu0 0.0
    %1854 = vmatpush1.msra.mxu0 0.0
    %1855 = vmatprep.mubr.f32.mxu0 0.0
    %1856 = vmatmul.mubr.f32.gmra.mrb[0].mxu0 %v1780
    %v1857 = vpop.f32.mrb[0].mxu0
    %v1858 = vadd.f32 0.0, %v1857
    %v1859 = vpop.f32.mrb[0].mxu0
    %v1860 = vadd.f32 0.0, %v1859
    %1861 = vmatprep.mubr.f32.mxu0 0.0
    %1862 = vmatmul.mubr.f32.gmra.mrb[0].mxu0 %v1783
    %v1863 = vpop.f32.mrb[0].mxu0
    %v1864 = vadd.f32 0.0, %v1863
    %v1865 = vpop.f32.mrb[0].mxu0
    %v1866 = vadd.f32 0.0, %v1865
    %1867 = vmatprep.mubr.f32.mxu0 0.0
    %1868 = vmatmul.mubr.f32.gmra.mrb[0].mxu0 %v1786
    %v1869 = vpop.f32.mrb[0].mxu0
    %v1870 = vadd.f32 0.0, %v1869
    %v1871 = vpop.f32.mrb[0].mxu0
    %v1872 = vadd.f32 0.0, %v1871
    %1873 = vmatprep.mubr.f32.mxu0 0.0
    %1874 = vmatmul.mubr.f32.gmra.mrb[0].mxu0 %v1789
    %v1875 = vpop.f32.mrb[0].mxu0
    %v1876 = vadd.f32 0.0, %v1875
    %v1877 = vpop.f32.mrb[0].mxu0
    %v1878 = vadd.f32 0.0, %v1877
    %1879 = vdwg.mxu0
    %v1880 = vadd.f32 %v1759, %v1858
    %v1881 = vadd.f32 %v1760, %v1860
    %v1882 = vadd.f32 %v1761, %v1864
    %v1883 = vadd.f32 %v1762, %v1866
    %v1884 = vadd.f32 %v1763, %v1870
    %v1885 = vadd.f32 %v1764, %v1872
    %v1886 = vadd.f32 %v1765, %v1876
    %v1887 = vadd.f32 %v1766, %v1878
    %v1888 = vld [vmem:[%s0 + $0x44] sm:$0xff]
    %v1889 = vld [vmem:[%s0 + $0x4c] sm:$0xff]
    %v1890 = vld [vmem:[%s0 + $0x54] sm:$0xff]
    %v1891 = vld [vmem:[%s0 + $0x5c] sm:$0xf]
    %v1892 = vld [vmem:[%s1 + $0x380] sm:$0xff]
    %v1893 = vld [vmem:[%s1 + $0x388] sm:$0xff]
    %v1894 = vld [vmem:[%s1 + $0x390] sm:$0xff]
    %v1895 = vld [vmem:[%s1 + $0x398] sm:$0xff]
    %v1896 = vld [vmem:[%s1 + $0x3a0] sm:$0xff]
    %v1897 = vld [vmem:[%s1 + $0x3a8] sm:$0xff]
    %v1898 = vld [vmem:[%s1 + $0x3b0] sm:$0xff]
    %v1899 = vld [vmem:[%s1 + $0x3b8] sm:$0xff]
    %v1901 = vsel %vm233, %v1888, 0
    %v1904 = vsel %vm233, %v1889, 0
    %v1907 = vsel %vm233, %v1890, 0
    %v1910 = vsel %vm233, %v1891, 0
    %1912 = vmatprep.subr.mxu0 %v1893
    %1913 = vmatpush1.msra.mxu0 %v1892
    %1914 = vmatprep.subr.mxu0 %v1895
    %1915 = vmatpush1.msra.mxu0 %v1894
    %1916 = vmatprep.subr.mxu0 %v1897
    %1917 = vmatpush1.msra.mxu0 %v1896
    %1918 = vmatprep.subr.mxu0 %v1899
    %1919 = vmatpush1.msra.mxu0 %v1898
    %1920 = vmatprep.subr.mxu0 0.0
    %1921 = vmatpush1.msra.mxu0 0.0
    %1922 = vmatprep.subr.mxu0 0.0
    %1923 = vmatpush1.msra.mxu0 0.0
    %1924 = vmatprep.subr.mxu0 0.0
    %1925 = vmatpush1.msra.mxu0 0.0
    %1926 = vmatprep.subr.mxu0 0.0
    %1927 = vmatpush1.msra.mxu0 0.0
    %1928 = vmatprep.subr.mxu0 0.0
    %1929 = vmatpush1.msra.mxu0 0.0
    %1930 = vmatprep.subr.mxu0 0.0
    %1931 = vmatpush1.msra.mxu0 0.0
    %1932 = vmatprep.subr.mxu0 0.0
    %1933 = vmatpush1.msra.mxu0 0.0
    %1934 = vmatprep.subr.mxu0 0.0
    %1935 = vmatpush1.msra.mxu0 0.0
    %1936 = vmatprep.subr.mxu0 0.0
    %1937 = vmatpush1.msra.mxu0 0.0
    %1938 = vmatprep.subr.mxu0 0.0
    %1939 = vmatpush1.msra.mxu0 0.0
    %1940 = vmatprep.subr.mxu0 0.0
    %1941 = vmatpush1.msra.mxu0 0.0
    %1942 = vmatprep.subr.mxu0 0.0
    %1943 = vmatpush1.msra.mxu0 0.0
    %1944 = vmatprep.subr.mxu0 0.0
    %1945 = vmatpush1.msra.mxu0 0.0
    %1946 = vmatprep.subr.mxu0 0.0
    %1947 = vmatpush1.msra.mxu0 0.0
    %1948 = vmatprep.subr.mxu0 0.0
    %1949 = vmatpush1.msra.mxu0 0.0
    %1950 = vmatprep.subr.mxu0 0.0
    %1951 = vmatpush1.msra.mxu0 0.0
    %1952 = vmatprep.subr.mxu0 0.0
    %1953 = vmatpush1.msra.mxu0 0.0
    %1954 = vmatprep.subr.mxu0 0.0
    %1955 = vmatpush1.msra.mxu0 0.0
    %1956 = vmatprep.subr.mxu0 0.0
    %1957 = vmatpush1.msra.mxu0 0.0
    %1958 = vmatprep.subr.mxu0 0.0
    %1959 = vmatpush1.msra.mxu0 0.0
    %1960 = vmatprep.subr.mxu0 0.0
    %1961 = vmatpush1.msra.mxu0 0.0
    %1962 = vmatprep.subr.mxu0 0.0
    %1963 = vmatpush1.msra.mxu0 0.0
    %1964 = vmatprep.subr.mxu0 0.0
    %1965 = vmatpush1.msra.mxu0 0.0
    %1966 = vmatprep.subr.mxu0 0.0
    %1967 = vmatpush1.msra.mxu0 0.0
    %1968 = vmatprep.subr.mxu0 0.0
    %1969 = vmatpush1.msra.mxu0 0.0
    %1970 = vmatprep.subr.mxu0 0.0
    %1971 = vmatpush1.msra.mxu0 0.0
    %1972 = vmatprep.subr.mxu0 0.0
    %1973 = vmatpush1.msra.mxu0 0.0
    %1974 = vmatprep.subr.mxu0 0.0
    %1975 = vmatpush1.msra.mxu0 0.0
    %1976 = vmatprep.mubr.f32.mxu0 0.0
    %1977 = vmatmul.mubr.f32.gmra.mrb[0].mxu0 %v1901
    %v1978 = vpop.f32.mrb[0].mxu0
    %v1979 = vadd.f32 0.0, %v1978
    %v1980 = vpop.f32.mrb[0].mxu0
    %v1981 = vadd.f32 0.0, %v1980
    %1982 = vmatprep.mubr.f32.mxu0 0.0
    %1983 = vmatmul.mubr.f32.gmra.mrb[0].mxu0 %v1904
    %v1984 = vpop.f32.mrb[0].mxu0
    %v1985 = vadd.f32 0.0, %v1984
    %v1986 = vpop.f32.mrb[0].mxu0
    %v1987 = vadd.f32 0.0, %v1986
    %1988 = vmatprep.mubr.f32.mxu0 0.0
    %1989 = vmatmul.mubr.f32.gmra.mrb[0].mxu0 %v1907
    %v1990 = vpop.f32.mrb[0].mxu0
    %v1991 = vadd.f32 0.0, %v1990
    %v1992 = vpop.f32.mrb[0].mxu0
    %v1993 = vadd.f32 0.0, %v1992
    %1994 = vmatprep.mubr.f32.mxu0 0.0
    %1995 = vmatmul.mubr.f32.gmra.mrb[0].mxu0 %v1910
    %v1996 = vpop.f32.mrb[0].mxu0
    %v1997 = vadd.f32 0.0, %v1996
    %v1998 = vpop.f32.mrb[0].mxu0
    %v1999 = vadd.f32 0.0, %v1998
    %2000 = vdwg.mxu0
    %v2001 = vadd.f32 %v1880, %v1979
    %v2002 = vadd.f32 %v1881, %v1981
    %v2003 = vadd.f32 %v1882, %v1985
    %v2004 = vadd.f32 %v1883, %v1987
    %v2005 = vadd.f32 %v1884, %v1991
    %v2006 = vadd.f32 %v1885, %v1993
    %v2007 = vadd.f32 %v1886, %v1997
    %v2008 = vadd.f32 %v1887, %v1999
    %v2010 = vlaneseq
    %v2011 = vshrl.u32 %v2010, 7
    %v2012 = vsub.s32 0, %v2011
    %v2013 = vrot.slane %v207, %v2012
    %v2014 = vlaneseq
    %v2015 = vshrl.u32 %v2014, 7
    %v2016 = vsub.s32 1, %v2015
    %v2017 = vrot.slane %v207, %v2016
    %v2020 = vadd.f32 %v2001, %v2013
    %v2021 = vadd.f32 %v2002, %v2017
    %v2022 = vadd.f32 %v2003, %v2013
    %v2023 = vadd.f32 %v2004, %v2017
    %v2024 = vadd.f32 %v2005, %v2013
    %v2025 = vadd.f32 %v2006, %v2017
    %v2026 = vadd.f32 %v2007, %v2013
    %v2027 = vadd.f32 %v2008, %v2017
    %v2028 = vmax.f32 %v2020, 0.0
    %v2029 = vmax.f32 %v2021, 0.0
    %v2030 = vmax.f32 %v2022, 0.0
    %v2031 = vmax.f32 %v2023, 0.0
    %v2032 = vmax.f32 %v2024, 0.0
    %v2033 = vmax.f32 %v2025, 0.0
    %v2034 = vmax.f32 %v2026, 0.0
    %v2035 = vmax.f32 %v2027, 0.0
    %vm2036 = vcmask 228352
    %v2038 = vsel %vm2036, %v50, 0
    %v2041 = vsel %vm2036, %v51, 0
    %vm2043 = vcmask 1043456
    %v2045 = vsel %vm2043, %v2034, 0
    %v2048 = vsel %vm2043, %v2035, 0
    %2050 = vmatprep.subr.mxu0 %v2029
    %2051 = vmatpush1.msra.mxu0 %v2028
    %2052 = vmatprep.subr.mxu0 %v2031
    %2053 = vmatpush1.msra.mxu0 %v2030
    %2054 = vmatprep.subr.mxu0 %v2033
    %2055 = vmatpush1.msra.mxu0 %v2032
    %2056 = vmatprep.subr.mxu0 %v2048
    %2057 = vmatpush1.msra.mxu0 %v2045
    %2058 = vmatprep.subr.mxu0 0.0
    %2059 = vmatpush1.msra.mxu0 0.0
    %2060 = vmatprep.subr.mxu0 0.0
    %2061 = vmatpush1.msra.mxu0 0.0
    %2062 = vmatprep.subr.mxu0 0.0
    %2063 = vmatpush1.msra.mxu0 0.0
    %2064 = vmatprep.subr.mxu0 0.0
    %2065 = vmatpush1.msra.mxu0 0.0
    %2066 = vmatprep.subr.mxu0 0.0
    %2067 = vmatpush1.msra.mxu0 0.0
    %2068 = vmatprep.subr.mxu0 0.0
    %2069 = vmatpush1.msra.mxu0 0.0
    %2070 = vmatprep.subr.mxu0 0.0
    %2071 = vmatpush1.msra.mxu0 0.0
    %2072 = vmatprep.subr.mxu0 0.0
    %2073 = vmatpush1.msra.mxu0 0.0
    %2074 = vmatprep.subr.mxu0 0.0
    %2075 = vmatpush1.msra.mxu0 0.0
    %2076 = vmatprep.subr.mxu0 0.0
    %2077 = vmatpush1.msra.mxu0 0.0
    %2078 = vmatprep.subr.mxu0 0.0
    %2079 = vmatpush1.msra.mxu0 0.0
    %2080 = vmatprep.subr.mxu0 0.0
    %2081 = vmatpush1.msra.mxu0 0.0
    %2082 = vmatprep.subr.mxu0 0.0
    %2083 = vmatpush1.msra.mxu0 0.0
    %2084 = vmatprep.subr.mxu0 0.0
    %2085 = vmatpush1.msra.mxu0 0.0
    %2086 = vmatprep.subr.mxu0 0.0
    %2087 = vmatpush1.msra.mxu0 0.0
    %2088 = vmatprep.subr.mxu0 0.0
    %2089 = vmatpush1.msra.mxu0 0.0
    %2090 = vmatprep.subr.mxu0 0.0
    %2091 = vmatpush1.msra.mxu0 0.0
    %2092 = vmatprep.subr.mxu0 0.0
    %2093 = vmatpush1.msra.mxu0 0.0
    %2094 = vmatprep.subr.mxu0 0.0
    %2095 = vmatpush1.msra.mxu0 0.0
    %2096 = vmatprep.subr.mxu0 0.0
    %2097 = vmatpush1.msra.mxu0 0.0
    %2098 = vmatprep.subr.mxu0 0.0
    %2099 = vmatpush1.msra.mxu0 0.0
    %2100 = vmatprep.subr.mxu0 0.0
    %2101 = vmatpush1.msra.mxu0 0.0
    %2102 = vmatprep.subr.mxu0 0.0
    %2103 = vmatpush1.msra.mxu0 0.0
    %2104 = vmatprep.subr.mxu0 0.0
    %2105 = vmatpush1.msra.mxu0 0.0
    %2106 = vmatprep.subr.mxu0 0.0
    %2107 = vmatpush1.msra.mxu0 0.0
    %2108 = vmatprep.subr.mxu0 0.0
    %2109 = vmatpush1.msra.mxu0 0.0
    %2110 = vmatprep.subr.mxu0 0.0
    %2111 = vmatpush1.msra.mxu0 0.0
    %2112 = vmatprep.subr.mxu0 0.0
    %2113 = vmatpush1.msra.mxu0 0.0
    %2114 = vmatprep.mubr.f32.mxu0 0.0
    %2115 = vmatmul.mubr.f32.gmra.mrb[0].mxu0 %v2038
    %v2116 = vpop.f32.mrb[0].mxu0
    %v2117 = vadd.f32 0.0, %v2116
    %v2118 = vpop.f32.mrb[0].mxu0
    %v2119 = vadd.f32 0.0, %v2118
    %2120 = vmatprep.mubr.f32.mxu0 0.0
    %2121 = vmatmul.mubr.f32.gmra.mrb[0].mxu0 %v2041
    %v2122 = vpop.f32.mrb[0].mxu0
    %v2123 = vadd.f32 0.0, %v2122
    %v2124 = vpop.f32.mrb[0].mxu0
    %v2125 = vadd.f32 0.0, %v2124
    %2126 = vdwg.mxu0
    %v2128 = vsel %vm2036, %v58, 0
    %v2131 = vsel %vm2036, %v59, 0
    %2133 = vmatprep.subr.mxu0 %v2029
    %2134 = vmatpush1.msra.mxu0 %v2028
    %2135 = vmatprep.subr.mxu0 %v2031
    %2136 = vmatpush1.msra.mxu0 %v2030
    %2137 = vmatprep.subr.mxu0 %v2033
    %2138 = vmatpush1.msra.mxu0 %v2032
    %2139 = vmatprep.subr.mxu0 %v2048
    %2140 = vmatpush1.msra.mxu0 %v2045
    %2141 = vmatprep.subr.mxu0 0.0
    %2142 = vmatpush1.msra.mxu0 0.0
    %2143 = vmatprep.subr.mxu0 0.0
    %2144 = vmatpush1.msra.mxu0 0.0
    %2145 = vmatprep.subr.mxu0 0.0
    %2146 = vmatpush1.msra.mxu0 0.0
    %2147 = vmatprep.subr.mxu0 0.0
    %2148 = vmatpush1.msra.mxu0 0.0
    %2149 = vmatprep.subr.mxu0 0.0
    %2150 = vmatpush1.msra.mxu0 0.0
    %2151 = vmatprep.subr.mxu0 0.0
    %2152 = vmatpush1.msra.mxu0 0.0
    %2153 = vmatprep.subr.mxu0 0.0
    %2154 = vmatpush1.msra.mxu0 0.0
    %2155 = vmatprep.subr.mxu0 0.0
    %2156 = vmatpush1.msra.mxu0 0.0
    %2157 = vmatprep.subr.mxu0 0.0
    %2158 = vmatpush1.msra.mxu0 0.0
    %2159 = vmatprep.subr.mxu0 0.0
    %2160 = vmatpush1.msra.mxu0 0.0
    %2161 = vmatprep.subr.mxu0 0.0
    %2162 = vmatpush1.msra.mxu0 0.0
    %2163 = vmatprep.subr.mxu0 0.0
    %2164 = vmatpush1.msra.mxu0 0.0
    %2165 = vmatprep.subr.mxu0 0.0
    %2166 = vmatpush1.msra.mxu0 0.0
    %2167 = vmatprep.subr.mxu0 0.0
    %2168 = vmatpush1.msra.mxu0 0.0
    %2169 = vmatprep.subr.mxu0 0.0
    %2170 = vmatpush1.msra.mxu0 0.0
    %2171 = vmatprep.subr.mxu0 0.0
    %2172 = vmatpush1.msra.mxu0 0.0
    %2173 = vmatprep.subr.mxu0 0.0
    %2174 = vmatpush1.msra.mxu0 0.0
    %2175 = vmatprep.subr.mxu0 0.0
    %2176 = vmatpush1.msra.mxu0 0.0
    %2177 = vmatprep.subr.mxu0 0.0
    %2178 = vmatpush1.msra.mxu0 0.0
    %2179 = vmatprep.subr.mxu0 0.0
    %2180 = vmatpush1.msra.mxu0 0.0
    %2181 = vmatprep.subr.mxu0 0.0
    %2182 = vmatpush1.msra.mxu0 0.0
    %2183 = vmatprep.subr.mxu0 0.0
    %2184 = vmatpush1.msra.mxu0 0.0
    %2185 = vmatprep.subr.mxu0 0.0
    %2186 = vmatpush1.msra.mxu0 0.0
    %2187 = vmatprep.subr.mxu0 0.0
    %2188 = vmatpush1.msra.mxu0 0.0
    %2189 = vmatprep.subr.mxu0 0.0
    %2190 = vmatpush1.msra.mxu0 0.0
    %2191 = vmatprep.subr.mxu0 0.0
    %2192 = vmatpush1.msra.mxu0 0.0
    %2193 = vmatprep.subr.mxu0 0.0
    %2194 = vmatpush1.msra.mxu0 0.0
    %2195 = vmatprep.subr.mxu0 0.0
    %2196 = vmatpush1.msra.mxu0 0.0
    %2197 = vmatprep.mubr.f32.mxu0 0.0
    %2198 = vmatmul.mubr.f32.gmra.mrb[0].mxu0 %v2128
    %v2199 = vpop.f32.mrb[0].mxu0
    %v2200 = vadd.f32 0.0, %v2199
    %v2201 = vpop.f32.mrb[0].mxu0
    %v2202 = vadd.f32 0.0, %v2201
    %2203 = vmatprep.mubr.f32.mxu0 0.0
    %2204 = vmatmul.mubr.f32.gmra.mrb[0].mxu0 %v2131
    %v2205 = vpop.f32.mrb[0].mxu0
    %v2206 = vadd.f32 0.0, %v2205
    %v2207 = vpop.f32.mrb[0].mxu0
    %v2208 = vadd.f32 0.0, %v2207
    %2209 = vdwg.mxu0
    %v2210 = vmax.f32 %v2117, %v2200
    %v2211 = vmax.f32 %v2119, %v2202
    %v2212 = vmax.f32 %v2123, %v2206
    %v2213 = vmax.f32 %v2125, %v2208
    %vm2214 = vcmask 326656
    %v2216 = vsel %vm2214, %v2211, 0
    %v2219 = vsel %vm2214, %v2213, 0
    %2221 = vmatprep.subr.mxu0 0.0
    %2222 = vmatpush1.msra.mxu0 %v122
    %2223 = vmatprep.subr.mxu0 0.0
    %2224 = vmatpush1.msra.mxu0 %v123
    %2225 = vmatprep.subr.mxu0 0.0
    %2226 = vmatpush1.msra.mxu0 %v124
    %2227 = vmatprep.subr.mxu0 0.0
    %2228 = vmatpush1.msra.mxu0 %v125
    %2229 = vmatprep.subr.mxu0 0.0
    %2230 = vmatpush1.msra.mxu0 %v126
    %2231 = vmatprep.subr.mxu0 0.0
    %2232 = vmatpush1.msra.mxu0 %v127
    %2233 = vmatprep.subr.mxu0 0.0
    %2234 = vmatpush1.msra.mxu0 %v128
    %2235 = vmatprep.subr.mxu0 0.0
    %2236 = vmatpush1.msra.mxu0 %v129
    %2237 = vmatprep.subr.mxu0 0.0
    %2238 = vmatpush1.msra.mxu0 %v130
    %2239 = vmatprep.subr.mxu0 0.0
    %2240 = vmatpush1.msra.mxu0 %v131
    %2241 = vmatprep.subr.mxu0 0.0
    %2242 = vmatpush1.msra.mxu0 %v132
    %2243 = vmatprep.subr.mxu0 0.0
    %2244 = vmatpush1.msra.mxu0 %v133
    %2245 = vmatprep.subr.mxu0 0.0
    %2246 = vmatpush1.msra.mxu0 %v134
    %2247 = vmatprep.subr.mxu0 0.0
    %2248 = vmatpush1.msra.mxu0 %v135
    %2249 = vmatprep.subr.mxu0 0.0
    %2250 = vmatpush1.msra.mxu0 %v136
    %2251 = vmatprep.subr.mxu0 0.0
    %2252 = vmatpush1.msra.mxu0 %v137
    %2253 = vmatprep.subr.mxu0 0.0
    %2254 = vmatpush1.msra.mxu0 %v138
    %2255 = vmatprep.subr.mxu0 0.0
    %2256 = vmatpush1.msra.mxu0 %v139
    %2257 = vmatprep.subr.mxu0 0.0
    %2258 = vmatpush1.msra.mxu0 %v140
    %2259 = vmatprep.subr.mxu0 0.0
    %2260 = vmatpush1.msra.mxu0 %v141
    %2261 = vmatprep.subr.mxu0 0.0
    %2262 = vmatpush1.msra.mxu0 %v142
    %2263 = vmatprep.subr.mxu0 0.0
    %2264 = vmatpush1.msra.mxu0 0.0
    %2265 = vmatprep.subr.mxu0 0.0
    %2266 = vmatpush1.msra.mxu0 0.0
    %2267 = vmatprep.subr.mxu0 0.0
    %2268 = vmatpush1.msra.mxu0 0.0
    %2269 = vmatprep.subr.mxu0 0.0
    %2270 = vmatpush1.msra.mxu0 0.0
    %2271 = vmatprep.subr.mxu0 0.0
    %2272 = vmatpush1.msra.mxu0 0.0
    %2273 = vmatprep.subr.mxu0 0.0
    %2274 = vmatpush1.msra.mxu0 0.0
    %2275 = vmatprep.subr.mxu0 0.0
    %2276 = vmatpush1.msra.mxu0 0.0
    %2277 = vmatprep.subr.mxu0 0.0
    %2278 = vmatpush1.msra.mxu0 0.0
    %2279 = vmatprep.subr.mxu0 0.0
    %2280 = vmatpush1.msra.mxu0 0.0
    %2281 = vmatprep.subr.mxu0 0.0
    %2282 = vmatpush1.msra.mxu0 0.0
    %2283 = vmatprep.subr.mxu0 0.0
    %2284 = vmatpush1.msra.mxu0 0.0
    %2285 = vmatprep.mubr.f32.mxu0 %v2216
    %2286 = vmatmul.mubr.f32.gmra.mrb[0].mxu0 %v2210
    %v2287 = vpop.f32.mrb[0].mxu0
    %v2288 = vadd.f32 0.0, %v2287
    %v2289 = vpop.f32.mrb[0].mxu0
    %2290 = vmatprep.mubr.f32.mxu0 %v2219
    %2291 = vmatmul.mubr.f32.gmra.mrb[0].mxu0 %v2212
    %v2292 = vpop.f32.mrb[0].mxu0
    %v2293 = vadd.f32 0.0, %v2292
    %v2294 = vpop.f32.mrb[0].mxu0
    %2295 = vdwg.mxu0
    %2296 = vmatprep.subr.mxu0 0.0
    %2297 = vmatpush1.msra.mxu0 %v186
    %2298 = vmatprep.subr.mxu0 0.0
    %2299 = vmatpush1.msra.mxu0 %v187
    %2300 = vmatprep.subr.mxu0 0.0
    %2301 = vmatpush1.msra.mxu0 %v188
    %2302 = vmatprep.subr.mxu0 0.0
    %2303 = vmatpush1.msra.mxu0 %v189
    %2304 = vmatprep.subr.mxu0 0.0
    %2305 = vmatpush1.msra.mxu0 %v190
    %2306 = vmatprep.subr.mxu0 0.0
    %2307 = vmatpush1.msra.mxu0 %v191
    %2308 = vmatprep.subr.mxu0 0.0
    %2309 = vmatpush1.msra.mxu0 %v192
    %2310 = vmatprep.subr.mxu0 0.0
    %2311 = vmatpush1.msra.mxu0 %v193
    %2312 = vmatprep.subr.mxu0 0.0
    %2313 = vmatpush1.msra.mxu0 %v194
    %2314 = vmatprep.subr.mxu0 0.0
    %2315 = vmatpush1.msra.mxu0 %v195
    %2316 = vmatprep.subr.mxu0 0.0
    %2317 = vmatpush1.msra.mxu0 %v196
    %2318 = vmatprep.subr.mxu0 0.0
    %2319 = vmatpush1.msra.mxu0 %v197
    %2320 = vmatprep.subr.mxu0 0.0
    %2321 = vmatpush1.msra.mxu0 %v198
    %2322 = vmatprep.subr.mxu0 0.0
    %2323 = vmatpush1.msra.mxu0 %v199
    %2324 = vmatprep.subr.mxu0 0.0
    %2325 = vmatpush1.msra.mxu0 %v200
    %2326 = vmatprep.subr.mxu0 0.0
    %2327 = vmatpush1.msra.mxu0 %v201
    %2328 = vmatprep.subr.mxu0 0.0
    %2329 = vmatpush1.msra.mxu0 %v202
    %2330 = vmatprep.subr.mxu0 0.0
    %2331 = vmatpush1.msra.mxu0 %v203
    %2332 = vmatprep.subr.mxu0 0.0
    %2333 = vmatpush1.msra.mxu0 %v204
    %2334 = vmatprep.subr.mxu0 0.0
    %2335 = vmatpush1.msra.mxu0 %v205
    %2336 = vmatprep.subr.mxu0 0.0
    %2337 = vmatpush1.msra.mxu0 %v206
    %2338 = vmatprep.subr.mxu0 0.0
    %2339 = vmatpush1.msra.mxu0 0.0
    %2340 = vmatprep.subr.mxu0 0.0
    %2341 = vmatpush1.msra.mxu0 0.0
    %2342 = vmatprep.subr.mxu0 0.0
    %2343 = vmatpush1.msra.mxu0 0.0
    %2344 = vmatprep.subr.mxu0 0.0
    %2345 = vmatpush1.msra.mxu0 0.0
    %2346 = vmatprep.subr.mxu0 0.0
    %2347 = vmatpush1.msra.mxu0 0.0
    %2348 = vmatprep.subr.mxu0 0.0
    %2349 = vmatpush1.msra.mxu0 0.0
    %2350 = vmatprep.subr.mxu0 0.0
    %2351 = vmatpush1.msra.mxu0 0.0
    %2352 = vmatprep.subr.mxu0 0.0
    %2353 = vmatpush1.msra.mxu0 0.0
    %2354 = vmatprep.subr.mxu0 0.0
    %2355 = vmatpush1.msra.mxu0 0.0
    %2356 = vmatprep.subr.mxu0 0.0
    %2357 = vmatpush1.msra.mxu0 0.0
    %2358 = vmatprep.subr.mxu0 0.0
    %2359 = vmatpush1.msra.mxu0 0.0
    %2360 = vmatprep.mubr.f32.mxu0 %v2216
    %2361 = vmatmul.mubr.f32.gmra.mrb[0].mxu0 %v2210
    %v2362 = vpop.f32.mrb[0].mxu0
    %v2363 = vadd.f32 0.0, %v2362
    %v2364 = vpop.f32.mrb[0].mxu0
    %2365 = vmatprep.mubr.f32.mxu0 %v2219
    %2366 = vmatmul.mubr.f32.gmra.mrb[0].mxu0 %v2212
    %v2367 = vpop.f32.mrb[0].mxu0
    %v2368 = vadd.f32 0.0, %v2367
    %v2369 = vpop.f32.mrb[0].mxu0
    %2370 = vdwg.mxu0
    %v2371 = vmax.f32 %v2288, %v2363
    %v2372 = vmax.f32 %v2293, %v2368
    %v2373 = vld [vmem:[%s3] sm:$0xff]
    %v2374 = vld [vmem:[%s3 + $0x8] sm:$0xff]
    %v2375 = vld [vmem:[%s3 + $0x10] sm:$0xff]
    %v2376 = vld [vmem:[%s3 + $0x18] sm:$0xff]
    %v2377 = vld [vmem:[%s3 + $0x20] sm:$0xff]
    %v2378 = vld [vmem:[%s3 + $0x28] sm:$0xff]
    %v2379 = vld [vmem:[%s3 + $0x30] sm:$0xff]
    %v2380 = vld [vmem:[%s3 + $0x38] sm:$0xff]
    %v2381 = vld [vmem:[%s3 + $0x40] sm:$0xff]
    %v2382 = vld [vmem:[%s3 + $0x48] sm:$0xff]
    %v2383 = vld [vmem:[%s3 + $0x50] sm:$0xff]
    %v2384 = vld [vmem:[%s3 + $0x58] sm:$0xff]
    %v2385 = vld [vmem:[%s3 + $0x60] sm:$0xff]
    %v2386 = vld [vmem:[%s3 + $0x68] sm:$0xff]
    %v2387 = vld [vmem:[%s3 + $0x70] sm:$0xff]
    %v2388 = vld [vmem:[%s3 + $0x78] sm:$0xff]
    %v2389 = vld [vmem:[%s3 + $0x80] sm:$0xff]
    %v2390 = vld [vmem:[%s3 + $0x88] sm:$0xff]
    %v2391 = vld [vmem:[%s3 + $0x90] sm:$0xff]
    %v2392 = vld [vmem:[%s3 + $0x98] sm:$0xff]
    %v2393 = vld [vmem:[%s3 + $0xa0] sm:$0xf]
    %v2394 = vld [vmem:[%s3 + $0xa8] sm:$0xf]
    %v2395 = vld [vmem:[%s3 + $0xa0] sm:$0xf0]
    %v2396 = vld [vmem:[%s3 + $0xa8] sm:$0xf0]
    %v2397 = vld [vmem:[%s3 + $0xb0] sm:$0xff]
    %v2398 = vld [vmem:[%s3 + $0xb8] sm:$0xff]
    %v2399 = vld [vmem:[%s3 + $0xc0] sm:$0xff]
    %v2400 = vld [vmem:[%s3 + $0xc8] sm:$0xff]
    %v2401 = vld [vmem:[%s3 + $0xd0] sm:$0xff]
    %v2402 = vld [vmem:[%s3 + $0xd8] sm:$0xff]
    %v2403 = vld [vmem:[%s3 + $0xe0] sm:$0xff]
    %v2404 = vld [vmem:[%s3 + $0xe8] sm:$0xff]
    %v2405 = vld [vmem:[%s3 + $0xf0] sm:$0xff]
    %v2406 = vld [vmem:[%s3 + $0xf8] sm:$0xff]
    %v2407 = vld [vmem:[%s3 + $0x100] sm:$0xff]
    %v2408 = vld [vmem:[%s3 + $0x108] sm:$0xff]
    %v2409 = vld [vmem:[%s3 + $0x110] sm:$0xff]
    %v2410 = vld [vmem:[%s3 + $0x118] sm:$0xff]
    %v2411 = vld [vmem:[%s3 + $0x120] sm:$0xff]
    %v2412 = vld [vmem:[%s3 + $0x128] sm:$0xff]
    %v2413 = vld [vmem:[%s3 + $0x130] sm:$0xff]
    %v2414 = vld [vmem:[%s3 + $0x138] sm:$0xff]
    %v2415 = vld [vmem:[%s3 + $0x140] sm:$0xff]
    %v2416 = vld [vmem:[%s3 + $0x148] sm:$0xff]
    %vm2419 = vcmask 1046528
    %v2420 = vrot.slane %v2371, 1
    %v2421 = vrot.slane %v2372, 1
    %v2422 = vsel %vm2419, %v2420, %v2421
    %v2445 = vrot.slane %v2395, 4
    %v2446 = vrot.slane %v2397, 4
    %v2447 = vsel %vm2043, %v2445, %v2446
    %v2448 = vrot.slane %v2396, 4
    %v2449 = vrot.slane %v2398, 4
    %v2450 = vsel %vm2043, %v2448, %v2449
    %v2451 = vrot.slane %v2399, 4
    %v2452 = vsel %vm2043, %v2446, %v2451
    %v2453 = vrot.slane %v2400, 4
    %v2454 = vsel %vm2043, %v2449, %v2453
    %v2455 = vrot.slane %v2401, 4
    %v2456 = vsel %vm2043, %v2451, %v2455
    %v2457 = vrot.slane %v2402, 4
    %v2458 = vsel %vm2043, %v2453, %v2457
    %v2459 = vrot.slane %v2403, 4
    %v2460 = vsel %vm2043, %v2455, %v2459
    %v2461 = vrot.slane %v2404, 4
    %v2462 = vsel %vm2043, %v2457, %v2461
    %v2463 = vrot.slane %v2405, 4
    %v2464 = vsel %vm2043, %v2459, %v2463
    %v2465 = vrot.slane %v2406, 4
    %v2466 = vsel %vm2043, %v2461, %v2465
    %v2467 = vrot.slane %v2407, 4
    %v2468 = vsel %vm2043, %v2463, %v2467
    %v2469 = vrot.slane %v2408, 4
    %v2470 = vsel %vm2043, %v2465, %v2469
    %v2471 = vrot.slane %v2409, 4
    %v2472 = vsel %vm2043, %v2467, %v2471
    %v2473 = vrot.slane %v2410, 4
    %v2474 = vsel %vm2043, %v2469, %v2473
    %v2475 = vrot.slane %v2411, 4
    %v2476 = vsel %vm2043, %v2471, %v2475
    %v2477 = vrot.slane %v2412, 4
    %v2478 = vsel %vm2043, %v2473, %v2477
    %v2479 = vrot.slane %v2413, 4
    %v2480 = vsel %vm2043, %v2475, %v2479
    %v2481 = vrot.slane %v2414, 4
    %v2482 = vsel %vm2043, %v2477, %v2481
    %v2483 = vrot.slane %v2415, 4
    %v2484 = vsel %vm2043, %v2479, %v2483
    %v2485 = vrot.slane %v2416, 4
    %v2486 = vsel %vm2043, %v2481, %v2485
    %vm2507 = vcmask 687104
    %v2508 = vsel %vm2507, %v2422, 0
    %v2510 = vsel %vm2507, %v2421, 0
    %v2512 = vsel %vm2043, %v2483, 0
    %v2514 = vsel %vm2043, %v2485, 0
    %2516 = vmatprep.subr.mxu0 %v2450
    %2517 = vmatpush1.msra.mxu0 %v2447
    %2518 = vmatprep.subr.mxu0 %v2454
    %2519 = vmatpush1.msra.mxu0 %v2452
    %2520 = vmatprep.subr.mxu0 %v2458
    %2521 = vmatpush1.msra.mxu0 %v2456
    %2522 = vmatprep.subr.mxu0 %v2462
    %2523 = vmatpush1.msra.mxu0 %v2460
    %2524 = vmatprep.subr.mxu0 %v2466
    %2525 = vmatpush1.msra.mxu0 %v2464
    %2526 = vmatprep.subr.mxu0 %v2470
    %2527 = vmatpush1.msra.mxu0 %v2468
    %2528 = vmatprep.subr.mxu0 %v2474
    %2529 = vmatpush1.msra.mxu0 %v2472
    %2530 = vmatprep.subr.mxu0 %v2478
    %2531 = vmatpush1.msra.mxu0 %v2476
    %2532 = vmatprep.subr.mxu0 %v2482
    %2533 = vmatpush1.msra.mxu0 %v2480
    %2534 = vmatprep.subr.mxu0 %v2486
    %2535 = vmatpush1.msra.mxu0 %v2484
    %2536 = vmatprep.subr.mxu0 %v2514
    %2537 = vmatpush1.msra.mxu0 %v2512
    %2538 = vmatprep.subr.mxu0 0.0
    %2539 = vmatpush1.msra.mxu0 0.0
    %2540 = vmatprep.subr.mxu0 0.0
    %2541 = vmatpush1.msra.mxu0 0.0
    %2542 = vmatprep.subr.mxu0 0.0
    %2543 = vmatpush1.msra.mxu0 0.0
    %2544 = vmatprep.subr.mxu0 0.0
    %2545 = vmatpush1.msra.mxu0 0.0
    %2546 = vmatprep.subr.mxu0 0.0
    %2547 = vmatpush1.msra.mxu0 0.0
    %2548 = vmatprep.subr.mxu0 0.0
    %2549 = vmatpush1.msra.mxu0 0.0
    %2550 = vmatprep.subr.mxu0 0.0
    %2551 = vmatpush1.msra.mxu0 0.0
    %2552 = vmatprep.subr.mxu0 0.0
    %2553 = vmatpush1.msra.mxu0 0.0
    %2554 = vmatprep.subr.mxu0 0.0
    %2555 = vmatpush1.msra.mxu0 0.0
    %2556 = vmatprep.subr.mxu0 0.0
    %2557 = vmatpush1.msra.mxu0 0.0
    %2558 = vmatprep.subr.mxu0 0.0
    %2559 = vmatpush1.msra.mxu0 0.0
    %2560 = vmatprep.subr.mxu0 0.0
    %2561 = vmatpush1.msra.mxu0 0.0
    %2562 = vmatprep.subr.mxu0 0.0
    %2563 = vmatpush1.msra.mxu0 0.0
    %2564 = vmatprep.subr.mxu0 0.0
    %2565 = vmatpush1.msra.mxu0 0.0
    %2566 = vmatprep.subr.mxu0 0.0
    %2567 = vmatpush1.msra.mxu0 0.0
    %2568 = vmatprep.subr.mxu0 0.0
    %2569 = vmatpush1.msra.mxu0 0.0
    %2570 = vmatprep.subr.mxu0 0.0
    %2571 = vmatpush1.msra.mxu0 0.0
    %2572 = vmatprep.subr.mxu0 0.0
    %2573 = vmatpush1.msra.mxu0 0.0
    %2574 = vmatprep.subr.mxu0 0.0
    %2575 = vmatpush1.msra.mxu0 0.0
    %2576 = vmatprep.subr.mxu0 0.0
    %2577 = vmatpush1.msra.mxu0 0.0
    %2578 = vmatprep.subr.mxu0 0.0
    %2579 = vmatpush1.msra.mxu0 0.0
    %2580 = vmatprep.mubr.f32.mxu0 0.0
    %2581 = vmatmul.mubr.f32.gmra.mrb[0].mxu0 %v2508
    %v2582 = vpop.f32.mrb[0].mxu0
    %v2583 = vadd.f32 0.0, %v2582
    %v2584 = vpop.f32.mrb[0].mxu0
    %v2585 = vadd.f32 0.0, %v2584
    %2586 = vmatprep.mubr.f32.mxu0 0.0
    %2587 = vmatmul.mubr.f32.gmra.mrb[0].mxu0 %v2510
    %v2588 = vpop.f32.mrb[0].mxu0
    %v2589 = vadd.f32 0.0, %v2588
    %v2590 = vpop.f32.mrb[0].mxu0
    %v2591 = vadd.f32 0.0, %v2590
    %2592 = vdwg.mxu0
    %v2593 = vsel %vm2507, %v2371, 0
    %v2595 = vsel %vm2507, %v2372, 0
    %v2598 = vsel %vm2043, %v2393, 0
    %v2601 = vsel %vm2043, %v2394, 0
    %2603 = vmatprep.subr.mxu0 %v2374
    %2604 = vmatpush1.msra.mxu0 %v2373
    %2605 = vmatprep.subr.mxu0 %v2376
    %2606 = vmatpush1.msra.mxu0 %v2375
    %2607 = vmatprep.subr.mxu0 %v2378
    %2608 = vmatpush1.msra.mxu0 %v2377
    %2609 = vmatprep.subr.mxu0 %v2380
    %2610 = vmatpush1.msra.mxu0 %v2379
    %2611 = vmatprep.subr.mxu0 %v2382
    %2612 = vmatpush1.msra.mxu0 %v2381
    %2613 = vmatprep.subr.mxu0 %v2384
    %2614 = vmatpush1.msra.mxu0 %v2383
    %2615 = vmatprep.subr.mxu0 %v2386
    %2616 = vmatpush1.msra.mxu0 %v2385
    %2617 = vmatprep.subr.mxu0 %v2388
    %2618 = vmatpush1.msra.mxu0 %v2387
    %2619 = vmatprep.subr.mxu0 %v2390
    %2620 = vmatpush1.msra.mxu0 %v2389
    %2621 = vmatprep.subr.mxu0 %v2392
    %2622 = vmatpush1.msra.mxu0 %v2391
    %2623 = vmatprep.subr.mxu0 %v2601
    %2624 = vmatpush1.msra.mxu0 %v2598
    %2625 = vmatprep.subr.mxu0 0.0
    %2626 = vmatpush1.msra.mxu0 0.0
    %2627 = vmatprep.subr.mxu0 0.0
    %2628 = vmatpush1.msra.mxu0 0.0
    %2629 = vmatprep.subr.mxu0 0.0
    %2630 = vmatpush1.msra.mxu0 0.0
    %2631 = vmatprep.subr.mxu0 0.0
    %2632 = vmatpush1.msra.mxu0 0.0
    %2633 = vmatprep.subr.mxu0 0.0
    %2634 = vmatpush1.msra.mxu0 0.0
    %2635 = vmatprep.subr.mxu0 0.0
    %2636 = vmatpush1.msra.mxu0 0.0
    %2637 = vmatprep.subr.mxu0 0.0
    %2638 = vmatpush1.msra.mxu0 0.0
    %2639 = vmatprep.subr.mxu0 0.0
    %2640 = vmatpush1.msra.mxu0 0.0
    %2641 = vmatprep.subr.mxu0 0.0
    %2642 = vmatpush1.msra.mxu0 0.0
    %2643 = vmatprep.subr.mxu0 0.0
    %2644 = vmatpush1.msra.mxu0 0.0
    %2645 = vmatprep.subr.mxu0 0.0
    %2646 = vmatpush1.msra.mxu0 0.0
    %2647 = vmatprep.subr.mxu0 0.0
    %2648 = vmatpush1.msra.mxu0 0.0
    %2649 = vmatprep.subr.mxu0 0.0
    %2650 = vmatpush1.msra.mxu0 0.0
    %2651 = vmatprep.subr.mxu0 0.0
    %2652 = vmatpush1.msra.mxu0 0.0
    %2653 = vmatprep.subr.mxu0 0.0
    %2654 = vmatpush1.msra.mxu0 0.0
    %2655 = vmatprep.subr.mxu0 0.0
    %2656 = vmatpush1.msra.mxu0 0.0
    %2657 = vmatprep.subr.mxu0 0.0
    %2658 = vmatpush1.msra.mxu0 0.0
    %2659 = vmatprep.subr.mxu0 0.0
    %2660 = vmatpush1.msra.mxu0 0.0
    %2661 = vmatprep.subr.mxu0 0.0
    %2662 = vmatpush1.msra.mxu0 0.0
    %2663 = vmatprep.subr.mxu0 0.0
    %2664 = vmatpush1.msra.mxu0 0.0
    %2665 = vmatprep.subr.mxu0 0.0
    %2666 = vmatpush1.msra.mxu0 0.0
    %2667 = vmatprep.mubr.f32.mxu0 0.0
    %2668 = vmatmul.mubr.f32.gmra.mrb[0].mxu0 %v2593
    %v2669 = vpop.f32.mrb[0].mxu0
    %v2670 = vadd.f32 %v2583, %v2669
    %v2671 = vpop.f32.mrb[0].mxu0
    %v2672 = vadd.f32 %v2585, %v2671
    %2673 = vmatprep.mubr.f32.mxu0 0.0
    %2674 = vmatmul.mubr.f32.gmra.mrb[0].mxu0 %v2595
    %v2675 = vpop.f32.mrb[0].mxu0
    %v2676 = vadd.f32 %v2589, %v2675
    %v2677 = vpop.f32.mrb[0].mxu0
    %v2678 = vadd.f32 %v2591, %v2677
    %2679 = vdwg.mxu0
    %v2680 = vld [vmem:[%s3 + $0x150] sm:$0xff]
    %v2681 = vld [vmem:[%s3 + $0x158] sm:$0xff]
    %v2682 = vld [vmem:[%s3 + $0x160] sm:$0xff]
    %v2683 = vld [vmem:[%s3 + $0x168] sm:$0xff]
    %v2684 = vld [vmem:[%s3 + $0x170] sm:$0xff]
    %v2685 = vld [vmem:[%s3 + $0x178] sm:$0xff]
    %v2686 = vld [vmem:[%s3 + $0x180] sm:$0xff]
    %v2687 = vld [vmem:[%s3 + $0x188] sm:$0xff]
    %v2688 = vld [vmem:[%s3 + $0x190] sm:$0xff]
    %v2689 = vld [vmem:[%s3 + $0x198] sm:$0xff]
    %v2690 = vld [vmem:[%s3 + $0x1a0] sm:$0xff]
    %v2691 = vld [vmem:[%s3 + $0x1a8] sm:$0xff]
    %v2692 = vld [vmem:[%s3 + $0x1b0] sm:$0xff]
    %v2693 = vld [vmem:[%s3 + $0x1b8] sm:$0xff]
    %v2694 = vld [vmem:[%s3 + $0x1c0] sm:$0xff]
    %v2695 = vld [vmem:[%s3 + $0x1c8] sm:$0xff]
    %v2696 = vld [vmem:[%s3 + $0x1d0] sm:$0xff]
    %v2697 = vld [vmem:[%s3 + $0x1d8] sm:$0xff]
    %v2698 = vld [vmem:[%s3 + $0x1e0] sm:$0xff]
    %v2699 = vld [vmem:[%s3 + $0x1e8] sm:$0xff]
    %v2700 = vld [vmem:[%s3 + $0x1f0] sm:$0xf]
    %v2701 = vld [vmem:[%s3 + $0x1f8] sm:$0xf]
    %vm2702 = vcmask 1045504
    %v2703 = vrot.slane %v2371, 2
    %v2704 = vrot.slane %v2372, 2
    %v2705 = vsel %vm2702, %v2703, %v2704
    %v2706 = vsel %vm2507, %v2705, 0
    %v2708 = vsel %vm2507, %v2704, 0
    %v2711 = vsel %vm2043, %v2700, 0
    %v2714 = vsel %vm2043, %v2701, 0
    %2716 = vmatprep.subr.mxu0 %v2681
    %2717 = vmatpush1.msra.mxu0 %v2680
    %2718 = vmatprep.subr.mxu0 %v2683
    %2719 = vmatpush1.msra.mxu0 %v2682
    %2720 = vmatprep.subr.mxu0 %v2685
    %2721 = vmatpush1.msra.mxu0 %v2684
    %2722 = vmatprep.subr.mxu0 %v2687
    %2723 = vmatpush1.msra.mxu0 %v2686
    %2724 = vmatprep.subr.mxu0 %v2689
    %2725 = vmatpush1.msra.mxu0 %v2688
    %2726 = vmatprep.subr.mxu0 %v2691
    %2727 = vmatpush1.msra.mxu0 %v2690
    %2728 = vmatprep.subr.mxu0 %v2693
    %2729 = vmatpush1.msra.mxu0 %v2692
    %2730 = vmatprep.subr.mxu0 %v2695
    %2731 = vmatpush1.msra.mxu0 %v2694
    %2732 = vmatprep.subr.mxu0 %v2697
    %2733 = vmatpush1.msra.mxu0 %v2696
    %2734 = vmatprep.subr.mxu0 %v2699
    %2735 = vmatpush1.msra.mxu0 %v2698
    %2736 = vmatprep.subr.mxu0 %v2714
    %2737 = vmatpush1.msra.mxu0 %v2711
    %2738 = vmatprep.subr.mxu0 0.0
    %2739 = vmatpush1.msra.mxu0 0.0
    %2740 = vmatprep.subr.mxu0 0.0
    %2741 = vmatpush1.msra.mxu0 0.0
    %2742 = vmatprep.subr.mxu0 0.0
    %2743 = vmatpush1.msra.mxu0 0.0
    %2744 = vmatprep.subr.mxu0 0.0
    %2745 = vmatpush1.msra.mxu0 0.0
    %2746 = vmatprep.subr.mxu0 0.0
    %2747 = vmatpush1.msra.mxu0 0.0
    %2748 = vmatprep.subr.mxu0 0.0
    %2749 = vmatpush1.msra.mxu0 0.0
    %2750 = vmatprep.subr.mxu0 0.0
    %2751 = vmatpush1.msra.mxu0 0.0
    %2752 = vmatprep.subr.mxu0 0.0
    %2753 = vmatpush1.msra.mxu0 0.0
    %2754 = vmatprep.subr.mxu0 0.0
    %2755 = vmatpush1.msra.mxu0 0.0
    %2756 = vmatprep.subr.mxu0 0.0
    %2757 = vmatpush1.msra.mxu0 0.0
    %2758 = vmatprep.subr.mxu0 0.0
    %2759 = vmatpush1.msra.mxu0 0.0
    %2760 = vmatprep.subr.mxu0 0.0
    %2761 = vmatpush1.msra.mxu0 0.0
    %2762 = vmatprep.subr.mxu0 0.0
    %2763 = vmatpush1.msra.mxu0 0.0
    %2764 = vmatprep.subr.mxu0 0.0
    %2765 = vmatpush1.msra.mxu0 0.0
    %2766 = vmatprep.subr.mxu0 0.0
    %2767 = vmatpush1.msra.mxu0 0.0
    %2768 = vmatprep.subr.mxu0 0.0
    %2769 = vmatpush1.msra.mxu0 0.0
    %2770 = vmatprep.subr.mxu0 0.0
    %2771 = vmatpush1.msra.mxu0 0.0
    %2772 = vmatprep.subr.mxu0 0.0
    %2773 = vmatpush1.msra.mxu0 0.0
    %2774 = vmatprep.subr.mxu0 0.0
    %2775 = vmatpush1.msra.mxu0 0.0
    %2776 = vmatprep.subr.mxu0 0.0
    %2777 = vmatpush1.msra.mxu0 0.0
    %2778 = vmatprep.subr.mxu0 0.0
    %2779 = vmatpush1.msra.mxu0 0.0
    %2780 = vmatprep.mubr.f32.mxu0 0.0
    %2781 = vmatmul.mubr.f32.gmra.mrb[0].mxu0 %v2706
    %v2782 = vpop.f32.mrb[0].mxu0
    %v2783 = vadd.f32 0.0, %v2782
    %v2784 = vpop.f32.mrb[0].mxu0
    %v2785 = vadd.f32 0.0, %v2784
    %2786 = vmatprep.mubr.f32.mxu0 0.0
    %2787 = vmatmul.mubr.f32.gmra.mrb[0].mxu0 %v2708
    %v2788 = vpop.f32.mrb[0].mxu0
    %v2789 = vadd.f32 0.0, %v2788
    %v2790 = vpop.f32.mrb[0].mxu0
    %v2791 = vadd.f32 0.0, %v2790
    %2792 = vdwg.mxu0
    %v2793 = vadd.f32 %v2670, %v2783
    %v2794 = vadd.f32 %v2672, %v2785
    %v2795 = vadd.f32 %v2676, %v2789
    %v2796 = vadd.f32 %v2678, %v2791
    %v2797 = vld [vmem:[%s3 + $0x1f0] sm:$0xf0]
    %v2798 = vld [vmem:[%s3 + $0x1f8] sm:$0xf0]
    %v2799 = vld [vmem:[%s3 + $0x200] sm:$0xff]
    %v2800 = vld [vmem:[%s3 + $0x208] sm:$0xff]
    %v2801 = vld [vmem:[%s3 + $0x210] sm:$0xff]
    %v2802 = vld [vmem:[%s3 + $0x218] sm:$0xff]
    %v2803 = vld [vmem:[%s3 + $0x220] sm:$0xff]
    %v2804 = vld [vmem:[%s3 + $0x228] sm:$0xff]
    %v2805 = vld [vmem:[%s3 + $0x230] sm:$0xff]
    %v2806 = vld [vmem:[%s3 + $0x238] sm:$0xff]
    %v2807 = vld [vmem:[%s3 + $0x240] sm:$0xff]
    %v2808 = vld [vmem:[%s3 + $0x248] sm:$0xff]
    %v2809 = vld [vmem:[%s3 + $0x250] sm:$0xff]
    %v2810 = vld [vmem:[%s3 + $0x258] sm:$0xff]
    %v2811 = vld [vmem:[%s3 + $0x260] sm:$0xff]
    %v2812 = vld [vmem:[%s3 + $0x268] sm:$0xff]
    %v2813 = vld [vmem:[%s3 + $0x270] sm:$0xff]
    %v2814 = vld [vmem:[%s3 + $0x278] sm:$0xff]
    %v2815 = vld [vmem:[%s3 + $0x280] sm:$0xff]
    %v2816 = vld [vmem:[%s3 + $0x288] sm:$0xff]
    %v2817 = vld [vmem:[%s3 + $0x290] sm:$0xff]
    %v2818 = vld [vmem:[%s3 + $0x298] sm:$0xff]
    %vm2819 = vcmask 1044480
    %v2820 = vrot.slane %v2371, 3
    %v2821 = vrot.slane %v2372, 3
    %v2822 = vsel %vm2819, %v2820, %v2821
    %v2845 = vrot.slane %v2797, 4
    %v2846 = vrot.slane %v2799, 4
    %v2847 = vsel %vm2043, %v2845, %v2846
    %v2848 = vrot.slane %v2798, 4
    %v2849 = vrot.slane %v2800, 4
    %v2850 = vsel %vm2043, %v2848, %v2849
    %v2851 = vrot.slane %v2801, 4
    %v2852 = vsel %vm2043, %v2846, %v2851
    %v2853 = vrot.slane %v2802, 4
    %v2854 = vsel %vm2043, %v2849, %v2853
    %v2855 = vrot.slane %v2803, 4
    %v2856 = vsel %vm2043, %v2851, %v2855
    %v2857 = vrot.slane %v2804, 4
    %v2858 = vsel %vm2043, %v2853, %v2857
    %v2859 = vrot.slane %v2805, 4
    %v2860 = vsel %vm2043, %v2855, %v2859
    %v2861 = vrot.slane %v2806, 4
    %v2862 = vsel %vm2043, %v2857, %v2861
    %v2863 = vrot.slane %v2807, 4
    %v2864 = vsel %vm2043, %v2859, %v2863
    %v2865 = vrot.slane %v2808, 4
    %v2866 = vsel %vm2043, %v2861, %v2865
    %v2867 = vrot.slane %v2809, 4
    %v2868 = vsel %vm2043, %v2863, %v2867
    %v2869 = vrot.slane %v2810, 4
    %v2870 = vsel %vm2043, %v2865, %v2869
    %v2871 = vrot.slane %v2811, 4
    %v2872 = vsel %vm2043, %v2867, %v2871
    %v2873 = vrot.slane %v2812, 4
    %v2874 = vsel %vm2043, %v2869, %v2873
    %v2875 = vrot.slane %v2813, 4
    %v2876 = vsel %vm2043, %v2871, %v2875
    %v2877 = vrot.slane %v2814, 4
    %v2878 = vsel %vm2043, %v2873, %v2877
    %v2879 = vrot.slane %v2815, 4
    %v2880 = vsel %vm2043, %v2875, %v2879
    %v2881 = vrot.slane %v2816, 4
    %v2882 = vsel %vm2043, %v2877, %v2881
    %v2883 = vrot.slane %v2817, 4
    %v2884 = vsel %vm2043, %v2879, %v2883
    %v2885 = vrot.slane %v2818, 4
    %v2886 = vsel %vm2043, %v2881, %v2885
    %v2907 = vsel %vm2507, %v2822, 0
    %v2909 = vsel %vm2507, %v2821, 0
    %v2911 = vsel %vm2043, %v2883, 0
    %v2913 = vsel %vm2043, %v2885, 0
    %2915 = vmatprep.subr.mxu0 %v2850
    %2916 = vmatpush1.msra.mxu0 %v2847
    %2917 = vmatprep.subr.mxu0 %v2854
    %2918 = vmatpush1.msra.mxu0 %v2852
    %2919 = vmatprep.subr.mxu0 %v2858
    %2920 = vmatpush1.msra.mxu0 %v2856
    %2921 = vmatprep.subr.mxu0 %v2862
    %2922 = vmatpush1.msra.mxu0 %v2860
    %2923 = vmatprep.subr.mxu0 %v2866
    %2924 = vmatpush1.msra.mxu0 %v2864
    %2925 = vmatprep.subr.mxu0 %v2870
    %2926 = vmatpush1.msra.mxu0 %v2868
    %2927 = vmatprep.subr.mxu0 %v2874
    %2928 = vmatpush1.msra.mxu0 %v2872
    %2929 = vmatprep.subr.mxu0 %v2878
    %2930 = vmatpush1.msra.mxu0 %v2876
    %2931 = vmatprep.subr.mxu0 %v2882
    %2932 = vmatpush1.msra.mxu0 %v2880
    %2933 = vmatprep.subr.mxu0 %v2886
    %2934 = vmatpush1.msra.mxu0 %v2884
    %2935 = vmatprep.subr.mxu0 %v2913
    %2936 = vmatpush1.msra.mxu0 %v2911
    %2937 = vmatprep.subr.mxu0 0.0
    %2938 = vmatpush1.msra.mxu0 0.0
    %2939 = vmatprep.subr.mxu0 0.0
    %2940 = vmatpush1.msra.mxu0 0.0
    %2941 = vmatprep.subr.mxu0 0.0
    %2942 = vmatpush1.msra.mxu0 0.0
    %2943 = vmatprep.subr.mxu0 0.0
    %2944 = vmatpush1.msra.mxu0 0.0
    %2945 = vmatprep.subr.mxu0 0.0
    %2946 = vmatpush1.msra.mxu0 0.0
    %2947 = vmatprep.subr.mxu0 0.0
    %2948 = vmatpush1.msra.mxu0 0.0
    %2949 = vmatprep.subr.mxu0 0.0
    %2950 = vmatpush1.msra.mxu0 0.0
    %2951 = vmatprep.subr.mxu0 0.0
    %2952 = vmatpush1.msra.mxu0 0.0
    %2953 = vmatprep.subr.mxu0 0.0
    %2954 = vmatpush1.msra.mxu0 0.0
    %2955 = vmatprep.subr.mxu0 0.0
    %2956 = vmatpush1.msra.mxu0 0.0
    %2957 = vmatprep.subr.mxu0 0.0
    %2958 = vmatpush1.msra.mxu0 0.0
    %2959 = vmatprep.subr.mxu0 0.0
    %2960 = vmatpush1.msra.mxu0 0.0
    %2961 = vmatprep.subr.mxu0 0.0
    %2962 = vmatpush1.msra.mxu0 0.0
    %2963 = vmatprep.subr.mxu0 0.0
    %2964 = vmatpush1.msra.mxu0 0.0
    %2965 = vmatprep.subr.mxu0 0.0
    %2966 = vmatpush1.msra.mxu0 0.0
    %2967 = vmatprep.subr.mxu0 0.0
    %2968 = vmatpush1.msra.mxu0 0.0
    %2969 = vmatprep.subr.mxu0 0.0
    %2970 = vmatpush1.msra.mxu0 0.0
    %2971 = vmatprep.subr.mxu0 0.0
    %2972 = vmatpush1.msra.mxu0 0.0
    %2973 = vmatprep.subr.mxu0 0.0
    %2974 = vmatpush1.msra.mxu0 0.0
    %2975 = vmatprep.subr.mxu0 0.0
    %2976 = vmatpush1.msra.mxu0 0.0
    %2977 = vmatprep.subr.mxu0 0.0
    %2978 = vmatpush1.msra.mxu0 0.0
    %2979 = vmatprep.mubr.f32.mxu0 0.0
    %2980 = vmatmul.mubr.f32.gmra.mrb[0].mxu0 %v2907
    %v2981 = vpop.f32.mrb[0].mxu0
    %v2982 = vadd.f32 0.0, %v2981
    %v2983 = vpop.f32.mrb[0].mxu0
    %v2984 = vadd.f32 0.0, %v2983
    %2985 = vmatprep.mubr.f32.mxu0 0.0
    %2986 = vmatmul.mubr.f32.gmra.mrb[0].mxu0 %v2909
    %v2987 = vpop.f32.mrb[0].mxu0
    %v2988 = vadd.f32 0.0, %v2987
    %v2989 = vpop.f32.mrb[0].mxu0
    %v2990 = vadd.f32 0.0, %v2989
    %2991 = vdwg.mxu0
    %v2992 = vadd.f32 %v2793, %v2982
    %v2993 = vadd.f32 %v2794, %v2984
    %v2994 = vadd.f32 %v2795, %v2988
    %v2995 = vadd.f32 %v2796, %v2990
    %v2996 = vld [vmem:[%s3 + $0x2a0] sm:$0xff]
    %v2997 = vld [vmem:[%s3 + $0x2a8] sm:$0xff]
    %v2998 = vld [vmem:[%s3 + $0x2b0] sm:$0xff]
    %v2999 = vld [vmem:[%s3 + $0x2b8] sm:$0xff]
    %v3000 = vld [vmem:[%s3 + $0x2c0] sm:$0xff]
    %v3001 = vld [vmem:[%s3 + $0x2c8] sm:$0xff]
    %v3002 = vld [vmem:[%s3 + $0x2d0] sm:$0xff]
    %v3003 = vld [vmem:[%s3 + $0x2d8] sm:$0xff]
    %v3004 = vld [vmem:[%s3 + $0x2e0] sm:$0xff]
    %v3005 = vld [vmem:[%s3 + $0x2e8] sm:$0xff]
    %v3006 = vld [vmem:[%s3 + $0x2f0] sm:$0xff]
    %v3007 = vld [vmem:[%s3 + $0x2f8] sm:$0xff]
    %v3008 = vld [vmem:[%s3 + $0x300] sm:$0xff]
    %v3009 = vld [vmem:[%s3 + $0x308] sm:$0xff]
    %v3010 = vld [vmem:[%s3 + $0x310] sm:$0xff]
    %v3011 = vld [vmem:[%s3 + $0x318] sm:$0xff]
    %v3012 = vld [vmem:[%s3 + $0x320] sm:$0xff]
    %v3013 = vld [vmem:[%s3 + $0x328] sm:$0xff]
    %v3014 = vld [vmem:[%s3 + $0x330] sm:$0xff]
    %v3015 = vld [vmem:[%s3 + $0x338] sm:$0xff]
    %v3016 = vld [vmem:[%s3 + $0x340] sm:$0xf]
    %v3017 = vld [vmem:[%s3 + $0x348] sm:$0xf]
    %v3018 = vrot.slane %v2371, 4
    %v3019 = vrot.slane %v2372, 4
    %v3020 = vsel %vm2043, %v3018, %v3019
    %v3021 = vsel %vm2507, %v3020, 0
    %v3023 = vsel %vm2507, %v3019, 0
    %v3026 = vsel %vm2043, %v3016, 0
    %v3029 = vsel %vm2043, %v3017, 0
    %3031 = vmatprep.subr.mxu0 %v2997
    %3032 = vmatpush1.msra.mxu0 %v2996
    %3033 = vmatprep.subr.mxu0 %v2999
    %3034 = vmatpush1.msra.mxu0 %v2998
    %3035 = vmatprep.subr.mxu0 %v3001
    %3036 = vmatpush1.msra.mxu0 %v3000
    %3037 = vmatprep.subr.mxu0 %v3003
    %3038 = vmatpush1.msra.mxu0 %v3002
    %3039 = vmatprep.subr.mxu0 %v3005
    %3040 = vmatpush1.msra.mxu0 %v3004
    %3041 = vmatprep.subr.mxu0 %v3007
    %3042 = vmatpush1.msra.mxu0 %v3006
    %3043 = vmatprep.subr.mxu0 %v3009
    %3044 = vmatpush1.msra.mxu0 %v3008
    %3045 = vmatprep.subr.mxu0 %v3011
    %3046 = vmatpush1.msra.mxu0 %v3010
    %3047 = vmatprep.subr.mxu0 %v3013
    %3048 = vmatpush1.msra.mxu0 %v3012
    %3049 = vmatprep.subr.mxu0 %v3015
    %3050 = vmatpush1.msra.mxu0 %v3014
    %3051 = vmatprep.subr.mxu0 %v3029
    %3052 = vmatpush1.msra.mxu0 %v3026
    %3053 = vmatprep.subr.mxu0 0.0
    %3054 = vmatpush1.msra.mxu0 0.0
    %3055 = vmatprep.subr.mxu0 0.0
    %3056 = vmatpush1.msra.mxu0 0.0
    %3057 = vmatprep.subr.mxu0 0.0
    %3058 = vmatpush1.msra.mxu0 0.0
    %3059 = vmatprep.subr.mxu0 0.0
    %3060 = vmatpush1.msra.mxu0 0.0
    %3061 = vmatprep.subr.mxu0 0.0
    %3062 = vmatpush1.msra.mxu0 0.0
    %3063 = vmatprep.subr.mxu0 0.0
    %3064 = vmatpush1.msra.mxu0 0.0
    %3065 = vmatprep.subr.mxu0 0.0
    %3066 = vmatpush1.msra.mxu0 0.0
    %3067 = vmatprep.subr.mxu0 0.0
    %3068 = vmatpush1.msra.mxu0 0.0
    %3069 = vmatprep.subr.mxu0 0.0
    %3070 = vmatpush1.msra.mxu0 0.0
    %3071 = vmatprep.subr.mxu0 0.0
    %3072 = vmatpush1.msra.mxu0 0.0
    %3073 = vmatprep.subr.mxu0 0.0
    %3074 = vmatpush1.msra.mxu0 0.0
    %3075 = vmatprep.subr.mxu0 0.0
    %3076 = vmatpush1.msra.mxu0 0.0
    %3077 = vmatprep.subr.mxu0 0.0
    %3078 = vmatpush1.msra.mxu0 0.0
    %3079 = vmatprep.subr.mxu0 0.0
    %3080 = vmatpush1.msra.mxu0 0.0
    %3081 = vmatprep.subr.mxu0 0.0
    %3082 = vmatpush1.msra.mxu0 0.0
    %3083 = vmatprep.subr.mxu0 0.0
    %3084 = vmatpush1.msra.mxu0 0.0
    %3085 = vmatprep.subr.mxu0 0.0
    %3086 = vmatpush1.msra.mxu0 0.0
    %3087 = vmatprep.subr.mxu0 0.0
    %3088 = vmatpush1.msra.mxu0 0.0
    %3089 = vmatprep.subr.mxu0 0.0
    %3090 = vmatpush1.msra.mxu0 0.0
    %3091 = vmatprep.subr.mxu0 0.0
    %3092 = vmatpush1.msra.mxu0 0.0
    %3093 = vmatprep.subr.mxu0 0.0
    %3094 = vmatpush1.msra.mxu0 0.0
    %3095 = vmatprep.mubr.f32.mxu0 0.0
    %3096 = vmatmul.mubr.f32.gmra.mrb[0].mxu0 %v3021
    %v3097 = vpop.f32.mrb[0].mxu0
    %v3098 = vadd.f32 0.0, %v3097
    %v3099 = vpop.f32.mrb[0].mxu0
    %v3100 = vadd.f32 0.0, %v3099
    %3101 = vmatprep.mubr.f32.mxu0 0.0
    %3102 = vmatmul.mubr.f32.gmra.mrb[0].mxu0 %v3023
    %v3103 = vpop.f32.mrb[0].mxu0
    %v3104 = vadd.f32 0.0, %v3103
    %v3105 = vpop.f32.mrb[0].mxu0
    %v3106 = vadd.f32 0.0, %v3105
    %3107 = vdwg.mxu0
    %v3108 = vadd.f32 %v2992, %v3098
    %v3109 = vadd.f32 %v2993, %v3100
    %v3110 = vadd.f32 %v2994, %v3104
    %v3111 = vadd.f32 %v2995, %v3106
    %v3113 = vlaneseq
    %v3114 = vshrl.u32 %v3113, 7
    %v3115 = vsub.s32 0, %v3114
    %v3116 = vrot.slane %v208, %v3115
    %v3117 = vlaneseq
    %v3118 = vshrl.u32 %v3117, 7
    %v3119 = vsub.s32 1, %v3118
    %v3120 = vrot.slane %v208, %v3119
    %v3123 = vadd.f32 %v3108, %v3116
    %v3124 = vadd.f32 %v3109, %v3120
    %v3125 = vadd.f32 %v3110, %v3116
    %v3126 = vadd.f32 %v3111, %v3120
    %v3127 = vmax.f32 %v3123, 0.0
    %v3128 = vmax.f32 %v3124, 0.0
    %v3129 = vmax.f32 %v3125, 0.0
    %v3130 = vmax.f32 %v3126, 0.0
    %vm3131 = vcmask 80896
    %v3132 = vsel %vm3131, %v50, 0
    %vm3134 = vcmask 1041408
    %v3136 = vsel %vm3134, %v3129, 0
    %v3139 = vsel %vm3134, %v3130, 0
    %3141 = vmatprep.subr.mxu0 %v3128
    %3142 = vmatpush1.msra.mxu0 %v3127
    %3143 = vmatprep.subr.mxu0 %v3139
    %3144 = vmatpush1.msra.mxu0 %v3136
    %3145 = vmatprep.subr.mxu0 0.0
    %3146 = vmatpush1.msra.mxu0 0.0
    %3147 = vmatprep.subr.mxu0 0.0
    %3148 = vmatpush1.msra.mxu0 0.0
    %3149 = vmatprep.subr.mxu0 0.0
    %3150 = vmatpush1.msra.mxu0 0.0
    %3151 = vmatprep.subr.mxu0 0.0
    %3152 = vmatpush1.msra.mxu0 0.0
    %3153 = vmatprep.subr.mxu0 0.0
    %3154 = vmatpush1.msra.mxu0 0.0
    %3155 = vmatprep.subr.mxu0 0.0
    %3156 = vmatpush1.msra.mxu0 0.0
    %3157 = vmatprep.subr.mxu0 0.0
    %3158 = vmatpush1.msra.mxu0 0.0
    %3159 = vmatprep.subr.mxu0 0.0
    %3160 = vmatpush1.msra.mxu0 0.0
    %3161 = vmatprep.subr.mxu0 0.0
    %3162 = vmatpush1.msra.mxu0 0.0
    %3163 = vmatprep.subr.mxu0 0.0
    %3164 = vmatpush1.msra.mxu0 0.0
    %3165 = vmatprep.subr.mxu0 0.0
    %3166 = vmatpush1.msra.mxu0 0.0
    %3167 = vmatprep.subr.mxu0 0.0
    %3168 = vmatpush1.msra.mxu0 0.0
    %3169 = vmatprep.subr.mxu0 0.0
    %3170 = vmatpush1.msra.mxu0 0.0
    %3171 = vmatprep.subr.mxu0 0.0
    %3172 = vmatpush1.msra.mxu0 0.0
    %3173 = vmatprep.subr.mxu0 0.0
    %3174 = vmatpush1.msra.mxu0 0.0
    %3175 = vmatprep.subr.mxu0 0.0
    %3176 = vmatpush1.msra.mxu0 0.0
    %3177 = vmatprep.subr.mxu0 0.0
    %3178 = vmatpush1.msra.mxu0 0.0
    %3179 = vmatprep.subr.mxu0 0.0
    %3180 = vmatpush1.msra.mxu0 0.0
    %3181 = vmatprep.subr.mxu0 0.0
    %3182 = vmatpush1.msra.mxu0 0.0
    %3183 = vmatprep.subr.mxu0 0.0
    %3184 = vmatpush1.msra.mxu0 0.0
    %3185 = vmatprep.subr.mxu0 0.0
    %3186 = vmatpush1.msra.mxu0 0.0
    %3187 = vmatprep.subr.mxu0 0.0
    %3188 = vmatpush1.msra.mxu0 0.0
    %3189 = vmatprep.subr.mxu0 0.0
    %3190 = vmatpush1.msra.mxu0 0.0
    %3191 = vmatprep.subr.mxu0 0.0
    %3192 = vmatpush1.msra.mxu0 0.0
    %3193 = vmatprep.subr.mxu0 0.0
    %3194 = vmatpush1.msra.mxu0 0.0
    %3195 = vmatprep.subr.mxu0 0.0
    %3196 = vmatpush1.msra.mxu0 0.0
    %3197 = vmatprep.subr.mxu0 0.0
    %3198 = vmatpush1.msra.mxu0 0.0
    %3199 = vmatprep.subr.mxu0 0.0
    %3200 = vmatpush1.msra.mxu0 0.0
    %3201 = vmatprep.subr.mxu0 0.0
    %3202 = vmatpush1.msra.mxu0 0.0
    %3203 = vmatprep.subr.mxu0 0.0
    %3204 = vmatpush1.msra.mxu0 0.0
    %3205 = vmatprep.mubr.f32.mxu0 0.0
    %3206 = vmatmul.mubr.f32.gmra.mrb[0].mxu0 %v3132
    %v3207 = vpop.f32.mrb[0].mxu0
    %v3208 = vadd.f32 0.0, %v3207
    %v3209 = vpop.f32.mrb[0].mxu0
    %v3210 = vadd.f32 0.0, %v3209
    %3211 = vdwg.mxu0
    %v3212 = vsel %vm3131, %v58, 0
    %3214 = vmatprep.subr.mxu0 %v3128
    %3215 = vmatpush1.msra.mxu0 %v3127
    %3216 = vmatprep.subr.mxu0 %v3139
    %3217 = vmatpush1.msra.mxu0 %v3136
    %3218 = vmatprep.subr.mxu0 0.0
    %3219 = vmatpush1.msra.mxu0 0.0
    %3220 = vmatprep.subr.mxu0 0.0
    %3221 = vmatpush1.msra.mxu0 0.0
    %3222 = vmatprep.subr.mxu0 0.0
    %3223 = vmatpush1.msra.mxu0 0.0
    %3224 = vmatprep.subr.mxu0 0.0
    %3225 = vmatpush1.msra.mxu0 0.0
    %3226 = vmatprep.subr.mxu0 0.0
    %3227 = vmatpush1.msra.mxu0 0.0
    %3228 = vmatprep.subr.mxu0 0.0
    %3229 = vmatpush1.msra.mxu0 0.0
    %3230 = vmatprep.subr.mxu0 0.0
    %3231 = vmatpush1.msra.mxu0 0.0
    %3232 = vmatprep.subr.mxu0 0.0
    %3233 = vmatpush1.msra.mxu0 0.0
    %3234 = vmatprep.subr.mxu0 0.0
    %3235 = vmatpush1.msra.mxu0 0.0
    %3236 = vmatprep.subr.mxu0 0.0
    %3237 = vmatpush1.msra.mxu0 0.0
    %3238 = vmatprep.subr.mxu0 0.0
    %3239 = vmatpush1.msra.mxu0 0.0
    %3240 = vmatprep.subr.mxu0 0.0
    %3241 = vmatpush1.msra.mxu0 0.0
    %3242 = vmatprep.subr.mxu0 0.0
    %3243 = vmatpush1.msra.mxu0 0.0
    %3244 = vmatprep.subr.mxu0 0.0
    %3245 = vmatpush1.msra.mxu0 0.0
    %3246 = vmatprep.subr.mxu0 0.0
    %3247 = vmatpush1.msra.mxu0 0.0
    %3248 = vmatprep.subr.mxu0 0.0
    %3249 = vmatpush1.msra.mxu0 0.0
    %3250 = vmatprep.subr.mxu0 0.0
    %3251 = vmatpush1.msra.mxu0 0.0
    %3252 = vmatprep.subr.mxu0 0.0
    %3253 = vmatpush1.msra.mxu0 0.0
    %3254 = vmatprep.subr.mxu0 0.0
    %3255 = vmatpush1.msra.mxu0 0.0
    %3256 = vmatprep.subr.mxu0 0.0
    %3257 = vmatpush1.msra.mxu0 0.0
    %3258 = vmatprep.subr.mxu0 0.0
    %3259 = vmatpush1.msra.mxu0 0.0
    %3260 = vmatprep.subr.mxu0 0.0
    %3261 = vmatpush1.msra.mxu0 0.0
    %3262 = vmatprep.subr.mxu0 0.0
    %3263 = vmatpush1.msra.mxu0 0.0
    %3264 = vmatprep.subr.mxu0 0.0
    %3265 = vmatpush1.msra.mxu0 0.0
    %3266 = vmatprep.subr.mxu0 0.0
    %3267 = vmatpush1.msra.mxu0 0.0
    %3268 = vmatprep.subr.mxu0 0.0
    %3269 = vmatpush1.msra.mxu0 0.0
    %3270 = vmatprep.subr.mxu0 0.0
    %3271 = vmatpush1.msra.mxu0 0.0
    %3272 = vmatprep.subr.mxu0 0.0
    %3273 = vmatpush1.msra.mxu0 0.0
    %3274 = vmatprep.subr.mxu0 0.0
    %3275 = vmatpush1.msra.mxu0 0.0
    %3276 = vmatprep.subr.mxu0 0.0
    %3277 = vmatpush1.msra.mxu0 0.0
    %3278 = vmatprep.mubr.f32.mxu0 0.0
    %3279 = vmatmul.mubr.f32.gmra.mrb[0].mxu0 %v3212
    %v3280 = vpop.f32.mrb[0].mxu0
    %v3281 = vadd.f32 0.0, %v3280
    %v3282 = vpop.f32.mrb[0].mxu0
    %v3283 = vadd.f32 0.0, %v3282
    %3284 = vdwg.mxu0
    %v3285 = vmax.f32 %v3208, %v3281
    %v3286 = vmax.f32 %v3210, %v3283
    %v3288 = vsel %vm233, %v3286, 0
    %3290 = vmatprep.subr.mxu0 0.0
    %3291 = vmatpush1.msra.mxu0 %v122
    %3292 = vmatprep.subr.mxu0 0.0
    %3293 = vmatpush1.msra.mxu0 %v123
    %3294 = vmatprep.subr.mxu0 0.0
    %3295 = vmatpush1.msra.mxu0 %v124
    %3296 = vmatprep.subr.mxu0 0.0
    %3297 = vmatpush1.msra.mxu0 %v125
    %3298 = vmatprep.subr.mxu0 0.0
    %3299 = vmatpush1.msra.mxu0 %v126
    %3300 = vmatprep.subr.mxu0 0.0
    %3301 = vmatpush1.msra.mxu0 %v127
    %3302 = vmatprep.subr.mxu0 0.0
    %3303 = vmatpush1.msra.mxu0 %v128
    %3304 = vmatprep.subr.mxu0 0.0
    %3305 = vmatpush1.msra.mxu0 %v129
    %3306 = vmatprep.subr.mxu0 0.0
    %3307 = vmatpush1.msra.mxu0 %v130
    %3308 = vmatprep.subr.mxu0 0.0
    %3309 = vmatpush1.msra.mxu0 %v131
    %3310 = vmatprep.subr.mxu0 0.0
    %3311 = vmatpush1.msra.mxu0 %v132
    %3312 = vmatprep.subr.mxu0 0.0
    %3313 = vmatpush1.msra.mxu0 %v133
    %3314 = vmatprep.subr.mxu0 0.0
    %3315 = vmatpush1.msra.mxu0 %v134
    %3316 = vmatprep.subr.mxu0 0.0
    %3317 = vmatpush1.msra.mxu0 %v135
    %3318 = vmatprep.subr.mxu0 0.0
    %3319 = vmatpush1.msra.mxu0 %v136
    %3320 = vmatprep.subr.mxu0 0.0
    %3321 = vmatpush1.msra.mxu0 %v137
    %3322 = vmatprep.subr.mxu0 0.0
    %3323 = vmatpush1.msra.mxu0 %v138
    %3324 = vmatprep.subr.mxu0 0.0
    %3325 = vmatpush1.msra.mxu0 %v139
    %3326 = vmatprep.subr.mxu0 0.0
    %3327 = vmatpush1.msra.mxu0 %v140
    %3328 = vmatprep.subr.mxu0 0.0
    %3329 = vmatpush1.msra.mxu0 %v141
    %3330 = vmatprep.subr.mxu0 0.0
    %3331 = vmatpush1.msra.mxu0 0.0
    %3332 = vmatprep.subr.mxu0 0.0
    %3333 = vmatpush1.msra.mxu0 0.0
    %3334 = vmatprep.subr.mxu0 0.0
    %3335 = vmatpush1.msra.mxu0 0.0
    %3336 = vmatprep.subr.mxu0 0.0
    %3337 = vmatpush1.msra.mxu0 0.0
    %3338 = vmatprep.subr.mxu0 0.0
    %3339 = vmatpush1.msra.mxu0 0.0
    %3340 = vmatprep.subr.mxu0 0.0
    %3341 = vmatpush1.msra.mxu0 0.0
    %3342 = vmatprep.subr.mxu0 0.0
    %3343 = vmatpush1.msra.mxu0 0.0
    %3344 = vmatprep.subr.mxu0 0.0
    %3345 = vmatpush1.msra.mxu0 0.0
    %3346 = vmatprep.subr.mxu0 0.0
    %3347 = vmatpush1.msra.mxu0 0.0
    %3348 = vmatprep.subr.mxu0 0.0
    %3349 = vmatpush1.msra.mxu0 0.0
    %3350 = vmatprep.subr.mxu0 0.0
    %3351 = vmatpush1.msra.mxu0 0.0
    %3352 = vmatprep.subr.mxu0 0.0
    %3353 = vmatpush1.msra.mxu0 0.0
    %3354 = vmatprep.mubr.f32.mxu0 %v3288
    %3355 = vmatmul.mubr.f32.gmra.mrb[0].mxu0 %v3285
    %v3356 = vpop.f32.mrb[0].mxu0
    %v3357 = vadd.f32 0.0, %v3356
    %v3358 = vpop.f32.mrb[0].mxu0
    %3359 = vdwg.mxu0
    %3360 = vmatprep.subr.mxu0 0.0
    %3361 = vmatpush1.msra.mxu0 %v186
    %3362 = vmatprep.subr.mxu0 0.0
    %3363 = vmatpush1.msra.mxu0 %v187
    %3364 = vmatprep.subr.mxu0 0.0
    %3365 = vmatpush1.msra.mxu0 %v188
    %3366 = vmatprep.subr.mxu0 0.0
    %3367 = vmatpush1.msra.mxu0 %v189
    %3368 = vmatprep.subr.mxu0 0.0
    %3369 = vmatpush1.msra.mxu0 %v190
    %3370 = vmatprep.subr.mxu0 0.0
    %3371 = vmatpush1.msra.mxu0 %v191
    %3372 = vmatprep.subr.mxu0 0.0
    %3373 = vmatpush1.msra.mxu0 %v192
    %3374 = vmatprep.subr.mxu0 0.0
    %3375 = vmatpush1.msra.mxu0 %v193
    %3376 = vmatprep.subr.mxu0 0.0
    %3377 = vmatpush1.msra.mxu0 %v194
    %3378 = vmatprep.subr.mxu0 0.0
    %3379 = vmatpush1.msra.mxu0 %v195
    %3380 = vmatprep.subr.mxu0 0.0
    %3381 = vmatpush1.msra.mxu0 %v196
    %3382 = vmatprep.subr.mxu0 0.0
    %3383 = vmatpush1.msra.mxu0 %v197
    %3384 = vmatprep.subr.mxu0 0.0
    %3385 = vmatpush1.msra.mxu0 %v198
    %3386 = vmatprep.subr.mxu0 0.0
    %3387 = vmatpush1.msra.mxu0 %v199
    %3388 = vmatprep.subr.mxu0 0.0
    %3389 = vmatpush1.msra.mxu0 %v200
    %3390 = vmatprep.subr.mxu0 0.0
    %3391 = vmatpush1.msra.mxu0 %v201
    %3392 = vmatprep.subr.mxu0 0.0
    %3393 = vmatpush1.msra.mxu0 %v202
    %3394 = vmatprep.subr.mxu0 0.0
    %3395 = vmatpush1.msra.mxu0 %v203
    %3396 = vmatprep.subr.mxu0 0.0
    %3397 = vmatpush1.msra.mxu0 %v204
    %3398 = vmatprep.subr.mxu0 0.0
    %3399 = vmatpush1.msra.mxu0 %v205
    %3400 = vmatprep.subr.mxu0 0.0
    %3401 = vmatpush1.msra.mxu0 0.0
    %3402 = vmatprep.subr.mxu0 0.0
    %3403 = vmatpush1.msra.mxu0 0.0
    %3404 = vmatprep.subr.mxu0 0.0
    %3405 = vmatpush1.msra.mxu0 0.0
    %3406 = vmatprep.subr.mxu0 0.0
    %3407 = vmatpush1.msra.mxu0 0.0
    %3408 = vmatprep.subr.mxu0 0.0
    %3409 = vmatpush1.msra.mxu0 0.0
    %3410 = vmatprep.subr.mxu0 0.0
    %3411 = vmatpush1.msra.mxu0 0.0
    %3412 = vmatprep.subr.mxu0 0.0
    %3413 = vmatpush1.msra.mxu0 0.0
    %3414 = vmatprep.subr.mxu0 0.0
    %3415 = vmatpush1.msra.mxu0 0.0
    %3416 = vmatprep.subr.mxu0 0.0
    %3417 = vmatpush1.msra.mxu0 0.0
    %3418 = vmatprep.subr.mxu0 0.0
    %3419 = vmatpush1.msra.mxu0 0.0
    %3420 = vmatprep.subr.mxu0 0.0
    %3421 = vmatpush1.msra.mxu0 0.0
    %3422 = vmatprep.subr.mxu0 0.0
    %3423 = vmatpush1.msra.mxu0 0.0
    %3424 = vmatprep.mubr.f32.mxu0 %v3288
    %3425 = vmatmul.mubr.f32.gmra.mrb[0].mxu0 %v3285
    %v3426 = vpop.f32.mrb[0].mxu0
    %v3427 = vadd.f32 0.0, %v3426
    %v3428 = vpop.f32.mrb[0].mxu0
    %3429 = vdwg.mxu0
    %v3430 = vmax.f32 %v3357, %v3427
    %vm3431 = vcmask 647168
    %3432 = vst.msk [vmem:[#allocation2] sm:$0x1] %vm3431, %v3430
    %v3435 = vunpack.c.l.s4 1983009808
    %v3436 = vunpack.c.0.s8 %v3435
    %v3437 = vlaneseq
    %v3438 = vshrl.u32 %v3437, 7
    %v3439 = vsub.s32 %v3436, %v3438
    %v3440 = vrot.slane %v3430, %v3439
    %v3441 = vrot.slane %v3440, 7
    %v3442 = vrot.slane %v3441, 2
    %3443 = vrot.lane.b32.xlu0 %v3442, 80
    %v3444 = vpop.permute.xlu0 %3443
    %v3445 = vrot.slane %v3444, 6
    %vm3446 = vcmask 654336
    %v3447 = vsel %vm3446, %v3445, %v3444
    %vm3449 = vcmask 1041024
    %vm3450 = vcmask 256002
    %vm3451 = vmor %vm3450, %vm3449
    %3452 = vst.msk [vmem:[#allocation2] sm:$0x5] %vm3451, %v3447
    %v3453 = vcombine.high %v3440, %v3440
    %3454 = vrot.lane.b32.xlu0 %v3453, 32
    %v3455 = vpop.permute.xlu0 %3454
    %vm3457 = vcmask 909568
    %3458 = vst.msk [vmem:[#allocation2 + $0x2] sm:$0x1] %vm3457, %v3455
    %v3459 = vrot.slane %v3453, 7
    %v3460 = vrot.slane %v3459, 2
    %3461 = vrot.lane.b32.xlu0 %v3460, 112
    %v3462 = vpop.permute.xlu0 %3461
    %v3463 = vrot.slane %v3462, 6
    %vm3464 = vcmask 916480
    %v3465 = vsel %vm3464, %v3463, %v3462
    %vm3467 = vcmask 1041280
    %vm3468 = vcmask 518146
    %vm3469 = vmor %vm3468, %vm3467
    %3470 = vst.msk [vmem:[#allocation2 + $0x2] sm:$0x5] %vm3469, %v3465
    %v3471 = vcombine.high %v3430, %v3430
    %v3473 = vunpack.c.l.s4 1983009808
    %v3474 = vunpack.c.0.s8 %v3473
    %v3475 = vlaneseq
    %v3476 = vshrl.u32 %v3475, 7
    %v3477 = vsub.s32 %v3474, %v3476
    %v3478 = vrot.slane %v3471, %v3477
    %3479 = vrot.lane.b32.xlu0 %v3478, 64
    %v3480 = vpop.permute.xlu0 %3479
    %v3481 = vrot.slane %v3480, 6
    %vm3482 = vcmask 523264
    %v3483 = vsel %vm3482, %v3481, %v3480
    %vm3485 = vcmask 1040896
    %vm3486 = vcmask 124930
    %vm3487 = vmor %vm3486, %vm3485
    %3488 = vst.msk [vmem:[#allocation2 + $0x4] sm:$0x5] %vm3487, %v3483
    %v3489 = vld [vmem:[%s0 + $0x60] sm:$0xff]
    %v3490 = vld [vmem:[%s0 + $0x68] sm:$0xff]
    %v3491 = vld [vmem:[%s0 + $0x70] sm:$0xff]
    %v3492 = vld [vmem:[%s0 + $0x78] sm:$0xf]
    %v3493 = vld [vmem:[%s1] sm:$0xff]
    %v3494 = vld [vmem:[%s1 + $0x8] sm:$0xff]
    %v3495 = vld [vmem:[%s1 + $0x10] sm:$0xff]
    %v3496 = vld [vmem:[%s1 + $0x18] sm:$0xff]
    %v3497 = vld [vmem:[%s1 + $0x20] sm:$0xff]
    %v3498 = vld [vmem:[%s1 + $0x28] sm:$0xff]
    %v3499 = vld [vmem:[%s1 + $0x30] sm:$0xff]
    %v3500 = vld [vmem:[%s1 + $0x38] sm:$0xff]
    %v3501 = vld [vmem:[%s0 + $0x80] sm:$0xff]
    %v3502 = vld [vmem:[%s0 + $0x88] sm:$0xff]
    %v3503 = vld [vmem:[%s0 + $0x90] sm:$0xff]
    %v3504 = vld [vmem:[%s0 + $0x98] sm:$0xf]
    %v3505 = vld [vmem:[%s1 + $0x40] sm:$0xff]
    %v3506 = vld [vmem:[%s1 + $0x48] sm:$0xff]
    %v3507 = vld [vmem:[%s1 + $0x50] sm:$0xff]
    %v3508 = vld [vmem:[%s1 + $0x58] sm:$0xff]
    %v3509 = vld [vmem:[%s1 + $0x60] sm:$0xff]
    %v3510 = vld [vmem:[%s1 + $0x68] sm:$0xff]
    %v3511 = vld [vmem:[%s1 + $0x70] sm:$0xff]
    %v3512 = vld [vmem:[%s1 + $0x78] sm:$0xff]
    %v3514 = vsel %vm233, %v3501, 0
    %v3517 = vsel %vm233, %v3502, 0
    %v3520 = vsel %vm233, %v3503, 0
    %v3523 = vsel %vm233, %v3504, 0
    %3525 = vmatprep.subr.mxu0 %v3506
    %3526 = vmatpush1.msra.mxu0 %v3505
    %3527 = vmatprep.subr.mxu0 %v3508
    %3528 = vmatpush1.msra.mxu0 %v3507
    %3529 = vmatprep.subr.mxu0 %v3510
    %3530 = vmatpush1.msra.mxu0 %v3509
    %3531 = vmatprep.subr.mxu0 %v3512
    %3532 = vmatpush1.msra.mxu0 %v3511
    %3533 = vmatprep.subr.mxu0 0.0
    %3534 = vmatpush1.msra.mxu0 0.0
    %3535 = vmatprep.subr.mxu0 0.0
    %3536 = vmatpush1.msra.mxu0 0.0
    %3537 = vmatprep.subr.mxu0 0.0
    %3538 = vmatpush1.msra.mxu0 0.0
    %3539 = vmatprep.subr.mxu0 0.0
    %3540 = vmatpush1.msra.mxu0 0.0
    %3541 = vmatprep.subr.mxu0 0.0
    %3542 = vmatpush1.msra.mxu0 0.0
    %3543 = vmatprep.subr.mxu0 0.0
    %3544 = vmatpush1.msra.mxu0 0.0
    %3545 = vmatprep.subr.mxu0 0.0
    %3546 = vmatpush1.msra.mxu0 0.0
    %3547 = vmatprep.subr.mxu0 0.0
    %3548 = vmatpush1.msra.mxu0 0.0
    %3549 = vmatprep.subr.mxu0 0.0
    %3550 = vmatpush1.msra.mxu0 0.0
    %3551 = vmatprep.subr.mxu0 0.0
    %3552 = vmatpush1.msra.mxu0 0.0
    %3553 = vmatprep.subr.mxu0 0.0
    %3554 = vmatpush1.msra.mxu0 0.0
    %3555 = vmatprep.subr.mxu0 0.0
    %3556 = vmatpush1.msra.mxu0 0.0
    %3557 = vmatprep.subr.mxu0 0.0
    %3558 = vmatpush1.msra.mxu0 0.0
    %3559 = vmatprep.subr.mxu0 0.0
    %3560 = vmatpush1.msra.mxu0 0.0
    %3561 = vmatprep.subr.mxu0 0.0
    %3562 = vmatpush1.msra.mxu0 0.0
    %3563 = vmatprep.subr.mxu0 0.0
    %3564 = vmatpush1.msra.mxu0 0.0
    %3565 = vmatprep.subr.mxu0 0.0
    %3566 = vmatpush1.msra.mxu0 0.0
    %3567 = vmatprep.subr.mxu0 0.0
    %3568 = vmatpush1.msra.mxu0 0.0
    %3569 = vmatprep.subr.mxu0 0.0
    %3570 = vmatpush1.msra.mxu0 0.0
    %3571 = vmatprep.subr.mxu0 0.0
    %3572 = vmatpush1.msra.mxu0 0.0
    %3573 = vmatprep.subr.mxu0 0.0
    %3574 = vmatpush1.msra.mxu0 0.0
    %3575 = vmatprep.subr.mxu0 0.0
    %3576 = vmatpush1.msra.mxu0 0.0
    %3577 = vmatprep.subr.mxu0 0.0
    %3578 = vmatpush1.msra.mxu0 0.0
    %3579 = vmatprep.subr.mxu0 0.0
    %3580 = vmatpush1.msra.mxu0 0.0
    %3581 = vmatprep.subr.mxu0 0.0
    %3582 = vmatpush1.msra.mxu0 0.0
    %3583 = vmatprep.subr.mxu0 0.0
    %3584 = vmatpush1.msra.mxu0 0.0
    %3585 = vmatprep.subr.mxu0 0.0
    %3586 = vmatpush1.msra.mxu0 0.0
    %3587 = vmatprep.subr.mxu0 0.0
    %3588 = vmatpush1.msra.mxu0 0.0
    %3589 = vmatprep.mubr.f32.mxu0 0.0
    %3590 = vmatmul.mubr.f32.gmra.mrb[0].mxu0 %v3514
    %v3591 = vpop.f32.mrb[0].mxu0
    %v3592 = vadd.f32 0.0, %v3591
    %v3593 = vpop.f32.mrb[0].mxu0
    %v3594 = vadd.f32 0.0, %v3593
    %3595 = vmatprep.mubr.f32.mxu0 0.0
    %3596 = vmatmul.mubr.f32.gmra.mrb[0].mxu0 %v3517
    %v3597 = vpop.f32.mrb[0].mxu0
    %v3598 = vadd.f32 0.0, %v3597
    %v3599 = vpop.f32.mrb[0].mxu0
    %v3600 = vadd.f32 0.0, %v3599
    %3601 = vmatprep.mubr.f32.mxu0 0.0
    %3602 = vmatmul.mubr.f32.gmra.mrb[0].mxu0 %v3520
    %v3603 = vpop.f32.mrb[0].mxu0
    %v3604 = vadd.f32 0.0, %v3603
    %v3605 = vpop.f32.mrb[0].mxu0
    %v3606 = vadd.f32 0.0, %v3605
    %3607 = vmatprep.mubr.f32.mxu0 0.0
    %3608 = vmatmul.mubr.f32.gmra.mrb[0].mxu0 %v3523
    %v3609 = vpop.f32.mrb[0].mxu0
    %v3610 = vadd.f32 0.0, %v3609
    %v3611 = vpop.f32.mrb[0].mxu0
    %v3612 = vadd.f32 0.0, %v3611
    %3613 = vdwg.mxu0
    %v3615 = vsel %vm233, %v3489, 0
    %v3618 = vsel %vm233, %v3490, 0
    %v3621 = vsel %vm233, %v3491, 0
    %v3624 = vsel %vm233, %v3492, 0
    %3626 = vmatprep.subr.mxu0 %v3494
    %3627 = vmatpush1.msra.mxu0 %v3493
    %3628 = vmatprep.subr.mxu0 %v3496
    %3629 = vmatpush1.msra.mxu0 %v3495
    %3630 = vmatprep.subr.mxu0 %v3498
    %3631 = vmatpush1.msra.mxu0 %v3497
    %3632 = vmatprep.subr.mxu0 %v3500
    %3633 = vmatpush1.msra.mxu0 %v3499
    %3634 = vmatprep.subr.mxu0 0.0
    %3635 = vmatpush1.msra.mxu0 0.0
    %3636 = vmatprep.subr.mxu0 0.0
    %3637 = vmatpush1.msra.mxu0 0.0
    %3638 = vmatprep.subr.mxu0 0.0
    %3639 = vmatpush1.msra.mxu0 0.0
    %3640 = vmatprep.subr.mxu0 0.0
    %3641 = vmatpush1.msra.mxu0 0.0
    %3642 = vmatprep.subr.mxu0 0.0
    %3643 = vmatpush1.msra.mxu0 0.0
    %3644 = vmatprep.subr.mxu0 0.0
    %3645 = vmatpush1.msra.mxu0 0.0
    %3646 = vmatprep.subr.mxu0 0.0
    %3647 = vmatpush1.msra.mxu0 0.0
    %3648 = vmatprep.subr.mxu0 0.0
    %3649 = vmatpush1.msra.mxu0 0.0
    %3650 = vmatprep.subr.mxu0 0.0
    %3651 = vmatpush1.msra.mxu0 0.0
    %3652 = vmatprep.subr.mxu0 0.0
    %3653 = vmatpush1.msra.mxu0 0.0
    %3654 = vmatprep.subr.mxu0 0.0
    %3655 = vmatpush1.msra.mxu0 0.0
    %3656 = vmatprep.subr.mxu0 0.0
    %3657 = vmatpush1.msra.mxu0 0.0
    %3658 = vmatprep.subr.mxu0 0.0
    %3659 = vmatpush1.msra.mxu0 0.0
    %3660 = vmatprep.subr.mxu0 0.0
    %3661 = vmatpush1.msra.mxu0 0.0
    %3662 = vmatprep.subr.mxu0 0.0
    %3663 = vmatpush1.msra.mxu0 0.0
    %3664 = vmatprep.subr.mxu0 0.0
    %3665 = vmatpush1.msra.mxu0 0.0
    %3666 = vmatprep.subr.mxu0 0.0
    %3667 = vmatpush1.msra.mxu0 0.0
    %3668 = vmatprep.subr.mxu0 0.0
    %3669 = vmatpush1.msra.mxu0 0.0
    %3670 = vmatprep.subr.mxu0 0.0
    %3671 = vmatpush1.msra.mxu0 0.0
    %3672 = vmatprep.subr.mxu0 0.0
    %3673 = vmatpush1.msra.mxu0 0.0
    %3674 = vmatprep.subr.mxu0 0.0
    %3675 = vmatpush1.msra.mxu0 0.0
    %3676 = vmatprep.subr.mxu0 0.0
    %3677 = vmatpush1.msra.mxu0 0.0
    %3678 = vmatprep.subr.mxu0 0.0
    %3679 = vmatpush1.msra.mxu0 0.0
    %3680 = vmatprep.subr.mxu0 0.0
    %3681 = vmatpush1.msra.mxu0 0.0
    %3682 = vmatprep.subr.mxu0 0.0
    %3683 = vmatpush1.msra.mxu0 0.0
    %3684 = vmatprep.subr.mxu0 0.0
    %3685 = vmatpush1.msra.mxu0 0.0
    %3686 = vmatprep.subr.mxu0 0.0
    %3687 = vmatpush1.msra.mxu0 0.0
    %3688 = vmatprep.subr.mxu0 0.0
    %3689 = vmatpush1.msra.mxu0 0.0
    %3690 = vmatprep.mubr.f32.mxu0 0.0
    %3691 = vmatmul.mubr.f32.gmra.mrb[0].mxu0 %v3615
    %v3692 = vpop.f32.mrb[0].mxu0
    %v3693 = vadd.f32 %v3592, %v3692
    %v3694 = vpop.f32.mrb[0].mxu0
    %v3695 = vadd.f32 %v3594, %v3694
    %3696 = vmatprep.mubr.f32.mxu0 0.0
    %3697 = vmatmul.mubr.f32.gmra.mrb[0].mxu0 %v3618
    %v3698 = vpop.f32.mrb[0].mxu0
    %v3699 = vadd.f32 %v3598, %v3698
    %v3700 = vpop.f32.mrb[0].mxu0
    %v3701 = vadd.f32 %v3600, %v3700
    %3702 = vmatprep.mubr.f32.mxu0 0.0
    %3703 = vmatmul.mubr.f32.gmra.mrb[0].mxu0 %v3621
    %v3704 = vpop.f32.mrb[0].mxu0
    %v3705 = vadd.f32 %v3604, %v3704
    %v3706 = vpop.f32.mrb[0].mxu0
    %v3707 = vadd.f32 %v3606, %v3706
    %3708 = vmatprep.mubr.f32.mxu0 0.0
    %3709 = vmatmul.mubr.f32.gmra.mrb[0].mxu0 %v3624
    %v3710 = vpop.f32.mrb[0].mxu0
    %v3711 = vadd.f32 %v3610, %v3710
    %v3712 = vpop.f32.mrb[0].mxu0
    %v3713 = vadd.f32 %v3612, %v3712
    %3714 = vdwg.mxu0
    %v3715 = vld [vmem:[%s0 + $0xa0] sm:$0xff]
    %v3716 = vld [vmem:[%s0 + $0xa8] sm:$0xff]
    %v3717 = vld [vmem:[%s0 + $0xb0] sm:$0xff]
    %v3718 = vld [vmem:[%s0 + $0xb8] sm:$0xf]
    %v3719 = vld [vmem:[%s1 + $0x80] sm:$0xff]
    %v3720 = vld [vmem:[%s1 + $0x88] sm:$0xff]
    %v3721 = vld [vmem:[%s1 + $0x90] sm:$0xff]
    %v3722 = vld [vmem:[%s1 + $0x98] sm:$0xff]
    %v3723 = vld [vmem:[%s1 + $0xa0] sm:$0xff]
    %v3724 = vld [vmem:[%s1 + $0xa8] sm:$0xff]
    %v3725 = vld [vmem:[%s1 + $0xb0] sm:$0xff]
    %v3726 = vld [vmem:[%s1 + $0xb8] sm:$0xff]
    %v3728 = vsel %vm233, %v3715, 0
    %v3731 = vsel %vm233, %v3716, 0
    %v3734 = vsel %vm233, %v3717, 0
    %v3737 = vsel %vm233, %v3718, 0
    %3739 = vmatprep.subr.mxu0 %v3720
    %3740 = vmatpush1.msra.mxu0 %v3719
    %3741 = vmatprep.subr.mxu0 %v3722
    %3742 = vmatpush1.msra.mxu0 %v3721
    %3743 = vmatprep.subr.mxu0 %v3724
    %3744 = vmatpush1.msra.mxu0 %v3723
    %3745 = vmatprep.subr.mxu0 %v3726
    %3746 = vmatpush1.msra.mxu0 %v3725
    %3747 = vmatprep.subr.mxu0 0.0
    %3748 = vmatpush1.msra.mxu0 0.0
    %3749 = vmatprep.subr.mxu0 0.0
    %3750 = vmatpush1.msra.mxu0 0.0
    %3751 = vmatprep.subr.mxu0 0.0
    %3752 = vmatpush1.msra.mxu0 0.0
    %3753 = vmatprep.subr.mxu0 0.0
    %3754 = vmatpush1.msra.mxu0 0.0
    %3755 = vmatprep.subr.mxu0 0.0
    %3756 = vmatpush1.msra.mxu0 0.0
    %3757 = vmatprep.subr.mxu0 0.0
    %3758 = vmatpush1.msra.mxu0 0.0
    %3759 = vmatprep.subr.mxu0 0.0
    %3760 = vmatpush1.msra.mxu0 0.0
    %3761 = vmatprep.subr.mxu0 0.0
    %3762 = vmatpush1.msra.mxu0 0.0
    %3763 = vmatprep.subr.mxu0 0.0
    %3764 = vmatpush1.msra.mxu0 0.0
    %3765 = vmatprep.subr.mxu0 0.0
    %3766 = vmatpush1.msra.mxu0 0.0
    %3767 = vmatprep.subr.mxu0 0.0
    %3768 = vmatpush1.msra.mxu0 0.0
    %3769 = vmatprep.subr.mxu0 0.0
    %3770 = vmatpush1.msra.mxu0 0.0
    %3771 = vmatprep.subr.mxu0 0.0
    %3772 = vmatpush1.msra.mxu0 0.0
    %3773 = vmatprep.subr.mxu0 0.0
    %3774 = vmatpush1.msra.mxu0 0.0
    %3775 = vmatprep.subr.mxu0 0.0
    %3776 = vmatpush1.msra.mxu0 0.0
    %3777 = vmatprep.subr.mxu0 0.0
    %3778 = vmatpush1.msra.mxu0 0.0
    %3779 = vmatprep.subr.mxu0 0.0
    %3780 = vmatpush1.msra.mxu0 0.0
    %3781 = vmatprep.subr.mxu0 0.0
    %3782 = vmatpush1.msra.mxu0 0.0
    %3783 = vmatprep.subr.mxu0 0.0
    %3784 = vmatpush1.msra.mxu0 0.0
    %3785 = vmatprep.subr.mxu0 0.0
    %3786 = vmatpush1.msra.mxu0 0.0
    %3787 = vmatprep.subr.mxu0 0.0
    %3788 = vmatpush1.msra.mxu0 0.0
    %3789 = vmatprep.subr.mxu0 0.0
    %3790 = vmatpush1.msra.mxu0 0.0
    %3791 = vmatprep.subr.mxu0 0.0
    %3792 = vmatpush1.msra.mxu0 0.0
    %3793 = vmatprep.subr.mxu0 0.0
    %3794 = vmatpush1.msra.mxu0 0.0
    %3795 = vmatprep.subr.mxu0 0.0
    %3796 = vmatpush1.msra.mxu0 0.0
    %3797 = vmatprep.subr.mxu0 0.0
    %3798 = vmatpush1.msra.mxu0 0.0
    %3799 = vmatprep.subr.mxu0 0.0
    %3800 = vmatpush1.msra.mxu0 0.0
    %3801 = vmatprep.subr.mxu0 0.0
    %3802 = vmatpush1.msra.mxu0 0.0
    %3803 = vmatprep.mubr.f32.mxu0 0.0
    %3804 = vmatmul.mubr.f32.gmra.mrb[0].mxu0 %v3728
    %v3805 = vpop.f32.mrb[0].mxu0
    %v3806 = vadd.f32 0.0, %v3805
    %v3807 = vpop.f32.mrb[0].mxu0
    %v3808 = vadd.f32 0.0, %v3807
    %3809 = vmatprep.mubr.f32.mxu0 0.0
    %3810 = vmatmul.mubr.f32.gmra.mrb[0].mxu0 %v3731
    %v3811 = vpop.f32.mrb[0].mxu0
    %v3812 = vadd.f32 0.0, %v3811
    %v3813 = vpop.f32.mrb[0].mxu0
    %v3814 = vadd.f32 0.0, %v3813
    %3815 = vmatprep.mubr.f32.mxu0 0.0
    %3816 = vmatmul.mubr.f32.gmra.mrb[0].mxu0 %v3734
    %v3817 = vpop.f32.mrb[0].mxu0
    %v3818 = vadd.f32 0.0, %v3817
    %v3819 = vpop.f32.mrb[0].mxu0
    %v3820 = vadd.f32 0.0, %v3819
    %3821 = vmatprep.mubr.f32.mxu0 0.0
    %3822 = vmatmul.mubr.f32.gmra.mrb[0].mxu0 %v3737
    %v3823 = vpop.f32.mrb[0].mxu0
    %v3824 = vadd.f32 0.0, %v3823
    %v3825 = vpop.f32.mrb[0].mxu0
    %v3826 = vadd.f32 0.0, %v3825
    %3827 = vdwg.mxu0
    %v3828 = vadd.f32 %v3693, %v3806
    %v3829 = vadd.f32 %v3695, %v3808
    %v3830 = vadd.f32 %v3699, %v3812
    %v3831 = vadd.f32 %v3701, %v3814
    %v3832 = vadd.f32 %v3705, %v3818
    %v3833 = vadd.f32 %v3707, %v3820
    %v3834 = vadd.f32 %v3711, %v3824
    %v3835 = vadd.f32 %v3713, %v3826
    %v3836 = vld [vmem:[%s0 + $0x61] sm:$0xff]
    %v3837 = vld [vmem:[%s0 + $0x69] sm:$0xff]
    %v3838 = vld [vmem:[%s0 + $0x71] sm:$0xff]
    %v3839 = vld [vmem:[%s0 + $0x79] sm:$0xf]
    %v3840 = vld [vmem:[%s1 + $0xc0] sm:$0xff]
    %v3841 = vld [vmem:[%s1 + $0xc8] sm:$0xff]
    %v3842 = vld [vmem:[%s1 + $0xd0] sm:$0xff]
    %v3843 = vld [vmem:[%s1 + $0xd8] sm:$0xff]
    %v3844 = vld [vmem:[%s1 + $0xe0] sm:$0xff]
    %v3845 = vld [vmem:[%s1 + $0xe8] sm:$0xff]
    %v3846 = vld [vmem:[%s1 + $0xf0] sm:$0xff]
    %v3847 = vld [vmem:[%s1 + $0xf8] sm:$0xff]
    %v3849 = vsel %vm233, %v3836, 0
    %v3852 = vsel %vm233, %v3837, 0
    %v3855 = vsel %vm233, %v3838, 0
    %v3858 = vsel %vm233, %v3839, 0
    %3860 = vmatprep.subr.mxu0 %v3841
    %3861 = vmatpush1.msra.mxu0 %v3840
    %3862 = vmatprep.subr.mxu0 %v3843
    %3863 = vmatpush1.msra.mxu0 %v3842
    %3864 = vmatprep.subr.mxu0 %v3845
    %3865 = vmatpush1.msra.mxu0 %v3844
    %3866 = vmatprep.subr.mxu0 %v3847
    %3867 = vmatpush1.msra.mxu0 %v3846
    %3868 = vmatprep.subr.mxu0 0.0
    %3869 = vmatpush1.msra.mxu0 0.0
    %3870 = vmatprep.subr.mxu0 0.0
    %3871 = vmatpush1.msra.mxu0 0.0
    %3872 = vmatprep.subr.mxu0 0.0
    %3873 = vmatpush1.msra.mxu0 0.0
    %3874 = vmatprep.subr.mxu0 0.0
    %3875 = vmatpush1.msra.mxu0 0.0
    %3876 = vmatprep.subr.mxu0 0.0
    %3877 = vmatpush1.msra.mxu0 0.0
    %3878 = vmatprep.subr.mxu0 0.0
    %3879 = vmatpush1.msra.mxu0 0.0
    %3880 = vmatprep.subr.mxu0 0.0
    %3881 = vmatpush1.msra.mxu0 0.0
    %3882 = vmatprep.subr.mxu0 0.0
    %3883 = vmatpush1.msra.mxu0 0.0
    %3884 = vmatprep.subr.mxu0 0.0
    %3885 = vmatpush1.msra.mxu0 0.0
    %3886 = vmatprep.subr.mxu0 0.0
    %3887 = vmatpush1.msra.mxu0 0.0
    %3888 = vmatprep.subr.mxu0 0.0
    %3889 = vmatpush1.msra.mxu0 0.0
    %3890 = vmatprep.subr.mxu0 0.0
    %3891 = vmatpush1.msra.mxu0 0.0
    %3892 = vmatprep.subr.mxu0 0.0
    %3893 = vmatpush1.msra.mxu0 0.0
    %3894 = vmatprep.subr.mxu0 0.0
    %3895 = vmatpush1.msra.mxu0 0.0
    %3896 = vmatprep.subr.mxu0 0.0
    %3897 = vmatpush1.msra.mxu0 0.0
    %3898 = vmatprep.subr.mxu0 0.0
    %3899 = vmatpush1.msra.mxu0 0.0
    %3900 = vmatprep.subr.mxu0 0.0
    %3901 = vmatpush1.msra.mxu0 0.0
    %3902 = vmatprep.subr.mxu0 0.0
    %3903 = vmatpush1.msra.mxu0 0.0
    %3904 = vmatprep.subr.mxu0 0.0
    %3905 = vmatpush1.msra.mxu0 0.0
    %3906 = vmatprep.subr.mxu0 0.0
    %3907 = vmatpush1.msra.mxu0 0.0
    %3908 = vmatprep.subr.mxu0 0.0
    %3909 = vmatpush1.msra.mxu0 0.0
    %3910 = vmatprep.subr.mxu0 0.0
    %3911 = vmatpush1.msra.mxu0 0.0
    %3912 = vmatprep.subr.mxu0 0.0
    %3913 = vmatpush1.msra.mxu0 0.0
    %3914 = vmatprep.subr.mxu0 0.0
    %3915 = vmatpush1.msra.mxu0 0.0
    %3916 = vmatprep.subr.mxu0 0.0
    %3917 = vmatpush1.msra.mxu0 0.0
    %3918 = vmatprep.subr.mxu0 0.0
    %3919 = vmatpush1.msra.mxu0 0.0
    %3920 = vmatprep.subr.mxu0 0.0
    %3921 = vmatpush1.msra.mxu0 0.0
    %3922 = vmatprep.subr.mxu0 0.0
    %3923 = vmatpush1.msra.mxu0 0.0
    %3924 = vmatprep.mubr.f32.mxu0 0.0
    %3925 = vmatmul.mubr.f32.gmra.mrb[0].mxu0 %v3849
    %v3926 = vpop.f32.mrb[0].mxu0
    %v3927 = vadd.f32 0.0, %v3926
    %v3928 = vpop.f32.mrb[0].mxu0
    %v3929 = vadd.f32 0.0, %v3928
    %3930 = vmatprep.mubr.f32.mxu0 0.0
    %3931 = vmatmul.mubr.f32.gmra.mrb[0].mxu0 %v3852
    %v3932 = vpop.f32.mrb[0].mxu0
    %v3933 = vadd.f32 0.0, %v3932
    %v3934 = vpop.f32.mrb[0].mxu0
    %v3935 = vadd.f32 0.0, %v3934
    %3936 = vmatprep.mubr.f32.mxu0 0.0
    %3937 = vmatmul.mubr.f32.gmra.mrb[0].mxu0 %v3855
    %v3938 = vpop.f32.mrb[0].mxu0
    %v3939 = vadd.f32 0.0, %v3938
    %v3940 = vpop.f32.mrb[0].mxu0
    %v3941 = vadd.f32 0.0, %v3940
    %3942 = vmatprep.mubr.f32.mxu0 0.0
    %3943 = vmatmul.mubr.f32.gmra.mrb[0].mxu0 %v3858
    %v3944 = vpop.f32.mrb[0].mxu0
    %v3945 = vadd.f32 0.0, %v3944
    %v3946 = vpop.f32.mrb[0].mxu0
    %v3947 = vadd.f32 0.0, %v3946
    %3948 = vdwg.mxu0
    %v3949 = vadd.f32 %v3828, %v3927
    %v3950 = vadd.f32 %v3829, %v3929
    %v3951 = vadd.f32 %v3830, %v3933
    %v3952 = vadd.f32 %v3831, %v3935
    %v3953 = vadd.f32 %v3832, %v3939
    %v3954 = vadd.f32 %v3833, %v3941
    %v3955 = vadd.f32 %v3834, %v3945
    %v3956 = vadd.f32 %v3835, %v3947
    %v3957 = vld [vmem:[%s0 + $0x81] sm:$0xff]
    %v3958 = vld [vmem:[%s0 + $0x89] sm:$0xff]
    %v3959 = vld [vmem:[%s0 + $0x91] sm:$0xff]
    %v3960 = vld [vmem:[%s0 + $0x99] sm:$0xf]
    %v3961 = vld [vmem:[%s1 + $0x100] sm:$0xff]
    %v3962 = vld [vmem:[%s1 + $0x108] sm:$0xff]
    %v3963 = vld [vmem:[%s1 + $0x110] sm:$0xff]
    %v3964 = vld [vmem:[%s1 + $0x118] sm:$0xff]
    %v3965 = vld [vmem:[%s1 + $0x120] sm:$0xff]
    %v3966 = vld [vmem:[%s1 + $0x128] sm:$0xff]
    %v3967 = vld [vmem:[%s1 + $0x130] sm:$0xff]
    %v3968 = vld [vmem:[%s1 + $0x138] sm:$0xff]
    %v3970 = vsel %vm233, %v3957, 0
    %v3973 = vsel %vm233, %v3958, 0
    %v3976 = vsel %vm233, %v3959, 0
    %v3979 = vsel %vm233, %v3960, 0
    %3981 = vmatprep.subr.mxu0 %v3962
    %3982 = vmatpush1.msra.mxu0 %v3961
    %3983 = vmatprep.subr.mxu0 %v3964
    %3984 = vmatpush1.msra.mxu0 %v3963
    %3985 = vmatprep.subr.mxu0 %v3966
    %3986 = vmatpush1.msra.mxu0 %v3965
    %3987 = vmatprep.subr.mxu0 %v3968
    %3988 = vmatpush1.msra.mxu0 %v3967
    %3989 = vmatprep.subr.mxu0 0.0
    %3990 = vmatpush1.msra.mxu0 0.0
    %3991 = vmatprep.subr.mxu0 0.0
    %3992 = vmatpush1.msra.mxu0 0.0
    %3993 = vmatprep.subr.mxu0 0.0
    %3994 = vmatpush1.msra.mxu0 0.0
    %3995 = vmatprep.subr.mxu0 0.0
    %3996 = vmatpush1.msra.mxu0 0.0
    %3997 = vmatprep.subr.mxu0 0.0
    %3998 = vmatpush1.msra.mxu0 0.0
    %3999 = vmatprep.subr.mxu0 0.0
    %4000 = vmatpush1.msra.mxu0 0.0
    %4001 = vmatprep.subr.mxu0 0.0
    %4002 = vmatpush1.msra.mxu0 0.0
    %4003 = vmatprep.subr.mxu0 0.0
    %4004 = vmatpush1.msra.mxu0 0.0
    %4005 = vmatprep.subr.mxu0 0.0
    %4006 = vmatpush1.msra.mxu0 0.0
    %4007 = vmatprep.subr.mxu0 0.0
    %4008 = vmatpush1.msra.mxu0 0.0
    %4009 = vmatprep.subr.mxu0 0.0
    %4010 = vmatpush1.msra.mxu0 0.0
    %4011 = vmatprep.subr.mxu0 0.0
    %4012 = vmatpush1.msra.mxu0 0.0
    %4013 = vmatprep.subr.mxu0 0.0
    %4014 = vmatpush1.msra.mxu0 0.0
    %4015 = vmatprep.subr.mxu0 0.0
    %4016 = vmatpush1.msra.mxu0 0.0
    %4017 = vmatprep.subr.mxu0 0.0
    %4018 = vmatpush1.msra.mxu0 0.0
    %4019 = vmatprep.subr.mxu0 0.0
    %4020 = vmatpush1.msra.mxu0 0.0
    %4021 = vmatprep.subr.mxu0 0.0
    %4022 = vmatpush1.msra.mxu0 0.0
    %4023 = vmatprep.subr.mxu0 0.0
    %4024 = vmatpush1.msra.mxu0 0.0
    %4025 = vmatprep.subr.mxu0 0.0
    %4026 = vmatpush1.msra.mxu0 0.0
    %4027 = vmatprep.subr.mxu0 0.0
    %4028 = vmatpush1.msra.mxu0 0.0
    %4029 = vmatprep.subr.mxu0 0.0
    %4030 = vmatpush1.msra.mxu0 0.0
    %4031 = vmatprep.subr.mxu0 0.0
    %4032 = vmatpush1.msra.mxu0 0.0
    %4033 = vmatprep.subr.mxu0 0.0
    %4034 = vmatpush1.msra.mxu0 0.0
    %4035 = vmatprep.subr.mxu0 0.0
    %4036 = vmatpush1.msra.mxu0 0.0
    %4037 = vmatprep.subr.mxu0 0.0
    %4038 = vmatpush1.msra.mxu0 0.0
    %4039 = vmatprep.subr.mxu0 0.0
    %4040 = vmatpush1.msra.mxu0 0.0
    %4041 = vmatprep.subr.mxu0 0.0
    %4042 = vmatpush1.msra.mxu0 0.0
    %4043 = vmatprep.subr.mxu0 0.0
    %4044 = vmatpush1.msra.mxu0 0.0
    %4045 = vmatprep.mubr.f32.mxu0 0.0
    %4046 = vmatmul.mubr.f32.gmra.mrb[0].mxu0 %v3970
    %v4047 = vpop.f32.mrb[0].mxu0
    %v4048 = vadd.f32 0.0, %v4047
    %v4049 = vpop.f32.mrb[0].mxu0
    %v4050 = vadd.f32 0.0, %v4049
    %4051 = vmatprep.mubr.f32.mxu0 0.0
    %4052 = vmatmul.mubr.f32.gmra.mrb[0].mxu0 %v3973
    %v4053 = vpop.f32.mrb[0].mxu0
    %v4054 = vadd.f32 0.0, %v4053
    %v4055 = vpop.f32.mrb[0].mxu0
    %v4056 = vadd.f32 0.0, %v4055
    %4057 = vmatprep.mubr.f32.mxu0 0.0
    %4058 = vmatmul.mubr.f32.gmra.mrb[0].mxu0 %v3976
    %v4059 = vpop.f32.mrb[0].mxu0
    %v4060 = vadd.f32 0.0, %v4059
    %v4061 = vpop.f32.mrb[0].mxu0
    %v4062 = vadd.f32 0.0, %v4061
    %4063 = vmatprep.mubr.f32.mxu0 0.0
    %4064 = vmatmul.mubr.f32.gmra.mrb[0].mxu0 %v3979
    %v4065 = vpop.f32.mrb[0].mxu0
    %v4066 = vadd.f32 0.0, %v4065
    %v4067 = vpop.f32.mrb[0].mxu0
    %v4068 = vadd.f32 0.0, %v4067
    %4069 = vdwg.mxu0
    %v4070 = vadd.f32 %v3949, %v4048
    %v4071 = vadd.f32 %v3950, %v4050
    %v4072 = vadd.f32 %v3951, %v4054
    %v4073 = vadd.f32 %v3952, %v4056
    %v4074 = vadd.f32 %v3953, %v4060
    %v4075 = vadd.f32 %v3954, %v4062
    %v4076 = vadd.f32 %v3955, %v4066
    %v4077 = vadd.f32 %v3956, %v4068
    %v4078 = vld [vmem:[%s0 + $0xa1] sm:$0xff]
    %v4079 = vld [vmem:[%s0 + $0xa9] sm:$0xff]
    %v4080 = vld [vmem:[%s0 + $0xb1] sm:$0xff]
    %v4081 = vld [vmem:[%s0 + $0xb9] sm:$0xf]
    %v4082 = vld [vmem:[%s1 + $0x140] sm:$0xff]
    %v4083 = vld [vmem:[%s1 + $0x148] sm:$0xff]
    %v4084 = vld [vmem:[%s1 + $0x150] sm:$0xff]
    %v4085 = vld [vmem:[%s1 + $0x158] sm:$0xff]
    %v4086 = vld [vmem:[%s1 + $0x160] sm:$0xff]
    %v4087 = vld [vmem:[%s1 + $0x168] sm:$0xff]
    %v4088 = vld [vmem:[%s1 + $0x170] sm:$0xff]
    %v4089 = vld [vmem:[%s1 + $0x178] sm:$0xff]
    %v4091 = vsel %vm233, %v4078, 0
    %v4094 = vsel %vm233, %v4079, 0
    %v4097 = vsel %vm233, %v4080, 0
    %v4100 = vsel %vm233, %v4081, 0
    %4102 = vmatprep.subr.mxu0 %v4083
    %4103 = vmatpush1.msra.mxu0 %v4082
    %4104 = vmatprep.subr.mxu0 %v4085
    %4105 = vmatpush1.msra.mxu0 %v4084
    %4106 = vmatprep.subr.mxu0 %v4087
    %4107 = vmatpush1.msra.mxu0 %v4086
    %4108 = vmatprep.subr.mxu0 %v4089
    %4109 = vmatpush1.msra.mxu0 %v4088
    %4110 = vmatprep.subr.mxu0 0.0
    %4111 = vmatpush1.msra.mxu0 0.0
    %4112 = vmatprep.subr.mxu0 0.0
    %4113 = vmatpush1.msra.mxu0 0.0
    %4114 = vmatprep.subr.mxu0 0.0
    %4115 = vmatpush1.msra.mxu0 0.0
    %4116 = vmatprep.subr.mxu0 0.0
    %4117 = vmatpush1.msra.mxu0 0.0
    %4118 = vmatprep.subr.mxu0 0.0
    %4119 = vmatpush1.msra.mxu0 0.0
    %4120 = vmatprep.subr.mxu0 0.0
    %4121 = vmatpush1.msra.mxu0 0.0
    %4122 = vmatprep.subr.mxu0 0.0
    %4123 = vmatpush1.msra.mxu0 0.0
    %4124 = vmatprep.subr.mxu0 0.0
    %4125 = vmatpush1.msra.mxu0 0.0
    %4126 = vmatprep.subr.mxu0 0.0
    %4127 = vmatpush1.msra.mxu0 0.0
    %4128 = vmatprep.subr.mxu0 0.0
    %4129 = vmatpush1.msra.mxu0 0.0
    %4130 = vmatprep.subr.mxu0 0.0
    %4131 = vmatpush1.msra.mxu0 0.0
    %4132 = vmatprep.subr.mxu0 0.0
    %4133 = vmatpush1.msra.mxu0 0.0
    %4134 = vmatprep.subr.mxu0 0.0
    %4135 = vmatpush1.msra.mxu0 0.0
    %4136 = vmatprep.subr.mxu0 0.0
    %4137 = vmatpush1.msra.mxu0 0.0
    %4138 = vmatprep.subr.mxu0 0.0
    %4139 = vmatpush1.msra.mxu0 0.0
    %4140 = vmatprep.subr.mxu0 0.0
    %4141 = vmatpush1.msra.mxu0 0.0
    %4142 = vmatprep.subr.mxu0 0.0
    %4143 = vmatpush1.msra.mxu0 0.0
    %4144 = vmatprep.subr.mxu0 0.0
    %4145 = vmatpush1.msra.mxu0 0.0
    %4146 = vmatprep.subr.mxu0 0.0
    %4147 = vmatpush1.msra.mxu0 0.0
    %4148 = vmatprep.subr.mxu0 0.0
    %4149 = vmatpush1.msra.mxu0 0.0
    %4150 = vmatprep.subr.mxu0 0.0
    %4151 = vmatpush1.msra.mxu0 0.0
    %4152 = vmatprep.subr.mxu0 0.0
    %4153 = vmatpush1.msra.mxu0 0.0
    %4154 = vmatprep.subr.mxu0 0.0
    %4155 = vmatpush1.msra.mxu0 0.0
    %4156 = vmatprep.subr.mxu0 0.0
    %4157 = vmatpush1.msra.mxu0 0.0
    %4158 = vmatprep.subr.mxu0 0.0
    %4159 = vmatpush1.msra.mxu0 0.0
    %4160 = vmatprep.subr.mxu0 0.0
    %4161 = vmatpush1.msra.mxu0 0.0
    %4162 = vmatprep.subr.mxu0 0.0
    %4163 = vmatpush1.msra.mxu0 0.0
    %4164 = vmatprep.subr.mxu0 0.0
    %4165 = vmatpush1.msra.mxu0 0.0
    %4166 = vmatprep.mubr.f32.mxu0 0.0
    %4167 = vmatmul.mubr.f32.gmra.mrb[0].mxu0 %v4091
    %v4168 = vpop.f32.mrb[0].mxu0
    %v4169 = vadd.f32 0.0, %v4168
    %v4170 = vpop.f32.mrb[0].mxu0
    %v4171 = vadd.f32 0.0, %v4170
    %4172 = vmatprep.mubr.f32.mxu0 0.0
    %4173 = vmatmul.mubr.f32.gmra.mrb[0].mxu0 %v4094
    %v4174 = vpop.f32.mrb[0].mxu0
    %v4175 = vadd.f32 0.0, %v4174
    %v4176 = vpop.f32.mrb[0].mxu0
    %v4177 = vadd.f32 0.0, %v4176
    %4178 = vmatprep.mubr.f32.mxu0 0.0
    %4179 = vmatmul.mubr.f32.gmra.mrb[0].mxu0 %v4097
    %v4180 = vpop.f32.mrb[0].mxu0
    %v4181 = vadd.f32 0.0, %v4180
    %v4182 = vpop.f32.mrb[0].mxu0
    %v4183 = vadd.f32 0.0, %v4182
    %4184 = vmatprep.mubr.f32.mxu0 0.0
    %4185 = vmatmul.mubr.f32.gmra.mrb[0].mxu0 %v4100
    %v4186 = vpop.f32.mrb[0].mxu0
    %v4187 = vadd.f32 0.0, %v4186
    %v4188 = vpop.f32.mrb[0].mxu0
    %v4189 = vadd.f32 0.0, %v4188
    %4190 = vdwg.mxu0
    %v4191 = vadd.f32 %v4070, %v4169
    %v4192 = vadd.f32 %v4071, %v4171
    %v4193 = vadd.f32 %v4072, %v4175
    %v4194 = vadd.f32 %v4073, %v4177
    %v4195 = vadd.f32 %v4074, %v4181
    %v4196 = vadd.f32 %v4075, %v4183
    %v4197 = vadd.f32 %v4076, %v4187
    %v4198 = vadd.f32 %v4077, %v4189
    %v4199 = vld [vmem:[%s0 + $0x62] sm:$0xff]
    %v4200 = vld [vmem:[%s0 + $0x6a] sm:$0xff]
    %v4201 = vld [vmem:[%s0 + $0x72] sm:$0xff]
    %v4202 = vld [vmem:[%s0 + $0x7a] sm:$0xf]
    %v4203 = vld [vmem:[%s1 + $0x180] sm:$0xff]
    %v4204 = vld [vmem:[%s1 + $0x188] sm:$0xff]
    %v4205 = vld [vmem:[%s1 + $0x190] sm:$0xff]
    %v4206 = vld [vmem:[%s1 + $0x198] sm:$0xff]
    %v4207 = vld [vmem:[%s1 + $0x1a0] sm:$0xff]
    %v4208 = vld [vmem:[%s1 + $0x1a8] sm:$0xff]
    %v4209 = vld [vmem:[%s1 + $0x1b0] sm:$0xff]
    %v4210 = vld [vmem:[%s1 + $0x1b8] sm:$0xff]
    %v4212 = vsel %vm233, %v4199, 0
    %v4215 = vsel %vm233, %v4200, 0
    %v4218 = vsel %vm233, %v4201, 0
    %v4221 = vsel %vm233, %v4202, 0
    %4223 = vmatprep.subr.mxu0 %v4204
    %4224 = vmatpush1.msra.mxu0 %v4203
    %4225 = vmatprep.subr.mxu0 %v4206
    %4226 = vmatpush1.msra.mxu0 %v4205
    %4227 = vmatprep.subr.mxu0 %v4208
    %4228 = vmatpush1.msra.mxu0 %v4207
    %4229 = vmatprep.subr.mxu0 %v4210
    %4230 = vmatpush1.msra.mxu0 %v4209
    %4231 = vmatprep.subr.mxu0 0.0
    %4232 = vmatpush1.msra.mxu0 0.0
    %4233 = vmatprep.subr.mxu0 0.0
    %4234 = vmatpush1.msra.mxu0 0.0
    %4235 = vmatprep.subr.mxu0 0.0
    %4236 = vmatpush1.msra.mxu0 0.0
    %4237 = vmatprep.subr.mxu0 0.0
    %4238 = vmatpush1.msra.mxu0 0.0
    %4239 = vmatprep.subr.mxu0 0.0
    %4240 = vmatpush1.msra.mxu0 0.0
    %4241 = vmatprep.subr.mxu0 0.0
    %4242 = vmatpush1.msra.mxu0 0.0
    %4243 = vmatprep.subr.mxu0 0.0
    %4244 = vmatpush1.msra.mxu0 0.0
    %4245 = vmatprep.subr.mxu0 0.0
    %4246 = vmatpush1.msra.mxu0 0.0
    %4247 = vmatprep.subr.mxu0 0.0
    %4248 = vmatpush1.msra.mxu0 0.0
    %4249 = vmatprep.subr.mxu0 0.0
    %4250 = vmatpush1.msra.mxu0 0.0
    %4251 = vmatprep.subr.mxu0 0.0
    %4252 = vmatpush1.msra.mxu0 0.0
    %4253 = vmatprep.subr.mxu0 0.0
    %4254 = vmatpush1.msra.mxu0 0.0
    %4255 = vmatprep.subr.mxu0 0.0
    %4256 = vmatpush1.msra.mxu0 0.0
    %4257 = vmatprep.subr.mxu0 0.0
    %4258 = vmatpush1.msra.mxu0 0.0
    %4259 = vmatprep.subr.mxu0 0.0
    %4260 = vmatpush1.msra.mxu0 0.0
    %4261 = vmatprep.subr.mxu0 0.0
    %4262 = vmatpush1.msra.mxu0 0.0
    %4263 = vmatprep.subr.mxu0 0.0
    %4264 = vmatpush1.msra.mxu0 0.0
    %4265 = vmatprep.subr.mxu0 0.0
    %4266 = vmatpush1.msra.mxu0 0.0
    %4267 = vmatprep.subr.mxu0 0.0
    %4268 = vmatpush1.msra.mxu0 0.0
    %4269 = vmatprep.subr.mxu0 0.0
    %4270 = vmatpush1.msra.mxu0 0.0
    %4271 = vmatprep.subr.mxu0 0.0
    %4272 = vmatpush1.msra.mxu0 0.0
    %4273 = vmatprep.subr.mxu0 0.0
    %4274 = vmatpush1.msra.mxu0 0.0
    %4275 = vmatprep.subr.mxu0 0.0
    %4276 = vmatpush1.msra.mxu0 0.0
    %4277 = vmatprep.subr.mxu0 0.0
    %4278 = vmatpush1.msra.mxu0 0.0
    %4279 = vmatprep.subr.mxu0 0.0
    %4280 = vmatpush1.msra.mxu0 0.0
    %4281 = vmatprep.subr.mxu0 0.0
    %4282 = vmatpush1.msra.mxu0 0.0
    %4283 = vmatprep.subr.mxu0 0.0
    %4284 = vmatpush1.msra.mxu0 0.0
    %4285 = vmatprep.subr.mxu0 0.0
    %4286 = vmatpush1.msra.mxu0 0.0
    %4287 = vmatprep.mubr.f32.mxu0 0.0
    %4288 = vmatmul.mubr.f32.gmra.mrb[0].mxu0 %v4212
    %v4289 = vpop.f32.mrb[0].mxu0
    %v4290 = vadd.f32 0.0, %v4289
    %v4291 = vpop.f32.mrb[0].mxu0
    %v4292 = vadd.f32 0.0, %v4291
    %4293 = vmatprep.mubr.f32.mxu0 0.0
    %4294 = vmatmul.mubr.f32.gmra.mrb[0].mxu0 %v4215
    %v4295 = vpop.f32.mrb[0].mxu0
    %v4296 = vadd.f32 0.0, %v4295
    %v4297 = vpop.f32.mrb[0].mxu0
    %v4298 = vadd.f32 0.0, %v4297
    %4299 = vmatprep.mubr.f32.mxu0 0.0
    %4300 = vmatmul.mubr.f32.gmra.mrb[0].mxu0 %v4218
    %v4301 = vpop.f32.mrb[0].mxu0
    %v4302 = vadd.f32 0.0, %v4301
    %v4303 = vpop.f32.mrb[0].mxu0
    %v4304 = vadd.f32 0.0, %v4303
    %4305 = vmatprep.mubr.f32.mxu0 0.0
    %4306 = vmatmul.mubr.f32.gmra.mrb[0].mxu0 %v4221
    %v4307 = vpop.f32.mrb[0].mxu0
    %v4308 = vadd.f32 0.0, %v4307
    %v4309 = vpop.f32.mrb[0].mxu0
    %v4310 = vadd.f32 0.0, %v4309
    %4311 = vdwg.mxu0
    %v4312 = vadd.f32 %v4191, %v4290
    %v4313 = vadd.f32 %v4192, %v4292
    %v4314 = vadd.f32 %v4193, %v4296
    %v4315 = vadd.f32 %v4194, %v4298
    %v4316 = vadd.f32 %v4195, %v4302
    %v4317 = vadd.f32 %v4196, %v4304
    %v4318 = vadd.f32 %v4197, %v4308
    %v4319 = vadd.f32 %v4198, %v4310
    %v4320 = vld [vmem:[%s0 + $0x82] sm:$0xff]
    %v4321 = vld [vmem:[%s0 + $0x8a] sm:$0xff]
    %v4322 = vld [vmem:[%s0 + $0x92] sm:$0xff]
    %v4323 = vld [vmem:[%s0 + $0x9a] sm:$0xf]
    %v4324 = vld [vmem:[%s1 + $0x1c0] sm:$0xff]
    %v4325 = vld [vmem:[%s1 + $0x1c8] sm:$0xff]
    %v4326 = vld [vmem:[%s1 + $0x1d0] sm:$0xff]
    %v4327 = vld [vmem:[%s1 + $0x1d8] sm:$0xff]
    %v4328 = vld [vmem:[%s1 + $0x1e0] sm:$0xff]
    %v4329 = vld [vmem:[%s1 + $0x1e8] sm:$0xff]
    %v4330 = vld [vmem:[%s1 + $0x1f0] sm:$0xff]
    %v4331 = vld [vmem:[%s1 + $0x1f8] sm:$0xff]
    %v4333 = vsel %vm233, %v4320, 0
    %v4336 = vsel %vm233, %v4321, 0
    %v4339 = vsel %vm233, %v4322, 0
    %v4342 = vsel %vm233, %v4323, 0
    %4344 = vmatprep.subr.mxu0 %v4325
    %4345 = vmatpush1.msra.mxu0 %v4324
    %4346 = vmatprep.subr.mxu0 %v4327
    %4347 = vmatpush1.msra.mxu0 %v4326
    %4348 = vmatprep.subr.mxu0 %v4329
    %4349 = vmatpush1.msra.mxu0 %v4328
    %4350 = vmatprep.subr.mxu0 %v4331
    %4351 = vmatpush1.msra.mxu0 %v4330
    %4352 = vmatprep.subr.mxu0 0.0
    %4353 = vmatpush1.msra.mxu0 0.0
    %4354 = vmatprep.subr.mxu0 0.0
    %4355 = vmatpush1.msra.mxu0 0.0
    %4356 = vmatprep.subr.mxu0 0.0
    %4357 = vmatpush1.msra.mxu0 0.0
    %4358 = vmatprep.subr.mxu0 0.0
    %4359 = vmatpush1.msra.mxu0 0.0
    %4360 = vmatprep.subr.mxu0 0.0
    %4361 = vmatpush1.msra.mxu0 0.0
    %4362 = vmatprep.subr.mxu0 0.0
    %4363 = vmatpush1.msra.mxu0 0.0
    %4364 = vmatprep.subr.mxu0 0.0
    %4365 = vmatpush1.msra.mxu0 0.0
    %4366 = vmatprep.subr.mxu0 0.0
    %4367 = vmatpush1.msra.mxu0 0.0
    %4368 = vmatprep.subr.mxu0 0.0
    %4369 = vmatpush1.msra.mxu0 0.0
    %4370 = vmatprep.subr.mxu0 0.0
    %4371 = vmatpush1.msra.mxu0 0.0
    %4372 = vmatprep.subr.mxu0 0.0
    %4373 = vmatpush1.msra.mxu0 0.0
    %4374 = vmatprep.subr.mxu0 0.0
    %4375 = vmatpush1.msra.mxu0 0.0
    %4376 = vmatprep.subr.mxu0 0.0
    %4377 = vmatpush1.msra.mxu0 0.0
    %4378 = vmatprep.subr.mxu0 0.0
    %4379 = vmatpush1.msra.mxu0 0.0
    %4380 = vmatprep.subr.mxu0 0.0
    %4381 = vmatpush1.msra.mxu0 0.0
    %4382 = vmatprep.subr.mxu0 0.0
    %4383 = vmatpush1.msra.mxu0 0.0
    %4384 = vmatprep.subr.mxu0 0.0
    %4385 = vmatpush1.msra.mxu0 0.0
    %4386 = vmatprep.subr.mxu0 0.0
    %4387 = vmatpush1.msra.mxu0 0.0
    %4388 = vmatprep.subr.mxu0 0.0
    %4389 = vmatpush1.msra.mxu0 0.0
    %4390 = vmatprep.subr.mxu0 0.0
    %4391 = vmatpush1.msra.mxu0 0.0
    %4392 = vmatprep.subr.mxu0 0.0
    %4393 = vmatpush1.msra.mxu0 0.0
    %4394 = vmatprep.subr.mxu0 0.0
    %4395 = vmatpush1.msra.mxu0 0.0
    %4396 = vmatprep.subr.mxu0 0.0
    %4397 = vmatpush1.msra.mxu0 0.0
    %4398 = vmatprep.subr.mxu0 0.0
    %4399 = vmatpush1.msra.mxu0 0.0
    %4400 = vmatprep.subr.mxu0 0.0
    %4401 = vmatpush1.msra.mxu0 0.0
    %4402 = vmatprep.subr.mxu0 0.0
    %4403 = vmatpush1.msra.mxu0 0.0
    %4404 = vmatprep.subr.mxu0 0.0
    %4405 = vmatpush1.msra.mxu0 0.0
    %4406 = vmatprep.subr.mxu0 0.0
    %4407 = vmatpush1.msra.mxu0 0.0
    %4408 = vmatprep.mubr.f32.mxu0 0.0
    %4409 = vmatmul.mubr.f32.gmra.mrb[0].mxu0 %v4333
    %v4410 = vpop.f32.mrb[0].mxu0
    %v4411 = vadd.f32 0.0, %v4410
    %v4412 = vpop.f32.mrb[0].mxu0
    %v4413 = vadd.f32 0.0, %v4412
    %4414 = vmatprep.mubr.f32.mxu0 0.0
    %4415 = vmatmul.mubr.f32.gmra.mrb[0].mxu0 %v4336
    %v4416 = vpop.f32.mrb[0].mxu0
    %v4417 = vadd.f32 0.0, %v4416
    %v4418 = vpop.f32.mrb[0].mxu0
    %v4419 = vadd.f32 0.0, %v4418
    %4420 = vmatprep.mubr.f32.mxu0 0.0
    %4421 = vmatmul.mubr.f32.gmra.mrb[0].mxu0 %v4339
    %v4422 = vpop.f32.mrb[0].mxu0
    %v4423 = vadd.f32 0.0, %v4422
    %v4424 = vpop.f32.mrb[0].mxu0
    %v4425 = vadd.f32 0.0, %v4424
    %4426 = vmatprep.mubr.f32.mxu0 0.0
    %4427 = vmatmul.mubr.f32.gmra.mrb[0].mxu0 %v4342
    %v4428 = vpop.f32.mrb[0].mxu0
    %v4429 = vadd.f32 0.0, %v4428
    %v4430 = vpop.f32.mrb[0].mxu0
    %v4431 = vadd.f32 0.0, %v4430
    %4432 = vdwg.mxu0
    %v4433 = vadd.f32 %v4312, %v4411
    %v4434 = vadd.f32 %v4313, %v4413
    %v4435 = vadd.f32 %v4314, %v4417
    %v4436 = vadd.f32 %v4315, %v4419
    %v4437 = vadd.f32 %v4316, %v4423
    %v4438 = vadd.f32 %v4317, %v4425
    %v4439 = vadd.f32 %v4318, %v4429
    %v4440 = vadd.f32 %v4319, %v4431
    %v4441 = vld [vmem:[%s0 + $0xa2] sm:$0xff]
    %v4442 = vld [vmem:[%s0 + $0xaa] sm:$0xff]
    %v4443 = vld [vmem:[%s0 + $0xb2] sm:$0xff]
    %v4444 = vld [vmem:[%s0 + $0xba] sm:$0xf]
    %v4445 = vld [vmem:[%s1 + $0x200] sm:$0xff]
    %v4446 = vld [vmem:[%s1 + $0x208] sm:$0xff]
    %v4447 = vld [vmem:[%s1 + $0x210] sm:$0xff]
    %v4448 = vld [vmem:[%s1 + $0x218] sm:$0xff]
    %v4449 = vld [vmem:[%s1 + $0x220] sm:$0xff]
    %v4450 = vld [vmem:[%s1 + $0x228] sm:$0xff]
    %v4451 = vld [vmem:[%s1 + $0x230] sm:$0xff]
    %v4452 = vld [vmem:[%s1 + $0x238] sm:$0xff]
    %v4454 = vsel %vm233, %v4441, 0
    %v4457 = vsel %vm233, %v4442, 0
    %v4460 = vsel %vm233, %v4443, 0
    %v4463 = vsel %vm233, %v4444, 0
    %4465 = vmatprep.subr.mxu0 %v4446
    %4466 = vmatpush1.msra.mxu0 %v4445
    %4467 = vmatprep.subr.mxu0 %v4448
    %4468 = vmatpush1.msra.mxu0 %v4447
    %4469 = vmatprep.subr.mxu0 %v4450
    %4470 = vmatpush1.msra.mxu0 %v4449
    %4471 = vmatprep.subr.mxu0 %v4452
    %4472 = vmatpush1.msra.mxu0 %v4451
    %4473 = vmatprep.subr.mxu0 0.0
    %4474 = vmatpush1.msra.mxu0 0.0
    %4475 = vmatprep.subr.mxu0 0.0
    %4476 = vmatpush1.msra.mxu0 0.0
    %4477 = vmatprep.subr.mxu0 0.0
    %4478 = vmatpush1.msra.mxu0 0.0
    %4479 = vmatprep.subr.mxu0 0.0
    %4480 = vmatpush1.msra.mxu0 0.0
    %4481 = vmatprep.subr.mxu0 0.0
    %4482 = vmatpush1.msra.mxu0 0.0
    %4483 = vmatprep.subr.mxu0 0.0
    %4484 = vmatpush1.msra.mxu0 0.0
    %4485 = vmatprep.subr.mxu0 0.0
    %4486 = vmatpush1.msra.mxu0 0.0
    %4487 = vmatprep.subr.mxu0 0.0
    %4488 = vmatpush1.msra.mxu0 0.0
    %4489 = vmatprep.subr.mxu0 0.0
    %4490 = vmatpush1.msra.mxu0 0.0
    %4491 = vmatprep.subr.mxu0 0.0
    %4492 = vmatpush1.msra.mxu0 0.0
    %4493 = vmatprep.subr.mxu0 0.0
    %4494 = vmatpush1.msra.mxu0 0.0
    %4495 = vmatprep.subr.mxu0 0.0
    %4496 = vmatpush1.msra.mxu0 0.0
    %4497 = vmatprep.subr.mxu0 0.0
    %4498 = vmatpush1.msra.mxu0 0.0
    %4499 = vmatprep.subr.mxu0 0.0
    %4500 = vmatpush1.msra.mxu0 0.0
    %4501 = vmatprep.subr.mxu0 0.0
    %4502 = vmatpush1.msra.mxu0 0.0
    %4503 = vmatprep.subr.mxu0 0.0
    %4504 = vmatpush1.msra.mxu0 0.0
    %4505 = vmatprep.subr.mxu0 0.0
    %4506 = vmatpush1.msra.mxu0 0.0
    %4507 = vmatprep.subr.mxu0 0.0
    %4508 = vmatpush1.msra.mxu0 0.0
    %4509 = vmatprep.subr.mxu0 0.0
    %4510 = vmatpush1.msra.mxu0 0.0
    %4511 = vmatprep.subr.mxu0 0.0
    %4512 = vmatpush1.msra.mxu0 0.0
    %4513 = vmatprep.subr.mxu0 0.0
    %4514 = vmatpush1.msra.mxu0 0.0
    %4515 = vmatprep.subr.mxu0 0.0
    %4516 = vmatpush1.msra.mxu0 0.0
    %4517 = vmatprep.subr.mxu0 0.0
    %4518 = vmatpush1.msra.mxu0 0.0
    %4519 = vmatprep.subr.mxu0 0.0
    %4520 = vmatpush1.msra.mxu0 0.0
    %4521 = vmatprep.subr.mxu0 0.0
    %4522 = vmatpush1.msra.mxu0 0.0
    %4523 = vmatprep.subr.mxu0 0.0
    %4524 = vmatpush1.msra.mxu0 0.0
    %4525 = vmatprep.subr.mxu0 0.0
    %4526 = vmatpush1.msra.mxu0 0.0
    %4527 = vmatprep.subr.mxu0 0.0
    %4528 = vmatpush1.msra.mxu0 0.0
    %4529 = vmatprep.mubr.f32.mxu0 0.0
    %4530 = vmatmul.mubr.f32.gmra.mrb[0].mxu0 %v4454
    %v4531 = vpop.f32.mrb[0].mxu0
    %v4532 = vadd.f32 0.0, %v4531
    %v4533 = vpop.f32.mrb[0].mxu0
    %v4534 = vadd.f32 0.0, %v4533
    %4535 = vmatprep.mubr.f32.mxu0 0.0
    %4536 = vmatmul.mubr.f32.gmra.mrb[0].mxu0 %v4457
    %v4537 = vpop.f32.mrb[0].mxu0
    %v4538 = vadd.f32 0.0, %v4537
    %v4539 = vpop.f32.mrb[0].mxu0
    %v4540 = vadd.f32 0.0, %v4539
    %4541 = vmatprep.mubr.f32.mxu0 0.0
    %4542 = vmatmul.mubr.f32.gmra.mrb[0].mxu0 %v4460
    %v4543 = vpop.f32.mrb[0].mxu0
    %v4544 = vadd.f32 0.0, %v4543
    %v4545 = vpop.f32.mrb[0].mxu0
    %v4546 = vadd.f32 0.0, %v4545
    %4547 = vmatprep.mubr.f32.mxu0 0.0
    %4548 = vmatmul.mubr.f32.gmra.mrb[0].mxu0 %v4463
    %v4549 = vpop.f32.mrb[0].mxu0
    %v4550 = vadd.f32 0.0, %v4549
    %v4551 = vpop.f32.mrb[0].mxu0
    %v4552 = vadd.f32 0.0, %v4551
    %4553 = vdwg.mxu0
    %v4554 = vadd.f32 %v4433, %v4532
    %v4555 = vadd.f32 %v4434, %v4534
    %v4556 = vadd.f32 %v4435, %v4538
    %v4557 = vadd.f32 %v4436, %v4540
    %v4558 = vadd.f32 %v4437, %v4544
    %v4559 = vadd.f32 %v4438, %v4546
    %v4560 = vadd.f32 %v4439, %v4550
    %v4561 = vadd.f32 %v4440, %v4552
    %v4562 = vld [vmem:[%s0 + $0x63] sm:$0xff]
    %v4563 = vld [vmem:[%s0 + $0x6b] sm:$0xff]
    %v4564 = vld [vmem:[%s0 + $0x73] sm:$0xff]
    %v4565 = vld [vmem:[%s0 + $0x7b] sm:$0xf]
    %v4566 = vld [vmem:[%s1 + $0x240] sm:$0xff]
    %v4567 = vld [vmem:[%s1 + $0x248] sm:$0xff]
    %v4568 = vld [vmem:[%s1 + $0x250] sm:$0xff]
    %v4569 = vld [vmem:[%s1 + $0x258] sm:$0xff]
    %v4570 = vld [vmem:[%s1 + $0x260] sm:$0xff]
    %v4571 = vld [vmem:[%s1 + $0x268] sm:$0xff]
    %v4572 = vld [vmem:[%s1 + $0x270] sm:$0xff]
    %v4573 = vld [vmem:[%s1 + $0x278] sm:$0xff]
    %v4575 = vsel %vm233, %v4562, 0
    %v4578 = vsel %vm233, %v4563, 0
    %v4581 = vsel %vm233, %v4564, 0
    %v4584 = vsel %vm233, %v4565, 0
    %4586 = vmatprep.subr.mxu0 %v4567
    %4587 = vmatpush1.msra.mxu0 %v4566
    %4588 = vmatprep.subr.mxu0 %v4569
    %4589 = vmatpush1.msra.mxu0 %v4568
    %4590 = vmatprep.subr.mxu0 %v4571
    %4591 = vmatpush1.msra.mxu0 %v4570
    %4592 = vmatprep.subr.mxu0 %v4573
    %4593 = vmatpush1.msra.mxu0 %v4572
    %4594 = vmatprep.subr.mxu0 0.0
    %4595 = vmatpush1.msra.mxu0 0.0
    %4596 = vmatprep.subr.mxu0 0.0
    %4597 = vmatpush1.msra.mxu0 0.0
    %4598 = vmatprep.subr.mxu0 0.0
    %4599 = vmatpush1.msra.mxu0 0.0
    %4600 = vmatprep.subr.mxu0 0.0
    %4601 = vmatpush1.msra.mxu0 0.0
    %4602 = vmatprep.subr.mxu0 0.0
    %4603 = vmatpush1.msra.mxu0 0.0
    %4604 = vmatprep.subr.mxu0 0.0
    %4605 = vmatpush1.msra.mxu0 0.0
    %4606 = vmatprep.subr.mxu0 0.0
    %4607 = vmatpush1.msra.mxu0 0.0
    %4608 = vmatprep.subr.mxu0 0.0
    %4609 = vmatpush1.msra.mxu0 0.0
    %4610 = vmatprep.subr.mxu0 0.0
    %4611 = vmatpush1.msra.mxu0 0.0
    %4612 = vmatprep.subr.mxu0 0.0
    %4613 = vmatpush1.msra.mxu0 0.0
    %4614 = vmatprep.subr.mxu0 0.0
    %4615 = vmatpush1.msra.mxu0 0.0
    %4616 = vmatprep.subr.mxu0 0.0
    %4617 = vmatpush1.msra.mxu0 0.0
    %4618 = vmatprep.subr.mxu0 0.0
    %4619 = vmatpush1.msra.mxu0 0.0
    %4620 = vmatprep.subr.mxu0 0.0
    %4621 = vmatpush1.msra.mxu0 0.0
    %4622 = vmatprep.subr.mxu0 0.0
    %4623 = vmatpush1.msra.mxu0 0.0
    %4624 = vmatprep.subr.mxu0 0.0
    %4625 = vmatpush1.msra.mxu0 0.0
    %4626 = vmatprep.subr.mxu0 0.0
    %4627 = vmatpush1.msra.mxu0 0.0
    %4628 = vmatprep.subr.mxu0 0.0
    %4629 = vmatpush1.msra.mxu0 0.0
    %4630 = vmatprep.subr.mxu0 0.0
    %4631 = vmatpush1.msra.mxu0 0.0
    %4632 = vmatprep.subr.mxu0 0.0
    %4633 = vmatpush1.msra.mxu0 0.0
    %4634 = vmatprep.subr.mxu0 0.0
    %4635 = vmatpush1.msra.mxu0 0.0
    %4636 = vmatprep.subr.mxu0 0.0
    %4637 = vmatpush1.msra.mxu0 0.0
    %4638 = vmatprep.subr.mxu0 0.0
    %4639 = vmatpush1.msra.mxu0 0.0
    %4640 = vmatprep.subr.mxu0 0.0
    %4641 = vmatpush1.msra.mxu0 0.0
    %4642 = vmatprep.subr.mxu0 0.0
    %4643 = vmatpush1.msra.mxu0 0.0
    %4644 = vmatprep.subr.mxu0 0.0
    %4645 = vmatpush1.msra.mxu0 0.0
    %4646 = vmatprep.subr.mxu0 0.0
    %4647 = vmatpush1.msra.mxu0 0.0
    %4648 = vmatprep.subr.mxu0 0.0
    %4649 = vmatpush1.msra.mxu0 0.0
    %4650 = vmatprep.mubr.f32.mxu0 0.0
    %4651 = vmatmul.mubr.f32.gmra.mrb[0].mxu0 %v4575
    %v4652 = vpop.f32.mrb[0].mxu0
    %v4653 = vadd.f32 0.0, %v4652
    %v4654 = vpop.f32.mrb[0].mxu0
    %v4655 = vadd.f32 0.0, %v4654
    %4656 = vmatprep.mubr.f32.mxu0 0.0
    %4657 = vmatmul.mubr.f32.gmra.mrb[0].mxu0 %v4578
    %v4658 = vpop.f32.mrb[0].mxu0
    %v4659 = vadd.f32 0.0, %v4658
    %v4660 = vpop.f32.mrb[0].mxu0
    %v4661 = vadd.f32 0.0, %v4660
    %4662 = vmatprep.mubr.f32.mxu0 0.0
    %4663 = vmatmul.mubr.f32.gmra.mrb[0].mxu0 %v4581
    %v4664 = vpop.f32.mrb[0].mxu0
    %v4665 = vadd.f32 0.0, %v4664
    %v4666 = vpop.f32.mrb[0].mxu0
    %v4667 = vadd.f32 0.0, %v4666
    %4668 = vmatprep.mubr.f32.mxu0 0.0
    %4669 = vmatmul.mubr.f32.gmra.mrb[0].mxu0 %v4584
    %v4670 = vpop.f32.mrb[0].mxu0
    %v4671 = vadd.f32 0.0, %v4670
    %v4672 = vpop.f32.mrb[0].mxu0
    %v4673 = vadd.f32 0.0, %v4672
    %4674 = vdwg.mxu0
    %v4675 = vadd.f32 %v4554, %v4653
    %v4676 = vadd.f32 %v4555, %v4655
    %v4677 = vadd.f32 %v4556, %v4659
    %v4678 = vadd.f32 %v4557, %v4661
    %v4679 = vadd.f32 %v4558, %v4665
    %v4680 = vadd.f32 %v4559, %v4667
    %v4681 = vadd.f32 %v4560, %v4671
    %v4682 = vadd.f32 %v4561, %v4673
    %v4683 = vld [vmem:[%s0 + $0x83] sm:$0xff]
    %v4684 = vld [vmem:[%s0 + $0x8b] sm:$0xff]
    %v4685 = vld [vmem:[%s0 + $0x93] sm:$0xff]
    %v4686 = vld [vmem:[%s0 + $0x9b] sm:$0xf]
    %v4687 = vld [vmem:[%s1 + $0x280] sm:$0xff]
    %v4688 = vld [vmem:[%s1 + $0x288] sm:$0xff]
    %v4689 = vld [vmem:[%s1 + $0x290] sm:$0xff]
    %v4690 = vld [vmem:[%s1 + $0x298] sm:$0xff]
    %v4691 = vld [vmem:[%s1 + $0x2a0] sm:$0xff]
    %v4692 = vld [vmem:[%s1 + $0x2a8] sm:$0xff]
    %v4693 = vld [vmem:[%s1 + $0x2b0] sm:$0xff]
    %v4694 = vld [vmem:[%s1 + $0x2b8] sm:$0xff]
    %v4696 = vsel %vm233, %v4683, 0
    %v4699 = vsel %vm233, %v4684, 0
    %v4702 = vsel %vm233, %v4685, 0
    %v4705 = vsel %vm233, %v4686, 0
    %4707 = vmatprep.subr.mxu0 %v4688
    %4708 = vmatpush1.msra.mxu0 %v4687
    %4709 = vmatprep.subr.mxu0 %v4690
    %4710 = vmatpush1.msra.mxu0 %v4689
    %4711 = vmatprep.subr.mxu0 %v4692
    %4712 = vmatpush1.msra.mxu0 %v4691
    %4713 = vmatprep.subr.mxu0 %v4694
    %4714 = vmatpush1.msra.mxu0 %v4693
    %4715 = vmatprep.subr.mxu0 0.0
    %4716 = vmatpush1.msra.mxu0 0.0
    %4717 = vmatprep.subr.mxu0 0.0
    %4718 = vmatpush1.msra.mxu0 0.0
    %4719 = vmatprep.subr.mxu0 0.0
    %4720 = vmatpush1.msra.mxu0 0.0
    %4721 = vmatprep.subr.mxu0 0.0
    %4722 = vmatpush1.msra.mxu0 0.0
    %4723 = vmatprep.subr.mxu0 0.0
    %4724 = vmatpush1.msra.mxu0 0.0
    %4725 = vmatprep.subr.mxu0 0.0
    %4726 = vmatpush1.msra.mxu0 0.0
    %4727 = vmatprep.subr.mxu0 0.0
    %4728 = vmatpush1.msra.mxu0 0.0
    %4729 = vmatprep.subr.mxu0 0.0
    %4730 = vmatpush1.msra.mxu0 0.0
    %4731 = vmatprep.subr.mxu0 0.0
    %4732 = vmatpush1.msra.mxu0 0.0
    %4733 = vmatprep.subr.mxu0 0.0
    %4734 = vmatpush1.msra.mxu0 0.0
    %4735 = vmatprep.subr.mxu0 0.0
    %4736 = vmatpush1.msra.mxu0 0.0
    %4737 = vmatprep.subr.mxu0 0.0
    %4738 = vmatpush1.msra.mxu0 0.0
    %4739 = vmatprep.subr.mxu0 0.0
    %4740 = vmatpush1.msra.mxu0 0.0
    %4741 = vmatprep.subr.mxu0 0.0
    %4742 = vmatpush1.msra.mxu0 0.0
    %4743 = vmatprep.subr.mxu0 0.0
    %4744 = vmatpush1.msra.mxu0 0.0
    %4745 = vmatprep.subr.mxu0 0.0
    %4746 = vmatpush1.msra.mxu0 0.0
    %4747 = vmatprep.subr.mxu0 0.0
    %4748 = vmatpush1.msra.mxu0 0.0
    %4749 = vmatprep.subr.mxu0 0.0
    %4750 = vmatpush1.msra.mxu0 0.0
    %4751 = vmatprep.subr.mxu0 0.0
    %4752 = vmatpush1.msra.mxu0 0.0
    %4753 = vmatprep.subr.mxu0 0.0
    %4754 = vmatpush1.msra.mxu0 0.0
    %4755 = vmatprep.subr.mxu0 0.0
    %4756 = vmatpush1.msra.mxu0 0.0
    %4757 = vmatprep.subr.mxu0 0.0
    %4758 = vmatpush1.msra.mxu0 0.0
    %4759 = vmatprep.subr.mxu0 0.0
    %4760 = vmatpush1.msra.mxu0 0.0
    %4761 = vmatprep.subr.mxu0 0.0
    %4762 = vmatpush1.msra.mxu0 0.0
    %4763 = vmatprep.subr.mxu0 0.0
    %4764 = vmatpush1.msra.mxu0 0.0
    %4765 = vmatprep.subr.mxu0 0.0
    %4766 = vmatpush1.msra.mxu0 0.0
    %4767 = vmatprep.subr.mxu0 0.0
    %4768 = vmatpush1.msra.mxu0 0.0
    %4769 = vmatprep.subr.mxu0 0.0
    %4770 = vmatpush1.msra.mxu0 0.0
    %4771 = vmatprep.mubr.f32.mxu0 0.0
    %4772 = vmatmul.mubr.f32.gmra.mrb[0].mxu0 %v4696
    %v4773 = vpop.f32.mrb[0].mxu0
    %v4774 = vadd.f32 0.0, %v4773
    %v4775 = vpop.f32.mrb[0].mxu0
    %v4776 = vadd.f32 0.0, %v4775
    %4777 = vmatprep.mubr.f32.mxu0 0.0
    %4778 = vmatmul.mubr.f32.gmra.mrb[0].mxu0 %v4699
    %v4779 = vpop.f32.mrb[0].mxu0
    %v4780 = vadd.f32 0.0, %v4779
    %v4781 = vpop.f32.mrb[0].mxu0
    %v4782 = vadd.f32 0.0, %v4781
    %4783 = vmatprep.mubr.f32.mxu0 0.0
    %4784 = vmatmul.mubr.f32.gmra.mrb[0].mxu0 %v4702
    %v4785 = vpop.f32.mrb[0].mxu0
    %v4786 = vadd.f32 0.0, %v4785
    %v4787 = vpop.f32.mrb[0].mxu0
    %v4788 = vadd.f32 0.0, %v4787
    %4789 = vmatprep.mubr.f32.mxu0 0.0
    %4790 = vmatmul.mubr.f32.gmra.mrb[0].mxu0 %v4705
    %v4791 = vpop.f32.mrb[0].mxu0
    %v4792 = vadd.f32 0.0, %v4791
    %v4793 = vpop.f32.mrb[0].mxu0
    %v4794 = vadd.f32 0.0, %v4793
    %4795 = vdwg.mxu0
    %v4796 = vadd.f32 %v4675, %v4774
    %v4797 = vadd.f32 %v4676, %v4776
    %v4798 = vadd.f32 %v4677, %v4780
    %v4799 = vadd.f32 %v4678, %v4782
    %v4800 = vadd.f32 %v4679, %v4786
    %v4801 = vadd.f32 %v4680, %v4788
    %v4802 = vadd.f32 %v4681, %v4792
    %v4803 = vadd.f32 %v4682, %v4794
    %v4804 = vld [vmem:[%s0 + $0xa3] sm:$0xff]
    %v4805 = vld [vmem:[%s0 + $0xab] sm:$0xff]
    %v4806 = vld [vmem:[%s0 + $0xb3] sm:$0xff]
    %v4807 = vld [vmem:[%s0 + $0xbb] sm:$0xf]
    %v4808 = vld [vmem:[%s1 + $0x2c0] sm:$0xff]
    %v4809 = vld [vmem:[%s1 + $0x2c8] sm:$0xff]
    %v4810 = vld [vmem:[%s1 + $0x2d0] sm:$0xff]
    %v4811 = vld [vmem:[%s1 + $0x2d8] sm:$0xff]
    %v4812 = vld [vmem:[%s1 + $0x2e0] sm:$0xff]
    %v4813 = vld [vmem:[%s1 + $0x2e8] sm:$0xff]
    %v4814 = vld [vmem:[%s1 + $0x2f0] sm:$0xff]
    %v4815 = vld [vmem:[%s1 + $0x2f8] sm:$0xff]
    %v4817 = vsel %vm233, %v4804, 0
    %v4820 = vsel %vm233, %v4805, 0
    %v4823 = vsel %vm233, %v4806, 0
    %v4826 = vsel %vm233, %v4807, 0
    %4828 = vmatprep.subr.mxu0 %v4809
    %4829 = vmatpush1.msra.mxu0 %v4808
    %4830 = vmatprep.subr.mxu0 %v4811
    %4831 = vmatpush1.msra.mxu0 %v4810
    %4832 = vmatprep.subr.mxu0 %v4813
    %4833 = vmatpush1.msra.mxu0 %v4812
    %4834 = vmatprep.subr.mxu0 %v4815
    %4835 = vmatpush1.msra.mxu0 %v4814
    %4836 = vmatprep.subr.mxu0 0.0
    %4837 = vmatpush1.msra.mxu0 0.0
    %4838 = vmatprep.subr.mxu0 0.0
    %4839 = vmatpush1.msra.mxu0 0.0
    %4840 = vmatprep.subr.mxu0 0.0
    %4841 = vmatpush1.msra.mxu0 0.0
    %4842 = vmatprep.subr.mxu0 0.0
    %4843 = vmatpush1.msra.mxu0 0.0
    %4844 = vmatprep.subr.mxu0 0.0
    %4845 = vmatpush1.msra.mxu0 0.0
    %4846 = vmatprep.subr.mxu0 0.0
    %4847 = vmatpush1.msra.mxu0 0.0
    %4848 = vmatprep.subr.mxu0 0.0
    %4849 = vmatpush1.msra.mxu0 0.0
    %4850 = vmatprep.subr.mxu0 0.0
    %4851 = vmatpush1.msra.mxu0 0.0
    %4852 = vmatprep.subr.mxu0 0.0
    %4853 = vmatpush1.msra.mxu0 0.0
    %4854 = vmatprep.subr.mxu0 0.0
    %4855 = vmatpush1.msra.mxu0 0.0
    %4856 = vmatprep.subr.mxu0 0.0
    %4857 = vmatpush1.msra.mxu0 0.0
    %4858 = vmatprep.subr.mxu0 0.0
    %4859 = vmatpush1.msra.mxu0 0.0
    %4860 = vmatprep.subr.mxu0 0.0
    %4861 = vmatpush1.msra.mxu0 0.0
    %4862 = vmatprep.subr.mxu0 0.0
    %4863 = vmatpush1.msra.mxu0 0.0
    %4864 = vmatprep.subr.mxu0 0.0
    %4865 = vmatpush1.msra.mxu0 0.0
    %4866 = vmatprep.subr.mxu0 0.0
    %4867 = vmatpush1.msra.mxu0 0.0
    %4868 = vmatprep.subr.mxu0 0.0
    %4869 = vmatpush1.msra.mxu0 0.0
    %4870 = vmatprep.subr.mxu0 0.0
    %4871 = vmatpush1.msra.mxu0 0.0
    %4872 = vmatprep.subr.mxu0 0.0
    %4873 = vmatpush1.msra.mxu0 0.0
    %4874 = vmatprep.subr.mxu0 0.0
    %4875 = vmatpush1.msra.mxu0 0.0
    %4876 = vmatprep.subr.mxu0 0.0
    %4877 = vmatpush1.msra.mxu0 0.0
    %4878 = vmatprep.subr.mxu0 0.0
    %4879 = vmatpush1.msra.mxu0 0.0
    %4880 = vmatprep.subr.mxu0 0.0
    %4881 = vmatpush1.msra.mxu0 0.0
    %4882 = vmatprep.subr.mxu0 0.0
    %4883 = vmatpush1.msra.mxu0 0.0
    %4884 = vmatprep.subr.mxu0 0.0
    %4885 = vmatpush1.msra.mxu0 0.0
    %4886 = vmatprep.subr.mxu0 0.0
    %4887 = vmatpush1.msra.mxu0 0.0
    %4888 = vmatprep.subr.mxu0 0.0
    %4889 = vmatpush1.msra.mxu0 0.0
    %4890 = vmatprep.subr.mxu0 0.0
    %4891 = vmatpush1.msra.mxu0 0.0
    %4892 = vmatprep.mubr.f32.mxu0 0.0
    %4893 = vmatmul.mubr.f32.gmra.mrb[0].mxu0 %v4817
    %v4894 = vpop.f32.mrb[0].mxu0
    %v4895 = vadd.f32 0.0, %v4894
    %v4896 = vpop.f32.mrb[0].mxu0
    %v4897 = vadd.f32 0.0, %v4896
    %4898 = vmatprep.mubr.f32.mxu0 0.0
    %4899 = vmatmul.mubr.f32.gmra.mrb[0].mxu0 %v4820
    %v4900 = vpop.f32.mrb[0].mxu0
    %v4901 = vadd.f32 0.0, %v4900
    %v4902 = vpop.f32.mrb[0].mxu0
    %v4903 = vadd.f32 0.0, %v4902
    %4904 = vmatprep.mubr.f32.mxu0 0.0
    %4905 = vmatmul.mubr.f32.gmra.mrb[0].mxu0 %v4823
    %v4906 = vpop.f32.mrb[0].mxu0
    %v4907 = vadd.f32 0.0, %v4906
    %v4908 = vpop.f32.mrb[0].mxu0
    %v4909 = vadd.f32 0.0, %v4908
    %4910 = vmatprep.mubr.f32.mxu0 0.0
    %4911 = vmatmul.mubr.f32.gmra.mrb[0].mxu0 %v4826
    %v4912 = vpop.f32.mrb[0].mxu0
    %v4913 = vadd.f32 0.0, %v4912
    %v4914 = vpop.f32.mrb[0].mxu0
    %v4915 = vadd.f32 0.0, %v4914
    %4916 = vdwg.mxu0
    %v4917 = vadd.f32 %v4796, %v4895
    %v4918 = vadd.f32 %v4797, %v4897
    %v4919 = vadd.f32 %v4798, %v4901
    %v4920 = vadd.f32 %v4799, %v4903
    %v4921 = vadd.f32 %v4800, %v4907
    %v4922 = vadd.f32 %v4801, %v4909
    %v4923 = vadd.f32 %v4802, %v4913
    %v4924 = vadd.f32 %v4803, %v4915
    %v4925 = vld [vmem:[%s0 + $0x64] sm:$0xff]
    %v4926 = vld [vmem:[%s0 + $0x6c] sm:$0xff]
    %v4927 = vld [vmem:[%s0 + $0x74] sm:$0xff]
    %v4928 = vld [vmem:[%s0 + $0x7c] sm:$0xf]
    %v4929 = vld [vmem:[%s1 + $0x300] sm:$0xff]
    %v4930 = vld [vmem:[%s1 + $0x308] sm:$0xff]
    %v4931 = vld [vmem:[%s1 + $0x310] sm:$0xff]
    %v4932 = vld [vmem:[%s1 + $0x318] sm:$0xff]
    %v4933 = vld [vmem:[%s1 + $0x320] sm:$0xff]
    %v4934 = vld [vmem:[%s1 + $0x328] sm:$0xff]
    %v4935 = vld [vmem:[%s1 + $0x330] sm:$0xff]
    %v4936 = vld [vmem:[%s1 + $0x338] sm:$0xff]
    %v4938 = vsel %vm233, %v4925, 0
    %v4941 = vsel %vm233, %v4926, 0
    %v4944 = vsel %vm233, %v4927, 0
    %v4947 = vsel %vm233, %v4928, 0
    %4949 = vmatprep.subr.mxu0 %v4930
    %4950 = vmatpush1.msra.mxu0 %v4929
    %4951 = vmatprep.subr.mxu0 %v4932
    %4952 = vmatpush1.msra.mxu0 %v4931
    %4953 = vmatprep.subr.mxu0 %v4934
    %4954 = vmatpush1.msra.mxu0 %v4933
    %4955 = vmatprep.subr.mxu0 %v4936
    %4956 = vmatpush1.msra.mxu0 %v4935
    %4957 = vmatprep.subr.mxu0 0.0
    %4958 = vmatpush1.msra.mxu0 0.0
    %4959 = vmatprep.subr.mxu0 0.0
    %4960 = vmatpush1.msra.mxu0 0.0
    %4961 = vmatprep.subr.mxu0 0.0
    %4962 = vmatpush1.msra.mxu0 0.0
    %4963 = vmatprep.subr.mxu0 0.0
    %4964 = vmatpush1.msra.mxu0 0.0
    %4965 = vmatprep.subr.mxu0 0.0
    %4966 = vmatpush1.msra.mxu0 0.0
    %4967 = vmatprep.subr.mxu0 0.0
    %4968 = vmatpush1.msra.mxu0 0.0
    %4969 = vmatprep.subr.mxu0 0.0
    %4970 = vmatpush1.msra.mxu0 0.0
    %4971 = vmatprep.subr.mxu0 0.0
    %4972 = vmatpush1.msra.mxu0 0.0
    %4973 = vmatprep.subr.mxu0 0.0
    %4974 = vmatpush1.msra.mxu0 0.0
    %4975 = vmatprep.subr.mxu0 0.0
    %4976 = vmatpush1.msra.mxu0 0.0
    %4977 = vmatprep.subr.mxu0 0.0
    %4978 = vmatpush1.msra.mxu0 0.0
    %4979 = vmatprep.subr.mxu0 0.0
    %4980 = vmatpush1.msra.mxu0 0.0
    %4981 = vmatprep.subr.mxu0 0.0
    %4982 = vmatpush1.msra.mxu0 0.0
    %4983 = vmatprep.subr.mxu0 0.0
    %4984 = vmatpush1.msra.mxu0 0.0
    %4985 = vmatprep.subr.mxu0 0.0
    %4986 = vmatpush1.msra.mxu0 0.0
    %4987 = vmatprep.subr.mxu0 0.0
    %4988 = vmatpush1.msra.mxu0 0.0
    %4989 = vmatprep.subr.mxu0 0.0
    %4990 = vmatpush1.msra.mxu0 0.0
    %4991 = vmatprep.subr.mxu0 0.0
    %4992 = vmatpush1.msra.mxu0 0.0
    %4993 = vmatprep.subr.mxu0 0.0
    %4994 = vmatpush1.msra.mxu0 0.0
    %4995 = vmatprep.subr.mxu0 0.0
    %4996 = vmatpush1.msra.mxu0 0.0
    %4997 = vmatprep.subr.mxu0 0.0
    %4998 = vmatpush1.msra.mxu0 0.0
    %4999 = vmatprep.subr.mxu0 0.0
    %5000 = vmatpush1.msra.mxu0 0.0
    %5001 = vmatprep.subr.mxu0 0.0
    %5002 = vmatpush1.msra.mxu0 0.0
    %5003 = vmatprep.subr.mxu0 0.0
    %5004 = vmatpush1.msra.mxu0 0.0
    %5005 = vmatprep.subr.mxu0 0.0
    %5006 = vmatpush1.msra.mxu0 0.0
    %5007 = vmatprep.subr.mxu0 0.0
    %5008 = vmatpush1.msra.mxu0 0.0
    %5009 = vmatprep.subr.mxu0 0.0
    %5010 = vmatpush1.msra.mxu0 0.0
    %5011 = vmatprep.subr.mxu0 0.0
    %5012 = vmatpush1.msra.mxu0 0.0
    %5013 = vmatprep.mubr.f32.mxu0 0.0
    %5014 = vmatmul.mubr.f32.gmra.mrb[0].mxu0 %v4938
    %v5015 = vpop.f32.mrb[0].mxu0
    %v5016 = vadd.f32 0.0, %v5015
    %v5017 = vpop.f32.mrb[0].mxu0
    %v5018 = vadd.f32 0.0, %v5017
    %5019 = vmatprep.mubr.f32.mxu0 0.0
    %5020 = vmatmul.mubr.f32.gmra.mrb[0].mxu0 %v4941
    %v5021 = vpop.f32.mrb[0].mxu0
    %v5022 = vadd.f32 0.0, %v5021
    %v5023 = vpop.f32.mrb[0].mxu0
    %v5024 = vadd.f32 0.0, %v5023
    %5025 = vmatprep.mubr.f32.mxu0 0.0
    %5026 = vmatmul.mubr.f32.gmra.mrb[0].mxu0 %v4944
    %v5027 = vpop.f32.mrb[0].mxu0
    %v5028 = vadd.f32 0.0, %v5027
    %v5029 = vpop.f32.mrb[0].mxu0
    %v5030 = vadd.f32 0.0, %v5029
    %5031 = vmatprep.mubr.f32.mxu0 0.0
    %5032 = vmatmul.mubr.f32.gmra.mrb[0].mxu0 %v4947
    %v5033 = vpop.f32.mrb[0].mxu0
    %v5034 = vadd.f32 0.0, %v5033
    %v5035 = vpop.f32.mrb[0].mxu0
    %v5036 = vadd.f32 0.0, %v5035
    %5037 = vdwg.mxu0
    %v5038 = vadd.f32 %v4917, %v5016
    %v5039 = vadd.f32 %v4918, %v5018
    %v5040 = vadd.f32 %v4919, %v5022
    %v5041 = vadd.f32 %v4920, %v5024
    %v5042 = vadd.f32 %v4921, %v5028
    %v5043 = vadd.f32 %v4922, %v5030
    %v5044 = vadd.f32 %v4923, %v5034
    %v5045 = vadd.f32 %v4924, %v5036
    %v5046 = vld [vmem:[%s0 + $0x84] sm:$0xff]
    %v5047 = vld [vmem:[%s0 + $0x8c] sm:$0xff]
    %v5048 = vld [vmem:[%s0 + $0x94] sm:$0xff]
    %v5049 = vld [vmem:[%s0 + $0x9c] sm:$0xf]
    %v5050 = vld [vmem:[%s1 + $0x340] sm:$0xff]
    %v5051 = vld [vmem:[%s1 + $0x348] sm:$0xff]
    %v5052 = vld [vmem:[%s1 + $0x350] sm:$0xff]
    %v5053 = vld [vmem:[%s1 + $0x358] sm:$0xff]
    %v5054 = vld [vmem:[%s1 + $0x360] sm:$0xff]
    %v5055 = vld [vmem:[%s1 + $0x368] sm:$0xff]
    %v5056 = vld [vmem:[%s1 + $0x370] sm:$0xff]
    %v5057 = vld [vmem:[%s1 + $0x378] sm:$0xff]
    %v5059 = vsel %vm233, %v5046, 0
    %v5062 = vsel %vm233, %v5047, 0
    %v5065 = vsel %vm233, %v5048, 0
    %v5068 = vsel %vm233, %v5049, 0
    %5070 = vmatprep.subr.mxu0 %v5051
    %5071 = vmatpush1.msra.mxu0 %v5050
    %5072 = vmatprep.subr.mxu0 %v5053
    %5073 = vmatpush1.msra.mxu0 %v5052
    %5074 = vmatprep.subr.mxu0 %v5055
    %5075 = vmatpush1.msra.mxu0 %v5054
    %5076 = vmatprep.subr.mxu0 %v5057
    %5077 = vmatpush1.msra.mxu0 %v5056
    %5078 = vmatprep.subr.mxu0 0.0
    %5079 = vmatpush1.msra.mxu0 0.0
    %5080 = vmatprep.subr.mxu0 0.0
    %5081 = vmatpush1.msra.mxu0 0.0
    %5082 = vmatprep.subr.mxu0 0.0
    %5083 = vmatpush1.msra.mxu0 0.0
    %5084 = vmatprep.subr.mxu0 0.0
    %5085 = vmatpush1.msra.mxu0 0.0
    %5086 = vmatprep.subr.mxu0 0.0
    %5087 = vmatpush1.msra.mxu0 0.0
    %5088 = vmatprep.subr.mxu0 0.0
    %5089 = vmatpush1.msra.mxu0 0.0
    %5090 = vmatprep.subr.mxu0 0.0
    %5091 = vmatpush1.msra.mxu0 0.0
    %5092 = vmatprep.subr.mxu0 0.0
    %5093 = vmatpush1.msra.mxu0 0.0
    %5094 = vmatprep.subr.mxu0 0.0
    %5095 = vmatpush1.msra.mxu0 0.0
    %5096 = vmatprep.subr.mxu0 0.0
    %5097 = vmatpush1.msra.mxu0 0.0
    %5098 = vmatprep.subr.mxu0 0.0
    %5099 = vmatpush1.msra.mxu0 0.0
    %5100 = vmatprep.subr.mxu0 0.0
    %5101 = vmatpush1.msra.mxu0 0.0
    %5102 = vmatprep.subr.mxu0 0.0
    %5103 = vmatpush1.msra.mxu0 0.0
    %5104 = vmatprep.subr.mxu0 0.0
    %5105 = vmatpush1.msra.mxu0 0.0
    %5106 = vmatprep.subr.mxu0 0.0
    %5107 = vmatpush1.msra.mxu0 0.0
    %5108 = vmatprep.subr.mxu0 0.0
    %5109 = vmatpush1.msra.mxu0 0.0
    %5110 = vmatprep.subr.mxu0 0.0
    %5111 = vmatpush1.msra.mxu0 0.0
    %5112 = vmatprep.subr.mxu0 0.0
    %5113 = vmatpush1.msra.mxu0 0.0
    %5114 = vmatprep.subr.mxu0 0.0
    %5115 = vmatpush1.msra.mxu0 0.0
    %5116 = vmatprep.subr.mxu0 0.0
    %5117 = vmatpush1.msra.mxu0 0.0
    %5118 = vmatprep.subr.mxu0 0.0
    %5119 = vmatpush1.msra.mxu0 0.0
    %5120 = vmatprep.subr.mxu0 0.0
    %5121 = vmatpush1.msra.mxu0 0.0
    %5122 = vmatprep.subr.mxu0 0.0
    %5123 = vmatpush1.msra.mxu0 0.0
    %5124 = vmatprep.subr.mxu0 0.0
    %5125 = vmatpush1.msra.mxu0 0.0
    %5126 = vmatprep.subr.mxu0 0.0
    %5127 = vmatpush1.msra.mxu0 0.0
    %5128 = vmatprep.subr.mxu0 0.0
    %5129 = vmatpush1.msra.mxu0 0.0
    %5130 = vmatprep.subr.mxu0 0.0
    %5131 = vmatpush1.msra.mxu0 0.0
    %5132 = vmatprep.subr.mxu0 0.0
    %5133 = vmatpush1.msra.mxu0 0.0
    %5134 = vmatprep.mubr.f32.mxu0 0.0
    %5135 = vmatmul.mubr.f32.gmra.mrb[0].mxu0 %v5059
    %v5136 = vpop.f32.mrb[0].mxu0
    %v5137 = vadd.f32 0.0, %v5136
    %v5138 = vpop.f32.mrb[0].mxu0
    %v5139 = vadd.f32 0.0, %v5138
    %5140 = vmatprep.mubr.f32.mxu0 0.0
    %5141 = vmatmul.mubr.f32.gmra.mrb[0].mxu0 %v5062
    %v5142 = vpop.f32.mrb[0].mxu0
    %v5143 = vadd.f32 0.0, %v5142
    %v5144 = vpop.f32.mrb[0].mxu0
    %v5145 = vadd.f32 0.0, %v5144
    %5146 = vmatprep.mubr.f32.mxu0 0.0
    %5147 = vmatmul.mubr.f32.gmra.mrb[0].mxu0 %v5065
    %v5148 = vpop.f32.mrb[0].mxu0
    %v5149 = vadd.f32 0.0, %v5148
    %v5150 = vpop.f32.mrb[0].mxu0
    %v5151 = vadd.f32 0.0, %v5150
    %5152 = vmatprep.mubr.f32.mxu0 0.0
    %5153 = vmatmul.mubr.f32.gmra.mrb[0].mxu0 %v5068
    %v5154 = vpop.f32.mrb[0].mxu0
    %v5155 = vadd.f32 0.0, %v5154
    %v5156 = vpop.f32.mrb[0].mxu0
    %v5157 = vadd.f32 0.0, %v5156
    %5158 = vdwg.mxu0
    %v5159 = vadd.f32 %v5038, %v5137
    %v5160 = vadd.f32 %v5039, %v5139
    %v5161 = vadd.f32 %v5040, %v5143
    %v5162 = vadd.f32 %v5041, %v5145
    %v5163 = vadd.f32 %v5042, %v5149
    %v5164 = vadd.f32 %v5043, %v5151
    %v5165 = vadd.f32 %v5044, %v5155
    %v5166 = vadd.f32 %v5045, %v5157
    %v5167 = vld [vmem:[%s0 + $0xa4] sm:$0xff]
    %v5168 = vld [vmem:[%s0 + $0xac] sm:$0xff]
    %v5169 = vld [vmem:[%s0 + $0xb4] sm:$0xff]
    %v5170 = vld [vmem:[%s0 + $0xbc] sm:$0xf]
    %v5171 = vld [vmem:[%s1 + $0x380] sm:$0xff]
    %v5172 = vld [vmem:[%s1 + $0x388] sm:$0xff]
    %v5173 = vld [vmem:[%s1 + $0x390] sm:$0xff]
    %v5174 = vld [vmem:[%s1 + $0x398] sm:$0xff]
    %v5175 = vld [vmem:[%s1 + $0x3a0] sm:$0xff]
    %v5176 = vld [vmem:[%s1 + $0x3a8] sm:$0xff]
    %v5177 = vld [vmem:[%s1 + $0x3b0] sm:$0xff]
    %v5178 = vld [vmem:[%s1 + $0x3b8] sm:$0xff]
    %v5180 = vsel %vm233, %v5167, 0
    %v5183 = vsel %vm233, %v5168, 0
    %v5186 = vsel %vm233, %v5169, 0
    %v5189 = vsel %vm233, %v5170, 0
    %5191 = vmatprep.subr.mxu0 %v5172
    %5192 = vmatpush1.msra.mxu0 %v5171
    %5193 = vmatprep.subr.mxu0 %v5174
    %5194 = vmatpush1.msra.mxu0 %v5173
    %5195 = vmatprep.subr.mxu0 %v5176
    %5196 = vmatpush1.msra.mxu0 %v5175
    %5197 = vmatprep.subr.mxu0 %v5178
    %5198 = vmatpush1.msra.mxu0 %v5177
    %5199 = vmatprep.subr.mxu0 0.0
    %5200 = vmatpush1.msra.mxu0 0.0
    %5201 = vmatprep.subr.mxu0 0.0
    %5202 = vmatpush1.msra.mxu0 0.0
    %5203 = vmatprep.subr.mxu0 0.0
    %5204 = vmatpush1.msra.mxu0 0.0
    %5205 = vmatprep.subr.mxu0 0.0
    %5206 = vmatpush1.msra.mxu0 0.0
    %5207 = vmatprep.subr.mxu0 0.0
    %5208 = vmatpush1.msra.mxu0 0.0
    %5209 = vmatprep.subr.mxu0 0.0
    %5210 = vmatpush1.msra.mxu0 0.0
    %5211 = vmatprep.subr.mxu0 0.0
    %5212 = vmatpush1.msra.mxu0 0.0
    %5213 = vmatprep.subr.mxu0 0.0
    %5214 = vmatpush1.msra.mxu0 0.0
    %5215 = vmatprep.subr.mxu0 0.0
    %5216 = vmatpush1.msra.mxu0 0.0
    %5217 = vmatprep.subr.mxu0 0.0
    %5218 = vmatpush1.msra.mxu0 0.0
    %5219 = vmatprep.subr.mxu0 0.0
    %5220 = vmatpush1.msra.mxu0 0.0
    %5221 = vmatprep.subr.mxu0 0.0
    %5222 = vmatpush1.msra.mxu0 0.0
    %5223 = vmatprep.subr.mxu0 0.0
    %5224 = vmatpush1.msra.mxu0 0.0
    %5225 = vmatprep.subr.mxu0 0.0
    %5226 = vmatpush1.msra.mxu0 0.0
    %5227 = vmatprep.subr.mxu0 0.0
    %5228 = vmatpush1.msra.mxu0 0.0
    %5229 = vmatprep.subr.mxu0 0.0
    %5230 = vmatpush1.msra.mxu0 0.0
    %5231 = vmatprep.subr.mxu0 0.0
    %5232 = vmatpush1.msra.mxu0 0.0
    %5233 = vmatprep.subr.mxu0 0.0
    %5234 = vmatpush1.msra.mxu0 0.0
    %5235 = vmatprep.subr.mxu0 0.0
    %5236 = vmatpush1.msra.mxu0 0.0
    %5237 = vmatprep.subr.mxu0 0.0
    %5238 = vmatpush1.msra.mxu0 0.0
    %5239 = vmatprep.subr.mxu0 0.0
    %5240 = vmatpush1.msra.mxu0 0.0
    %5241 = vmatprep.subr.mxu0 0.0
    %5242 = vmatpush1.msra.mxu0 0.0
    %5243 = vmatprep.subr.mxu0 0.0
    %5244 = vmatpush1.msra.mxu0 0.0
    %5245 = vmatprep.subr.mxu0 0.0
    %5246 = vmatpush1.msra.mxu0 0.0
    %5247 = vmatprep.subr.mxu0 0.0
    %5248 = vmatpush1.msra.mxu0 0.0
    %5249 = vmatprep.subr.mxu0 0.0
    %5250 = vmatpush1.msra.mxu0 0.0
    %5251 = vmatprep.subr.mxu0 0.0
    %5252 = vmatpush1.msra.mxu0 0.0
    %5253 = vmatprep.subr.mxu0 0.0
    %5254 = vmatpush1.msra.mxu0 0.0
    %5255 = vmatprep.mubr.f32.mxu0 0.0
    %5256 = vmatmul.mubr.f32.gmra.mrb[0].mxu0 %v5180
    %v5257 = vpop.f32.mrb[0].mxu0
    %v5258 = vadd.f32 0.0, %v5257
    %v5259 = vpop.f32.mrb[0].mxu0
    %v5260 = vadd.f32 0.0, %v5259
    %5261 = vmatprep.mubr.f32.mxu0 0.0
    %5262 = vmatmul.mubr.f32.gmra.mrb[0].mxu0 %v5183
    %v5263 = vpop.f32.mrb[0].mxu0
    %v5264 = vadd.f32 0.0, %v5263
    %v5265 = vpop.f32.mrb[0].mxu0
    %v5266 = vadd.f32 0.0, %v5265
    %5267 = vmatprep.mubr.f32.mxu0 0.0
    %5268 = vmatmul.mubr.f32.gmra.mrb[0].mxu0 %v5186
    %v5269 = vpop.f32.mrb[0].mxu0
    %v5270 = vadd.f32 0.0, %v5269
    %v5271 = vpop.f32.mrb[0].mxu0
    %v5272 = vadd.f32 0.0, %v5271
    %5273 = vmatprep.mubr.f32.mxu0 0.0
    %5274 = vmatmul.mubr.f32.gmra.mrb[0].mxu0 %v5189
    %v5275 = vpop.f32.mrb[0].mxu0
    %v5276 = vadd.f32 0.0, %v5275
    %v5277 = vpop.f32.mrb[0].mxu0
    %v5278 = vadd.f32 0.0, %v5277
    %5279 = vdwg.mxu0
    %v5280 = vadd.f32 %v5159, %v5258
    %v5281 = vadd.f32 %v5160, %v5260
    %v5282 = vadd.f32 %v5161, %v5264
    %v5283 = vadd.f32 %v5162, %v5266
    %v5284 = vadd.f32 %v5163, %v5270
    %v5285 = vadd.f32 %v5164, %v5272
    %v5286 = vadd.f32 %v5165, %v5276
    %v5287 = vadd.f32 %v5166, %v5278
    %v5288 = vadd.f32 %v5280, %v2013
    %v5289 = vadd.f32 %v5281, %v2017
    %v5290 = vadd.f32 %v5282, %v2013
    %v5291 = vadd.f32 %v5283, %v2017
    %v5292 = vadd.f32 %v5284, %v2013
    %v5293 = vadd.f32 %v5285, %v2017
    %v5294 = vadd.f32 %v5286, %v2013
    %v5295 = vadd.f32 %v5287, %v2017
    %v5296 = vmax.f32 %v5288, 0.0
    %v5297 = vmax.f32 %v5289, 0.0
    %v5298 = vmax.f32 %v5290, 0.0
    %v5299 = vmax.f32 %v5291, 0.0
    %v5300 = vmax.f32 %v5292, 0.0
    %v5301 = vmax.f32 %v5293, 0.0
    %v5302 = vmax.f32 %v5294, 0.0
    %v5303 = vmax.f32 %v5295, 0.0
    %v5305 = vsel %vm2043, %v5302, 0
    %v5308 = vsel %vm2043, %v5303, 0
    %5310 = vmatprep.subr.mxu0 %v5297
    %5311 = vmatpush1.msra.mxu0 %v5296
    %5312 = vmatprep.subr.mxu0 %v5299
    %5313 = vmatpush1.msra.mxu0 %v5298
    %5314 = vmatprep.subr.mxu0 %v5301
    %5315 = vmatpush1.msra.mxu0 %v5300
    %5316 = vmatprep.subr.mxu0 %v5308
    %5317 = vmatpush1.msra.mxu0 %v5305
    %5318 = vmatprep.subr.mxu0 0.0
    %5319 = vmatpush1.msra.mxu0 0.0
    %5320 = vmatprep.subr.mxu0 0.0
    %5321 = vmatpush1.msra.mxu0 0.0
    %5322 = vmatprep.subr.mxu0 0.0
    %5323 = vmatpush1.msra.mxu0 0.0
    %5324 = vmatprep.subr.mxu0 0.0
    %5325 = vmatpush1.msra.mxu0 0.0
    %5326 = vmatprep.subr.mxu0 0.0
    %5327 = vmatpush1.msra.mxu0 0.0
    %5328 = vmatprep.subr.mxu0 0.0
    %5329 = vmatpush1.msra.mxu0 0.0
    %5330 = vmatprep.subr.mxu0 0.0
    %5331 = vmatpush1.msra.mxu0 0.0
    %5332 = vmatprep.subr.mxu0 0.0
    %5333 = vmatpush1.msra.mxu0 0.0
    %5334 = vmatprep.subr.mxu0 0.0
    %5335 = vmatpush1.msra.mxu0 0.0
    %5336 = vmatprep.subr.mxu0 0.0
    %5337 = vmatpush1.msra.mxu0 0.0
    %5338 = vmatprep.subr.mxu0 0.0
    %5339 = vmatpush1.msra.mxu0 0.0
    %5340 = vmatprep.subr.mxu0 0.0
    %5341 = vmatpush1.msra.mxu0 0.0
    %5342 = vmatprep.subr.mxu0 0.0
    %5343 = vmatpush1.msra.mxu0 0.0
    %5344 = vmatprep.subr.mxu0 0.0
    %5345 = vmatpush1.msra.mxu0 0.0
    %5346 = vmatprep.subr.mxu0 0.0
    %5347 = vmatpush1.msra.mxu0 0.0
    %5348 = vmatprep.subr.mxu0 0.0
    %5349 = vmatpush1.msra.mxu0 0.0
    %5350 = vmatprep.subr.mxu0 0.0
    %5351 = vmatpush1.msra.mxu0 0.0
    %5352 = vmatprep.subr.mxu0 0.0
    %5353 = vmatpush1.msra.mxu0 0.0
    %5354 = vmatprep.subr.mxu0 0.0
    %5355 = vmatpush1.msra.mxu0 0.0
    %5356 = vmatprep.subr.mxu0 0.0
    %5357 = vmatpush1.msra.mxu0 0.0
    %5358 = vmatprep.subr.mxu0 0.0
    %5359 = vmatpush1.msra.mxu0 0.0
    %5360 = vmatprep.subr.mxu0 0.0
    %5361 = vmatpush1.msra.mxu0 0.0
    %5362 = vmatprep.subr.mxu0 0.0
    %5363 = vmatpush1.msra.mxu0 0.0
    %5364 = vmatprep.subr.mxu0 0.0
    %5365 = vmatpush1.msra.mxu0 0.0
    %5366 = vmatprep.subr.mxu0 0.0
    %5367 = vmatpush1.msra.mxu0 0.0
    %5368 = vmatprep.subr.mxu0 0.0
    %5369 = vmatpush1.msra.mxu0 0.0
    %5370 = vmatprep.subr.mxu0 0.0
    %5371 = vmatpush1.msra.mxu0 0.0
    %5372 = vmatprep.subr.mxu0 0.0
    %5373 = vmatpush1.msra.mxu0 0.0
    %5374 = vmatprep.mubr.f32.mxu0 0.0
    %5375 = vmatmul.mubr.f32.gmra.mrb[0].mxu0 %v2038
    %v5376 = vpop.f32.mrb[0].mxu0
    %v5377 = vadd.f32 0.0, %v5376
    %v5378 = vpop.f32.mrb[0].mxu0
    %v5379 = vadd.f32 0.0, %v5378
    %5380 = vmatprep.mubr.f32.mxu0 0.0
    %5381 = vmatmul.mubr.f32.gmra.mrb[0].mxu0 %v2041
    %v5382 = vpop.f32.mrb[0].mxu0
    %v5383 = vadd.f32 0.0, %v5382
    %v5384 = vpop.f32.mrb[0].mxu0
    %v5385 = vadd.f32 0.0, %v5384
    %5386 = vdwg.mxu0
    %5387 = vmatprep.subr.mxu0 %v5297
    %5388 = vmatpush1.msra.mxu0 %v5296
    %5389 = vmatprep.subr.mxu0 %v5299
    %5390 = vmatpush1.msra.mxu0 %v5298
    %5391 = vmatprep.subr.mxu0 %v5301
    %5392 = vmatpush1.msra.mxu0 %v5300
    %5393 = vmatprep.subr.mxu0 %v5308
    %5394 = vmatpush1.msra.mxu0 %v5305
    %5395 = vmatprep.subr.mxu0 0.0
    %5396 = vmatpush1.msra.mxu0 0.0
    %5397 = vmatprep.subr.mxu0 0.0
    %5398 = vmatpush1.msra.mxu0 0.0
    %5399 = vmatprep.subr.mxu0 0.0
    %5400 = vmatpush1.msra.mxu0 0.0
    %5401 = vmatprep.subr.mxu0 0.0
    %5402 = vmatpush1.msra.mxu0 0.0
    %5403 = vmatprep.subr.mxu0 0.0
    %5404 = vmatpush1.msra.mxu0 0.0
    %5405 = vmatprep.subr.mxu0 0.0
    %5406 = vmatpush1.msra.mxu0 0.0
    %5407 = vmatprep.subr.mxu0 0.0
    %5408 = vmatpush1.msra.mxu0 0.0
    %5409 = vmatprep.subr.mxu0 0.0
    %5410 = vmatpush1.msra.mxu0 0.0
    %5411 = vmatprep.subr.mxu0 0.0
    %5412 = vmatpush1.msra.mxu0 0.0
    %5413 = vmatprep.subr.mxu0 0.0
    %5414 = vmatpush1.msra.mxu0 0.0
    %5415 = vmatprep.subr.mxu0 0.0
    %5416 = vmatpush1.msra.mxu0 0.0
    %5417 = vmatprep.subr.mxu0 0.0
    %5418 = vmatpush1.msra.mxu0 0.0
    %5419 = vmatprep.subr.mxu0 0.0
    %5420 = vmatpush1.msra.mxu0 0.0
    %5421 = vmatprep.subr.mxu0 0.0
    %5422 = vmatpush1.msra.mxu0 0.0
    %5423 = vmatprep.subr.mxu0 0.0
    %5424 = vmatpush1.msra.mxu0 0.0
    %5425 = vmatprep.subr.mxu0 0.0
    %5426 = vmatpush1.msra.mxu0 0.0
    %5427 = vmatprep.subr.mxu0 0.0
    %5428 = vmatpush1.msra.mxu0 0.0
    %5429 = vmatprep.subr.mxu0 0.0
    %5430 = vmatpush1.msra.mxu0 0.0
    %5431 = vmatprep.subr.mxu0 0.0
    %5432 = vmatpush1.msra.mxu0 0.0
    %5433 = vmatprep.subr.mxu0 0.0
    %5434 = vmatpush1.msra.mxu0 0.0
    %5435 = vmatprep.subr.mxu0 0.0
    %5436 = vmatpush1.msra.mxu0 0.0
    %5437 = vmatprep.subr.mxu0 0.0
    %5438 = vmatpush1.msra.mxu0 0.0
    %5439 = vmatprep.subr.mxu0 0.0
    %5440 = vmatpush1.msra.mxu0 0.0
    %5441 = vmatprep.subr.mxu0 0.0
    %5442 = vmatpush1.msra.mxu0 0.0
    %5443 = vmatprep.subr.mxu0 0.0
    %5444 = vmatpush1.msra.mxu0 0.0
    %5445 = vmatprep.subr.mxu0 0.0
    %5446 = vmatpush1.msra.mxu0 0.0
    %5447 = vmatprep.subr.mxu0 0.0
    %5448 = vmatpush1.msra.mxu0 0.0
    %5449 = vmatprep.subr.mxu0 0.0
    %5450 = vmatpush1.msra.mxu0 0.0
    %5451 = vmatprep.mubr.f32.mxu0 0.0
    %5452 = vmatmul.mubr.f32.gmra.mrb[0].mxu0 %v2128
    %v5453 = vpop.f32.mrb[0].mxu0
    %v5454 = vadd.f32 0.0, %v5453
    %v5455 = vpop.f32.mrb[0].mxu0
    %v5456 = vadd.f32 0.0, %v5455
    %5457 = vmatprep.mubr.f32.mxu0 0.0
    %5458 = vmatmul.mubr.f32.gmra.mrb[0].mxu0 %v2131
    %v5459 = vpop.f32.mrb[0].mxu0
    %v5460 = vadd.f32 0.0, %v5459
    %v5461 = vpop.f32.mrb[0].mxu0
    %v5462 = vadd.f32 0.0, %v5461
    %5463 = vdwg.mxu0
    %v5464 = vmax.f32 %v5377, %v5454
    %v5465 = vmax.f32 %v5379, %v5456
    %v5466 = vmax.f32 %v5383, %v5460
    %v5467 = vmax.f32 %v5385, %v5462
    %v5469 = vsel %vm2214, %v5465, 0
    %v5472 = vsel %vm2214, %v5467, 0
    %5474 = vmatprep.subr.mxu0 0.0
    %5475 = vmatpush1.msra.mxu0 %v122
    %5476 = vmatprep.subr.mxu0 0.0
    %5477 = vmatpush1.msra.mxu0 %v123
    %5478 = vmatprep.subr.mxu0 0.0
    %5479 = vmatpush1.msra.mxu0 %v124
    %5480 = vmatprep.subr.mxu0 0.0
    %5481 = vmatpush1.msra.mxu0 %v125
    %5482 = vmatprep.subr.mxu0 0.0
    %5483 = vmatpush1.msra.mxu0 %v126
    %5484 = vmatprep.subr.mxu0 0.0
    %5485 = vmatpush1.msra.mxu0 %v127
    %5486 = vmatprep.subr.mxu0 0.0
    %5487 = vmatpush1.msra.mxu0 %v128
    %5488 = vmatprep.subr.mxu0 0.0
    %5489 = vmatpush1.msra.mxu0 %v129
    %5490 = vmatprep.subr.mxu0 0.0
    %5491 = vmatpush1.msra.mxu0 %v130
    %5492 = vmatprep.subr.mxu0 0.0
    %5493 = vmatpush1.msra.mxu0 %v131
    %5494 = vmatprep.subr.mxu0 0.0
    %5495 = vmatpush1.msra.mxu0 %v132
    %5496 = vmatprep.subr.mxu0 0.0
    %5497 = vmatpush1.msra.mxu0 %v133
    %5498 = vmatprep.subr.mxu0 0.0
    %5499 = vmatpush1.msra.mxu0 %v134
    %5500 = vmatprep.subr.mxu0 0.0
    %5501 = vmatpush1.msra.mxu0 %v135
    %5502 = vmatprep.subr.mxu0 0.0
    %5503 = vmatpush1.msra.mxu0 %v136
    %5504 = vmatprep.subr.mxu0 0.0
    %5505 = vmatpush1.msra.mxu0 %v137
    %5506 = vmatprep.subr.mxu0 0.0
    %5507 = vmatpush1.msra.mxu0 %v138
    %5508 = vmatprep.subr.mxu0 0.0
    %5509 = vmatpush1.msra.mxu0 %v139
    %5510 = vmatprep.subr.mxu0 0.0
    %5511 = vmatpush1.msra.mxu0 %v140
    %5512 = vmatprep.subr.mxu0 0.0
    %5513 = vmatpush1.msra.mxu0 %v141
    %5514 = vmatprep.subr.mxu0 0.0
    %5515 = vmatpush1.msra.mxu0 %v142
    %5516 = vmatprep.subr.mxu0 0.0
    %5517 = vmatpush1.msra.mxu0 0.0
    %5518 = vmatprep.subr.mxu0 0.0
    %5519 = vmatpush1.msra.mxu0 0.0
    %5520 = vmatprep.subr.mxu0 0.0
    %5521 = vmatpush1.msra.mxu0 0.0
    %5522 = vmatprep.subr.mxu0 0.0
    %5523 = vmatpush1.msra.mxu0 0.0
    %5524 = vmatprep.subr.mxu0 0.0
    %5525 = vmatpush1.msra.mxu0 0.0
    %5526 = vmatprep.subr.mxu0 0.0
    %5527 = vmatpush1.msra.mxu0 0.0
    %5528 = vmatprep.subr.mxu0 0.0
    %5529 = vmatpush1.msra.mxu0 0.0
    %5530 = vmatprep.subr.mxu0 0.0
    %5531 = vmatpush1.msra.mxu0 0.0
    %5532 = vmatprep.subr.mxu0 0.0
    %5533 = vmatpush1.msra.mxu0 0.0
    %5534 = vmatprep.subr.mxu0 0.0
    %5535 = vmatpush1.msra.mxu0 0.0
    %5536 = vmatprep.subr.mxu0 0.0
    %5537 = vmatpush1.msra.mxu0 0.0
    %5538 = vmatprep.mubr.f32.mxu0 %v5469
    %5539 = vmatmul.mubr.f32.gmra.mrb[0].mxu0 %v5464
    %v5540 = vpop.f32.mrb[0].mxu0
    %v5541 = vadd.f32 0.0, %v5540
    %v5542 = vpop.f32.mrb[0].mxu0
    %5543 = vmatprep.mubr.f32.mxu0 %v5472
    %5544 = vmatmul.mubr.f32.gmra.mrb[0].mxu0 %v5466
    %v5545 = vpop.f32.mrb[0].mxu0
    %v5546 = vadd.f32 0.0, %v5545
    %v5547 = vpop.f32.mrb[0].mxu0
    %5548 = vdwg.mxu0
    %5549 = vmatprep.subr.mxu0 0.0
    %5550 = vmatpush1.msra.mxu0 %v186
    %5551 = vmatprep.subr.mxu0 0.0
    %5552 = vmatpush1.msra.mxu0 %v187
    %5553 = vmatprep.subr.mxu0 0.0
    %5554 = vmatpush1.msra.mxu0 %v188
    %5555 = vmatprep.subr.mxu0 0.0
    %5556 = vmatpush1.msra.mxu0 %v189
    %5557 = vmatprep.subr.mxu0 0.0
    %5558 = vmatpush1.msra.mxu0 %v190
    %5559 = vmatprep.subr.mxu0 0.0
    %5560 = vmatpush1.msra.mxu0 %v191
    %5561 = vmatprep.subr.mxu0 0.0
    %5562 = vmatpush1.msra.mxu0 %v192
    %5563 = vmatprep.subr.mxu0 0.0
    %5564 = vmatpush1.msra.mxu0 %v193
    %5565 = vmatprep.subr.mxu0 0.0
    %5566 = vmatpush1.msra.mxu0 %v194
    %5567 = vmatprep.subr.mxu0 0.0
    %5568 = vmatpush1.msra.mxu0 %v195
    %5569 = vmatprep.subr.mxu0 0.0
    %5570 = vmatpush1.msra.mxu0 %v196
    %5571 = vmatprep.subr.mxu0 0.0
    %5572 = vmatpush1.msra.mxu0 %v197
    %5573 = vmatprep.subr.mxu0 0.0
    %5574 = vmatpush1.msra.mxu0 %v198
    %5575 = vmatprep.subr.mxu0 0.0
    %5576 = vmatpush1.msra.mxu0 %v199
    %5577 = vmatprep.subr.mxu0 0.0
    %5578 = vmatpush1.msra.mxu0 %v200
    %5579 = vmatprep.subr.mxu0 0.0
    %5580 = vmatpush1.msra.mxu0 %v201
    %5581 = vmatprep.subr.mxu0 0.0
    %5582 = vmatpush1.msra.mxu0 %v202
    %5583 = vmatprep.subr.mxu0 0.0
    %5584 = vmatpush1.msra.mxu0 %v203
    %5585 = vmatprep.subr.mxu0 0.0
    %5586 = vmatpush1.msra.mxu0 %v204
    %5587 = vmatprep.subr.mxu0 0.0
    %5588 = vmatpush1.msra.mxu0 %v205
    %5589 = vmatprep.subr.mxu0 0.0
    %5590 = vmatpush1.msra.mxu0 %v206
    %5591 = vmatprep.subr.mxu0 0.0
    %5592 = vmatpush1.msra.mxu0 0.0
    %5593 = vmatprep.subr.mxu0 0.0
    %5594 = vmatpush1.msra.mxu0 0.0
    %5595 = vmatprep.subr.mxu0 0.0
    %5596 = vmatpush1.msra.mxu0 0.0
    %5597 = vmatprep.subr.mxu0 0.0
    %5598 = vmatpush1.msra.mxu0 0.0
    %5599 = vmatprep.subr.mxu0 0.0
    %5600 = vmatpush1.msra.mxu0 0.0
    %5601 = vmatprep.subr.mxu0 0.0
    %5602 = vmatpush1.msra.mxu0 0.0
    %5603 = vmatprep.subr.mxu0 0.0
    %5604 = vmatpush1.msra.mxu0 0.0
    %5605 = vmatprep.subr.mxu0 0.0
    %5606 = vmatpush1.msra.mxu0 0.0
    %5607 = vmatprep.subr.mxu0 0.0
    %5608 = vmatpush1.msra.mxu0 0.0
    %5609 = vmatprep.subr.mxu0 0.0
    %5610 = vmatpush1.msra.mxu0 0.0
    %5611 = vmatprep.subr.mxu0 0.0
    %5612 = vmatpush1.msra.mxu0 0.0
    %5613 = vmatprep.mubr.f32.mxu0 %v5469
    %5614 = vmatmul.mubr.f32.gmra.mrb[0].mxu0 %v5464
    %v5615 = vpop.f32.mrb[0].mxu0
    %v5616 = vadd.f32 0.0, %v5615
    %v5617 = vpop.f32.mrb[0].mxu0
    %5618 = vmatprep.mubr.f32.mxu0 %v5472
    %5619 = vmatmul.mubr.f32.gmra.mrb[0].mxu0 %v5466
    %v5620 = vpop.f32.mrb[0].mxu0
    %v5621 = vadd.f32 0.0, %v5620
    %v5622 = vpop.f32.mrb[0].mxu0
    %5623 = vdwg.mxu0
    %v5624 = vmax.f32 %v5541, %v5616
    %v5625 = vmax.f32 %v5546, %v5621
    %v5626 = vld [vmem:[%s3] sm:$0xff]
    %v5627 = vld [vmem:[%s3 + $0x8] sm:$0xff]
    %v5628 = vld [vmem:[%s3 + $0x10] sm:$0xff]
    %v5629 = vld [vmem:[%s3 + $0x18] sm:$0xff]
    %v5630 = vld [vmem:[%s3 + $0x20] sm:$0xff]
    %v5631 = vld [vmem:[%s3 + $0x28] sm:$0xff]
    %v5632 = vld [vmem:[%s3 + $0x30] sm:$0xff]
    %v5633 = vld [vmem:[%s3 + $0x38] sm:$0xff]
    %v5634 = vld [vmem:[%s3 + $0x40] sm:$0xff]
    %v5635 = vld [vmem:[%s3 + $0x48] sm:$0xff]
    %v5636 = vld [vmem:[%s3 + $0x50] sm:$0xff]
    %v5637 = vld [vmem:[%s3 + $0x58] sm:$0xff]
    %v5638 = vld [vmem:[%s3 + $0x60] sm:$0xff]
    %v5639 = vld [vmem:[%s3 + $0x68] sm:$0xff]
    %v5640 = vld [vmem:[%s3 + $0x70] sm:$0xff]
    %v5641 = vld [vmem:[%s3 + $0x78] sm:$0xff]
    %v5642 = vld [vmem:[%s3 + $0x80] sm:$0xff]
    %v5643 = vld [vmem:[%s3 + $0x88] sm:$0xff]
    %v5644 = vld [vmem:[%s3 + $0x90] sm:$0xff]
    %v5645 = vld [vmem:[%s3 + $0x98] sm:$0xff]
    %v5646 = vld [vmem:[%s3 + $0xa0] sm:$0xf]
    %v5647 = vld [vmem:[%s3 + $0xa8] sm:$0xf]
    %v5648 = vld [vmem:[%s3 + $0xa0] sm:$0xf0]
    %v5649 = vld [vmem:[%s3 + $0xa8] sm:$0xf0]
    %v5650 = vld [vmem:[%s3 + $0xb0] sm:$0xff]
    %v5651 = vld [vmem:[%s3 + $0xb8] sm:$0xff]
    %v5652 = vld [vmem:[%s3 + $0xc0] sm:$0xff]
    %v5653 = vld [vmem:[%s3 + $0xc8] sm:$0xff]
    %v5654 = vld [vmem:[%s3 + $0xd0] sm:$0xff]
    %v5655 = vld [vmem:[%s3 + $0xd8] sm:$0xff]
    %v5656 = vld [vmem:[%s3 + $0xe0] sm:$0xff]
    %v5657 = vld [vmem:[%s3 + $0xe8] sm:$0xff]
    %v5658 = vld [vmem:[%s3 + $0xf0] sm:$0xff]
    %v5659 = vld [vmem:[%s3 + $0xf8] sm:$0xff]
    %v5660 = vld [vmem:[%s3 + $0x100] sm:$0xff]
    %v5661 = vld [vmem:[%s3 + $0x108] sm:$0xff]
    %v5662 = vld [vmem:[%s3 + $0x110] sm:$0xff]
    %v5663 = vld [vmem:[%s3 + $0x118] sm:$0xff]
    %v5664 = vld [vmem:[%s3 + $0x120] sm:$0xff]
    %v5665 = vld [vmem:[%s3 + $0x128] sm:$0xff]
    %v5666 = vld [vmem:[%s3 + $0x130] sm:$0xff]
    %v5667 = vld [vmem:[%s3 + $0x138] sm:$0xff]
    %v5668 = vld [vmem:[%s3 + $0x140] sm:$0xff]
    %v5669 = vld [vmem:[%s3 + $0x148] sm:$0xff]
    %v5672 = vrot.slane %v5624, 1
    %v5673 = vrot.slane %v5625, 1
    %v5674 = vsel %vm2419, %v5672, %v5673
    %v5697 = vrot.slane %v5648, 4
    %v5698 = vrot.slane %v5650, 4
    %v5699 = vsel %vm2043, %v5697, %v5698
    %v5700 = vrot.slane %v5649, 4
    %v5701 = vrot.slane %v5651, 4
    %v5702 = vsel %vm2043, %v5700, %v5701
    %v5703 = vrot.slane %v5652, 4
    %v5704 = vsel %vm2043, %v5698, %v5703
    %v5705 = vrot.slane %v5653, 4
    %v5706 = vsel %vm2043, %v5701, %v5705
    %v5707 = vrot.slane %v5654, 4
    %v5708 = vsel %vm2043, %v5703, %v5707
    %v5709 = vrot.slane %v5655, 4
    %v5710 = vsel %vm2043, %v5705, %v5709
    %v5711 = vrot.slane %v5656, 4
    %v5712 = vsel %vm2043, %v5707, %v5711
    %v5713 = vrot.slane %v5657, 4
    %v5714 = vsel %vm2043, %v5709, %v5713
    %v5715 = vrot.slane %v5658, 4
    %v5716 = vsel %vm2043, %v5711, %v5715
    %v5717 = vrot.slane %v5659, 4
    %v5718 = vsel %vm2043, %v5713, %v5717
    %v5719 = vrot.slane %v5660, 4
    %v5720 = vsel %vm2043, %v5715, %v5719
    %v5721 = vrot.slane %v5661, 4
    %v5722 = vsel %vm2043, %v5717, %v5721
    %v5723 = vrot.slane %v5662, 4
    %v5724 = vsel %vm2043, %v5719, %v5723
    %v5725 = vrot.slane %v5663, 4
    %v5726 = vsel %vm2043, %v5721, %v5725
    %v5727 = vrot.slane %v5664, 4
    %v5728 = vsel %vm2043, %v5723, %v5727
    %v5729 = vrot.slane %v5665, 4
    %v5730 = vsel %vm2043, %v5725, %v5729
    %v5731 = vrot.slane %v5666, 4
    %v5732 = vsel %vm2043, %v5727, %v5731
    %v5733 = vrot.slane %v5667, 4
    %v5734 = vsel %vm2043, %v5729, %v5733
    %v5735 = vrot.slane %v5668, 4
    %v5736 = vsel %vm2043, %v5731, %v5735
    %v5737 = vrot.slane %v5669, 4
    %v5738 = vsel %vm2043, %v5733, %v5737
    %v5759 = vsel %vm2507, %v5674, 0
    %v5761 = vsel %vm2507, %v5673, 0
    %v5763 = vsel %vm2043, %v5735, 0
    %v5765 = vsel %vm2043, %v5737, 0
    %5767 = vmatprep.subr.mxu0 %v5702
    %5768 = vmatpush1.msra.mxu0 %v5699
    %5769 = vmatprep.subr.mxu0 %v5706
    %5770 = vmatpush1.msra.mxu0 %v5704
    %5771 = vmatprep.subr.mxu0 %v5710
    %5772 = vmatpush1.msra.mxu0 %v5708
    %5773 = vmatprep.subr.mxu0 %v5714
    %5774 = vmatpush1.msra.mxu0 %v5712
    %5775 = vmatprep.subr.mxu0 %v5718
    %5776 = vmatpush1.msra.mxu0 %v5716
    %5777 = vmatprep.subr.mxu0 %v5722
    %5778 = vmatpush1.msra.mxu0 %v5720
    %5779 = vmatprep.subr.mxu0 %v5726
    %5780 = vmatpush1.msra.mxu0 %v5724
    %5781 = vmatprep.subr.mxu0 %v5730
    %5782 = vmatpush1.msra.mxu0 %v5728
    %5783 = vmatprep.subr.mxu0 %v5734
    %5784 = vmatpush1.msra.mxu0 %v5732
    %5785 = vmatprep.subr.mxu0 %v5738
    %5786 = vmatpush1.msra.mxu0 %v5736
    %5787 = vmatprep.subr.mxu0 %v5765
    %5788 = vmatpush1.msra.mxu0 %v5763
    %5789 = vmatprep.subr.mxu0 0.0
    %5790 = vmatpush1.msra.mxu0 0.0
    %5791 = vmatprep.subr.mxu0 0.0
    %5792 = vmatpush1.msra.mxu0 0.0
    %5793 = vmatprep.subr.mxu0 0.0
    %5794 = vmatpush1.msra.mxu0 0.0
    %5795 = vmatprep.subr.mxu0 0.0
    %5796 = vmatpush1.msra.mxu0 0.0
    %5797 = vmatprep.subr.mxu0 0.0
    %5798 = vmatpush1.msra.mxu0 0.0
    %5799 = vmatprep.subr.mxu0 0.0
    %5800 = vmatpush1.msra.mxu0 0.0
    %5801 = vmatprep.subr.mxu0 0.0
    %5802 = vmatpush1.msra.mxu0 0.0
    %5803 = vmatprep.subr.mxu0 0.0
    %5804 = vmatpush1.msra.mxu0 0.0
    %5805 = vmatprep.subr.mxu0 0.0
    %5806 = vmatpush1.msra.mxu0 0.0
    %5807 = vmatprep.subr.mxu0 0.0
    %5808 = vmatpush1.msra.mxu0 0.0
    %5809 = vmatprep.subr.mxu0 0.0
    %5810 = vmatpush1.msra.mxu0 0.0
    %5811 = vmatprep.subr.mxu0 0.0
    %5812 = vmatpush1.msra.mxu0 0.0
    %5813 = vmatprep.subr.mxu0 0.0
    %5814 = vmatpush1.msra.mxu0 0.0
    %5815 = vmatprep.subr.mxu0 0.0
    %5816 = vmatpush1.msra.mxu0 0.0
    %5817 = vmatprep.subr.mxu0 0.0
    %5818 = vmatpush1.msra.mxu0 0.0
    %5819 = vmatprep.subr.mxu0 0.0
    %5820 = vmatpush1.msra.mxu0 0.0
    %5821 = vmatprep.subr.mxu0 0.0
    %5822 = vmatpush1.msra.mxu0 0.0
    %5823 = vmatprep.subr.mxu0 0.0
    %5824 = vmatpush1.msra.mxu0 0.0
    %5825 = vmatprep.subr.mxu0 0.0
    %5826 = vmatpush1.msra.mxu0 0.0
    %5827 = vmatprep.subr.mxu0 0.0
    %5828 = vmatpush1.msra.mxu0 0.0
    %5829 = vmatprep.subr.mxu0 0.0
    %5830 = vmatpush1.msra.mxu0 0.0
    %5831 = vmatprep.mubr.f32.mxu0 0.0
    %5832 = vmatmul.mubr.f32.gmra.mrb[0].mxu0 %v5759
    %v5833 = vpop.f32.mrb[0].mxu0
    %v5834 = vadd.f32 0.0, %v5833
    %v5835 = vpop.f32.mrb[0].mxu0
    %v5836 = vadd.f32 0.0, %v5835
    %5837 = vmatprep.mubr.f32.mxu0 0.0
    %5838 = vmatmul.mubr.f32.gmra.mrb[0].mxu0 %v5761
    %v5839 = vpop.f32.mrb[0].mxu0
    %v5840 = vadd.f32 0.0, %v5839
    %v5841 = vpop.f32.mrb[0].mxu0
    %v5842 = vadd.f32 0.0, %v5841
    %5843 = vdwg.mxu0
    %v5844 = vsel %vm2507, %v5624, 0
    %v5846 = vsel %vm2507, %v5625, 0
    %v5849 = vsel %vm2043, %v5646, 0
    %v5852 = vsel %vm2043, %v5647, 0
    %5854 = vmatprep.subr.mxu0 %v5627
    %5855 = vmatpush1.msra.mxu0 %v5626
    %5856 = vmatprep.subr.mxu0 %v5629
    %5857 = vmatpush1.msra.mxu0 %v5628
    %5858 = vmatprep.subr.mxu0 %v5631
    %5859 = vmatpush1.msra.mxu0 %v5630
    %5860 = vmatprep.subr.mxu0 %v5633
    %5861 = vmatpush1.msra.mxu0 %v5632
    %5862 = vmatprep.subr.mxu0 %v5635
    %5863 = vmatpush1.msra.mxu0 %v5634
    %5864 = vmatprep.subr.mxu0 %v5637
    %5865 = vmatpush1.msra.mxu0 %v5636
    %5866 = vmatprep.subr.mxu0 %v5639
    %5867 = vmatpush1.msra.mxu0 %v5638
    %5868 = vmatprep.subr.mxu0 %v5641
    %5869 = vmatpush1.msra.mxu0 %v5640
    %5870 = vmatprep.subr.mxu0 %v5643
    %5871 = vmatpush1.msra.mxu0 %v5642
    %5872 = vmatprep.subr.mxu0 %v5645
    %5873 = vmatpush1.msra.mxu0 %v5644
    %5874 = vmatprep.subr.mxu0 %v5852
    %5875 = vmatpush1.msra.mxu0 %v5849
    %5876 = vmatprep.subr.mxu0 0.0
    %5877 = vmatpush1.msra.mxu0 0.0
    %5878 = vmatprep.subr.mxu0 0.0
    %5879 = vmatpush1.msra.mxu0 0.0
    %5880 = vmatprep.subr.mxu0 0.0
    %5881 = vmatpush1.msra.mxu0 0.0
    %5882 = vmatprep.subr.mxu0 0.0
    %5883 = vmatpush1.msra.mxu0 0.0
    %5884 = vmatprep.subr.mxu0 0.0
    %5885 = vmatpush1.msra.mxu0 0.0
    %5886 = vmatprep.subr.mxu0 0.0
    %5887 = vmatpush1.msra.mxu0 0.0
    %5888 = vmatprep.subr.mxu0 0.0
    %5889 = vmatpush1.msra.mxu0 0.0
    %5890 = vmatprep.subr.mxu0 0.0
    %5891 = vmatpush1.msra.mxu0 0.0
    %5892 = vmatprep.subr.mxu0 0.0
    %5893 = vmatpush1.msra.mxu0 0.0
    %5894 = vmatprep.subr.mxu0 0.0
    %5895 = vmatpush1.msra.mxu0 0.0
    %5896 = vmatprep.subr.mxu0 0.0
    %5897 = vmatpush1.msra.mxu0 0.0
    %5898 = vmatprep.subr.mxu0 0.0
    %5899 = vmatpush1.msra.mxu0 0.0
    %5900 = vmatprep.subr.mxu0 0.0
    %5901 = vmatpush1.msra.mxu0 0.0
    %5902 = vmatprep.subr.mxu0 0.0
    %5903 = vmatpush1.msra.mxu0 0.0
    %5904 = vmatprep.subr.mxu0 0.0
    %5905 = vmatpush1.msra.mxu0 0.0
    %5906 = vmatprep.subr.mxu0 0.0
    %5907 = vmatpush1.msra.mxu0 0.0
    %5908 = vmatprep.subr.mxu0 0.0
    %5909 = vmatpush1.msra.mxu0 0.0
    %5910 = vmatprep.subr.mxu0 0.0
    %5911 = vmatpush1.msra.mxu0 0.0
    %5912 = vmatprep.subr.mxu0 0.0
    %5913 = vmatpush1.msra.mxu0 0.0
    %5914 = vmatprep.subr.mxu0 0.0
    %5915 = vmatpush1.msra.mxu0 0.0
    %5916 = vmatprep.subr.mxu0 0.0
    %5917 = vmatpush1.msra.mxu0 0.0
    %5918 = vmatprep.mubr.f32.mxu0 0.0
    %5919 = vmatmul.mubr.f32.gmra.mrb[0].mxu0 %v5844
    %v5920 = vpop.f32.mrb[0].mxu0
    %v5921 = vadd.f32 %v5834, %v5920
    %v5922 = vpop.f32.mrb[0].mxu0
    %v5923 = vadd.f32 %v5836, %v5922
    %5924 = vmatprep.mubr.f32.mxu0 0.0
    %5925 = vmatmul.mubr.f32.gmra.mrb[0].mxu0 %v5846
    %v5926 = vpop.f32.mrb[0].mxu0
    %v5927 = vadd.f32 %v5840, %v5926
    %v5928 = vpop.f32.mrb[0].mxu0
    %v5929 = vadd.f32 %v5842, %v5928
    %5930 = vdwg.mxu0
    %v5931 = vld [vmem:[%s3 + $0x150] sm:$0xff]
    %v5932 = vld [vmem:[%s3 + $0x158] sm:$0xff]
    %v5933 = vld [vmem:[%s3 + $0x160] sm:$0xff]
    %v5934 = vld [vmem:[%s3 + $0x168] sm:$0xff]
    %v5935 = vld [vmem:[%s3 + $0x170] sm:$0xff]
    %v5936 = vld [vmem:[%s3 + $0x178] sm:$0xff]
    %v5937 = vld [vmem:[%s3 + $0x180] sm:$0xff]
    %v5938 = vld [vmem:[%s3 + $0x188] sm:$0xff]
    %v5939 = vld [vmem:[%s3 + $0x190] sm:$0xff]
    %v5940 = vld [vmem:[%s3 + $0x198] sm:$0xff]
    %v5941 = vld [vmem:[%s3 + $0x1a0] sm:$0xff]
    %v5942 = vld [vmem:[%s3 + $0x1a8] sm:$0xff]
    %v5943 = vld [vmem:[%s3 + $0x1b0] sm:$0xff]
    %v5944 = vld [vmem:[%s3 + $0x1b8] sm:$0xff]
    %v5945 = vld [vmem:[%s3 + $0x1c0] sm:$0xff]
    %v5946 = vld [vmem:[%s3 + $0x1c8] sm:$0xff]
    %v5947 = vld [vmem:[%s3 + $0x1d0] sm:$0xff]
    %v5948 = vld [vmem:[%s3 + $0x1d8] sm:$0xff]
    %v5949 = vld [vmem:[%s3 + $0x1e0] sm:$0xff]
    %v5950 = vld [vmem:[%s3 + $0x1e8] sm:$0xff]
    %v5951 = vld [vmem:[%s3 + $0x1f0] sm:$0xf]
    %v5952 = vld [vmem:[%s3 + $0x1f8] sm:$0xf]
    %v5953 = vrot.slane %v5624, 2
    %v5954 = vrot.slane %v5625, 2
    %v5955 = vsel %vm2702, %v5953, %v5954
    %v5956 = vsel %vm2507, %v5955, 0
    %v5958 = vsel %vm2507, %v5954, 0
    %v5961 = vsel %vm2043, %v5951, 0
    %v5964 = vsel %vm2043, %v5952, 0
    %5966 = vmatprep.subr.mxu0 %v5932
    %5967 = vmatpush1.msra.mxu0 %v5931
    %5968 = vmatprep.subr.mxu0 %v5934
    %5969 = vmatpush1.msra.mxu0 %v5933
    %5970 = vmatprep.subr.mxu0 %v5936
    %5971 = vmatpush1.msra.mxu0 %v5935
    %5972 = vmatprep.subr.mxu0 %v5938
    %5973 = vmatpush1.msra.mxu0 %v5937
    %5974 = vmatprep.subr.mxu0 %v5940
    %5975 = vmatpush1.msra.mxu0 %v5939
    %5976 = vmatprep.subr.mxu0 %v5942
    %5977 = vmatpush1.msra.mxu0 %v5941
    %5978 = vmatprep.subr.mxu0 %v5944
    %5979 = vmatpush1.msra.mxu0 %v5943
    %5980 = vmatprep.subr.mxu0 %v5946
    %5981 = vmatpush1.msra.mxu0 %v5945
    %5982 = vmatprep.subr.mxu0 %v5948
    %5983 = vmatpush1.msra.mxu0 %v5947
    %5984 = vmatprep.subr.mxu0 %v5950
    %5985 = vmatpush1.msra.mxu0 %v5949
    %5986 = vmatprep.subr.mxu0 %v5964
    %5987 = vmatpush1.msra.mxu0 %v5961
    %5988 = vmatprep.subr.mxu0 0.0
    %5989 = vmatpush1.msra.mxu0 0.0
    %5990 = vmatprep.subr.mxu0 0.0
    %5991 = vmatpush1.msra.mxu0 0.0
    %5992 = vmatprep.subr.mxu0 0.0
    %5993 = vmatpush1.msra.mxu0 0.0
    %5994 = vmatprep.subr.mxu0 0.0
    %5995 = vmatpush1.msra.mxu0 0.0
    %5996 = vmatprep.subr.mxu0 0.0
    %5997 = vmatpush1.msra.mxu0 0.0
    %5998 = vmatprep.subr.mxu0 0.0
    %5999 = vmatpush1.msra.mxu0 0.0
    %6000 = vmatprep.subr.mxu0 0.0
    %6001 = vmatpush1.msra.mxu0 0.0
    %6002 = vmatprep.subr.mxu0 0.0
    %6003 = vmatpush1.msra.mxu0 0.0
    %6004 = vmatprep.subr.mxu0 0.0
    %6005 = vmatpush1.msra.mxu0 0.0
    %6006 = vmatprep.subr.mxu0 0.0
    %6007 = vmatpush1.msra.mxu0 0.0
    %6008 = vmatprep.subr.mxu0 0.0
    %6009 = vmatpush1.msra.mxu0 0.0
    %6010 = vmatprep.subr.mxu0 0.0
    %6011 = vmatpush1.msra.mxu0 0.0
    %6012 = vmatprep.subr.mxu0 0.0
    %6013 = vmatpush1.msra.mxu0 0.0
    %6014 = vmatprep.subr.mxu0 0.0
    %6015 = vmatpush1.msra.mxu0 0.0
    %6016 = vmatprep.subr.mxu0 0.0
    %6017 = vmatpush1.msra.mxu0 0.0
    %6018 = vmatprep.subr.mxu0 0.0
    %6019 = vmatpush1.msra.mxu0 0.0
    %6020 = vmatprep.subr.mxu0 0.0
    %6021 = vmatpush1.msra.mxu0 0.0
    %6022 = vmatprep.subr.mxu0 0.0
    %6023 = vmatpush1.msra.mxu0 0.0
    %6024 = vmatprep.subr.mxu0 0.0
    %6025 = vmatpush1.msra.mxu0 0.0
    %6026 = vmatprep.subr.mxu0 0.0
    %6027 = vmatpush1.msra.mxu0 0.0
    %6028 = vmatprep.subr.mxu0 0.0
    %6029 = vmatpush1.msra.mxu0 0.0
    %6030 = vmatprep.mubr.f32.mxu0 0.0
    %6031 = vmatmul.mubr.f32.gmra.mrb[0].mxu0 %v5956
    %v6032 = vpop.f32.mrb[0].mxu0
    %v6033 = vadd.f32 0.0, %v6032
    %v6034 = vpop.f32.mrb[0].mxu0
    %v6035 = vadd.f32 0.0, %v6034
    %6036 = vmatprep.mubr.f32.mxu0 0.0
    %6037 = vmatmul.mubr.f32.gmra.mrb[0].mxu0 %v5958
    %v6038 = vpop.f32.mrb[0].mxu0
    %v6039 = vadd.f32 0.0, %v6038
    %v6040 = vpop.f32.mrb[0].mxu0
    %v6041 = vadd.f32 0.0, %v6040
    %6042 = vdwg.mxu0
    %v6043 = vadd.f32 %v5921, %v6033
    %v6044 = vadd.f32 %v5923, %v6035
    %v6045 = vadd.f32 %v5927, %v6039
    %v6046 = vadd.f32 %v5929, %v6041
    %v6047 = vld [vmem:[%s3 + $0x1f0] sm:$0xf0]
    %v6048 = vld [vmem:[%s3 + $0x1f8] sm:$0xf0]
    %v6049 = vld [vmem:[%s3 + $0x200] sm:$0xff]
    %v6050 = vld [vmem:[%s3 + $0x208] sm:$0xff]
    %v6051 = vld [vmem:[%s3 + $0x210] sm:$0xff]
    %v6052 = vld [vmem:[%s3 + $0x218] sm:$0xff]
    %v6053 = vld [vmem:[%s3 + $0x220] sm:$0xff]
    %v6054 = vld [vmem:[%s3 + $0x228] sm:$0xff]
    %v6055 = vld [vmem:[%s3 + $0x230] sm:$0xff]
    %v6056 = vld [vmem:[%s3 + $0x238] sm:$0xff]
    %v6057 = vld [vmem:[%s3 + $0x240] sm:$0xff]
    %v6058 = vld [vmem:[%s3 + $0x248] sm:$0xff]
    %v6059 = vld [vmem:[%s3 + $0x250] sm:$0xff]
    %v6060 = vld [vmem:[%s3 + $0x258] sm:$0xff]
    %v6061 = vld [vmem:[%s3 + $0x260] sm:$0xff]
    %v6062 = vld [vmem:[%s3 + $0x268] sm:$0xff]
    %v6063 = vld [vmem:[%s3 + $0x270] sm:$0xff]
    %v6064 = vld [vmem:[%s3 + $0x278] sm:$0xff]
    %v6065 = vld [vmem:[%s3 + $0x280] sm:$0xff]
    %v6066 = vld [vmem:[%s3 + $0x288] sm:$0xff]
    %v6067 = vld [vmem:[%s3 + $0x290] sm:$0xff]
    %v6068 = vld [vmem:[%s3 + $0x298] sm:$0xff]
    %v6069 = vrot.slane %v5624, 3
    %v6070 = vrot.slane %v5625, 3
    %v6071 = vsel %vm2819, %v6069, %v6070
    %v6094 = vrot.slane %v6047, 4
    %v6095 = vrot.slane %v6049, 4
    %v6096 = vsel %vm2043, %v6094, %v6095
    %v6097 = vrot.slane %v6048, 4
    %v6098 = vrot.slane %v6050, 4
    %v6099 = vsel %vm2043, %v6097, %v6098
    %v6100 = vrot.slane %v6051, 4
    %v6101 = vsel %vm2043, %v6095, %v6100
    %v6102 = vrot.slane %v6052, 4
    %v6103 = vsel %vm2043, %v6098, %v6102
    %v6104 = vrot.slane %v6053, 4
    %v6105 = vsel %vm2043, %v6100, %v6104
    %v6106 = vrot.slane %v6054, 4
    %v6107 = vsel %vm2043, %v6102, %v6106
    %v6108 = vrot.slane %v6055, 4
    %v6109 = vsel %vm2043, %v6104, %v6108
    %v6110 = vrot.slane %v6056, 4
    %v6111 = vsel %vm2043, %v6106, %v6110
    %v6112 = vrot.slane %v6057, 4
    %v6113 = vsel %vm2043, %v6108, %v6112
    %v6114 = vrot.slane %v6058, 4
    %v6115 = vsel %vm2043, %v6110, %v6114
    %v6116 = vrot.slane %v6059, 4
    %v6117 = vsel %vm2043, %v6112, %v6116
    %v6118 = vrot.slane %v6060, 4
    %v6119 = vsel %vm2043, %v6114, %v6118
    %v6120 = vrot.slane %v6061, 4
    %v6121 = vsel %vm2043, %v6116, %v6120
    %v6122 = vrot.slane %v6062, 4
    %v6123 = vsel %vm2043, %v6118, %v6122
    %v6124 = vrot.slane %v6063, 4
    %v6125 = vsel %vm2043, %v6120, %v6124
    %v6126 = vrot.slane %v6064, 4
    %v6127 = vsel %vm2043, %v6122, %v6126
    %v6128 = vrot.slane %v6065, 4
    %v6129 = vsel %vm2043, %v6124, %v6128
    %v6130 = vrot.slane %v6066, 4
    %v6131 = vsel %vm2043, %v6126, %v6130
    %v6132 = vrot.slane %v6067, 4
    %v6133 = vsel %vm2043, %v6128, %v6132
    %v6134 = vrot.slane %v6068, 4
    %v6135 = vsel %vm2043, %v6130, %v6134
    %v6156 = vsel %vm2507, %v6071, 0
    %v6158 = vsel %vm2507, %v6070, 0
    %v6160 = vsel %vm2043, %v6132, 0
    %v6162 = vsel %vm2043, %v6134, 0
    %6164 = vmatprep.subr.mxu0 %v6099
    %6165 = vmatpush1.msra.mxu0 %v6096
    %6166 = vmatprep.subr.mxu0 %v6103
    %6167 = vmatpush1.msra.mxu0 %v6101
    %6168 = vmatprep.subr.mxu0 %v6107
    %6169 = vmatpush1.msra.mxu0 %v6105
    %6170 = vmatprep.subr.mxu0 %v6111
    %6171 = vmatpush1.msra.mxu0 %v6109
    %6172 = vmatprep.subr.mxu0 %v6115
    %6173 = vmatpush1.msra.mxu0 %v6113
    %6174 = vmatprep.subr.mxu0 %v6119
    %6175 = vmatpush1.msra.mxu0 %v6117
    %6176 = vmatprep.subr.mxu0 %v6123
    %6177 = vmatpush1.msra.mxu0 %v6121
    %6178 = vmatprep.subr.mxu0 %v6127
    %6179 = vmatpush1.msra.mxu0 %v6125
    %6180 = vmatprep.subr.mxu0 %v6131
    %6181 = vmatpush1.msra.mxu0 %v6129
    %6182 = vmatprep.subr.mxu0 %v6135
    %6183 = vmatpush1.msra.mxu0 %v6133
    %6184 = vmatprep.subr.mxu0 %v6162
    %6185 = vmatpush1.msra.mxu0 %v6160
    %6186 = vmatprep.subr.mxu0 0.0
    %6187 = vmatpush1.msra.mxu0 0.0
    %6188 = vmatprep.subr.mxu0 0.0
    %6189 = vmatpush1.msra.mxu0 0.0
    %6190 = vmatprep.subr.mxu0 0.0
    %6191 = vmatpush1.msra.mxu0 0.0
    %6192 = vmatprep.subr.mxu0 0.0
    %6193 = vmatpush1.msra.mxu0 0.0
    %6194 = vmatprep.subr.mxu0 0.0
    %6195 = vmatpush1.msra.mxu0 0.0
    %6196 = vmatprep.subr.mxu0 0.0
    %6197 = vmatpush1.msra.mxu0 0.0
    %6198 = vmatprep.subr.mxu0 0.0
    %6199 = vmatpush1.msra.mxu0 0.0
    %6200 = vmatprep.subr.mxu0 0.0
    %6201 = vmatpush1.msra.mxu0 0.0
    %6202 = vmatprep.subr.mxu0 0.0
    %6203 = vmatpush1.msra.mxu0 0.0
    %6204 = vmatprep.subr.mxu0 0.0
    %6205 = vmatpush1.msra.mxu0 0.0
    %6206 = vmatprep.subr.mxu0 0.0
    %6207 = vmatpush1.msra.mxu0 0.0
    %6208 = vmatprep.subr.mxu0 0.0
    %6209 = vmatpush1.msra.mxu0 0.0
    %6210 = vmatprep.subr.mxu0 0.0
    %6211 = vmatpush1.msra.mxu0 0.0
    %6212 = vmatprep.subr.mxu0 0.0
    %6213 = vmatpush1.msra.mxu0 0.0
    %6214 = vmatprep.subr.mxu0 0.0
    %6215 = vmatpush1.msra.mxu0 0.0
    %6216 = vmatprep.subr.mxu0 0.0
    %6217 = vmatpush1.msra.mxu0 0.0
    %6218 = vmatprep.subr.mxu0 0.0
    %6219 = vmatpush1.msra.mxu0 0.0
    %6220 = vmatprep.subr.mxu0 0.0
    %6221 = vmatpush1.msra.mxu0 0.0
    %6222 = vmatprep.subr.mxu0 0.0
    %6223 = vmatpush1.msra.mxu0 0.0
    %6224 = vmatprep.subr.mxu0 0.0
    %6225 = vmatpush1.msra.mxu0 0.0
    %6226 = vmatprep.subr.mxu0 0.0
    %6227 = vmatpush1.msra.mxu0 0.0
    %6228 = vmatprep.mubr.f32.mxu0 0.0
    %6229 = vmatmul.mubr.f32.gmra.mrb[0].mxu0 %v6156
    %v6230 = vpop.f32.mrb[0].mxu0
    %v6231 = vadd.f32 0.0, %v6230
    %v6232 = vpop.f32.mrb[0].mxu0
    %v6233 = vadd.f32 0.0, %v6232
    %6234 = vmatprep.mubr.f32.mxu0 0.0
    %6235 = vmatmul.mubr.f32.gmra.mrb[0].mxu0 %v6158
    %v6236 = vpop.f32.mrb[0].mxu0
    %v6237 = vadd.f32 0.0, %v6236
    %v6238 = vpop.f32.mrb[0].mxu0
    %v6239 = vadd.f32 0.0, %v6238
    %6240 = vdwg.mxu0
    %v6241 = vadd.f32 %v6043, %v6231
    %v6242 = vadd.f32 %v6044, %v6233
    %v6243 = vadd.f32 %v6045, %v6237
    %v6244 = vadd.f32 %v6046, %v6239
    %v6245 = vld [vmem:[%s3 + $0x2a0] sm:$0xff]
    %v6246 = vld [vmem:[%s3 + $0x2a8] sm:$0xff]
    %v6247 = vld [vmem:[%s3 + $0x2b0] sm:$0xff]
    %v6248 = vld [vmem:[%s3 + $0x2b8] sm:$0xff]
    %v6249 = vld [vmem:[%s3 + $0x2c0] sm:$0xff]
    %v6250 = vld [vmem:[%s3 + $0x2c8] sm:$0xff]
    %v6251 = vld [vmem:[%s3 + $0x2d0] sm:$0xff]
    %v6252 = vld [vmem:[%s3 + $0x2d8] sm:$0xff]
    %v6253 = vld [vmem:[%s3 + $0x2e0] sm:$0xff]
    %v6254 = vld [vmem:[%s3 + $0x2e8] sm:$0xff]
    %v6255 = vld [vmem:[%s3 + $0x2f0] sm:$0xff]
    %v6256 = vld [vmem:[%s3 + $0x2f8] sm:$0xff]
    %v6257 = vld [vmem:[%s3 + $0x300] sm:$0xff]
    %v6258 = vld [vmem:[%s3 + $0x308] sm:$0xff]
    %v6259 = vld [vmem:[%s3 + $0x310] sm:$0xff]
    %v6260 = vld [vmem:[%s3 + $0x318] sm:$0xff]
    %v6261 = vld [vmem:[%s3 + $0x320] sm:$0xff]
    %v6262 = vld [vmem:[%s3 + $0x328] sm:$0xff]
    %v6263 = vld [vmem:[%s3 + $0x330] sm:$0xff]
    %v6264 = vld [vmem:[%s3 + $0x338] sm:$0xff]
    %v6265 = vld [vmem:[%s3 + $0x340] sm:$0xf]
    %v6266 = vld [vmem:[%s3 + $0x348] sm:$0xf]
    %v6267 = vrot.slane %v5624, 4
    %v6268 = vrot.slane %v5625, 4
    %v6269 = vsel %vm2043, %v6267, %v6268
    %v6270 = vsel %vm2507, %v6269, 0
    %v6272 = vsel %vm2507, %v6268, 0
    %v6275 = vsel %vm2043, %v6265, 0
    %v6278 = vsel %vm2043, %v6266, 0
    %6280 = vmatprep.subr.mxu0 %v6246
    %6281 = vmatpush1.msra.mxu0 %v6245
    %6282 = vmatprep.subr.mxu0 %v6248
    %6283 = vmatpush1.msra.mxu0 %v6247
    %6284 = vmatprep.subr.mxu0 %v6250
    %6285 = vmatpush1.msra.mxu0 %v6249
    %6286 = vmatprep.subr.mxu0 %v6252
    %6287 = vmatpush1.msra.mxu0 %v6251
    %6288 = vmatprep.subr.mxu0 %v6254
    %6289 = vmatpush1.msra.mxu0 %v6253
    %6290 = vmatprep.subr.mxu0 %v6256
    %6291 = vmatpush1.msra.mxu0 %v6255
    %6292 = vmatprep.subr.mxu0 %v6258
    %6293 = vmatpush1.msra.mxu0 %v6257
    %6294 = vmatprep.subr.mxu0 %v6260
    %6295 = vmatpush1.msra.mxu0 %v6259
    %6296 = vmatprep.subr.mxu0 %v6262
    %6297 = vmatpush1.msra.mxu0 %v6261
    %6298 = vmatprep.subr.mxu0 %v6264
    %6299 = vmatpush1.msra.mxu0 %v6263
    %6300 = vmatprep.subr.mxu0 %v6278
    %6301 = vmatpush1.msra.mxu0 %v6275
    %6302 = vmatprep.subr.mxu0 0.0
    %6303 = vmatpush1.msra.mxu0 0.0
    %6304 = vmatprep.subr.mxu0 0.0
    %6305 = vmatpush1.msra.mxu0 0.0
    %6306 = vmatprep.subr.mxu0 0.0
    %6307 = vmatpush1.msra.mxu0 0.0
    %6308 = vmatprep.subr.mxu0 0.0
    %6309 = vmatpush1.msra.mxu0 0.0
    %6310 = vmatprep.subr.mxu0 0.0
    %6311 = vmatpush1.msra.mxu0 0.0
    %6312 = vmatprep.subr.mxu0 0.0
    %6313 = vmatpush1.msra.mxu0 0.0
    %6314 = vmatprep.subr.mxu0 0.0
    %6315 = vmatpush1.msra.mxu0 0.0
    %6316 = vmatprep.subr.mxu0 0.0
    %6317 = vmatpush1.msra.mxu0 0.0
    %6318 = vmatprep.subr.mxu0 0.0
    %6319 = vmatpush1.msra.mxu0 0.0
    %6320 = vmatprep.subr.mxu0 0.0
    %6321 = vmatpush1.msra.mxu0 0.0
    %6322 = vmatprep.subr.mxu0 0.0
    %6323 = vmatpush1.msra.mxu0 0.0
    %6324 = vmatprep.subr.mxu0 0.0
    %6325 = vmatpush1.msra.mxu0 0.0
    %6326 = vmatprep.subr.mxu0 0.0
    %6327 = vmatpush1.msra.mxu0 0.0
    %6328 = vmatprep.subr.mxu0 0.0
    %6329 = vmatpush1.msra.mxu0 0.0
    %6330 = vmatprep.subr.mxu0 0.0
    %6331 = vmatpush1.msra.mxu0 0.0
    %6332 = vmatprep.subr.mxu0 0.0
    %6333 = vmatpush1.msra.mxu0 0.0
    %6334 = vmatprep.subr.mxu0 0.0
    %6335 = vmatpush1.msra.mxu0 0.0
    %6336 = vmatprep.subr.mxu0 0.0
    %6337 = vmatpush1.msra.mxu0 0.0
    %6338 = vmatprep.subr.mxu0 0.0
    %6339 = vmatpush1.msra.mxu0 0.0
    %6340 = vmatprep.subr.mxu0 0.0
    %6341 = vmatpush1.msra.mxu0 0.0
    %6342 = vmatprep.subr.mxu0 0.0
    %6343 = vmatpush1.msra.mxu0 0.0
    %6344 = vmatprep.mubr.f32.mxu0 0.0
    %6345 = vmatmul.mubr.f32.gmra.mrb[0].mxu0 %v6270
    %v6346 = vpop.f32.mrb[0].mxu0
    %v6347 = vadd.f32 0.0, %v6346
    %v6348 = vpop.f32.mrb[0].mxu0
    %v6349 = vadd.f32 0.0, %v6348
    %6350 = vmatprep.mubr.f32.mxu0 0.0
    %6351 = vmatmul.mubr.f32.gmra.mrb[0].mxu0 %v6272
    %v6352 = vpop.f32.mrb[0].mxu0
    %v6353 = vadd.f32 0.0, %v6352
    %v6354 = vpop.f32.mrb[0].mxu0
    %v6355 = vadd.f32 0.0, %v6354
    %6356 = vdwg.mxu0
    %v6357 = vadd.f32 %v6241, %v6347
    %v6358 = vadd.f32 %v6242, %v6349
    %v6359 = vadd.f32 %v6243, %v6353
    %v6360 = vadd.f32 %v6244, %v6355
    %v6361 = vadd.f32 %v6357, %v3116
    %v6362 = vadd.f32 %v6358, %v3120
    %v6363 = vadd.f32 %v6359, %v3116
    %v6364 = vadd.f32 %v6360, %v3120
    %v6365 = vmax.f32 %v6361, 0.0
    %v6366 = vmax.f32 %v6362, 0.0
    %v6367 = vmax.f32 %v6363, 0.0
    %v6368 = vmax.f32 %v6364, 0.0
    %v6370 = vsel %vm3134, %v6367, 0
    %v6373 = vsel %vm3134, %v6368, 0
    %6375 = vmatprep.subr.mxu0 %v6366
    %6376 = vmatpush1.msra.mxu0 %v6365
    %6377 = vmatprep.subr.mxu0 %v6373
    %6378 = vmatpush1.msra.mxu0 %v6370
    %6379 = vmatprep.subr.mxu0 0.0
    %6380 = vmatpush1.msra.mxu0 0.0
    %6381 = vmatprep.subr.mxu0 0.0
    %6382 = vmatpush1.msra.mxu0 0.0
    %6383 = vmatprep.subr.mxu0 0.0
    %6384 = vmatpush1.msra.mxu0 0.0
    %6385 = vmatprep.subr.mxu0 0.0
    %6386 = vmatpush1.msra.mxu0 0.0
    %6387 = vmatprep.subr.mxu0 0.0
    %6388 = vmatpush1.msra.mxu0 0.0
    %6389 = vmatprep.subr.mxu0 0.0
    %6390 = vmatpush1.msra.mxu0 0.0
    %6391 = vmatprep.subr.mxu0 0.0
    %6392 = vmatpush1.msra.mxu0 0.0
    %6393 = vmatprep.subr.mxu0 0.0
    %6394 = vmatpush1.msra.mxu0 0.0
    %6395 = vmatprep.subr.mxu0 0.0
    %6396 = vmatpush1.msra.mxu0 0.0
    %6397 = vmatprep.subr.mxu0 0.0
    %6398 = vmatpush1.msra.mxu0 0.0
    %6399 = vmatprep.subr.mxu0 0.0
    %6400 = vmatpush1.msra.mxu0 0.0
    %6401 = vmatprep.subr.mxu0 0.0
    %6402 = vmatpush1.msra.mxu0 0.0
    %6403 = vmatprep.subr.mxu0 0.0
    %6404 = vmatpush1.msra.mxu0 0.0
    %6405 = vmatprep.subr.mxu0 0.0
    %6406 = vmatpush1.msra.mxu0 0.0
    %6407 = vmatprep.subr.mxu0 0.0
    %6408 = vmatpush1.msra.mxu0 0.0
    %6409 = vmatprep.subr.mxu0 0.0
    %6410 = vmatpush1.msra.mxu0 0.0
    %6411 = vmatprep.subr.mxu0 0.0
    %6412 = vmatpush1.msra.mxu0 0.0
    %6413 = vmatprep.subr.mxu0 0.0
    %6414 = vmatpush1.msra.mxu0 0.0
    %6415 = vmatprep.subr.mxu0 0.0
    %6416 = vmatpush1.msra.mxu0 0.0
    %6417 = vmatprep.subr.mxu0 0.0
    %6418 = vmatpush1.msra.mxu0 0.0
    %6419 = vmatprep.subr.mxu0 0.0
    %6420 = vmatpush1.msra.mxu0 0.0
    %6421 = vmatprep.subr.mxu0 0.0
    %6422 = vmatpush1.msra.mxu0 0.0
    %6423 = vmatprep.subr.mxu0 0.0
    %6424 = vmatpush1.msra.mxu0 0.0
    %6425 = vmatprep.subr.mxu0 0.0
    %6426 = vmatpush1.msra.mxu0 0.0
    %6427 = vmatprep.subr.mxu0 0.0
    %6428 = vmatpush1.msra.mxu0 0.0
    %6429 = vmatprep.subr.mxu0 0.0
    %6430 = vmatpush1.msra.mxu0 0.0
    %6431 = vmatprep.subr.mxu0 0.0
    %6432 = vmatpush1.msra.mxu0 0.0
    %6433 = vmatprep.subr.mxu0 0.0
    %6434 = vmatpush1.msra.mxu0 0.0
    %6435 = vmatprep.subr.mxu0 0.0
    %6436 = vmatpush1.msra.mxu0 0.0
    %6437 = vmatprep.subr.mxu0 0.0
    %6438 = vmatpush1.msra.mxu0 0.0
    %6439 = vmatprep.mubr.f32.mxu0 0.0
    %6440 = vmatmul.mubr.f32.gmra.mrb[0].mxu0 %v3132
    %v6441 = vpop.f32.mrb[0].mxu0
    %v6442 = vadd.f32 0.0, %v6441
    %v6443 = vpop.f32.mrb[0].mxu0
    %v6444 = vadd.f32 0.0, %v6443
    %6445 = vdwg.mxu0
    %6446 = vmatprep.subr.mxu0 %v6366
    %6447 = vmatpush1.msra.mxu0 %v6365
    %6448 = vmatprep.subr.mxu0 %v6373
    %6449 = vmatpush1.msra.mxu0 %v6370
    %6450 = vmatprep.subr.mxu0 0.0
    %6451 = vmatpush1.msra.mxu0 0.0
    %6452 = vmatprep.subr.mxu0 0.0
    %6453 = vmatpush1.msra.mxu0 0.0
    %6454 = vmatprep.subr.mxu0 0.0
    %6455 = vmatpush1.msra.mxu0 0.0
    %6456 = vmatprep.subr.mxu0 0.0
    %6457 = vmatpush1.msra.mxu0 0.0
    %6458 = vmatprep.subr.mxu0 0.0
    %6459 = vmatpush1.msra.mxu0 0.0
    %6460 = vmatprep.subr.mxu0 0.0
    %6461 = vmatpush1.msra.mxu0 0.0
    %6462 = vmatprep.subr.mxu0 0.0
    %6463 = vmatpush1.msra.mxu0 0.0
    %6464 = vmatprep.subr.mxu0 0.0
    %6465 = vmatpush1.msra.mxu0 0.0
    %6466 = vmatprep.subr.mxu0 0.0
    %6467 = vmatpush1.msra.mxu0 0.0
    %6468 = vmatprep.subr.mxu0 0.0
    %6469 = vmatpush1.msra.mxu0 0.0
    %6470 = vmatprep.subr.mxu0 0.0
    %6471 = vmatpush1.msra.mxu0 0.0
    %6472 = vmatprep.subr.mxu0 0.0
    %6473 = vmatpush1.msra.mxu0 0.0
    %6474 = vmatprep.subr.mxu0 0.0
    %6475 = vmatpush1.msra.mxu0 0.0
    %6476 = vmatprep.subr.mxu0 0.0
    %6477 = vmatpush1.msra.mxu0 0.0
    %6478 = vmatprep.subr.mxu0 0.0
    %6479 = vmatpush1.msra.mxu0 0.0
    %6480 = vmatprep.subr.mxu0 0.0
    %6481 = vmatpush1.msra.mxu0 0.0
    %6482 = vmatprep.subr.mxu0 0.0
    %6483 = vmatpush1.msra.mxu0 0.0
    %6484 = vmatprep.subr.mxu0 0.0
    %6485 = vmatpush1.msra.mxu0 0.0
    %6486 = vmatprep.subr.mxu0 0.0
    %6487 = vmatpush1.msra.mxu0 0.0
    %6488 = vmatprep.subr.mxu0 0.0
    %6489 = vmatpush1.msra.mxu0 0.0
    %6490 = vmatprep.subr.mxu0 0.0
    %6491 = vmatpush1.msra.mxu0 0.0
    %6492 = vmatprep.subr.mxu0 0.0
    %6493 = vmatpush1.msra.mxu0 0.0
    %6494 = vmatprep.subr.mxu0 0.0
    %6495 = vmatpush1.msra.mxu0 0.0
    %6496 = vmatprep.subr.mxu0 0.0
    %6497 = vmatpush1.msra.mxu0 0.0
    %6498 = vmatprep.subr.mxu0 0.0
    %6499 = vmatpush1.msra.mxu0 0.0
    %6500 = vmatprep.subr.mxu0 0.0
    %6501 = vmatpush1.msra.mxu0 0.0
    %6502 = vmatprep.subr.mxu0 0.0
    %6503 = vmatpush1.msra.mxu0 0.0
    %6504 = vmatprep.subr.mxu0 0.0
    %6505 = vmatpush1.msra.mxu0 0.0
    %6506 = vmatprep.subr.mxu0 0.0
    %6507 = vmatpush1.msra.mxu0 0.0
    %6508 = vmatprep.subr.mxu0 0.0
    %6509 = vmatpush1.msra.mxu0 0.0
    %6510 = vmatprep.mubr.f32.mxu0 0.0
    %6511 = vmatmul.mubr.f32.gmra.mrb[0].mxu0 %v3212
    %v6512 = vpop.f32.mrb[0].mxu0
    %v6513 = vadd.f32 0.0, %v6512
    %v6514 = vpop.f32.mrb[0].mxu0
    %v6515 = vadd.f32 0.0, %v6514
    %6516 = vdwg.mxu0
    %v6517 = vmax.f32 %v6442, %v6513
    %v6518 = vmax.f32 %v6444, %v6515
    %v6520 = vsel %vm233, %v6518, 0
    %6522 = vmatprep.subr.mxu0 0.0
    %6523 = vmatpush1.msra.mxu0 %v122
    %6524 = vmatprep.subr.mxu0 0.0
    %6525 = vmatpush1.msra.mxu0 %v123
    %6526 = vmatprep.subr.mxu0 0.0
    %6527 = vmatpush1.msra.mxu0 %v124
    %6528 = vmatprep.subr.mxu0 0.0
    %6529 = vmatpush1.msra.mxu0 %v125
    %6530 = vmatprep.subr.mxu0 0.0
    %6531 = vmatpush1.msra.mxu0 %v126
    %6532 = vmatprep.subr.mxu0 0.0
    %6533 = vmatpush1.msra.mxu0 %v127
    %6534 = vmatprep.subr.mxu0 0.0
    %6535 = vmatpush1.msra.mxu0 %v128
    %6536 = vmatprep.subr.mxu0 0.0
    %6537 = vmatpush1.msra.mxu0 %v129
    %6538 = vmatprep.subr.mxu0 0.0
    %6539 = vmatpush1.msra.mxu0 %v130
    %6540 = vmatprep.subr.mxu0 0.0
    %6541 = vmatpush1.msra.mxu0 %v131
    %6542 = vmatprep.subr.mxu0 0.0
    %6543 = vmatpush1.msra.mxu0 %v132
    %6544 = vmatprep.subr.mxu0 0.0
    %6545 = vmatpush1.msra.mxu0 %v133
    %6546 = vmatprep.subr.mxu0 0.0
    %6547 = vmatpush1.msra.mxu0 %v134
    %6548 = vmatprep.subr.mxu0 0.0
    %6549 = vmatpush1.msra.mxu0 %v135
    %6550 = vmatprep.subr.mxu0 0.0
    %6551 = vmatpush1.msra.mxu0 %v136
    %6552 = vmatprep.subr.mxu0 0.0
    %6553 = vmatpush1.msra.mxu0 %v137
    %6554 = vmatprep.subr.mxu0 0.0
    %6555 = vmatpush1.msra.mxu0 %v138
    %6556 = vmatprep.subr.mxu0 0.0
    %6557 = vmatpush1.msra.mxu0 %v139
    %6558 = vmatprep.subr.mxu0 0.0
    %6559 = vmatpush1.msra.mxu0 %v140
    %6560 = vmatprep.subr.mxu0 0.0
    %6561 = vmatpush1.msra.mxu0 %v141
    %6562 = vmatprep.subr.mxu0 0.0
    %6563 = vmatpush1.msra.mxu0 0.0
    %6564 = vmatprep.subr.mxu0 0.0
    %6565 = vmatpush1.msra.mxu0 0.0
    %6566 = vmatprep.subr.mxu0 0.0
    %6567 = vmatpush1.msra.mxu0 0.0
    %6568 = vmatprep.subr.mxu0 0.0
    %6569 = vmatpush1.msra.mxu0 0.0
    %6570 = vmatprep.subr.mxu0 0.0
    %6571 = vmatpush1.msra.mxu0 0.0
    %6572 = vmatprep.subr.mxu0 0.0
    %6573 = vmatpush1.msra.mxu0 0.0
    %6574 = vmatprep.subr.mxu0 0.0
    %6575 = vmatpush1.msra.mxu0 0.0
    %6576 = vmatprep.subr.mxu0 0.0
    %6577 = vmatpush1.msra.mxu0 0.0
    %6578 = vmatprep.subr.mxu0 0.0
    %6579 = vmatpush1.msra.mxu0 0.0
    %6580 = vmatprep.subr.mxu0 0.0
    %6581 = vmatpush1.msra.mxu0 0.0
    %6582 = vmatprep.subr.mxu0 0.0
    %6583 = vmatpush1.msra.mxu0 0.0
    %6584 = vmatprep.subr.mxu0 0.0
    %6585 = vmatpush1.msra.mxu0 0.0
    %6586 = vmatprep.mubr.f32.mxu0 %v6520
    %6587 = vmatmul.mubr.f32.gmra.mrb[0].mxu0 %v6517
    %v6588 = vpop.f32.mrb[0].mxu0
    %v6589 = vadd.f32 0.0, %v6588
    %v6590 = vpop.f32.mrb[0].mxu0
    %6591 = vdwg.mxu0
    %6592 = vmatprep.subr.mxu0 0.0
    %6593 = vmatpush1.msra.mxu0 %v186
    %6594 = vmatprep.subr.mxu0 0.0
    %6595 = vmatpush1.msra.mxu0 %v187
    %6596 = vmatprep.subr.mxu0 0.0
    %6597 = vmatpush1.msra.mxu0 %v188
    %6598 = vmatprep.subr.mxu0 0.0
    %6599 = vmatpush1.msra.mxu0 %v189
    %6600 = vmatprep.subr.mxu0 0.0
    %6601 = vmatpush1.msra.mxu0 %v190
    %6602 = vmatprep.subr.mxu0 0.0
    %6603 = vmatpush1.msra.mxu0 %v191
    %6604 = vmatprep.subr.mxu0 0.0
    %6605 = vmatpush1.msra.mxu0 %v192
    %6606 = vmatprep.subr.mxu0 0.0
    %6607 = vmatpush1.msra.mxu0 %v193
    %6608 = vmatprep.subr.mxu0 0.0
    %6609 = vmatpush1.msra.mxu0 %v194
    %6610 = vmatprep.subr.mxu0 0.0
    %6611 = vmatpush1.msra.mxu0 %v195
    %6612 = vmatprep.subr.mxu0 0.0
    %6613 = vmatpush1.msra.mxu0 %v196
    %6614 = vmatprep.subr.mxu0 0.0
    %6615 = vmatpush1.msra.mxu0 %v197
    %6616 = vmatprep.subr.mxu0 0.0
    %6617 = vmatpush1.msra.mxu0 %v198
    %6618 = vmatprep.subr.mxu0 0.0
    %6619 = vmatpush1.msra.mxu0 %v199
    %6620 = vmatprep.subr.mxu0 0.0
    %6621 = vmatpush1.msra.mxu0 %v200
    %6622 = vmatprep.subr.mxu0 0.0
    %6623 = vmatpush1.msra.mxu0 %v201
    %6624 = vmatprep.subr.mxu0 0.0
    %6625 = vmatpush1.msra.mxu0 %v202
    %6626 = vmatprep.subr.mxu0 0.0
    %6627 = vmatpush1.msra.mxu0 %v203
    %6628 = vmatprep.subr.mxu0 0.0
    %6629 = vmatpush1.msra.mxu0 %v204
    %6630 = vmatprep.subr.mxu0 0.0
    %6631 = vmatpush1.msra.mxu0 %v205
    %6632 = vmatprep.subr.mxu0 0.0
    %6633 = vmatpush1.msra.mxu0 0.0
    %6634 = vmatprep.subr.mxu0 0.0
    %6635 = vmatpush1.msra.mxu0 0.0
    %6636 = vmatprep.subr.mxu0 0.0
    %6637 = vmatpush1.msra.mxu0 0.0
    %6638 = vmatprep.subr.mxu0 0.0
    %6639 = vmatpush1.msra.mxu0 0.0
    %6640 = vmatprep.subr.mxu0 0.0
    %6641 = vmatpush1.msra.mxu0 0.0
    %6642 = vmatprep.subr.mxu0 0.0
    %6643 = vmatpush1.msra.mxu0 0.0
    %6644 = vmatprep.subr.mxu0 0.0
    %6645 = vmatpush1.msra.mxu0 0.0
    %6646 = vmatprep.subr.mxu0 0.0
    %6647 = vmatpush1.msra.mxu0 0.0
    %6648 = vmatprep.subr.mxu0 0.0
    %6649 = vmatpush1.msra.mxu0 0.0
    %6650 = vmatprep.subr.mxu0 0.0
    %6651 = vmatpush1.msra.mxu0 0.0
    %6652 = vmatprep.subr.mxu0 0.0
    %6653 = vmatpush1.msra.mxu0 0.0
    %6654 = vmatprep.subr.mxu0 0.0
    %6655 = vmatpush1.msra.mxu0 0.0
    %6656 = vmatprep.mubr.f32.mxu0 %v6520
    %6657 = vmatmul.mubr.f32.gmra.mrb[0].mxu0 %v6517
    %v6658 = vpop.f32.mrb[0].mxu0
    %v6659 = vadd.f32 0.0, %v6658
    %v6660 = vpop.f32.mrb[0].mxu0
    %6661 = vdwg.mxu0
    %v6662 = vmax.f32 %v6589, %v6659
    %6663 = vst.msk [vmem:[#allocation2 + $0x1] sm:$0x1] %vm3431, %v6662
    %v6666 = vunpack.c.l.s4 1983009808
    %v6667 = vunpack.c.0.s8 %v6666
    %v6668 = vlaneseq
    %v6669 = vshrl.u32 %v6668, 7
    %v6670 = vsub.s32 %v6667, %v6669
    %v6671 = vrot.slane %v6662, %v6670
    %v6672 = vrot.slane %v6671, 7
    %v6673 = vrot.slane %v6672, 2
    %6674 = vrot.lane.b32.xlu0 %v6673, 80
    %v6675 = vpop.permute.xlu0 %6674
    %v6676 = vrot.slane %v6675, 6
    %v6677 = vsel %vm3446, %v6676, %v6675
    %6679 = vst.msk [vmem:[#allocation2 + $0x1] sm:$0x5] %vm3451, %v6677
    %v6680 = vcombine.high %v6671, %v6671
    %6681 = vrot.lane.b32.xlu0 %v6680, 32
    %v6682 = vpop.permute.xlu0 %6681
    %6684 = vst.msk [vmem:[#allocation2 + $0x3] sm:$0x1] %vm3457, %v6682
    %v6685 = vrot.slane %v6680, 7
    %v6686 = vrot.slane %v6685, 2
    %6687 = vrot.lane.b32.xlu0 %v6686, 112
    %v6688 = vpop.permute.xlu0 %6687
    %v6689 = vrot.slane %v6688, 6
    %v6690 = vsel %vm3464, %v6689, %v6688
    %6692 = vst.msk [vmem:[#allocation2 + $0x3] sm:$0x5] %vm3469, %v6690
    %v6693 = vcombine.high %v6662, %v6662
    %v6695 = vunpack.c.l.s4 1983009808
    %v6696 = vunpack.c.0.s8 %v6695
    %v6697 = vlaneseq
    %v6698 = vshrl.u32 %v6697, 7
    %v6699 = vsub.s32 %v6696, %v6698
    %v6700 = vrot.slane %v6693, %v6699
    %6701 = vrot.lane.b32.xlu0 %v6700, 64
    %v6702 = vpop.permute.xlu0 %6701
    %v6703 = vrot.slane %v6702, 6
    %v6704 = vsel %vm3482, %v6703, %v6702
    %6706 = vst.msk [vmem:[#allocation2 + $0x5] sm:$0x5] %vm3487, %v6704
    %v6707 = vld [vmem:[#allocation2] sm:$0xff]
    %v6708 = vld [vmem:[%s5] sm:$0xff]
    %v6709 = vld [vmem:[%s5 + $0x8] sm:$0xff]
    %v6710 = vld [vmem:[%s5 + $0x10] sm:$0xff]
    %v6711 = vld [vmem:[%s5 + $0x18] sm:$0xff]
    %v6712 = vld [vmem:[%s5 + $0x20] sm:$0xff]
    %v6713 = vld [vmem:[%s5 + $0x28] sm:$0xff]
    %v6714 = vld [vmem:[%s5 + $0x30] sm:$0xff]
    %v6715 = vld [vmem:[%s5 + $0x38] sm:$0xff]
    %v6716 = vld [vmem:[%s5 + $0x40] sm:$0xff]
    %v6717 = vld [vmem:[%s5 + $0x48] sm:$0xff]
    %v6718 = vld [vmem:[%s5 + $0x50] sm:$0xff]
    %v6719 = vld [vmem:[%s5 + $0x58] sm:$0xff]
    %v6720 = vld [vmem:[%s5 + $0x60] sm:$0xff]
    %v6721 = vld [vmem:[%s5 + $0x68] sm:$0xff]
    %v6722 = vld [vmem:[%s5 + $0x70] sm:$0xff]
    %v6723 = vld [vmem:[%s5 + $0x78] sm:$0xff]
    %v6724 = vld [vmem:[%s5 + $0x80] sm:$0xff]
    %v6725 = vld [vmem:[%s5 + $0x88] sm:$0xff]
    %v6726 = vld [vmem:[%s5 + $0x90] sm:$0xff]
    %v6727 = vld [vmem:[%s5 + $0x98] sm:$0xff]
    %v6728 = vld [vmem:[%s5 + $0xa0] sm:$0xff]
    %v6729 = vld [vmem:[%s5 + $0xa8] sm:$0xff]
    %v6730 = vld [vmem:[%s5 + $0xb0] sm:$0xff]
    %v6731 = vld [vmem:[%s5 + $0xb8] sm:$0xff]
    %v6732 = vld [vmem:[%s5 + $0xc0] sm:$0xff]
    %v6733 = vld [vmem:[%s5 + $0xc8] sm:$0xff]
    %v6734 = vld [vmem:[%s5 + $0xd0] sm:$0xff]
    %v6735 = vld [vmem:[%s5 + $0xd8] sm:$0xff]
    %v6736 = vld [vmem:[%s5 + $0xe0] sm:$0xff]
    %v6737 = vld [vmem:[%s5 + $0xe8] sm:$0xff]
    %v6738 = vld [vmem:[%s5 + $0xf0] sm:$0xff]
    %v6739 = vld [vmem:[%s5 + $0xf8] sm:$0xff]
    %v6740 = vld [vmem:[%s5 + $0x100] sm:$0xff]
    %v6741 = vld [vmem:[%s5 + $0x108] sm:$0xff]
    %v6742 = vld [vmem:[%s5 + $0x110] sm:$0xff]
    %v6743 = vld [vmem:[%s5 + $0x118] sm:$0xff]
    %v6744 = vld [vmem:[%s5 + $0x120] sm:$0xff]
    %v6745 = vld [vmem:[%s5 + $0x128] sm:$0xff]
    %v6746 = vld [vmem:[%s5 + $0x130] sm:$0xff]
    %v6747 = vld [vmem:[%s5 + $0x138] sm:$0xff]
    %v6748 = vld [vmem:[%s5 + $0x140] sm:$0xff]
    %v6749 = vld [vmem:[%s5 + $0x148] sm:$0xff]
    %v6750 = vld [vmem:[%s5 + $0x150] sm:$0xff]
    %v6751 = vld [vmem:[%s5 + $0x158] sm:$0xff]
    %v6752 = vld [vmem:[%s5 + $0x160] sm:$0xff]
    %v6753 = vld [vmem:[%s5 + $0x168] sm:$0xff]
    %v6754 = vld [vmem:[%s5 + $0x170] sm:$0xff]
    %v6755 = vld [vmem:[%s5 + $0x178] sm:$0xff]
    %v6756 = vld [vmem:[%s5 + $0x180] sm:$0xff]
    %v6757 = vld [vmem:[%s5 + $0x188] sm:$0xff]
    %v6758 = vld [vmem:[%s6] sm:$0x1]
    %v6760 = vlaneseq
    %v6761 = vshrl.u32 %v6760, 7
    %v6762 = vsub.s32 0, %v6761
    %v6763 = vrot.slane %v6758, %v6762
    %v6766 = vcombine.high %v6707, %v6707
    %v6768 = vunpack.c.l.s4 1983009808
    %v6769 = vunpack.c.0.s8 %v6768
    %v6770 = vlaneseq
    %v6771 = vshrl.u32 %v6770, 7
    %v6772 = vsub.s32 %v6769, %v6771
    %v6773 = vrot.slane %v6707, %v6772
    %v6775 = vunpack.c.l.s4 1983009808
    %v6776 = vunpack.c.0.s8 %v6775
    %v6777 = vlaneseq
    %v6778 = vshrl.u32 %v6777, 7
    %v6779 = vsub.s32 %v6776, %v6778
    %v6780 = vrot.slane %v6766, %v6779
    %v6781 = vcombine.high %v6773, %v6773
    %v6782 = vcombine.high %v6780, %v6780
    %vm6786 = vcmask 130048
    %v6787 = vsel %vm6786, %v6782, 0
    %6789 = vmatprep.subr.mxu0 0.0
    %6790 = vmatpush1.msra.mxu0 %v6708
    %6791 = vmatprep.subr.mxu0 0.0
    %6792 = vmatpush1.msra.mxu0 %v6709
    %6793 = vmatprep.subr.mxu0 0.0
    %6794 = vmatpush1.msra.mxu0 %v6710
    %6795 = vmatprep.subr.mxu0 0.0
    %6796 = vmatpush1.msra.mxu0 %v6711
    %6797 = vmatprep.subr.mxu0 0.0
    %6798 = vmatpush1.msra.mxu0 %v6712
    %6799 = vmatprep.subr.mxu0 0.0
    %6800 = vmatpush1.msra.mxu0 %v6713
    %6801 = vmatprep.subr.mxu0 0.0
    %6802 = vmatpush1.msra.mxu0 %v6714
    %6803 = vmatprep.subr.mxu0 0.0
    %6804 = vmatpush1.msra.mxu0 %v6715
    %6805 = vmatprep.subr.mxu0 0.0
    %6806 = vmatpush1.msra.mxu0 %v6716
    %6807 = vmatprep.subr.mxu0 0.0
    %6808 = vmatpush1.msra.mxu0 %v6717
    %6809 = vmatprep.subr.mxu0 0.0
    %6810 = vmatpush1.msra.mxu0 %v6718
    %6811 = vmatprep.subr.mxu0 0.0
    %6812 = vmatpush1.msra.mxu0 %v6719
    %6813 = vmatprep.subr.mxu0 0.0
    %6814 = vmatpush1.msra.mxu0 %v6720
    %6815 = vmatprep.subr.mxu0 0.0
    %6816 = vmatpush1.msra.mxu0 %v6721
    %6817 = vmatprep.subr.mxu0 0.0
    %6818 = vmatpush1.msra.mxu0 %v6722
    %6819 = vmatprep.subr.mxu0 0.0
    %6820 = vmatpush1.msra.mxu0 %v6723
    %6821 = vmatprep.subr.mxu0 0.0
    %6822 = vmatpush1.msra.mxu0 %v6724
    %6823 = vmatprep.subr.mxu0 0.0
    %6824 = vmatpush1.msra.mxu0 %v6725
    %6825 = vmatprep.subr.mxu0 0.0
    %6826 = vmatpush1.msra.mxu0 %v6726
    %6827 = vmatprep.subr.mxu0 0.0
    %6828 = vmatpush1.msra.mxu0 %v6727
    %6829 = vmatprep.subr.mxu0 0.0
    %6830 = vmatpush1.msra.mxu0 %v6728
    %6831 = vmatprep.subr.mxu0 0.0
    %6832 = vmatpush1.msra.mxu0 %v6729
    %6833 = vmatprep.subr.mxu0 0.0
    %6834 = vmatpush1.msra.mxu0 %v6730
    %6835 = vmatprep.subr.mxu0 0.0
    %6836 = vmatpush1.msra.mxu0 %v6731
    %6837 = vmatprep.subr.mxu0 0.0
    %6838 = vmatpush1.msra.mxu0 %v6732
    %6839 = vmatprep.subr.mxu0 0.0
    %6840 = vmatpush1.msra.mxu0 %v6733
    %6841 = vmatprep.subr.mxu0 0.0
    %6842 = vmatpush1.msra.mxu0 %v6734
    %6843 = vmatprep.subr.mxu0 0.0
    %6844 = vmatpush1.msra.mxu0 %v6735
    %6845 = vmatprep.subr.mxu0 0.0
    %6846 = vmatpush1.msra.mxu0 %v6736
    %6847 = vmatprep.subr.mxu0 0.0
    %6848 = vmatpush1.msra.mxu0 %v6737
    %6849 = vmatprep.subr.mxu0 0.0
    %6850 = vmatpush1.msra.mxu0 %v6738
    %6851 = vmatprep.subr.mxu0 0.0
    %6852 = vmatpush1.msra.mxu0 %v6739
    %6853 = vmatprep.mubr.f32.mxu0 %v6781
    %6854 = vmatmul.mubr.f32.gmra.mrb[0].mxu0 %v6773
    %v6855 = vpop.f32.mrb[0].mxu0
    %v6856 = vadd.f32 %v6763, %v6855
    %v6857 = vpop.f32.mrb[0].mxu0
    %6858 = vdwg.mxu0
    %6859 = vmatprep.subr.mxu0 0.0
    %6860 = vmatpush1.msra.mxu0 %v6740
    %6861 = vmatprep.subr.mxu0 0.0
    %6862 = vmatpush1.msra.mxu0 %v6741
    %6863 = vmatprep.subr.mxu0 0.0
    %6864 = vmatpush1.msra.mxu0 %v6742
    %6865 = vmatprep.subr.mxu0 0.0
    %6866 = vmatpush1.msra.mxu0 %v6743
    %6867 = vmatprep.subr.mxu0 0.0
    %6868 = vmatpush1.msra.mxu0 %v6744
    %6869 = vmatprep.subr.mxu0 0.0
    %6870 = vmatpush1.msra.mxu0 %v6745
    %6871 = vmatprep.subr.mxu0 0.0
    %6872 = vmatpush1.msra.mxu0 %v6746
    %6873 = vmatprep.subr.mxu0 0.0
    %6874 = vmatpush1.msra.mxu0 %v6747
    %6875 = vmatprep.subr.mxu0 0.0
    %6876 = vmatpush1.msra.mxu0 %v6748
    %6877 = vmatprep.subr.mxu0 0.0
    %6878 = vmatpush1.msra.mxu0 %v6749
    %6879 = vmatprep.subr.mxu0 0.0
    %6880 = vmatpush1.msra.mxu0 %v6750
    %6881 = vmatprep.subr.mxu0 0.0
    %6882 = vmatpush1.msra.mxu0 %v6751
    %6883 = vmatprep.subr.mxu0 0.0
    %6884 = vmatpush1.msra.mxu0 %v6752
    %6885 = vmatprep.subr.mxu0 0.0
    %6886 = vmatpush1.msra.mxu0 %v6753
    %6887 = vmatprep.subr.mxu0 0.0
    %6888 = vmatpush1.msra.mxu0 %v6754
    %6889 = vmatprep.subr.mxu0 0.0
    %6890 = vmatpush1.msra.mxu0 %v6755
    %6891 = vmatprep.subr.mxu0 0.0
    %6892 = vmatpush1.msra.mxu0 %v6756
    %6893 = vmatprep.subr.mxu0 0.0
    %6894 = vmatpush1.msra.mxu0 %v6757
    %6895 = vmatprep.subr.mxu0 0.0
    %6896 = vmatpush1.msra.mxu0 0.0
    %6897 = vmatprep.subr.mxu0 0.0
    %6898 = vmatpush1.msra.mxu0 0.0
    %6899 = vmatprep.subr.mxu0 0.0
    %6900 = vmatpush1.msra.mxu0 0.0
    %6901 = vmatprep.subr.mxu0 0.0
    %6902 = vmatpush1.msra.mxu0 0.0
    %6903 = vmatprep.subr.mxu0 0.0
    %6904 = vmatpush1.msra.mxu0 0.0
    %6905 = vmatprep.subr.mxu0 0.0
    %6906 = vmatpush1.msra.mxu0 0.0
    %6907 = vmatprep.subr.mxu0 0.0
    %6908 = vmatpush1.msra.mxu0 0.0
    %6909 = vmatprep.subr.mxu0 0.0
    %6910 = vmatpush1.msra.mxu0 0.0
    %6911 = vmatprep.subr.mxu0 0.0
    %6912 = vmatpush1.msra.mxu0 0.0
    %6913 = vmatprep.subr.mxu0 0.0
    %6914 = vmatpush1.msra.mxu0 0.0
    %6915 = vmatprep.subr.mxu0 0.0
    %6916 = vmatpush1.msra.mxu0 0.0
    %6917 = vmatprep.subr.mxu0 0.0
    %6918 = vmatpush1.msra.mxu0 0.0
    %6919 = vmatprep.subr.mxu0 0.0
    %6920 = vmatpush1.msra.mxu0 0.0
    %6921 = vmatprep.subr.mxu0 0.0
    %6922 = vmatpush1.msra.mxu0 0.0
    %6923 = vmatprep.mubr.f32.mxu0 %v6787
    %6924 = vmatmul.mubr.f32.gmra.mrb[0].mxu0 %v6780
    %v6925 = vpop.f32.mrb[0].mxu0
    %v6926 = vadd.f32 %v6856, %v6925
    %v6927 = vpop.f32.mrb[0].mxu0
    %6928 = vdwg.mxu0
    %v6929 = vmax.f32 %v6926, 0.0
    %v6930 = vld [vmem:[%s7] sm:$0xff]
    %v6931 = vld [vmem:[%s7 + $0x8] sm:$0xff]
    %v6932 = vld [vmem:[%s7 + $0x10] sm:$0xff]
    %v6933 = vld [vmem:[%s7 + $0x18] sm:$0xff]
    %v6934 = vld [vmem:[%s7 + $0x20] sm:$0xff]
    %v6935 = vld [vmem:[%s7 + $0x28] sm:$0xff]
    %v6936 = vld [vmem:[%s7 + $0x30] sm:$0xff]
    %v6937 = vld [vmem:[%s7 + $0x38] sm:$0xff]
    %v6938 = vld [vmem:[%s7 + $0x40] sm:$0xff]
    %v6939 = vld [vmem:[%s7 + $0x48] sm:$0xff]
    %v6940 = vld [vmem:[%s7 + $0x50] sm:$0xff]
    %v6941 = vld [vmem:[%s7 + $0x58] sm:$0xff]
    %v6942 = vld [vmem:[%s7 + $0x60] sm:$0xff]
    %v6943 = vld [vmem:[%s7 + $0x68] sm:$0xff]
    %v6944 = vld [vmem:[%s7 + $0x70] sm:$0xff]
    %v6945 = vld [vmem:[%s8] sm:$0x1]
    %v6947 = vlaneseq
    %v6948 = vshrl.u32 %v6947, 7
    %v6949 = vsub.s32 0, %v6948
    %v6950 = vrot.slane %v6945, %v6949
    %vm6952 = vcmask 982016
    %v6954 = vsel %vm6952, %v6929, 0
    %6956 = vmatprep.subr.mxu0 0.0
    %6957 = vmatpush1.msra.mxu0 %v6930
    %6958 = vmatprep.subr.mxu0 0.0
    %6959 = vmatpush1.msra.mxu0 %v6931
    %6960 = vmatprep.subr.mxu0 0.0
    %6961 = vmatpush1.msra.mxu0 %v6932
    %6962 = vmatprep.subr.mxu0 0.0
    %6963 = vmatpush1.msra.mxu0 %v6933
    %6964 = vmatprep.subr.mxu0 0.0
    %6965 = vmatpush1.msra.mxu0 %v6934
    %6966 = vmatprep.subr.mxu0 0.0
    %6967 = vmatpush1.msra.mxu0 %v6935
    %6968 = vmatprep.subr.mxu0 0.0
    %6969 = vmatpush1.msra.mxu0 %v6936
    %6970 = vmatprep.subr.mxu0 0.0
    %6971 = vmatpush1.msra.mxu0 %v6937
    %6972 = vmatprep.subr.mxu0 0.0
    %6973 = vmatpush1.msra.mxu0 %v6938
    %6974 = vmatprep.subr.mxu0 0.0
    %6975 = vmatpush1.msra.mxu0 %v6939
    %6976 = vmatprep.subr.mxu0 0.0
    %6977 = vmatpush1.msra.mxu0 %v6940
    %6978 = vmatprep.subr.mxu0 0.0
    %6979 = vmatpush1.msra.mxu0 %v6941
    %6980 = vmatprep.subr.mxu0 0.0
    %6981 = vmatpush1.msra.mxu0 %v6942
    %6982 = vmatprep.subr.mxu0 0.0
    %6983 = vmatpush1.msra.mxu0 %v6943
    %6984 = vmatprep.subr.mxu0 0.0
    %6985 = vmatpush1.msra.mxu0 %v6944
    %6986 = vmatprep.subr.mxu0 0.0
    %6987 = vmatpush1.msra.mxu0 0.0
    %6988 = vmatprep.subr.mxu0 0.0
    %6989 = vmatpush1.msra.mxu0 0.0
    %6990 = vmatprep.subr.mxu0 0.0
    %6991 = vmatpush1.msra.mxu0 0.0
    %6992 = vmatprep.subr.mxu0 0.0
    %6993 = vmatpush1.msra.mxu0 0.0
    %6994 = vmatprep.subr.mxu0 0.0
    %6995 = vmatpush1.msra.mxu0 0.0
    %6996 = vmatprep.subr.mxu0 0.0
    %6997 = vmatpush1.msra.mxu0 0.0
    %6998 = vmatprep.subr.mxu0 0.0
    %6999 = vmatpush1.msra.mxu0 0.0
    %7000 = vmatprep.subr.mxu0 0.0
    %7001 = vmatpush1.msra.mxu0 0.0
    %7002 = vmatprep.subr.mxu0 0.0
    %7003 = vmatpush1.msra.mxu0 0.0
    %7004 = vmatprep.subr.mxu0 0.0
    %7005 = vmatpush1.msra.mxu0 0.0
    %7006 = vmatprep.subr.mxu0 0.0
    %7007 = vmatpush1.msra.mxu0 0.0
    %7008 = vmatprep.subr.mxu0 0.0
    %7009 = vmatpush1.msra.mxu0 0.0
    %7010 = vmatprep.subr.mxu0 0.0
    %7011 = vmatpush1.msra.mxu0 0.0
    %7012 = vmatprep.subr.mxu0 0.0
    %7013 = vmatpush1.msra.mxu0 0.0
    %7014 = vmatprep.subr.mxu0 0.0
    %7015 = vmatpush1.msra.mxu0 0.0
    %7016 = vmatprep.subr.mxu0 0.0
    %7017 = vmatpush1.msra.mxu0 0.0
    %7018 = vmatprep.subr.mxu0 0.0
    %7019 = vmatpush1.msra.mxu0 0.0
    %7020 = vmatprep.mubr.f32.mxu0 0.0
    %7021 = vmatmul.mubr.f32.gmra.mrb[0].mxu0 %v6954
    %v7022 = vpop.f32.mrb[0].mxu0
    %v7023 = vadd.f32 %v6950, %v7022
    %v7024 = vpop.f32.mrb[0].mxu0
    %7025 = vdwg.mxu0
    %v7026 = vmax.f32 %v7023, 0.0
    %v7027 = vld [vmem:[%s9] sm:$0xff]
    %v7028 = vld [vmem:[%s9 + $0x8] sm:$0xff]
    %v7029 = vld [vmem:[%s9 + $0x10] sm:$0xff]
    %v7030 = vld [vmem:[%s9 + $0x18] sm:$0xff]
    %v7031 = vld [vmem:[%s9 + $0x20] sm:$0xff]
    %v7032 = vld [vmem:[%s9 + $0x28] sm:$0xff]
    %v7033 = vld [vmem:[%s9 + $0x30] sm:$0xff]
    %v7034 = vld [vmem:[%s9 + $0x38] sm:$0xff]
    %v7035 = vld [vmem:[%s9 + $0x40] sm:$0xff]
    %v7036 = vld [vmem:[%s9 + $0x48] sm:$0xff]
    %v7037 = vld [vmem:[%s9 + $0x50] sm:$0xf]
    %v7038 = vld [vmem:[%s10] sm:$0x1]
    %v7040 = vlaneseq
    %v7041 = vshrl.u32 %v7040, 7
    %v7042 = vsub.s32 0, %v7041
    %v7043 = vrot.slane %v7038, %v7042
    %v7046 = vsel %vm2507, %v7026, 0
    %v7049 = vsel %vm2043, %v7037, 0
    %7051 = vmatprep.subr.mxu0 0.0
    %7052 = vmatpush1.msra.mxu0 %v7027
    %7053 = vmatprep.subr.mxu0 0.0
    %7054 = vmatpush1.msra.mxu0 %v7028
    %7055 = vmatprep.subr.mxu0 0.0
    %7056 = vmatpush1.msra.mxu0 %v7029
    %7057 = vmatprep.subr.mxu0 0.0
    %7058 = vmatpush1.msra.mxu0 %v7030
    %7059 = vmatprep.subr.mxu0 0.0
    %7060 = vmatpush1.msra.mxu0 %v7031
    %7061 = vmatprep.subr.mxu0 0.0
    %7062 = vmatpush1.msra.mxu0 %v7032
    %7063 = vmatprep.subr.mxu0 0.0
    %7064 = vmatpush1.msra.mxu0 %v7033
    %7065 = vmatprep.subr.mxu0 0.0
    %7066 = vmatpush1.msra.mxu0 %v7034
    %7067 = vmatprep.subr.mxu0 0.0
    %7068 = vmatpush1.msra.mxu0 %v7035
    %7069 = vmatprep.subr.mxu0 0.0
    %7070 = vmatpush1.msra.mxu0 %v7036
    %7071 = vmatprep.subr.mxu0 0.0
    %7072 = vmatpush1.msra.mxu0 %v7049
    %7073 = vmatprep.subr.mxu0 0.0
    %7074 = vmatpush1.msra.mxu0 0.0
    %7075 = vmatprep.subr.mxu0 0.0
    %7076 = vmatpush1.msra.mxu0 0.0
    %7077 = vmatprep.subr.mxu0 0.0
    %7078 = vmatpush1.msra.mxu0 0.0
    %7079 = vmatprep.subr.mxu0 0.0
    %7080 = vmatpush1.msra.mxu0 0.0
    %7081 = vmatprep.subr.mxu0 0.0
    %7082 = vmatpush1.msra.mxu0 0.0
    %7083 = vmatprep.subr.mxu0 0.0
    %7084 = vmatpush1.msra.mxu0 0.0
    %7085 = vmatprep.subr.mxu0 0.0
    %7086 = vmatpush1.msra.mxu0 0.0
    %7087 = vmatprep.subr.mxu0 0.0
    %7088 = vmatpush1.msra.mxu0 0.0
    %7089 = vmatprep.subr.mxu0 0.0
    %7090 = vmatpush1.msra.mxu0 0.0
    %7091 = vmatprep.subr.mxu0 0.0
    %7092 = vmatpush1.msra.mxu0 0.0
    %7093 = vmatprep.subr.mxu0 0.0
    %7094 = vmatpush1.msra.mxu0 0.0
    %7095 = vmatprep.subr.mxu0 0.0
    %7096 = vmatpush1.msra.mxu0 0.0
    %7097 = vmatprep.subr.mxu0 0.0
    %7098 = vmatpush1.msra.mxu0 0.0
    %7099 = vmatprep.subr.mxu0 0.0
    %7100 = vmatpush1.msra.mxu0 0.0
    %7101 = vmatprep.subr.mxu0 0.0
    %7102 = vmatpush1.msra.mxu0 0.0
    %7103 = vmatprep.subr.mxu0 0.0
    %7104 = vmatpush1.msra.mxu0 0.0
    %7105 = vmatprep.subr.mxu0 0.0
    %7106 = vmatpush1.msra.mxu0 0.0
    %7107 = vmatprep.subr.mxu0 0.0
    %7108 = vmatpush1.msra.mxu0 0.0
    %7109 = vmatprep.subr.mxu0 0.0
    %7110 = vmatpush1.msra.mxu0 0.0
    %7111 = vmatprep.subr.mxu0 0.0
    %7112 = vmatpush1.msra.mxu0 0.0
    %7113 = vmatprep.subr.mxu0 0.0
    %7114 = vmatpush1.msra.mxu0 0.0
    %7115 = vmatprep.mubr.f32.mxu0 0.0
    %7116 = vmatmul.mubr.f32.gmra.mrb[0].mxu0 %v7046
    %v7117 = vpop.f32.mrb[0].mxu0
    %v7118 = vadd.f32 %v7043, %v7117
    %v7119 = vpop.f32.mrb[0].mxu0
    %7120 = vdwg.mxu0
    %vm7121 = vcmask 74752
    %7122 = vst.msk [vmem:[#allocation3] sm:$0x3] %vm7121, %v7118
    // Predicated region
    $region46: #{my_network_forward.1} parent=1 // pred_check
      _
    $region47: #{my_network_forward.1} parent=1 // pred_check_branch
      %7124 = sbr.rel (0) target = $region49
    $region48: #{my_network_forward.1} parent=1 // pred_region
      %s7126 = ssub.s32 32, 32
      %7127 = vsyncadd [#allocation4], %s7126
      %s7129 = sshll.u32 [#allocation3], 4
      %s7130 = int_to_ptr.vmem [resolvable:$true] %s7129
      %7132 = dma.vmem_to_hbm [thread:$0]  %s7130, 32, %s11, [#allocation4]
    $region49: #{my_network_forward.1} parent=1 // pred_fallthru
      _
    // Predicated region
    $region50: #{my_network_forward.1} parent=1 // pred_check
      _
    $region51: #{my_network_forward.1} parent=1 // pred_check_branch
      %7134 = sbr.rel (0) target = $region53
    $region52: #{my_network_forward.1} parent=1 // pred_region
      %7135 = dma.done [#allocation4], 32
    $region53: #{my_network_forward.1} parent=1 // pred_fallthru
      _
    %7136 = vsyncpa [#allocation4], 1

</llo_original>
